<compile_context>
chip_gen: v5e
topology: v5e:2x2
jax: 0.10.0
libtpu: 0.0.40
codegen_flags: <defaults>
</compile_context>

<pallas_src>
import jax
import jax.numpy as jnp
from jax.experimental import pallas as pl

# ----------------------------------------------------------------------------
# Config (small shapes consistent with the module's forward: src/trg are (L, N) ints)
# ----------------------------------------------------------------------------
EMBED = 64            # embedding_size
NHEADS = 4            # num_heads (EMBED % NHEADS == 0)
HEAD_DIM = EMBED // NHEADS
NUM_ENC = 2           # num_encoder_layers
NUM_DEC = 2           # num_decoder_layers
FFN = 128             # dim_feedforward
SRC_VOCAB = 37
TRG_VOCAB = 41
VOCAB_PAD = 128       # lane-dense padded fc_out width (sliced back to TRG_VOCAB)
MAX_LEN = 32
PAD_IDX = 1
EPS = 1e-5
NEG_INF = -1e30       # finite "masked" value (avoids NaN from fully masked rows)

SRC_LEN = 10
TRG_LEN = 8
BATCH = 2


# ----------------------------------------------------------------------------
# In-kernel helpers (operate on jnp values already loaded from VMEM refs)
# ----------------------------------------------------------------------------
def _layernorm(h, g, b):
    """LayerNorm over last axis. h:(M,E), g,b:(1,E)."""
    mu = jnp.mean(h, axis=-1, keepdims=True)
    var = jnp.mean((h - mu) ** 2, axis=-1, keepdims=True)
    return (h - mu) * jax.lax.rsqrt(var + EPS) * g + b


def _embed(ids_col, word_emb, pos_table, n_batch, seq_len):
    """Exact embedding gather via one-hot matmul + positional add.

    ids_col:(N*L,1) int32 (batch-major rows), word_emb:(V,E), pos_table:(MAX_LEN,E).
    Returns (N*L, E) f32.
    """
    vocab = word_emb.shape[0]
    rows = n_batch * seq_len
    onehot = jnp.where(
        ids_col == jax.lax.broadcasted_iota(jnp.int32, (rows, vocab), 1),
        jnp.float32(1.0), jnp.float32(0.0))
    x = jnp.dot(onehot, word_emb, preferred_element_type=jnp.float32)
    pos = pos_table[:seq_len, :]
    return x + jnp.concatenate([pos] * n_batch, axis=0)


def _attention_one(q, k, v, bias):
    """Multi-head attention for one batch element.

    q:(Lq,E), k,v:(Lk,E). bias: additive score bias broadcastable to (Lq,Lk) or None.
    Returns concat_heads(softmax(QK^T/sqrt(d)+bias) V) of shape (Lq,E).
    """
    scale = jnp.float32(HEAD_DIM ** -0.5)
    ctxs = []
    for h in range(NHEADS):
        sl = slice(h * HEAD_DIM, (h + 1) * HEAD_DIM)
        # Q @ K^T without materializing a transpose (contract dim 1 of both).
        s = jax.lax.dot_general(q[:, sl], k[:, sl], (((1,), (1,)), ((), ())),
                                preferred_element_type=jnp.float32) * scale
        if bias is not None:
            s = s + bias
        m = jnp.max(s, axis=-1, keepdims=True)
        p = jnp.exp(s - m)
        p = p / jnp.sum(p, axis=-1, keepdims=True)          # exact division
        ctxs.append(jnp.dot(p, v[:, sl], preferred_element_type=jnp.float32))
    return jnp.concatenate(ctxs, axis=-1)                    # (Lq, E)


def _batched_attention(q, k, v, lq, lk, n_batch, bias):
    """q:(N*Lq,E) k,v:(N*Lk,E) batch-major; bias: list per batch, shared array or None."""
    outs = []
    for n in range(n_batch):
        rq = slice(n * lq, (n + 1) * lq)
        rk = slice(n * lk, (n + 1) * lk)
        b = bias[n] if isinstance(bias, list) else bias
        outs.append(_attention_one(q[rq], k[rk], v[rk], b))
    return jnp.concatenate(outs, axis=0)                     # (N*Lq, E)


# ----------------------------------------------------------------------------
# The single fused kernel (no grid: every input is a full-array VMEM block)
# ----------------------------------------------------------------------------
def _transformer_kernel(
        src_col_ref, trg_col_ref, src_row_ref,
        src_emb_ref, src_pos_ref, trg_emb_ref, trg_pos_ref,
        enc_wqkv_ref, enc_wo_ref, enc_w1_ref, enc_w2_ref, enc_vec_ref,
        dec_swqkv_ref, dec_swo_ref, dec_cwq_ref, dec_cwkv_ref, dec_cwo_ref,
        dec_w1_ref, dec_w2_ref, dec_vec_ref,
        fc_w_ref, final_vec_ref,
        o_ref):
    E, F = EMBED, FFN
    n_batch, lt, _ = o_ref.shape
    ls = src_row_ref.shape[1]

    # ---- embeddings (exact one-hot matmul gather) + positional; dropout = identity ----
    x_src = _embed(src_col_ref[...], src_emb_ref[...], src_pos_ref[...], n_batch, ls)
    x_trg = _embed(trg_col_ref[...], trg_emb_ref[...], trg_pos_ref[...], n_batch, lt)

    # ---- masks (built in-register) ----
    src_row = src_row_ref[...]                               # (N, Ls) int32
    key_bias = [jnp.where(src_row[n:n + 1, :] == PAD_IDX,
                          jnp.float32(NEG_INF), jnp.float32(0.0))
                for n in range(n_batch)]                     # per-batch (1, Ls)
    r_iota = jax.lax.broadcasted_iota(jnp.int32, (lt, lt), 0)
    c_iota = jax.lax.broadcasted_iota(jnp.int32, (lt, lt), 1)
    causal = jnp.where(c_iota > r_iota, jnp.float32(NEG_INF), jnp.float32(0.0))

    # ---- encoder stack (batch folded into rows: (N*Ls, E)) ----
    mem = x_src
    for l in range(NUM_ENC):
        vec = enc_vec_ref[l]                                 # (8, 3E) packed vectors
        qkv = jnp.dot(mem, enc_wqkv_ref[l],
                      preferred_element_type=jnp.float32) + vec[0:1, :]
        q, k, v = qkv[:, :E], qkv[:, E:2 * E], qkv[:, 2 * E:]
        ctx = _batched_attention(q, k, v, ls, ls, n_batch, key_bias)
        a = jnp.dot(ctx, enc_wo_ref[l],
                    preferred_element_type=jnp.float32) + vec[1:2, :E]
        h = _layernorm(mem + a, vec[4:5, :E], vec[5:6, :E])
        f = jnp.maximum(jnp.dot(h, enc_w1_ref[l],
                                preferred_element_type=jnp.float32) + vec[2:3, :F], 0.0)
        f = jnp.dot(f, enc_w2_ref[l],
                    preferred_element_type=jnp.float32) + vec[3:4, :E]
        mem = _layernorm(h + f, vec[6:7, :E], vec[7:8, :E])

    fvec = final_vec_ref[...]                                # (5, VOCAB_PAD)
    mem = _layernorm(mem, fvec[0:1, :E], fvec[1:2, :E])      # encoder final norm

    # ---- decoder stack ((N*Lt, E)) ----
    h = x_trg
    for l in range(NUM_DEC):
        vec = dec_vec_ref[l]                                 # (13, 3E) packed vectors
        # self-attention (causal mask)
        qkv = jnp.dot(h, dec_swqkv_ref[l],
                      preferred_element_type=jnp.float32) + vec[0:1, :]
        q, k, v = qkv[:, :E], qkv[:, E:2 * E], qkv[:, 2 * E:]
        ctx = _batched_attention(q, k, v, lt, lt, n_batch, causal)
        a = jnp.dot(ctx, dec_swo_ref[l],
                    preferred_element_type=jnp.float32) + vec[1:2, :E]
        h = _layernorm(h + a, vec[7:8, :E], vec[8:9, :E])
        # cross-attention (memory_key_padding_mask is not passed in the PyTorch forward)
        cq = jnp.dot(h, dec_cwq_ref[l],
                     preferred_element_type=jnp.float32) + vec[2:3, :E]
        kv = jnp.dot(mem, dec_cwkv_ref[l],
                     preferred_element_type=jnp.float32) + vec[3:4, :2 * E]
        ctx = _batched_attention(cq, kv[:, :E], kv[:, E:], lt, ls, n_batch, None)
        c = jnp.dot(ctx, dec_cwo_ref[l],
                    preferred_element_type=jnp.float32) + vec[4:5, :E]
        h = _layernorm(h + c, vec[9:10, :E], vec[10:11, :E])
        # FFN
        f = jnp.maximum(jnp.dot(h, dec_w1_ref[l],
                                preferred_element_type=jnp.float32) + vec[5:6, :F], 0.0)
        f = jnp.dot(f, dec_w2_ref[l],
                    preferred_element_type=jnp.float32) + vec[6:7, :E]
        h = _layernorm(h + f, vec[11:12, :E], vec[12:13, :E])

    # ---- decoder final norm + fc_out (lane-padded to VOCAB_PAD) ----
    h = _layernorm(h, fvec[2:3, :E], fvec[3:4, :E])
    logits = jnp.dot(h, fc_w_ref[...],
                     preferred_element_type=jnp.float32) + fvec[4:5, :]
    o_ref[...] = logits.reshape(n_batch, lt, VOCAB_PAD)


# ----------------------------------------------------------------------------
# Forward wrapper (jit-compiled); only integer-id reshapes and the final
# slice/transpose remain outside the kernel.
# ----------------------------------------------------------------------------
def _forward(params, src, trg):
    """src:(Ls,N) int32, trg:(Lt,N) int32 -> (Lt, N, TRG_VOCAB) float32."""
    src_t = src.T.astype(jnp.int32)                     # (N, Ls)
    trg_t = trg.T.astype(jnp.int32)                     # (N, Lt)
    src_col = src_t.reshape(-1, 1)                      # (N*Ls, 1), batch-major
    trg_col = trg_t.reshape(-1, 1)                      # (N*Lt, 1), batch-major
    n, lt = trg_t.shape

    logits = pl.pallas_call(
        _transformer_kernel,
        out_shape=jax.ShapeDtypeStruct((n, lt, VOCAB_PAD), jnp.float32),
    )(src_col, trg_col, src_t,
      params["src_word_emb"], params["src_pos_emb"],
      params["trg_word_emb"], params["trg_pos_emb"],
      params["enc_wqkv"], params["enc_wo"], params["enc_w1"], params["enc_w2"],
      params["enc_vec"],
      params["dec_swqkv"], params["dec_swo"], params["dec_cwq"],
      params["dec_cwkv"], params["dec_cwo"], params["dec_w1"], params["dec_w2"],
      params["dec_vec"],
      params["fc_w"], params["final_vec"])

    return jnp.transpose(logits[:, :, :TRG_VOCAB], (1, 0, 2))   # (Lt, N, V)


transformer_forward = jax.jit(_forward)


# ----------------------------------------------------------------------------
# Deterministic parameter initialization (weights stored pre-transposed / stacked
# per layer; tiny bias & LayerNorm vectors packed into per-stack slabs).
# ----------------------------------------------------------------------------
def init_params(key):
    keys = iter(jax.random.split(key, 512))
    E, F, H3 = EMBED, FFN, 3 * EMBED

    def nrm(shape):
        return jax.random.normal(next(keys), shape, jnp.float32) * 0.02

    def enc_layer():
        # packed vector slab rows: 0 bqkv | 1 bo | 2 b1 | 3 b2 | 4 g1 | 5 be1 | 6 g2 | 7 be2
        vec = jnp.zeros((8, H3), jnp.float32)
        vec = vec.at[0, :H3].set(nrm((H3,)))
        vec = vec.at[1, :E].set(nrm((E,)))
        vec = vec.at[2, :F].set(nrm((F,)))
        vec = vec.at[3, :E].set(nrm((E,)))
        vec = vec.at[4, :E].set(1.0)
        vec = vec.at[6, :E].set(1.0)
        return dict(wqkv=nrm((E, H3)), wo=nrm((E, E)),
                    w1=nrm((E, F)), w2=nrm((F, E)), vec=vec)

    def dec_layer():
        # rows: 0 s_bqkv | 1 s_bo | 2 c_bq | 3 c_bkv | 4 c_bo | 5 b1 | 6 b2 |
        #       7 g1 | 8 be1 | 9 g2 | 10 be2 | 11 g3 | 12 be3
        vec = jnp.zeros((13, H3), jnp.float32)
        vec = vec.at[0, :H3].set(nrm((H3,)))
        vec = vec.at[1, :E].set(nrm((E,)))
        vec = vec.at[2, :E].set(nrm((E,)))
        vec = vec.at[3, :2 * E].set(nrm((2 * E,)))
        vec = vec.at[4, :E].set(nrm((E,)))
        vec = vec.at[5, :F].set(nrm((F,)))
        vec = vec.at[6, :E].set(nrm((E,)))
        vec = vec.at[7, :E].set(1.0)
        vec = vec.at[9, :E].set(1.0)
        vec = vec.at[11, :E].set(1.0)
        return dict(swqkv=nrm((E, H3)), swo=nrm((E, E)),
                    cwq=nrm((E, E)), cwkv=nrm((E, 2 * E)), cwo=nrm((E, E)),
                    w1=nrm((E, F)), w2=nrm((F, E)), vec=vec)

    enc = [enc_layer() for _ in range(NUM_ENC)]
    dec = [dec_layer() for _ in range(NUM_DEC)]

    def stack(layers, name):
        return jnp.stack([lay[name] for lay in layers])

    # fc_out: pre-transposed, lane-padded to VOCAB_PAD columns
    fc_w = jnp.zeros((E, VOCAB_PAD), jnp.float32).at[:, :TRG_VOCAB].set(
        nrm((E, TRG_VOCAB)))

    # final slab rows: 0 enc_norm_g | 1 enc_norm_b | 2 dec_norm_g | 3 dec_norm_b | 4 fc_b
    final_vec = jnp.zeros((5, VOCAB_PAD), jnp.float32)
    final_vec = final_vec.at[0, :E].set(1.0)
    final_vec = final_vec.at[2, :E].set(1.0)
    final_vec = final_vec.at[4, :TRG_VOCAB].set(nrm((TRG_VOCAB,)))

    return {
        "src_word_emb": nrm((SRC_VOCAB, E)),
        "src_pos_emb": nrm((MAX_LEN, E)),
        "trg_word_emb": nrm((TRG_VOCAB, E)),
        "trg_pos_emb": nrm((MAX_LEN, E)),
        "enc_wqkv": stack(enc, "wqkv"), "enc_wo": stack(enc, "wo"),
        "enc_w1": stack(enc, "w1"), "enc_w2": stack(enc, "w2"),
        "enc_vec": stack(enc, "vec"),
        "dec_swqkv": stack(dec, "swqkv"), "dec_swo": stack(dec, "swo"),
        "dec_cwq": stack(dec, "cwq"), "dec_cwkv": stack(dec, "cwkv"),
        "dec_cwo": stack(dec, "cwo"),
        "dec_w1": stack(dec, "w1"), "dec_w2": stack(dec, "w2"),
        "dec_vec": stack(dec, "vec"),
        "fc_w": fc_w, "final_vec": final_vec,
    }


# ----------------------------------------------------------------------------
if __name__ == "__main__":
    key = jax.random.PRNGKey(0)
    k_params, k_src, k_trg = jax.random.split(key, 3)

    params = init_params(k_params)

    # token ids (seq-first, like the PyTorch module): (L, N)
    src = jax.random.randint(k_src, (SRC_LEN, BATCH), 2, SRC_VOCAB, dtype=jnp.int32)
    trg = jax.random.randint(k_trg, (TRG_LEN, BATCH), 2, TRG_VOCAB, dtype=jnp.int32)
    # introduce some padding in src so src_key_padding_mask is non-trivial
    src = src.at[-2:, 0].set(PAD_IDX)

    out = transformer_forward(params, src, trg)
    out = jax.block_until_ready(out)

    assert out.shape == (TRG_LEN, BATCH, TRG_VOCAB), out.shape
    assert bool(jnp.all(jnp.isfinite(out)))
    print("KERNEL_OK")
</pallas_src>

<mosaic_0001>
module attributes {stable_mosaic.version = 11 : i64} {
  func.func @_transformer_kernel(%arg0: memref<20x1xi32, #tpu.memory_space<vmem>>, %arg1: memref<16x1xi32, #tpu.memory_space<vmem>>, %arg2: memref<2x10xi32, #tpu.memory_space<vmem>>, %arg3: memref<37x64xf32, #tpu.memory_space<vmem>>, %arg4: memref<32x64xf32, #tpu.memory_space<vmem>>, %arg5: memref<41x64xf32, #tpu.memory_space<vmem>>, %arg6: memref<32x64xf32, #tpu.memory_space<vmem>>, %arg7: memref<2x64x192xf32, #tpu.memory_space<vmem>>, %arg8: memref<2x64x64xf32, #tpu.memory_space<vmem>>, %arg9: memref<2x64x128xf32, #tpu.memory_space<vmem>>, %arg10: memref<2x128x64xf32, #tpu.memory_space<vmem>>, %arg11: memref<2x8x192xf32, #tpu.memory_space<vmem>>, %arg12: memref<2x64x192xf32, #tpu.memory_space<vmem>>, %arg13: memref<2x64x64xf32, #tpu.memory_space<vmem>>, %arg14: memref<2x64x64xf32, #tpu.memory_space<vmem>>, %arg15: memref<2x64x128xf32, #tpu.memory_space<vmem>>, %arg16: memref<2x64x64xf32, #tpu.memory_space<vmem>>, %arg17: memref<2x64x128xf32, #tpu.memory_space<vmem>>, %arg18: memref<2x128x64xf32, #tpu.memory_space<vmem>>, %arg19: memref<2x13x192xf32, #tpu.memory_space<vmem>>, %arg20: memref<64x128xf32, #tpu.memory_space<vmem>>, %arg21: memref<5x128xf32, #tpu.memory_space<vmem>>, %arg22: memref<2x8x128xf32, #tpu.memory_space<vmem>>) attributes {dimension_semantics = [], scalar_prefetch = 0 : i64, scratch_operands = 0 : i64, tpu.core_type = #tpu.core_type<tc>} {
    %c0 = arith.constant 0 : index
    %c0_0 = arith.constant 0 : index
    %0 = vector.load %arg0[%c0, %c0_0] : memref<20x1xi32, #tpu.memory_space<vmem>>, vector<20x1xi32>
    %c0_1 = arith.constant 0 : index
    %c0_2 = arith.constant 0 : index
    %1 = vector.load %arg3[%c0_1, %c0_2] : memref<37x64xf32, #tpu.memory_space<vmem>>, vector<37x64xf32>
    %c0_3 = arith.constant 0 : index
    %c0_4 = arith.constant 0 : index
    %2 = vector.load %arg4[%c0_3, %c0_4] : memref<32x64xf32, #tpu.memory_space<vmem>>, vector<32x64xf32>
    %3 = tpu.iota {dimensions = array<i32: 1>} : vector<20x37xi32>
    %4 = vector.broadcast %0 : vector<20x1xi32> to vector<20x37xi32>
    %5 = arith.cmpi eq, %4, %3 : vector<20x37xi32>
    %cst = arith.constant 1.000000e+00 : f32
    %cst_5 = arith.constant 0.000000e+00 : f32
    %6 = vector.broadcast %cst : f32 to vector<20x37xf32>
    %7 = vector.broadcast %cst_5 : f32 to vector<20x37xf32>
    %8 = arith.select %5, %6, %7 : vector<20x37xi1>, vector<20x37xf32>
    %cst_6 = arith.constant dense<0.000000e+00> : vector<20x64xf32>
    %9 = tpu.matmul %8, %1, %cst_6 {dimension_numbers = #tpu.dot_dimension_numbers<[1], [0], [0], [1], [0, 0, 1, 1], [], []>} : vector<20x37xf32>, vector<37x64xf32>, vector<20x64xf32> -> vector<20x64xf32>
    %10 = vector.extract_strided_slice %2 {offsets = [0, 0], sizes = [10, 64], strides = [1, 1]} : vector<32x64xf32> to vector<10x64xf32>
    %11 = tpu.concatenate %10, %10 in 0 : vector<10x64xf32>, vector<10x64xf32> -> vector<20x64xf32>
    %12 = arith.addf %9, %11 : vector<20x64xf32>
    %c0_7 = arith.constant 0 : index
    %c0_8 = arith.constant 0 : index
    %13 = vector.load %arg1[%c0_7, %c0_8] : memref<16x1xi32, #tpu.memory_space<vmem>>, vector<16x1xi32>
    %c0_9 = arith.constant 0 : index
    %c0_10 = arith.constant 0 : index
    %14 = vector.load %arg5[%c0_9, %c0_10] : memref<41x64xf32, #tpu.memory_space<vmem>>, vector<41x64xf32>
    %c0_11 = arith.constant 0 : index
    %c0_12 = arith.constant 0 : index
    %15 = vector.load %arg6[%c0_11, %c0_12] : memref<32x64xf32, #tpu.memory_space<vmem>>, vector<32x64xf32>
    %16 = tpu.iota {dimensions = array<i32: 1>} : vector<16x41xi32>
    %17 = vector.broadcast %13 : vector<16x1xi32> to vector<16x41xi32>
    %18 = arith.cmpi eq, %17, %16 : vector<16x41xi32>
    %cst_13 = arith.constant 1.000000e+00 : f32
    %cst_14 = arith.constant 0.000000e+00 : f32
    %19 = vector.broadcast %cst_13 : f32 to vector<16x41xf32>
    %20 = vector.broadcast %cst_14 : f32 to vector<16x41xf32>
    %21 = arith.select %18, %19, %20 : vector<16x41xi1>, vector<16x41xf32>
    %cst_15 = arith.constant dense<0.000000e+00> : vector<16x64xf32>
    %22 = tpu.matmul %21, %14, %cst_15 {dimension_numbers = #tpu.dot_dimension_numbers<[1], [0], [0], [1], [0, 0, 1, 1], [], []>} : vector<16x41xf32>, vector<41x64xf32>, vector<16x64xf32> -> vector<16x64xf32>
    %23 = vector.extract_strided_slice %15 {offsets = [0, 0], sizes = [8, 64], strides = [1, 1]} : vector<32x64xf32> to vector<8x64xf32>
    %24 = tpu.concatenate %23, %23 in 0 : vector<8x64xf32>, vector<8x64xf32> -> vector<16x64xf32>
    %25 = arith.addf %22, %24 : vector<16x64xf32>
    %c0_16 = arith.constant 0 : index
    %c0_17 = arith.constant 0 : index
    %26 = vector.load %arg2[%c0_16, %c0_17] : memref<2x10xi32, #tpu.memory_space<vmem>>, vector<2x10xi32>
    %27 = vector.extract_strided_slice %26 {offsets = [0, 0], sizes = [1, 10], strides = [1, 1]} : vector<2x10xi32> to vector<1x10xi32>
    %c1_i32 = arith.constant 1 : i32
    %28 = vector.broadcast %c1_i32 : i32 to vector<1x10xi32>
    %29 = arith.cmpi eq, %27, %28 : vector<1x10xi32>
    %cst_18 = arith.constant -1.000000e+30 : f32
    %cst_19 = arith.constant 0.000000e+00 : f32
    %30 = vector.broadcast %cst_18 : f32 to vector<1x10xf32>
    %31 = vector.broadcast %cst_19 : f32 to vector<1x10xf32>
    %32 = arith.select %29, %30, %31 : vector<1x10xi1>, vector<1x10xf32>
    %33 = vector.extract_strided_slice %26 {offsets = [1, 0], sizes = [1, 10], strides = [1, 1]} : vector<2x10xi32> to vector<1x10xi32>
    %c1_i32_20 = arith.constant 1 : i32
    %34 = vector.broadcast %c1_i32_20 : i32 to vector<1x10xi32>
    %35 = arith.cmpi eq, %33, %34 : vector<1x10xi32>
    %cst_21 = arith.constant -1.000000e+30 : f32
    %cst_22 = arith.constant 0.000000e+00 : f32
    %36 = vector.broadcast %cst_21 : f32 to vector<1x10xf32>
    %37 = vector.broadcast %cst_22 : f32 to vector<1x10xf32>
    %38 = arith.select %35, %36, %37 : vector<1x10xi1>, vector<1x10xf32>
    %39 = tpu.iota {dimensions = array<i32: 0>} : vector<8x8xi32>
    %40 = tpu.iota {dimensions = array<i32: 1>} : vector<8x8xi32>
    %41 = arith.cmpi sgt, %40, %39 : vector<8x8xi32>
    %cst_23 = arith.constant -1.000000e+30 : f32
    %cst_24 = arith.constant 0.000000e+00 : f32
    %42 = vector.broadcast %cst_23 : f32 to vector<8x8xf32>
    %43 = vector.broadcast %cst_24 : f32 to vector<8x8xf32>
    %44 = arith.select %41, %42, %43 : vector<8x8xi1>, vector<8x8xf32>
    %c0_25 = arith.constant 0 : index
    %c0_26 = arith.constant 0 : index
    %c0_27 = arith.constant 0 : index
    %45 = vector.load %arg11[%c0_25, %c0_26, %c0_27] : memref<2x8x192xf32, #tpu.memory_space<vmem>>, vector<1x8x192xf32>
    %46 = vector.shape_cast %45 : vector<1x8x192xf32> to vector<8x192xf32>
    %c0_28 = arith.constant 0 : index
    %c0_29 = arith.constant 0 : index
    %c0_30 = arith.constant 0 : index
    %47 = vector.load %arg7[%c0_28, %c0_29, %c0_30] : memref<2x64x192xf32, #tpu.memory_space<vmem>>, vector<1x64x192xf32>
    %48 = vector.shape_cast %47 : vector<1x64x192xf32> to vector<64x192xf32>
    %cst_31 = arith.constant dense<0.000000e+00> : vector<20x192xf32>
    %49 = tpu.matmul %12, %48, %cst_31 {dimension_numbers = #tpu.dot_dimension_numbers<[1], [0], [0], [1], [0, 0, 1, 1], [], []>} : vector<20x64xf32>, vector<64x192xf32>, vector<20x192xf32> -> vector<20x192xf32>
    %50 = vector.extract_strided_slice %46 {offsets = [0, 0], sizes = [1, 192], strides = [1, 1]} : vector<8x192xf32> to vector<1x192xf32>
    %51 = vector.broadcast %50 : vector<1x192xf32> to vector<20x192xf32>
    %52 = arith.addf %49, %51 : vector<20x192xf32>
    %53 = vector.extract_strided_slice %52 {offsets = [0, 0], sizes = [20, 64], strides = [1, 1]} : vector<20x192xf32> to vector<20x64xf32>
    %54 = vector.extract_strided_slice %52 {offsets = [0, 64], sizes = [20, 64], strides = [1, 1]} : vector<20x192xf32> to vector<20x64xf32>
    %55 = vector.extract_strided_slice %52 {offsets = [0, 128], sizes = [20, 64], strides = [1, 1]} : vector<20x192xf32> to vector<20x64xf32>
    %56 = vector.extract_strided_slice %53 {offsets = [0, 0], sizes = [10, 64], strides = [1, 1]} : vector<20x64xf32> to vector<10x64xf32>
    %57 = vector.extract_strided_slice %54 {offsets = [0, 0], sizes = [10, 64], strides = [1, 1]} : vector<20x64xf32> to vector<10x64xf32>
    %58 = vector.extract_strided_slice %55 {offsets = [0, 0], sizes = [10, 64], strides = [1, 1]} : vector<20x64xf32> to vector<10x64xf32>
    %59 = vector.extract_strided_slice %56 {offsets = [0, 0], sizes = [10, 16], strides = [1, 1]} : vector<10x64xf32> to vector<10x16xf32>
    %60 = vector.extract_strided_slice %57 {offsets = [0, 0], sizes = [10, 16], strides = [1, 1]} : vector<10x64xf32> to vector<10x16xf32>
    %cst_32 = arith.constant dense<0.000000e+00> : vector<10x10xf32>
    %61 = tpu.matmul %59, %60, %cst_32 {dimension_numbers = #tpu.dot_dimension_numbers<[1], [1], [0], [0], [0, 0, 1, 0], [], []>} : vector<10x16xf32>, vector<10x16xf32>, vector<10x10xf32> -> vector<10x10xf32>
    %cst_33 = arith.constant 2.500000e-01 : f32
    %62 = vector.broadcast %cst_33 : f32 to vector<10x10xf32>
    %63 = arith.mulf %61, %62 : vector<10x10xf32>
    %64 = vector.broadcast %32 : vector<1x10xf32> to vector<10x10xf32>
    %65 = arith.addf %63, %64 : vector<10x10xf32>
    %cst_34 = arith.constant dense<0xFF800000> : vector<10xf32>
    %66 = vector.multi_reduction <maximumf>, %65, %cst_34 [1] : vector<10x10xf32> to vector<10xf32>
    %67 = vector.shape_cast %66 : vector<10xf32> to vector<10x1xf32>
    %68 = vector.broadcast %67 : vector<10x1xf32> to vector<10x10xf32>
    %69 = arith.subf %65, %68 : vector<10x10xf32>
    %70 = math.exp %69 : vector<10x10xf32>
    %cst_35 = arith.constant dense<0.000000e+00> : vector<10xf32>
    %71 = vector.multi_reduction <add>, %70, %cst_35 [1] : vector<10x10xf32> to vector<10xf32>
    %72 = vector.shape_cast %71 : vector<10xf32> to vector<10x1xf32>
    %73 = vector.broadcast %72 : vector<10x1xf32> to vector<10x10xf32>
    %74 = arith.divf %70, %73 : vector<10x10xf32>
    %75 = vector.extract_strided_slice %58 {offsets = [0, 0], sizes = [10, 16], strides = [1, 1]} : vector<10x64xf32> to vector<10x16xf32>
    %cst_36 = arith.constant dense<0.000000e+00> : vector<10x16xf32>
    %76 = tpu.matmul %74, %75, %cst_36 {dimension_numbers = #tpu.dot_dimension_numbers<[1], [0], [0], [1], [0, 0, 1, 1], [], []>} : vector<10x10xf32>, vector<10x16xf32>, vector<10x16xf32> -> vector<10x16xf32>
    %77 = vector.extract_strided_slice %56 {offsets = [0, 16], sizes = [10, 16], strides = [1, 1]} : vector<10x64xf32> to vector<10x16xf32>
    %78 = vector.extract_strided_slice %57 {offsets = [0, 16], sizes = [10, 16], strides = [1, 1]} : vector<10x64xf32> to vector<10x16xf32>
    %cst_37 = arith.constant dense<0.000000e+00> : vector<10x10xf32>
    %79 = tpu.matmul %77, %78, %cst_37 {dimension_numbers = #tpu.dot_dimension_numbers<[1], [1], [0], [0], [0, 0, 1, 0], [], []>} : vector<10x16xf32>, vector<10x16xf32>, vector<10x10xf32> -> vector<10x10xf32>
    %cst_38 = arith.constant 2.500000e-01 : f32
    %80 = vector.broadcast %cst_38 : f32 to vector<10x10xf32>
    %81 = arith.mulf %79, %80 : vector<10x10xf32>
    %82 = vector.broadcast %32 : vector<1x10xf32> to vector<10x10xf32>
    %83 = arith.addf %81, %82 : vector<10x10xf32>
    %cst_39 = arith.constant dense<0xFF800000> : vector<10xf32>
    %84 = vector.multi_reduction <maximumf>, %83, %cst_39 [1] : vector<10x10xf32> to vector<10xf32>
    %85 = vector.shape_cast %84 : vector<10xf32> to vector<10x1xf32>
    %86 = vector.broadcast %85 : vector<10x1xf32> to vector<10x10xf32>
    %87 = arith.subf %83, %86 : vector<10x10xf32>
    %88 = math.exp %87 : vector<10x10xf32>
    %cst_40 = arith.constant dense<0.000000e+00> : vector<10xf32>
    %89 = vector.multi_reduction <add>, %88, %cst_40 [1] : vector<10x10xf32> to vector<10xf32>
    %90 = vector.shape_cast %89 : vector<10xf32> to vector<10x1xf32>
    %91 = vector.broadcast %90 : vector<10x1xf32> to vector<10x10xf32>
    %92 = arith.divf %88, %91 : vector<10x10xf32>
    %93 = vector.extract_strided_slice %58 {offsets = [0, 16], sizes = [10, 16], strides = [1, 1]} : vector<10x64xf32> to vector<10x16xf32>
    %cst_41 = arith.constant dense<0.000000e+00> : vector<10x16xf32>
    %94 = tpu.matmul %92, %93, %cst_41 {dimension_numbers = #tpu.dot_dimension_numbers<[1], [0], [0], [1], [0, 0, 1, 1], [], []>} : vector<10x10xf32>, vector<10x16xf32>, vector<10x16xf32> -> vector<10x16xf32>
    %95 = vector.extract_strided_slice %56 {offsets = [0, 32], sizes = [10, 16], strides = [1, 1]} : vector<10x64xf32> to vector<10x16xf32>
    %96 = vector.extract_strided_slice %57 {offsets = [0, 32], sizes = [10, 16], strides = [1, 1]} : vector<10x64xf32> to vector<10x16xf32>
    %cst_42 = arith.constant dense<0.000000e+00> : vector<10x10xf32>
    %97 = tpu.matmul %95, %96, %cst_42 {dimension_numbers = #tpu.dot_dimension_numbers<[1], [1], [0], [0], [0, 0, 1, 0], [], []>} : vector<10x16xf32>, vector<10x16xf32>, vector<10x10xf32> -> vector<10x10xf32>
    %cst_43 = arith.constant 2.500000e-01 : f32
    %98 = vector.broadcast %cst_43 : f32 to vector<10x10xf32>
    %99 = arith.mulf %97, %98 : vector<10x10xf32>
    %100 = vector.broadcast %32 : vector<1x10xf32> to vector<10x10xf32>
    %101 = arith.addf %99, %100 : vector<10x10xf32>
    %cst_44 = arith.constant dense<0xFF800000> : vector<10xf32>
    %102 = vector.multi_reduction <maximumf>, %101, %cst_44 [1] : vector<10x10xf32> to vector<10xf32>
    %103 = vector.shape_cast %102 : vector<10xf32> to vector<10x1xf32>
    %104 = vector.broadcast %103 : vector<10x1xf32> to vector<10x10xf32>
    %105 = arith.subf %101, %104 : vector<10x10xf32>
    %106 = math.exp %105 : vector<10x10xf32>
    %cst_45 = arith.constant dense<0.000000e+00> : vector<10xf32>
    %107 = vector.multi_reduction <add>, %106, %cst_45 [1] : vector<10x10xf32> to vector<10xf32>
    %108 = vector.shape_cast %107 : vector<10xf32> to vector<10x1xf32>
    %109 = vector.broadcast %108 : vector<10x1xf32> to vector<10x10xf32>
    %110 = arith.divf %106, %109 : vector<10x10xf32>
    %111 = vector.extract_strided_slice %58 {offsets = [0, 32], sizes = [10, 16], strides = [1, 1]} : vector<10x64xf32> to vector<10x16xf32>
    %cst_46 = arith.constant dense<0.000000e+00> : vector<10x16xf32>
    %112 = tpu.matmul %110, %111, %cst_46 {dimension_numbers = #tpu.dot_dimension_numbers<[1], [0], [0], [1], [0, 0, 1, 1], [], []>} : vector<10x10xf32>, vector<10x16xf32>, vector<10x16xf32> -> vector<10x16xf32>
    %113 = vector.extract_strided_slice %56 {offsets = [0, 48], sizes = [10, 16], strides = [1, 1]} : vector<10x64xf32> to vector<10x16xf32>
    %114 = vector.extract_strided_slice %57 {offsets = [0, 48], sizes = [10, 16], strides = [1, 1]} : vector<10x64xf32> to vector<10x16xf32>
    %cst_47 = arith.constant dense<0.000000e+00> : vector<10x10xf32>
    %115 = tpu.matmul %113, %114, %cst_47 {dimension_numbers = #tpu.dot_dimension_numbers<[1], [1], [0], [0], [0, 0, 1, 0], [], []>} : vector<10x16xf32>, vector<10x16xf32>, vector<10x10xf32> -> vector<10x10xf32>
    %cst_48 = arith.constant 2.500000e-01 : f32
    %116 = vector.broadcast %cst_48 : f32 to vector<10x10xf32>
    %117 = arith.mulf %115, %116 : vector<10x10xf32>
    %118 = vector.broadcast %32 : vector<1x10xf32> to vector<10x10xf32>
    %119 = arith.addf %117, %118 : vector<10x10xf32>
    %cst_49 = arith.constant dense<0xFF800000> : vector<10xf32>
    %120 = vector.multi_reduction <maximumf>, %119, %cst_49 [1] : vector<10x10xf32> to vector<10xf32>
    %121 = vector.shape_cast %120 : vector<10xf32> to vector<10x1xf32>
    %122 = vector.broadcast %121 : vector<10x1xf32> to vector<10x10xf32>
    %123 = arith.subf %119, %122 : vector<10x10xf32>
    %124 = math.exp %123 : vector<10x10xf32>
    %cst_50 = arith.constant dense<0.000000e+00> : vector<10xf32>
    %125 = vector.multi_reduction <add>, %124, %cst_50 [1] : vector<10x10xf32> to vector<10xf32>
    %126 = vector.shape_cast %125 : vector<10xf32> to vector<10x1xf32>
    %127 = vector.broadcast %126 : vector<10x1xf32> to vector<10x10xf32>
    %128 = arith.divf %124, %127 : vector<10x10xf32>
    %129 = vector.extract_strided_slice %58 {offsets = [0, 48], sizes = [10, 16], strides = [1, 1]} : vector<10x64xf32> to vector<10x16xf32>
    %cst_51 = arith.constant dense<0.000000e+00> : vector<10x16xf32>
    %130 = tpu.matmul %128, %129, %cst_51 {dimension_numbers = #tpu.dot_dimension_numbers<[1], [0], [0], [1], [0, 0, 1, 1], [], []>} : vector<10x10xf32>, vector<10x16xf32>, vector<10x16xf32> -> vector<10x16xf32>
    %131 = tpu.concatenate %76, %94, %112, %130 in 1 : vector<10x16xf32>, vector<10x16xf32>, vector<10x16xf32>, vector<10x16xf32> -> vector<10x64xf32>
    %132 = vector.extract_strided_slice %53 {offsets = [10, 0], sizes = [10, 64], strides = [1, 1]} : vector<20x64xf32> to vector<10x64xf32>
    %133 = vector.extract_strided_slice %54 {offsets = [10, 0], sizes = [10, 64], strides = [1, 1]} : vector<20x64xf32> to vector<10x64xf32>
    %134 = vector.extract_strided_slice %55 {offsets = [10, 0], sizes = [10, 64], strides = [1, 1]} : vector<20x64xf32> to vector<10x64xf32>
    %135 = vector.extract_strided_slice %132 {offsets = [0, 0], sizes = [10, 16], strides = [1, 1]} : vector<10x64xf32> to vector<10x16xf32>
    %136 = vector.extract_strided_slice %133 {offsets = [0, 0], sizes = [10, 16], strides = [1, 1]} : vector<10x64xf32> to vector<10x16xf32>
    %cst_52 = arith.constant dense<0.000000e+00> : vector<10x10xf32>
    %137 = tpu.matmul %135, %136, %cst_52 {dimension_numbers = #tpu.dot_dimension_numbers<[1], [1], [0], [0], [0, 0, 1, 0], [], []>} : vector<10x16xf32>, vector<10x16xf32>, vector<10x10xf32> -> vector<10x10xf32>
    %cst_53 = arith.constant 2.500000e-01 : f32
    %138 = vector.broadcast %cst_53 : f32 to vector<10x10xf32>
    %139 = arith.mulf %137, %138 : vector<10x10xf32>
    %140 = vector.broadcast %38 : vector<1x10xf32> to vector<10x10xf32>
    %141 = arith.addf %139, %140 : vector<10x10xf32>
    %cst_54 = arith.constant dense<0xFF800000> : vector<10xf32>
    %142 = vector.multi_reduction <maximumf>, %141, %cst_54 [1] : vector<10x10xf32> to vector<10xf32>
    %143 = vector.shape_cast %142 : vector<10xf32> to vector<10x1xf32>
    %144 = vector.broadcast %143 : vector<10x1xf32> to vector<10x10xf32>
    %145 = arith.subf %141, %144 : vector<10x10xf32>
    %146 = math.exp %145 : vector<10x10xf32>
    %cst_55 = arith.constant dense<0.000000e+00> : vector<10xf32>
    %147 = vector.multi_reduction <add>, %146, %cst_55 [1] : vector<10x10xf32> to vector<10xf32>
    %148 = vector.shape_cast %147 : vector<10xf32> to vector<10x1xf32>
    %149 = vector.broadcast %148 : vector<10x1xf32> to vector<10x10xf32>
    %150 = arith.divf %146, %149 : vector<10x10xf32>
    %151 = vector.extract_strided_slice %134 {offsets = [0, 0], sizes = [10, 16], strides = [1, 1]} : vector<10x64xf32> to vector<10x16xf32>
    %cst_56 = arith.constant dense<0.000000e+00> : vector<10x16xf32>
    %152 = tpu.matmul %150, %151, %cst_56 {dimension_numbers = #tpu.dot_dimension_numbers<[1], [0], [0], [1], [0, 0, 1, 1], [], []>} : vector<10x10xf32>, vector<10x16xf32>, vector<10x16xf32> -> vector<10x16xf32>
    %153 = vector.extract_strided_slice %132 {offsets = [0, 16], sizes = [10, 16], strides = [1, 1]} : vector<10x64xf32> to vector<10x16xf32>
    %154 = vector.extract_strided_slice %133 {offsets = [0, 16], sizes = [10, 16], strides = [1, 1]} : vector<10x64xf32> to vector<10x16xf32>
    %cst_57 = arith.constant dense<0.000000e+00> : vector<10x10xf32>
    %155 = tpu.matmul %153, %154, %cst_57 {dimension_numbers = #tpu.dot_dimension_numbers<[1], [1], [0], [0], [0, 0, 1, 0], [], []>} : vector<10x16xf32>, vector<10x16xf32>, vector<10x10xf32> -> vector<10x10xf32>
    %cst_58 = arith.constant 2.500000e-01 : f32
    %156 = vector.broadcast %cst_58 : f32 to vector<10x10xf32>
    %157 = arith.mulf %155, %156 : vector<10x10xf32>
    %158 = vector.broadcast %38 : vector<1x10xf32> to vector<10x10xf32>
    %159 = arith.addf %157, %158 : vector<10x10xf32>
    %cst_59 = arith.constant dense<0xFF800000> : vector<10xf32>
    %160 = vector.multi_reduction <maximumf>, %159, %cst_59 [1] : vector<10x10xf32> to vector<10xf32>
    %161 = vector.shape_cast %160 : vector<10xf32> to vector<10x1xf32>
    %162 = vector.broadcast %161 : vector<10x1xf32> to vector<10x10xf32>
    %163 = arith.subf %159, %162 : vector<10x10xf32>
    %164 = math.exp %163 : vector<10x10xf32>
    %cst_60 = arith.constant dense<0.000000e+00> : vector<10xf32>
    %165 = vector.multi_reduction <add>, %164, %cst_60 [1] : vector<10x10xf32> to vector<10xf32>
    %166 = vector.shape_cast %165 : vector<10xf32> to vector<10x1xf32>
    %167 = vector.broadcast %166 : vector<10x1xf32> to vector<10x10xf32>
    %168 = arith.divf %164, %167 : vector<10x10xf32>
    %169 = vector.extract_strided_slice %134 {offsets = [0, 16], sizes = [10, 16], strides = [1, 1]} : vector<10x64xf32> to vector<10x16xf32>
    %cst_61 = arith.constant dense<0.000000e+00> : vector<10x16xf32>
    %170 = tpu.matmul %168, %169, %cst_61 {dimension_numbers = #tpu.dot_dimension_numbers<[1], [0], [0], [1], [0, 0, 1, 1], [], []>} : vector<10x10xf32>, vector<10x16xf32>, vector<10x16xf32> -> vector<10x16xf32>
    %171 = vector.extract_strided_slice %132 {offsets = [0, 32], sizes = [10, 16], strides = [1, 1]} : vector<10x64xf32> to vector<10x16xf32>
    %172 = vector.extract_strided_slice %133 {offsets = [0, 32], sizes = [10, 16], strides = [1, 1]} : vector<10x64xf32> to vector<10x16xf32>
    %cst_62 = arith.constant dense<0.000000e+00> : vector<10x10xf32>
    %173 = tpu.matmul %171, %172, %cst_62 {dimension_numbers = #tpu.dot_dimension_numbers<[1], [1], [0], [0], [0, 0, 1, 0], [], []>} : vector<10x16xf32>, vector<10x16xf32>, vector<10x10xf32> -> vector<10x10xf32>
    %cst_63 = arith.constant 2.500000e-01 : f32
    %174 = vector.broadcast %cst_63 : f32 to vector<10x10xf32>
    %175 = arith.mulf %173, %174 : vector<10x10xf32>
    %176 = vector.broadcast %38 : vector<1x10xf32> to vector<10x10xf32>
    %177 = arith.addf %175, %176 : vector<10x10xf32>
    %cst_64 = arith.constant dense<0xFF800000> : vector<10xf32>
    %178 = vector.multi_reduction <maximumf>, %177, %cst_64 [1] : vector<10x10xf32> to vector<10xf32>
    %179 = vector.shape_cast %178 : vector<10xf32> to vector<10x1xf32>
    %180 = vector.broadcast %179 : vector<10x1xf32> to vector<10x10xf32>
    %181 = arith.subf %177, %180 : vector<10x10xf32>
    %182 = math.exp %181 : vector<10x10xf32>
    %cst_65 = arith.constant dense<0.000000e+00> : vector<10xf32>
    %183 = vector.multi_reduction <add>, %182, %cst_65 [1] : vector<10x10xf32> to vector<10xf32>
    %184 = vector.shape_cast %183 : vector<10xf32> to vector<10x1xf32>
    %185 = vector.broadcast %184 : vector<10x1xf32> to vector<10x10xf32>
    %186 = arith.divf %182, %185 : vector<10x10xf32>
    %187 = vector.extract_strided_slice %134 {offsets = [0, 32], sizes = [10, 16], strides = [1, 1]} : vector<10x64xf32> to vector<10x16xf32>
    %cst_66 = arith.constant dense<0.000000e+00> : vector<10x16xf32>
    %188 = tpu.matmul %186, %187, %cst_66 {dimension_numbers = #tpu.dot_dimension_numbers<[1], [0], [0], [1], [0, 0, 1, 1], [], []>} : vector<10x10xf32>, vector<10x16xf32>, vector<10x16xf32> -> vector<10x16xf32>
    %189 = vector.extract_strided_slice %132 {offsets = [0, 48], sizes = [10, 16], strides = [1, 1]} : vector<10x64xf32> to vector<10x16xf32>
    %190 = vector.extract_strided_slice %133 {offsets = [0, 48], sizes = [10, 16], strides = [1, 1]} : vector<10x64xf32> to vector<10x16xf32>
    %cst_67 = arith.constant dense<0.000000e+00> : vector<10x10xf32>
    %191 = tpu.matmul %189, %190, %cst_67 {dimension_numbers = #tpu.dot_dimension_numbers<[1], [1], [0], [0], [0, 0, 1, 0], [], []>} : vector<10x16xf32>, vector<10x16xf32>, vector<10x10xf32> -> vector<10x10xf32>
    %cst_68 = arith.constant 2.500000e-01 : f32
    %192 = vector.broadcast %cst_68 : f32 to vector<10x10xf32>
    %193 = arith.mulf %191, %192 : vector<10x10xf32>
    %194 = vector.broadcast %38 : vector<1x10xf32> to vector<10x10xf32>
    %195 = arith.addf %193, %194 : vector<10x10xf32>
    %cst_69 = arith.constant dense<0xFF800000> : vector<10xf32>
    %196 = vector.multi_reduction <maximumf>, %195, %cst_69 [1] : vector<10x10xf32> to vector<10xf32>
    %197 = vector.shape_cast %196 : vector<10xf32> to vector<10x1xf32>
    %198 = vector.broadcast %197 : vector<10x1xf32> to vector<10x10xf32>
    %199 = arith.subf %195, %198 : vector<10x10xf32>
    %200 = math.exp %199 : vector<10x10xf32>
    %cst_70 = arith.constant dense<0.000000e+00> : vector<10xf32>
    %201 = vector.multi_reduction <add>, %200, %cst_70 [1] : vector<10x10xf32> to vector<10xf32>
    %202 = vector.shape_cast %201 : vector<10xf32> to vector<10x1xf32>
    %203 = vector.broadcast %202 : vector<10x1xf32> to vector<10x10xf32>
    %204 = arith.divf %200, %203 : vector<10x10xf32>
    %205 = vector.extract_strided_slice %134 {offsets = [0, 48], sizes = [10, 16], strides = [1, 1]} : vector<10x64xf32> to vector<10x16xf32>
    %cst_71 = arith.constant dense<0.000000e+00> : vector<10x16xf32>
    %206 = tpu.matmul %204, %205, %cst_71 {dimension_numbers = #tpu.dot_dimension_numbers<[1], [0], [0], [1], [0, 0, 1, 1], [], []>} : vector<10x10xf32>, vector<10x16xf32>, vector<10x16xf32> -> vector<10x16xf32>
    %207 = tpu.concatenate %152, %170, %188, %206 in 1 : vector<10x16xf32>, vector<10x16xf32>, vector<10x16xf32>, vector<10x16xf32> -> vector<10x64xf32>
    %208 = tpu.concatenate %131, %207 in 0 : vector<10x64xf32>, vector<10x64xf32> -> vector<20x64xf32>
    %c0_72 = arith.constant 0 : index
    %c0_73 = arith.constant 0 : index
    %c0_74 = arith.constant 0 : index
    %209 = vector.load %arg8[%c0_72, %c0_73, %c0_74] : memref<2x64x64xf32, #tpu.memory_space<vmem>>, vector<1x64x64xf32>
    %210 = vector.shape_cast %209 : vector<1x64x64xf32> to vector<64x64xf32>
    %cst_75 = arith.constant dense<0.000000e+00> : vector<20x64xf32>
    %211 = tpu.matmul %208, %210, %cst_75 {dimension_numbers = #tpu.dot_dimension_numbers<[1], [0], [0], [1], [0, 0, 1, 1], [], []>} : vector<20x64xf32>, vector<64x64xf32>, vector<20x64xf32> -> vector<20x64xf32>
    %212 = vector.extract_strided_slice %46 {offsets = [1, 0], sizes = [1, 64], strides = [1, 1]} : vector<8x192xf32> to vector<1x64xf32>
    %213 = vector.broadcast %212 : vector<1x64xf32> to vector<20x64xf32>
    %214 = arith.addf %211, %213 : vector<20x64xf32>
    %215 = arith.addf %12, %214 : vector<20x64xf32>
    %216 = vector.extract_strided_slice %46 {offsets = [4, 0], sizes = [1, 64], strides = [1, 1]} : vector<8x192xf32> to vector<1x64xf32>
    %217 = vector.extract_strided_slice %46 {offsets = [5, 0], sizes = [1, 64], strides = [1, 1]} : vector<8x192xf32> to vector<1x64xf32>
    %cst_76 = arith.constant dense<0.000000e+00> : vector<20xf32>
    %218 = vector.multi_reduction <add>, %215, %cst_76 [1] : vector<20x64xf32> to vector<20xf32>
    %219 = vector.shape_cast %218 : vector<20xf32> to vector<20x1xf32>
    %cst_77 = arith.constant 6.400000e+01 : f32
    %220 = vector.broadcast %cst_77 : f32 to vector<20x1xf32>
    %221 = arith.divf %219, %220 : vector<20x1xf32>
    %222 = vector.broadcast %221 : vector<20x1xf32> to vector<20x64xf32>
    %223 = arith.subf %215, %222 : vector<20x64xf32>
    %224 = arith.mulf %223, %223 : vector<20x64xf32>
    %cst_78 = arith.constant dense<0.000000e+00> : vector<20xf32>
    %225 = vector.multi_reduction <add>, %224, %cst_78 [1] : vector<20x64xf32> to vector<20xf32>
    %226 = vector.shape_cast %225 : vector<20xf32> to vector<20x1xf32>
    %cst_79 = arith.constant 6.400000e+01 : f32
    %227 = vector.broadcast %cst_79 : f32 to vector<20x1xf32>
    %228 = arith.divf %226, %227 : vector<20x1xf32>
    %229 = vector.broadcast %221 : vector<20x1xf32> to vector<20x64xf32>
    %230 = arith.subf %215, %229 : vector<20x64xf32>
    %cst_80 = arith.constant 9.99999974E-6 : f32
    %231 = vector.broadcast %cst_80 : f32 to vector<20x1xf32>
    %232 = arith.addf %228, %231 : vector<20x1xf32>
    %233 = math.rsqrt %232 : vector<20x1xf32>
    %234 = vector.broadcast %233 : vector<20x1xf32> to vector<20x64xf32>
    %235 = arith.mulf %230, %234 : vector<20x64xf32>
    %236 = vector.broadcast %216 : vector<1x64xf32> to vector<20x64xf32>
    %237 = arith.mulf %235, %236 : vector<20x64xf32>
    %238 = vector.broadcast %217 : vector<1x64xf32> to vector<20x64xf32>
    %239 = arith.addf %237, %238 : vector<20x64xf32>
    %c0_81 = arith.constant 0 : index
    %c0_82 = arith.constant 0 : index
    %c0_83 = arith.constant 0 : index
    %240 = vector.load %arg9[%c0_81, %c0_82, %c0_83] : memref<2x64x128xf32, #tpu.memory_space<vmem>>, vector<1x64x128xf32>
    %241 = vector.shape_cast %240 : vector<1x64x128xf32> to vector<64x128xf32>
    %cst_84 = arith.constant dense<0.000000e+00> : vector<20x128xf32>
    %242 = tpu.matmul %239, %241, %cst_84 {dimension_numbers = #tpu.dot_dimension_numbers<[1], [0], [0], [1], [0, 0, 1, 1], [], []>} : vector<20x64xf32>, vector<64x128xf32>, vector<20x128xf32> -> vector<20x128xf32>
    %243 = vector.extract_strided_slice %46 {offsets = [2, 0], sizes = [1, 128], strides = [1, 1]} : vector<8x192xf32> to vector<1x128xf32>
    %244 = vector.broadcast %243 : vector<1x128xf32> to vector<20x128xf32>
    %245 = arith.addf %242, %244 : vector<20x128xf32>
    %cst_85 = arith.constant 0.000000e+00 : f32
    %246 = vector.broadcast %cst_85 : f32 to vector<20x128xf32>
    %247 = arith.maximumf %245, %246 : vector<20x128xf32>
    %c0_86 = arith.constant 0 : index
    %c0_87 = arith.constant 0 : index
    %c0_88 = arith.constant 0 : index
    %248 = vector.load %arg10[%c0_86, %c0_87, %c0_88] : memref<2x128x64xf32, #tpu.memory_space<vmem>>, vector<1x128x64xf32>
    %249 = vector.shape_cast %248 : vector<1x128x64xf32> to vector<128x64xf32>
    %cst_89 = arith.constant dense<0.000000e+00> : vector<20x64xf32>
    %250 = tpu.matmul %247, %249, %cst_89 {dimension_numbers = #tpu.dot_dimension_numbers<[1], [0], [0], [1], [0, 0, 1, 1], [], []>} : vector<20x128xf32>, vector<128x64xf32>, vector<20x64xf32> -> vector<20x64xf32>
    %251 = vector.extract_strided_slice %46 {offsets = [3, 0], sizes = [1, 64], strides = [1, 1]} : vector<8x192xf32> to vector<1x64xf32>
    %252 = vector.broadcast %251 : vector<1x64xf32> to vector<20x64xf32>
    %253 = arith.addf %250, %252 : vector<20x64xf32>
    %254 = arith.addf %239, %253 : vector<20x64xf32>
    %255 = vector.extract_strided_slice %46 {offsets = [6, 0], sizes = [1, 64], strides = [1, 1]} : vector<8x192xf32> to vector<1x64xf32>
    %256 = vector.extract_strided_slice %46 {offsets = [7, 0], sizes = [1, 64], strides = [1, 1]} : vector<8x192xf32> to vector<1x64xf32>
    %cst_90 = arith.constant dense<0.000000e+00> : vector<20xf32>
    %257 = vector.multi_reduction <add>, %254, %cst_90 [1] : vector<20x64xf32> to vector<20xf32>
    %258 = vector.shape_cast %257 : vector<20xf32> to vector<20x1xf32>
    %cst_91 = arith.constant 6.400000e+01 : f32
    %259 = vector.broadcast %cst_91 : f32 to vector<20x1xf32>
    %260 = arith.divf %258, %259 : vector<20x1xf32>
    %261 = vector.broadcast %260 : vector<20x1xf32> to vector<20x64xf32>
    %262 = arith.subf %254, %261 : vector<20x64xf32>
    %263 = arith.mulf %262, %262 : vector<20x64xf32>
    %cst_92 = arith.constant dense<0.000000e+00> : vector<20xf32>
    %264 = vector.multi_reduction <add>, %263, %cst_92 [1] : vector<20x64xf32> to vector<20xf32>
    %265 = vector.shape_cast %264 : vector<20xf32> to vector<20x1xf32>
    %cst_93 = arith.constant 6.400000e+01 : f32
    %266 = vector.broadcast %cst_93 : f32 to vector<20x1xf32>
    %267 = arith.divf %265, %266 : vector<20x1xf32>
    %268 = vector.broadcast %260 : vector<20x1xf32> to vector<20x64xf32>
    %269 = arith.subf %254, %268 : vector<20x64xf32>
    %cst_94 = arith.constant 9.99999974E-6 : f32
    %270 = vector.broadcast %cst_94 : f32 to vector<20x1xf32>
    %271 = arith.addf %267, %270 : vector<20x1xf32>
    %272 = math.rsqrt %271 : vector<20x1xf32>
    %273 = vector.broadcast %272 : vector<20x1xf32> to vector<20x64xf32>
    %274 = arith.mulf %269, %273 : vector<20x64xf32>
    %275 = vector.broadcast %255 : vector<1x64xf32> to vector<20x64xf32>
    %276 = arith.mulf %274, %275 : vector<20x64xf32>
    %277 = vector.broadcast %256 : vector<1x64xf32> to vector<20x64xf32>
    %278 = arith.addf %276, %277 : vector<20x64xf32>
    %c1 = arith.constant 1 : index
    %c0_95 = arith.constant 0 : index
    %c0_96 = arith.constant 0 : index
    %279 = vector.load %arg11[%c1, %c0_95, %c0_96] : memref<2x8x192xf32, #tpu.memory_space<vmem>>, vector<1x8x192xf32>
    %280 = vector.shape_cast %279 : vector<1x8x192xf32> to vector<8x192xf32>
    %c1_97 = arith.constant 1 : index
    %c0_98 = arith.constant 0 : index
    %c0_99 = arith.constant 0 : index
    %281 = vector.load %arg7[%c1_97, %c0_98, %c0_99] : memref<2x64x192xf32, #tpu.memory_space<vmem>>, vector<1x64x192xf32>
    %282 = vector.shape_cast %281 : vector<1x64x192xf32> to vector<64x192xf32>
    %cst_100 = arith.constant dense<0.000000e+00> : vector<20x192xf32>
    %283 = tpu.matmul %278, %282, %cst_100 {dimension_numbers = #tpu.dot_dimension_numbers<[1], [0], [0], [1], [0, 0, 1, 1], [], []>} : vector<20x64xf32>, vector<64x192xf32>, vector<20x192xf32> -> vector<20x192xf32>
    %284 = vector.extract_strided_slice %280 {offsets = [0, 0], sizes = [1, 192], strides = [1, 1]} : vector<8x192xf32> to vector<1x192xf32>
    %285 = vector.broadcast %284 : vector<1x192xf32> to vector<20x192xf32>
    %286 = arith.addf %283, %285 : vector<20x192xf32>
    %287 = vector.extract_strided_slice %286 {offsets = [0, 0], sizes = [20, 64], strides = [1, 1]} : vector<20x192xf32> to vector<20x64xf32>
    %288 = vector.extract_strided_slice %286 {offsets = [0, 64], sizes = [20, 64], strides = [1, 1]} : vector<20x192xf32> to vector<20x64xf32>
    %289 = vector.extract_strided_slice %286 {offsets = [0, 128], sizes = [20, 64], strides = [1, 1]} : vector<20x192xf32> to vector<20x64xf32>
    %290 = vector.extract_strided_slice %287 {offsets = [0, 0], sizes = [10, 64], strides = [1, 1]} : vector<20x64xf32> to vector<10x64xf32>
    %291 = vector.extract_strided_slice %288 {offsets = [0, 0], sizes = [10, 64], strides = [1, 1]} : vector<20x64xf32> to vector<10x64xf32>
    %292 = vector.extract_strided_slice %289 {offsets = [0, 0], sizes = [10, 64], strides = [1, 1]} : vector<20x64xf32> to vector<10x64xf32>
    %293 = vector.extract_strided_slice %290 {offsets = [0, 0], sizes = [10, 16], strides = [1, 1]} : vector<10x64xf32> to vector<10x16xf32>
    %294 = vector.extract_strided_slice %291 {offsets = [0, 0], sizes = [10, 16], strides = [1, 1]} : vector<10x64xf32> to vector<10x16xf32>
    %cst_101 = arith.constant dense<0.000000e+00> : vector<10x10xf32>
    %295 = tpu.matmul %293, %294, %cst_101 {dimension_numbers = #tpu.dot_dimension_numbers<[1], [1], [0], [0], [0, 0, 1, 0], [], []>} : vector<10x16xf32>, vector<10x16xf32>, vector<10x10xf32> -> vector<10x10xf32>
    %cst_102 = arith.constant 2.500000e-01 : f32
    %296 = vector.broadcast %cst_102 : f32 to vector<10x10xf32>
    %297 = arith.mulf %295, %296 : vector<10x10xf32>
    %298 = vector.broadcast %32 : vector<1x10xf32> to vector<10x10xf32>
    %299 = arith.addf %297, %298 : vector<10x10xf32>
    %cst_103 = arith.constant dense<0xFF800000> : vector<10xf32>
    %300 = vector.multi_reduction <maximumf>, %299, %cst_103 [1] : vector<10x10xf32> to vector<10xf32>
    %301 = vector.shape_cast %300 : vector<10xf32> to vector<10x1xf32>
    %302 = vector.broadcast %301 : vector<10x1xf32> to vector<10x10xf32>
    %303 = arith.subf %299, %302 : vector<10x10xf32>
    %304 = math.exp %303 : vector<10x10xf32>
    %cst_104 = arith.constant dense<0.000000e+00> : vector<10xf32>
    %305 = vector.multi_reduction <add>, %304, %cst_104 [1] : vector<10x10xf32> to vector<10xf32>
    %306 = vector.shape_cast %305 : vector<10xf32> to vector<10x1xf32>
    %307 = vector.broadcast %306 : vector<10x1xf32> to vector<10x10xf32>
    %308 = arith.divf %304, %307 : vector<10x10xf32>
    %309 = vector.extract_strided_slice %292 {offsets = [0, 0], sizes = [10, 16], strides = [1, 1]} : vector<10x64xf32> to vector<10x16xf32>
    %cst_105 = arith.constant dense<0.000000e+00> : vector<10x16xf32>
    %310 = tpu.matmul %308, %309, %cst_105 {dimension_numbers = #tpu.dot_dimension_numbers<[1], [0], [0], [1], [0, 0, 1, 1], [], []>} : vector<10x10xf32>, vector<10x16xf32>, vector<10x16xf32> -> vector<10x16xf32>
    %311 = vector.extract_strided_slice %290 {offsets = [0, 16], sizes = [10, 16], strides = [1, 1]} : vector<10x64xf32> to vector<10x16xf32>
    %312 = vector.extract_strided_slice %291 {offsets = [0, 16], sizes = [10, 16], strides = [1, 1]} : vector<10x64xf32> to vector<10x16xf32>
    %cst_106 = arith.constant dense<0.000000e+00> : vector<10x10xf32>
    %313 = tpu.matmul %311, %312, %cst_106 {dimension_numbers = #tpu.dot_dimension_numbers<[1], [1], [0], [0], [0, 0, 1, 0], [], []>} : vector<10x16xf32>, vector<10x16xf32>, vector<10x10xf32> -> vector<10x10xf32>
    %cst_107 = arith.constant 2.500000e-01 : f32
    %314 = vector.broadcast %cst_107 : f32 to vector<10x10xf32>
    %315 = arith.mulf %313, %314 : vector<10x10xf32>
    %316 = vector.broadcast %32 : vector<1x10xf32> to vector<10x10xf32>
    %317 = arith.addf %315, %316 : vector<10x10xf32>
    %cst_108 = arith.constant dense<0xFF800000> : vector<10xf32>
    %318 = vector.multi_reduction <maximumf>, %317, %cst_108 [1] : vector<10x10xf32> to vector<10xf32>
    %319 = vector.shape_cast %318 : vector<10xf32> to vector<10x1xf32>
    %320 = vector.broadcast %319 : vector<10x1xf32> to vector<10x10xf32>
    %321 = arith.subf %317, %320 : vector<10x10xf32>
    %322 = math.exp %321 : vector<10x10xf32>
    %cst_109 = arith.constant dense<0.000000e+00> : vector<10xf32>
    %323 = vector.multi_reduction <add>, %322, %cst_109 [1] : vector<10x10xf32> to vector<10xf32>
    %324 = vector.shape_cast %323 : vector<10xf32> to vector<10x1xf32>
    %325 = vector.broadcast %324 : vector<10x1xf32> to vector<10x10xf32>
    %326 = arith.divf %322, %325 : vector<10x10xf32>
    %327 = vector.extract_strided_slice %292 {offsets = [0, 16], sizes = [10, 16], strides = [1, 1]} : vector<10x64xf32> to vector<10x16xf32>
    %cst_110 = arith.constant dense<0.000000e+00> : vector<10x16xf32>
    %328 = tpu.matmul %326, %327, %cst_110 {dimension_numbers = #tpu.dot_dimension_numbers<[1], [0], [0], [1], [0, 0, 1, 1], [], []>} : vector<10x10xf32>, vector<10x16xf32>, vector<10x16xf32> -> vector<10x16xf32>
    %329 = vector.extract_strided_slice %290 {offsets = [0, 32], sizes = [10, 16], strides = [1, 1]} : vector<10x64xf32> to vector<10x16xf32>
    %330 = vector.extract_strided_slice %291 {offsets = [0, 32], sizes = [10, 16], strides = [1, 1]} : vector<10x64xf32> to vector<10x16xf32>
    %cst_111 = arith.constant dense<0.000000e+00> : vector<10x10xf32>
    %331 = tpu.matmul %329, %330, %cst_111 {dimension_numbers = #tpu.dot_dimension_numbers<[1], [1], [0], [0], [0, 0, 1, 0], [], []>} : vector<10x16xf32>, vector<10x16xf32>, vector<10x10xf32> -> vector<10x10xf32>
    %cst_112 = arith.constant 2.500000e-01 : f32
    %332 = vector.broadcast %cst_112 : f32 to vector<10x10xf32>
    %333 = arith.mulf %331, %332 : vector<10x10xf32>
    %334 = vector.broadcast %32 : vector<1x10xf32> to vector<10x10xf32>
    %335 = arith.addf %333, %334 : vector<10x10xf32>
    %cst_113 = arith.constant dense<0xFF800000> : vector<10xf32>
    %336 = vector.multi_reduction <maximumf>, %335, %cst_113 [1] : vector<10x10xf32> to vector<10xf32>
    %337 = vector.shape_cast %336 : vector<10xf32> to vector<10x1xf32>
    %338 = vector.broadcast %337 : vector<10x1xf32> to vector<10x10xf32>
    %339 = arith.subf %335, %338 : vector<10x10xf32>
    %340 = math.exp %339 : vector<10x10xf32>
    %cst_114 = arith.constant dense<0.000000e+00> : vector<10xf32>
    %341 = vector.multi_reduction <add>, %340, %cst_114 [1] : vector<10x10xf32> to vector<10xf32>
    %342 = vector.shape_cast %341 : vector<10xf32> to vector<10x1xf32>
    %343 = vector.broadcast %342 : vector<10x1xf32> to vector<10x10xf32>
    %344 = arith.divf %340, %343 : vector<10x10xf32>
    %345 = vector.extract_strided_slice %292 {offsets = [0, 32], sizes = [10, 16], strides = [1, 1]} : vector<10x64xf32> to vector<10x16xf32>
    %cst_115 = arith.constant dense<0.000000e+00> : vector<10x16xf32>
    %346 = tpu.matmul %344, %345, %cst_115 {dimension_numbers = #tpu.dot_dimension_numbers<[1], [0], [0], [1], [0, 0, 1, 1], [], []>} : vector<10x10xf32>, vector<10x16xf32>, vector<10x16xf32> -> vector<10x16xf32>
    %347 = vector.extract_strided_slice %290 {offsets = [0, 48], sizes = [10, 16], strides = [1, 1]} : vector<10x64xf32> to vector<10x16xf32>
    %348 = vector.extract_strided_slice %291 {offsets = [0, 48], sizes = [10, 16], strides = [1, 1]} : vector<10x64xf32> to vector<10x16xf32>
    %cst_116 = arith.constant dense<0.000000e+00> : vector<10x10xf32>
    %349 = tpu.matmul %347, %348, %cst_116 {dimension_numbers = #tpu.dot_dimension_numbers<[1], [1], [0], [0], [0, 0, 1, 0], [], []>} : vector<10x16xf32>, vector<10x16xf32>, vector<10x10xf32> -> vector<10x10xf32>
    %cst_117 = arith.constant 2.500000e-01 : f32
    %350 = vector.broadcast %cst_117 : f32 to vector<10x10xf32>
    %351 = arith.mulf %349, %350 : vector<10x10xf32>
    %352 = vector.broadcast %32 : vector<1x10xf32> to vector<10x10xf32>
    %353 = arith.addf %351, %352 : vector<10x10xf32>
    %cst_118 = arith.constant dense<0xFF800000> : vector<10xf32>
    %354 = vector.multi_reduction <maximumf>, %353, %cst_118 [1] : vector<10x10xf32> to vector<10xf32>
    %355 = vector.shape_cast %354 : vector<10xf32> to vector<10x1xf32>
    %356 = vector.broadcast %355 : vector<10x1xf32> to vector<10x10xf32>
    %357 = arith.subf %353, %356 : vector<10x10xf32>
    %358 = math.exp %357 : vector<10x10xf32>
    %cst_119 = arith.constant dense<0.000000e+00> : vector<10xf32>
    %359 = vector.multi_reduction <add>, %358, %cst_119 [1] : vector<10x10xf32> to vector<10xf32>
    %360 = vector.shape_cast %359 : vector<10xf32> to vector<10x1xf32>
    %361 = vector.broadcast %360 : vector<10x1xf32> to vector<10x10xf32>
    %362 = arith.divf %358, %361 : vector<10x10xf32>
    %363 = vector.extract_strided_slice %292 {offsets = [0, 48], sizes = [10, 16], strides = [1, 1]} : vector<10x64xf32> to vector<10x16xf32>
    %cst_120 = arith.constant dense<0.000000e+00> : vector<10x16xf32>
    %364 = tpu.matmul %362, %363, %cst_120 {dimension_numbers = #tpu.dot_dimension_numbers<[1], [0], [0], [1], [0, 0, 1, 1], [], []>} : vector<10x10xf32>, vector<10x16xf32>, vector<10x16xf32> -> vector<10x16xf32>
    %365 = tpu.concatenate %310, %328, %346, %364 in 1 : vector<10x16xf32>, vector<10x16xf32>, vector<10x16xf32>, vector<10x16xf32> -> vector<10x64xf32>
    %366 = vector.extract_strided_slice %287 {offsets = [10, 0], sizes = [10, 64], strides = [1, 1]} : vector<20x64xf32> to vector<10x64xf32>
    %367 = vector.extract_strided_slice %288 {offsets = [10, 0], sizes = [10, 64], strides = [1, 1]} : vector<20x64xf32> to vector<10x64xf32>
    %368 = vector.extract_strided_slice %289 {offsets = [10, 0], sizes = [10, 64], strides = [1, 1]} : vector<20x64xf32> to vector<10x64xf32>
    %369 = vector.extract_strided_slice %366 {offsets = [0, 0], sizes = [10, 16], strides = [1, 1]} : vector<10x64xf32> to vector<10x16xf32>
    %370 = vector.extract_strided_slice %367 {offsets = [0, 0], sizes = [10, 16], strides = [1, 1]} : vector<10x64xf32> to vector<10x16xf32>
    %cst_121 = arith.constant dense<0.000000e+00> : vector<10x10xf32>
    %371 = tpu.matmul %369, %370, %cst_121 {dimension_numbers = #tpu.dot_dimension_numbers<[1], [1], [0], [0], [0, 0, 1, 0], [], []>} : vector<10x16xf32>, vector<10x16xf32>, vector<10x10xf32> -> vector<10x10xf32>
    %cst_122 = arith.constant 2.500000e-01 : f32
    %372 = vector.broadcast %cst_122 : f32 to vector<10x10xf32>
    %373 = arith.mulf %371, %372 : vector<10x10xf32>
    %374 = vector.broadcast %38 : vector<1x10xf32> to vector<10x10xf32>
    %375 = arith.addf %373, %374 : vector<10x10xf32>
    %cst_123 = arith.constant dense<0xFF800000> : vector<10xf32>
    %376 = vector.multi_reduction <maximumf>, %375, %cst_123 [1] : vector<10x10xf32> to vector<10xf32>
    %377 = vector.shape_cast %376 : vector<10xf32> to vector<10x1xf32>
    %378 = vector.broadcast %377 : vector<10x1xf32> to vector<10x10xf32>
    %379 = arith.subf %375, %378 : vector<10x10xf32>
    %380 = math.exp %379 : vector<10x10xf32>
    %cst_124 = arith.constant dense<0.000000e+00> : vector<10xf32>
    %381 = vector.multi_reduction <add>, %380, %cst_124 [1] : vector<10x10xf32> to vector<10xf32>
    %382 = vector.shape_cast %381 : vector<10xf32> to vector<10x1xf32>
    %383 = vector.broadcast %382 : vector<10x1xf32> to vector<10x10xf32>
    %384 = arith.divf %380, %383 : vector<10x10xf32>
    %385 = vector.extract_strided_slice %368 {offsets = [0, 0], sizes = [10, 16], strides = [1, 1]} : vector<10x64xf32> to vector<10x16xf32>
    %cst_125 = arith.constant dense<0.000000e+00> : vector<10x16xf32>
    %386 = tpu.matmul %384, %385, %cst_125 {dimension_numbers = #tpu.dot_dimension_numbers<[1], [0], [0], [1], [0, 0, 1, 1], [], []>} : vector<10x10xf32>, vector<10x16xf32>, vector<10x16xf32> -> vector<10x16xf32>
    %387 = vector.extract_strided_slice %366 {offsets = [0, 16], sizes = [10, 16], strides = [1, 1]} : vector<10x64xf32> to vector<10x16xf32>
    %388 = vector.extract_strided_slice %367 {offsets = [0, 16], sizes = [10, 16], strides = [1, 1]} : vector<10x64xf32> to vector<10x16xf32>
    %cst_126 = arith.constant dense<0.000000e+00> : vector<10x10xf32>
    %389 = tpu.matmul %387, %388, %cst_126 {dimension_numbers = #tpu.dot_dimension_numbers<[1], [1], [0], [0], [0, 0, 1, 0], [], []>} : vector<10x16xf32>, vector<10x16xf32>, vector<10x10xf32> -> vector<10x10xf32>
    %cst_127 = arith.constant 2.500000e-01 : f32
    %390 = vector.broadcast %cst_127 : f32 to vector<10x10xf32>
    %391 = arith.mulf %389, %390 : vector<10x10xf32>
    %392 = vector.broadcast %38 : vector<1x10xf32> to vector<10x10xf32>
    %393 = arith.addf %391, %392 : vector<10x10xf32>
    %cst_128 = arith.constant dense<0xFF800000> : vector<10xf32>
    %394 = vector.multi_reduction <maximumf>, %393, %cst_128 [1] : vector<10x10xf32> to vector<10xf32>
    %395 = vector.shape_cast %394 : vector<10xf32> to vector<10x1xf32>
    %396 = vector.broadcast %395 : vector<10x1xf32> to vector<10x10xf32>
    %397 = arith.subf %393, %396 : vector<10x10xf32>
    %398 = math.exp %397 : vector<10x10xf32>
    %cst_129 = arith.constant dense<0.000000e+00> : vector<10xf32>
    %399 = vector.multi_reduction <add>, %398, %cst_129 [1] : vector<10x10xf32> to vector<10xf32>
    %400 = vector.shape_cast %399 : vector<10xf32> to vector<10x1xf32>
    %401 = vector.broadcast %400 : vector<10x1xf32> to vector<10x10xf32>
    %402 = arith.divf %398, %401 : vector<10x10xf32>
    %403 = vector.extract_strided_slice %368 {offsets = [0, 16], sizes = [10, 16], strides = [1, 1]} : vector<10x64xf32> to vector<10x16xf32>
    %cst_130 = arith.constant dense<0.000000e+00> : vector<10x16xf32>
    %404 = tpu.matmul %402, %403, %cst_130 {dimension_numbers = #tpu.dot_dimension_numbers<[1], [0], [0], [1], [0, 0, 1, 1], [], []>} : vector<10x10xf32>, vector<10x16xf32>, vector<10x16xf32> -> vector<10x16xf32>
    %405 = vector.extract_strided_slice %366 {offsets = [0, 32], sizes = [10, 16], strides = [1, 1]} : vector<10x64xf32> to vector<10x16xf32>
    %406 = vector.extract_strided_slice %367 {offsets = [0, 32], sizes = [10, 16], strides = [1, 1]} : vector<10x64xf32> to vector<10x16xf32>
    %cst_131 = arith.constant dense<0.000000e+00> : vector<10x10xf32>
    %407 = tpu.matmul %405, %406, %cst_131 {dimension_numbers = #tpu.dot_dimension_numbers<[1], [1], [0], [0], [0, 0, 1, 0], [], []>} : vector<10x16xf32>, vector<10x16xf32>, vector<10x10xf32> -> vector<10x10xf32>
    %cst_132 = arith.constant 2.500000e-01 : f32
    %408 = vector.broadcast %cst_132 : f32 to vector<10x10xf32>
    %409 = arith.mulf %407, %408 : vector<10x10xf32>
    %410 = vector.broadcast %38 : vector<1x10xf32> to vector<10x10xf32>
    %411 = arith.addf %409, %410 : vector<10x10xf32>
    %cst_133 = arith.constant dense<0xFF800000> : vector<10xf32>
    %412 = vector.multi_reduction <maximumf>, %411, %cst_133 [1] : vector<10x10xf32> to vector<10xf32>
    %413 = vector.shape_cast %412 : vector<10xf32> to vector<10x1xf32>
    %414 = vector.broadcast %413 : vector<10x1xf32> to vector<10x10xf32>
    %415 = arith.subf %411, %414 : vector<10x10xf32>
    %416 = math.exp %415 : vector<10x10xf32>
    %cst_134 = arith.constant dense<0.000000e+00> : vector<10xf32>
    %417 = vector.multi_reduction <add>, %416, %cst_134 [1] : vector<10x10xf32> to vector<10xf32>
    %418 = vector.shape_cast %417 : vector<10xf32> to vector<10x1xf32>
    %419 = vector.broadcast %418 : vector<10x1xf32> to vector<10x10xf32>
    %420 = arith.divf %416, %419 : vector<10x10xf32>
    %421 = vector.extract_strided_slice %368 {offsets = [0, 32], sizes = [10, 16], strides = [1, 1]} : vector<10x64xf32> to vector<10x16xf32>
    %cst_135 = arith.constant dense<0.000000e+00> : vector<10x16xf32>
    %422 = tpu.matmul %420, %421, %cst_135 {dimension_numbers = #tpu.dot_dimension_numbers<[1], [0], [0], [1], [0, 0, 1, 1], [], []>} : vector<10x10xf32>, vector<10x16xf32>, vector<10x16xf32> -> vector<10x16xf32>
    %423 = vector.extract_strided_slice %366 {offsets = [0, 48], sizes = [10, 16], strides = [1, 1]} : vector<10x64xf32> to vector<10x16xf32>
    %424 = vector.extract_strided_slice %367 {offsets = [0, 48], sizes = [10, 16], strides = [1, 1]} : vector<10x64xf32> to vector<10x16xf32>
    %cst_136 = arith.constant dense<0.000000e+00> : vector<10x10xf32>
    %425 = tpu.matmul %423, %424, %cst_136 {dimension_numbers = #tpu.dot_dimension_numbers<[1], [1], [0], [0], [0, 0, 1, 0], [], []>} : vector<10x16xf32>, vector<10x16xf32>, vector<10x10xf32> -> vector<10x10xf32>
    %cst_137 = arith.constant 2.500000e-01 : f32
    %426 = vector.broadcast %cst_137 : f32 to vector<10x10xf32>
    %427 = arith.mulf %425, %426 : vector<10x10xf32>
    %428 = vector.broadcast %38 : vector<1x10xf32> to vector<10x10xf32>
    %429 = arith.addf %427, %428 : vector<10x10xf32>
    %cst_138 = arith.constant dense<0xFF800000> : vector<10xf32>
    %430 = vector.multi_reduction <maximumf>, %429, %cst_138 [1] : vector<10x10xf32> to vector<10xf32>
    %431 = vector.shape_cast %430 : vector<10xf32> to vector<10x1xf32>
    %432 = vector.broadcast %431 : vector<10x1xf32> to vector<10x10xf32>
    %433 = arith.subf %429, %432 : vector<10x10xf32>
    %434 = math.exp %433 : vector<10x10xf32>
    %cst_139 = arith.constant dense<0.000000e+00> : vector<10xf32>
    %435 = vector.multi_reduction <add>, %434, %cst_139 [1] : vector<10x10xf32> to vector<10xf32>
    %436 = vector.shape_cast %435 : vector<10xf32> to vector<10x1xf32>
    %437 = vector.broadcast %436 : vector<10x1xf32> to vector<10x10xf32>
    %438 = arith.divf %434, %437 : vector<10x10xf32>
    %439 = vector.extract_strided_slice %368 {offsets = [0, 48], sizes = [10, 16], strides = [1, 1]} : vector<10x64xf32> to vector<10x16xf32>
    %cst_140 = arith.constant dense<0.000000e+00> : vector<10x16xf32>
    %440 = tpu.matmul %438, %439, %cst_140 {dimension_numbers = #tpu.dot_dimension_numbers<[1], [0], [0], [1], [0, 0, 1, 1], [], []>} : vector<10x10xf32>, vector<10x16xf32>, vector<10x16xf32> -> vector<10x16xf32>
    %441 = tpu.concatenate %386, %404, %422, %440 in 1 : vector<10x16xf32>, vector<10x16xf32>, vector<10x16xf32>, vector<10x16xf32> -> vector<10x64xf32>
    %442 = tpu.concatenate %365, %441 in 0 : vector<10x64xf32>, vector<10x64xf32> -> vector<20x64xf32>
    %c1_141 = arith.constant 1 : index
    %c0_142 = arith.constant 0 : index
    %c0_143 = arith.constant 0 : index
    %443 = vector.load %arg8[%c1_141, %c0_142, %c0_143] : memref<2x64x64xf32, #tpu.memory_space<vmem>>, vector<1x64x64xf32>
    %444 = vector.shape_cast %443 : vector<1x64x64xf32> to vector<64x64xf32>
    %cst_144 = arith.constant dense<0.000000e+00> : vector<20x64xf32>
    %445 = tpu.matmul %442, %444, %cst_144 {dimension_numbers = #tpu.dot_dimension_numbers<[1], [0], [0], [1], [0, 0, 1, 1], [], []>} : vector<20x64xf32>, vector<64x64xf32>, vector<20x64xf32> -> vector<20x64xf32>
    %446 = vector.extract_strided_slice %280 {offsets = [1, 0], sizes = [1, 64], strides = [1, 1]} : vector<8x192xf32> to vector<1x64xf32>
    %447 = vector.broadcast %446 : vector<1x64xf32> to vector<20x64xf32>
    %448 = arith.addf %445, %447 : vector<20x64xf32>
    %449 = arith.addf %278, %448 : vector<20x64xf32>
    %450 = vector.extract_strided_slice %280 {offsets = [4, 0], sizes = [1, 64], strides = [1, 1]} : vector<8x192xf32> to vector<1x64xf32>
    %451 = vector.extract_strided_slice %280 {offsets = [5, 0], sizes = [1, 64], strides = [1, 1]} : vector<8x192xf32> to vector<1x64xf32>
    %cst_145 = arith.constant dense<0.000000e+00> : vector<20xf32>
    %452 = vector.multi_reduction <add>, %449, %cst_145 [1] : vector<20x64xf32> to vector<20xf32>
    %453 = vector.shape_cast %452 : vector<20xf32> to vector<20x1xf32>
    %cst_146 = arith.constant 6.400000e+01 : f32
    %454 = vector.broadcast %cst_146 : f32 to vector<20x1xf32>
    %455 = arith.divf %453, %454 : vector<20x1xf32>
    %456 = vector.broadcast %455 : vector<20x1xf32> to vector<20x64xf32>
    %457 = arith.subf %449, %456 : vector<20x64xf32>
    %458 = arith.mulf %457, %457 : vector<20x64xf32>
    %cst_147 = arith.constant dense<0.000000e+00> : vector<20xf32>
    %459 = vector.multi_reduction <add>, %458, %cst_147 [1] : vector<20x64xf32> to vector<20xf32>
    %460 = vector.shape_cast %459 : vector<20xf32> to vector<20x1xf32>
    %cst_148 = arith.constant 6.400000e+01 : f32
    %461 = vector.broadcast %cst_148 : f32 to vector<20x1xf32>
    %462 = arith.divf %460, %461 : vector<20x1xf32>
    %463 = vector.broadcast %455 : vector<20x1xf32> to vector<20x64xf32>
    %464 = arith.subf %449, %463 : vector<20x64xf32>
    %cst_149 = arith.constant 9.99999974E-6 : f32
    %465 = vector.broadcast %cst_149 : f32 to vector<20x1xf32>
    %466 = arith.addf %462, %465 : vector<20x1xf32>
    %467 = math.rsqrt %466 : vector<20x1xf32>
    %468 = vector.broadcast %467 : vector<20x1xf32> to vector<20x64xf32>
    %469 = arith.mulf %464, %468 : vector<20x64xf32>
    %470 = vector.broadcast %450 : vector<1x64xf32> to vector<20x64xf32>
    %471 = arith.mulf %469, %470 : vector<20x64xf32>
    %472 = vector.broadcast %451 : vector<1x64xf32> to vector<20x64xf32>
    %473 = arith.addf %471, %472 : vector<20x64xf32>
    %c1_150 = arith.constant 1 : index
    %c0_151 = arith.constant 0 : index
    %c0_152 = arith.constant 0 : index
    %474 = vector.load %arg9[%c1_150, %c0_151, %c0_152] : memref<2x64x128xf32, #tpu.memory_space<vmem>>, vector<1x64x128xf32>
    %475 = vector.shape_cast %474 : vector<1x64x128xf32> to vector<64x128xf32>
    %cst_153 = arith.constant dense<0.000000e+00> : vector<20x128xf32>
    %476 = tpu.matmul %473, %475, %cst_153 {dimension_numbers = #tpu.dot_dimension_numbers<[1], [0], [0], [1], [0, 0, 1, 1], [], []>} : vector<20x64xf32>, vector<64x128xf32>, vector<20x128xf32> -> vector<20x128xf32>
    %477 = vector.extract_strided_slice %280 {offsets = [2, 0], sizes = [1, 128], strides = [1, 1]} : vector<8x192xf32> to vector<1x128xf32>
    %478 = vector.broadcast %477 : vector<1x128xf32> to vector<20x128xf32>
    %479 = arith.addf %476, %478 : vector<20x128xf32>
    %cst_154 = arith.constant 0.000000e+00 : f32
    %480 = vector.broadcast %cst_154 : f32 to vector<20x128xf32>
    %481 = arith.maximumf %479, %480 : vector<20x128xf32>
    %c1_155 = arith.constant 1 : index
    %c0_156 = arith.constant 0 : index
    %c0_157 = arith.constant 0 : index
    %482 = vector.load %arg10[%c1_155, %c0_156, %c0_157] : memref<2x128x64xf32, #tpu.memory_space<vmem>>, vector<1x128x64xf32>
    %483 = vector.shape_cast %482 : vector<1x128x64xf32> to vector<128x64xf32>
    %cst_158 = arith.constant dense<0.000000e+00> : vector<20x64xf32>
    %484 = tpu.matmul %481, %483, %cst_158 {dimension_numbers = #tpu.dot_dimension_numbers<[1], [0], [0], [1], [0, 0, 1, 1], [], []>} : vector<20x128xf32>, vector<128x64xf32>, vector<20x64xf32> -> vector<20x64xf32>
    %485 = vector.extract_strided_slice %280 {offsets = [3, 0], sizes = [1, 64], strides = [1, 1]} : vector<8x192xf32> to vector<1x64xf32>
    %486 = vector.broadcast %485 : vector<1x64xf32> to vector<20x64xf32>
    %487 = arith.addf %484, %486 : vector<20x64xf32>
    %488 = arith.addf %473, %487 : vector<20x64xf32>
    %489 = vector.extract_strided_slice %280 {offsets = [6, 0], sizes = [1, 64], strides = [1, 1]} : vector<8x192xf32> to vector<1x64xf32>
    %490 = vector.extract_strided_slice %280 {offsets = [7, 0], sizes = [1, 64], strides = [1, 1]} : vector<8x192xf32> to vector<1x64xf32>
    %cst_159 = arith.constant dense<0.000000e+00> : vector<20xf32>
    %491 = vector.multi_reduction <add>, %488, %cst_159 [1] : vector<20x64xf32> to vector<20xf32>
    %492 = vector.shape_cast %491 : vector<20xf32> to vector<20x1xf32>
    %cst_160 = arith.constant 6.400000e+01 : f32
    %493 = vector.broadcast %cst_160 : f32 to vector<20x1xf32>
    %494 = arith.divf %492, %493 : vector<20x1xf32>
    %495 = vector.broadcast %494 : vector<20x1xf32> to vector<20x64xf32>
    %496 = arith.subf %488, %495 : vector<20x64xf32>
    %497 = arith.mulf %496, %496 : vector<20x64xf32>
    %cst_161 = arith.constant dense<0.000000e+00> : vector<20xf32>
    %498 = vector.multi_reduction <add>, %497, %cst_161 [1] : vector<20x64xf32> to vector<20xf32>
    %499 = vector.shape_cast %498 : vector<20xf32> to vector<20x1xf32>
    %cst_162 = arith.constant 6.400000e+01 : f32
    %500 = vector.broadcast %cst_162 : f32 to vector<20x1xf32>
    %501 = arith.divf %499, %500 : vector<20x1xf32>
    %502 = vector.broadcast %494 : vector<20x1xf32> to vector<20x64xf32>
    %503 = arith.subf %488, %502 : vector<20x64xf32>
    %cst_163 = arith.constant 9.99999974E-6 : f32
    %504 = vector.broadcast %cst_163 : f32 to vector<20x1xf32>
    %505 = arith.addf %501, %504 : vector<20x1xf32>
    %506 = math.rsqrt %505 : vector<20x1xf32>
    %507 = vector.broadcast %506 : vector<20x1xf32> to vector<20x64xf32>
    %508 = arith.mulf %503, %507 : vector<20x64xf32>
    %509 = vector.broadcast %489 : vector<1x64xf32> to vector<20x64xf32>
    %510 = arith.mulf %508, %509 : vector<20x64xf32>
    %511 = vector.broadcast %490 : vector<1x64xf32> to vector<20x64xf32>
    %512 = arith.addf %510, %511 : vector<20x64xf32>
    %c0_164 = arith.constant 0 : index
    %c0_165 = arith.constant 0 : index
    %513 = vector.load %arg21[%c0_164, %c0_165] : memref<5x128xf32, #tpu.memory_space<vmem>>, vector<5x128xf32>
    %514 = vector.extract_strided_slice %513 {offsets = [0, 0], sizes = [1, 64], strides = [1, 1]} : vector<5x128xf32> to vector<1x64xf32>
    %515 = vector.extract_strided_slice %513 {offsets = [1, 0], sizes = [1, 64], strides = [1, 1]} : vector<5x128xf32> to vector<1x64xf32>
    %cst_166 = arith.constant dense<0.000000e+00> : vector<20xf32>
    %516 = vector.multi_reduction <add>, %512, %cst_166 [1] : vector<20x64xf32> to vector<20xf32>
    %517 = vector.shape_cast %516 : vector<20xf32> to vector<20x1xf32>
    %cst_167 = arith.constant 6.400000e+01 : f32
    %518 = vector.broadcast %cst_167 : f32 to vector<20x1xf32>
    %519 = arith.divf %517, %518 : vector<20x1xf32>
    %520 = vector.broadcast %519 : vector<20x1xf32> to vector<20x64xf32>
    %521 = arith.subf %512, %520 : vector<20x64xf32>
    %522 = arith.mulf %521, %521 : vector<20x64xf32>
    %cst_168 = arith.constant dense<0.000000e+00> : vector<20xf32>
    %523 = vector.multi_reduction <add>, %522, %cst_168 [1] : vector<20x64xf32> to vector<20xf32>
    %524 = vector.shape_cast %523 : vector<20xf32> to vector<20x1xf32>
    %cst_169 = arith.constant 6.400000e+01 : f32
    %525 = vector.broadcast %cst_169 : f32 to vector<20x1xf32>
    %526 = arith.divf %524, %525 : vector<20x1xf32>
    %527 = vector.broadcast %519 : vector<20x1xf32> to vector<20x64xf32>
    %528 = arith.subf %512, %527 : vector<20x64xf32>
    %cst_170 = arith.constant 9.99999974E-6 : f32
    %529 = vector.broadcast %cst_170 : f32 to vector<20x1xf32>
    %530 = arith.addf %526, %529 : vector<20x1xf32>
    %531 = math.rsqrt %530 : vector<20x1xf32>
    %532 = vector.broadcast %531 : vector<20x1xf32> to vector<20x64xf32>
    %533 = arith.mulf %528, %532 : vector<20x64xf32>
    %534 = vector.broadcast %514 : vector<1x64xf32> to vector<20x64xf32>
    %535 = arith.mulf %533, %534 : vector<20x64xf32>
    %536 = vector.broadcast %515 : vector<1x64xf32> to vector<20x64xf32>
    %537 = arith.addf %535, %536 : vector<20x64xf32>
    %c0_171 = arith.constant 0 : index
    %c0_172 = arith.constant 0 : index
    %c0_173 = arith.constant 0 : index
    %538 = vector.load %arg19[%c0_171, %c0_172, %c0_173] : memref<2x13x192xf32, #tpu.memory_space<vmem>>, vector<1x13x192xf32>
    %539 = vector.shape_cast %538 : vector<1x13x192xf32> to vector<13x192xf32>
    %c0_174 = arith.constant 0 : index
    %c0_175 = arith.constant 0 : index
    %c0_176 = arith.constant 0 : index
    %540 = vector.load %arg12[%c0_174, %c0_175, %c0_176] : memref<2x64x192xf32, #tpu.memory_space<vmem>>, vector<1x64x192xf32>
    %541 = vector.shape_cast %540 : vector<1x64x192xf32> to vector<64x192xf32>
    %cst_177 = arith.constant dense<0.000000e+00> : vector<16x192xf32>
    %542 = tpu.matmul %25, %541, %cst_177 {dimension_numbers = #tpu.dot_dimension_numbers<[1], [0], [0], [1], [0, 0, 1, 1], [], []>} : vector<16x64xf32>, vector<64x192xf32>, vector<16x192xf32> -> vector<16x192xf32>
    %543 = vector.extract_strided_slice %539 {offsets = [0, 0], sizes = [1, 192], strides = [1, 1]} : vector<13x192xf32> to vector<1x192xf32>
    %544 = vector.broadcast %543 : vector<1x192xf32> to vector<16x192xf32>
    %545 = arith.addf %542, %544 : vector<16x192xf32>
    %546 = vector.extract_strided_slice %545 {offsets = [0, 0], sizes = [16, 64], strides = [1, 1]} : vector<16x192xf32> to vector<16x64xf32>
    %547 = vector.extract_strided_slice %545 {offsets = [0, 64], sizes = [16, 64], strides = [1, 1]} : vector<16x192xf32> to vector<16x64xf32>
    %548 = vector.extract_strided_slice %545 {offsets = [0, 128], sizes = [16, 64], strides = [1, 1]} : vector<16x192xf32> to vector<16x64xf32>
    %549 = vector.extract_strided_slice %546 {offsets = [0, 0], sizes = [8, 64], strides = [1, 1]} : vector<16x64xf32> to vector<8x64xf32>
    %550 = vector.extract_strided_slice %547 {offsets = [0, 0], sizes = [8, 64], strides = [1, 1]} : vector<16x64xf32> to vector<8x64xf32>
    %551 = vector.extract_strided_slice %548 {offsets = [0, 0], sizes = [8, 64], strides = [1, 1]} : vector<16x64xf32> to vector<8x64xf32>
    %552 = vector.extract_strided_slice %549 {offsets = [0, 0], sizes = [8, 16], strides = [1, 1]} : vector<8x64xf32> to vector<8x16xf32>
    %553 = vector.extract_strided_slice %550 {offsets = [0, 0], sizes = [8, 16], strides = [1, 1]} : vector<8x64xf32> to vector<8x16xf32>
    %cst_178 = arith.constant dense<0.000000e+00> : vector<8x8xf32>
    %554 = tpu.matmul %552, %553, %cst_178 {dimension_numbers = #tpu.dot_dimension_numbers<[1], [1], [0], [0], [0, 0, 1, 0], [], []>} : vector<8x16xf32>, vector<8x16xf32>, vector<8x8xf32> -> vector<8x8xf32>
    %cst_179 = arith.constant 2.500000e-01 : f32
    %555 = vector.broadcast %cst_179 : f32 to vector<8x8xf32>
    %556 = arith.mulf %554, %555 : vector<8x8xf32>
    %557 = arith.addf %556, %44 : vector<8x8xf32>
    %cst_180 = arith.constant dense<0xFF800000> : vector<8xf32>
    %558 = vector.multi_reduction <maximumf>, %557, %cst_180 [1] : vector<8x8xf32> to vector<8xf32>
    %559 = vector.shape_cast %558 : vector<8xf32> to vector<8x1xf32>
    %560 = vector.broadcast %559 : vector<8x1xf32> to vector<8x8xf32>
    %561 = arith.subf %557, %560 : vector<8x8xf32>
    %562 = math.exp %561 : vector<8x8xf32>
    %cst_181 = arith.constant dense<0.000000e+00> : vector<8xf32>
    %563 = vector.multi_reduction <add>, %562, %cst_181 [1] : vector<8x8xf32> to vector<8xf32>
    %564 = vector.shape_cast %563 : vector<8xf32> to vector<8x1xf32>
    %565 = vector.broadcast %564 : vector<8x1xf32> to vector<8x8xf32>
    %566 = arith.divf %562, %565 : vector<8x8xf32>
    %567 = vector.extract_strided_slice %551 {offsets = [0, 0], sizes = [8, 16], strides = [1, 1]} : vector<8x64xf32> to vector<8x16xf32>
    %cst_182 = arith.constant dense<0.000000e+00> : vector<8x16xf32>
    %568 = tpu.matmul %566, %567, %cst_182 {dimension_numbers = #tpu.dot_dimension_numbers<[1], [0], [0], [1], [0, 0, 1, 1], [], []>} : vector<8x8xf32>, vector<8x16xf32>, vector<8x16xf32> -> vector<8x16xf32>
    %569 = vector.extract_strided_slice %549 {offsets = [0, 16], sizes = [8, 16], strides = [1, 1]} : vector<8x64xf32> to vector<8x16xf32>
    %570 = vector.extract_strided_slice %550 {offsets = [0, 16], sizes = [8, 16], strides = [1, 1]} : vector<8x64xf32> to vector<8x16xf32>
    %cst_183 = arith.constant dense<0.000000e+00> : vector<8x8xf32>
    %571 = tpu.matmul %569, %570, %cst_183 {dimension_numbers = #tpu.dot_dimension_numbers<[1], [1], [0], [0], [0, 0, 1, 0], [], []>} : vector<8x16xf32>, vector<8x16xf32>, vector<8x8xf32> -> vector<8x8xf32>
    %cst_184 = arith.constant 2.500000e-01 : f32
    %572 = vector.broadcast %cst_184 : f32 to vector<8x8xf32>
    %573 = arith.mulf %571, %572 : vector<8x8xf32>
    %574 = arith.addf %573, %44 : vector<8x8xf32>
    %cst_185 = arith.constant dense<0xFF800000> : vector<8xf32>
    %575 = vector.multi_reduction <maximumf>, %574, %cst_185 [1] : vector<8x8xf32> to vector<8xf32>
    %576 = vector.shape_cast %575 : vector<8xf32> to vector<8x1xf32>
    %577 = vector.broadcast %576 : vector<8x1xf32> to vector<8x8xf32>
    %578 = arith.subf %574, %577 : vector<8x8xf32>
    %579 = math.exp %578 : vector<8x8xf32>
    %cst_186 = arith.constant dense<0.000000e+00> : vector<8xf32>
    %580 = vector.multi_reduction <add>, %579, %cst_186 [1] : vector<8x8xf32> to vector<8xf32>
    %581 = vector.shape_cast %580 : vector<8xf32> to vector<8x1xf32>
    %582 = vector.broadcast %581 : vector<8x1xf32> to vector<8x8xf32>
    %583 = arith.divf %579, %582 : vector<8x8xf32>
    %584 = vector.extract_strided_slice %551 {offsets = [0, 16], sizes = [8, 16], strides = [1, 1]} : vector<8x64xf32> to vector<8x16xf32>
    %cst_187 = arith.constant dense<0.000000e+00> : vector<8x16xf32>
    %585 = tpu.matmul %583, %584, %cst_187 {dimension_numbers = #tpu.dot_dimension_numbers<[1], [0], [0], [1], [0, 0, 1, 1], [], []>} : vector<8x8xf32>, vector<8x16xf32>, vector<8x16xf32> -> vector<8x16xf32>
    %586 = vector.extract_strided_slice %549 {offsets = [0, 32], sizes = [8, 16], strides = [1, 1]} : vector<8x64xf32> to vector<8x16xf32>
    %587 = vector.extract_strided_slice %550 {offsets = [0, 32], sizes = [8, 16], strides = [1, 1]} : vector<8x64xf32> to vector<8x16xf32>
    %cst_188 = arith.constant dense<0.000000e+00> : vector<8x8xf32>
    %588 = tpu.matmul %586, %587, %cst_188 {dimension_numbers = #tpu.dot_dimension_numbers<[1], [1], [0], [0], [0, 0, 1, 0], [], []>} : vector<8x16xf32>, vector<8x16xf32>, vector<8x8xf32> -> vector<8x8xf32>
    %cst_189 = arith.constant 2.500000e-01 : f32
    %589 = vector.broadcast %cst_189 : f32 to vector<8x8xf32>
    %590 = arith.mulf %588, %589 : vector<8x8xf32>
    %591 = arith.addf %590, %44 : vector<8x8xf32>
    %cst_190 = arith.constant dense<0xFF800000> : vector<8xf32>
    %592 = vector.multi_reduction <maximumf>, %591, %cst_190 [1] : vector<8x8xf32> to vector<8xf32>
    %593 = vector.shape_cast %592 : vector<8xf32> to vector<8x1xf32>
    %594 = vector.broadcast %593 : vector<8x1xf32> to vector<8x8xf32>
    %595 = arith.subf %591, %594 : vector<8x8xf32>
    %596 = math.exp %595 : vector<8x8xf32>
    %cst_191 = arith.constant dense<0.000000e+00> : vector<8xf32>
    %597 = vector.multi_reduction <add>, %596, %cst_191 [1] : vector<8x8xf32> to vector<8xf32>
    %598 = vector.shape_cast %597 : vector<8xf32> to vector<8x1xf32>
    %599 = vector.broadcast %598 : vector<8x1xf32> to vector<8x8xf32>
    %600 = arith.divf %596, %599 : vector<8x8xf32>
    %601 = vector.extract_strided_slice %551 {offsets = [0, 32], sizes = [8, 16], strides = [1, 1]} : vector<8x64xf32> to vector<8x16xf32>
    %cst_192 = arith.constant dense<0.000000e+00> : vector<8x16xf32>
    %602 = tpu.matmul %600, %601, %cst_192 {dimension_numbers = #tpu.dot_dimension_numbers<[1], [0], [0], [1], [0, 0, 1, 1], [], []>} : vector<8x8xf32>, vector<8x16xf32>, vector<8x16xf32> -> vector<8x16xf32>
    %603 = vector.extract_strided_slice %549 {offsets = [0, 48], sizes = [8, 16], strides = [1, 1]} : vector<8x64xf32> to vector<8x16xf32>
    %604 = vector.extract_strided_slice %550 {offsets = [0, 48], sizes = [8, 16], strides = [1, 1]} : vector<8x64xf32> to vector<8x16xf32>
    %cst_193 = arith.constant dense<0.000000e+00> : vector<8x8xf32>
    %605 = tpu.matmul %603, %604, %cst_193 {dimension_numbers = #tpu.dot_dimension_numbers<[1], [1], [0], [0], [0, 0, 1, 0], [], []>} : vector<8x16xf32>, vector<8x16xf32>, vector<8x8xf32> -> vector<8x8xf32>
    %cst_194 = arith.constant 2.500000e-01 : f32
    %606 = vector.broadcast %cst_194 : f32 to vector<8x8xf32>
    %607 = arith.mulf %605, %606 : vector<8x8xf32>
    %608 = arith.addf %607, %44 : vector<8x8xf32>
    %cst_195 = arith.constant dense<0xFF800000> : vector<8xf32>
    %609 = vector.multi_reduction <maximumf>, %608, %cst_195 [1] : vector<8x8xf32> to vector<8xf32>
    %610 = vector.shape_cast %609 : vector<8xf32> to vector<8x1xf32>
    %611 = vector.broadcast %610 : vector<8x1xf32> to vector<8x8xf32>
    %612 = arith.subf %608, %611 : vector<8x8xf32>
    %613 = math.exp %612 : vector<8x8xf32>
    %cst_196 = arith.constant dense<0.000000e+00> : vector<8xf32>
    %614 = vector.multi_reduction <add>, %613, %cst_196 [1] : vector<8x8xf32> to vector<8xf32>
    %615 = vector.shape_cast %614 : vector<8xf32> to vector<8x1xf32>
    %616 = vector.broadcast %615 : vector<8x1xf32> to vector<8x8xf32>
    %617 = arith.divf %613, %616 : vector<8x8xf32>
    %618 = vector.extract_strided_slice %551 {offsets = [0, 48], sizes = [8, 16], strides = [1, 1]} : vector<8x64xf32> to vector<8x16xf32>
    %cst_197 = arith.constant dense<0.000000e+00> : vector<8x16xf32>
    %619 = tpu.matmul %617, %618, %cst_197 {dimension_numbers = #tpu.dot_dimension_numbers<[1], [0], [0], [1], [0, 0, 1, 1], [], []>} : vector<8x8xf32>, vector<8x16xf32>, vector<8x16xf32> -> vector<8x16xf32>
    %620 = tpu.concatenate %568, %585, %602, %619 in 1 : vector<8x16xf32>, vector<8x16xf32>, vector<8x16xf32>, vector<8x16xf32> -> vector<8x64xf32>
    %621 = vector.extract_strided_slice %546 {offsets = [8, 0], sizes = [8, 64], strides = [1, 1]} : vector<16x64xf32> to vector<8x64xf32>
    %622 = vector.extract_strided_slice %547 {offsets = [8, 0], sizes = [8, 64], strides = [1, 1]} : vector<16x64xf32> to vector<8x64xf32>
    %623 = vector.extract_strided_slice %548 {offsets = [8, 0], sizes = [8, 64], strides = [1, 1]} : vector<16x64xf32> to vector<8x64xf32>
    %624 = vector.extract_strided_slice %621 {offsets = [0, 0], sizes = [8, 16], strides = [1, 1]} : vector<8x64xf32> to vector<8x16xf32>
    %625 = vector.extract_strided_slice %622 {offsets = [0, 0], sizes = [8, 16], strides = [1, 1]} : vector<8x64xf32> to vector<8x16xf32>
    %cst_198 = arith.constant dense<0.000000e+00> : vector<8x8xf32>
    %626 = tpu.matmul %624, %625, %cst_198 {dimension_numbers = #tpu.dot_dimension_numbers<[1], [1], [0], [0], [0, 0, 1, 0], [], []>} : vector<8x16xf32>, vector<8x16xf32>, vector<8x8xf32> -> vector<8x8xf32>
    %cst_199 = arith.constant 2.500000e-01 : f32
    %627 = vector.broadcast %cst_199 : f32 to vector<8x8xf32>
    %628 = arith.mulf %626, %627 : vector<8x8xf32>
    %629 = arith.addf %628, %44 : vector<8x8xf32>
    %cst_200 = arith.constant dense<0xFF800000> : vector<8xf32>
    %630 = vector.multi_reduction <maximumf>, %629, %cst_200 [1] : vector<8x8xf32> to vector<8xf32>
    %631 = vector.shape_cast %630 : vector<8xf32> to vector<8x1xf32>
    %632 = vector.broadcast %631 : vector<8x1xf32> to vector<8x8xf32>
    %633 = arith.subf %629, %632 : vector<8x8xf32>
    %634 = math.exp %633 : vector<8x8xf32>
    %cst_201 = arith.constant dense<0.000000e+00> : vector<8xf32>
    %635 = vector.multi_reduction <add>, %634, %cst_201 [1] : vector<8x8xf32> to vector<8xf32>
    %636 = vector.shape_cast %635 : vector<8xf32> to vector<8x1xf32>
    %637 = vector.broadcast %636 : vector<8x1xf32> to vector<8x8xf32>
    %638 = arith.divf %634, %637 : vector<8x8xf32>
    %639 = vector.extract_strided_slice %623 {offsets = [0, 0], sizes = [8, 16], strides = [1, 1]} : vector<8x64xf32> to vector<8x16xf32>
    %cst_202 = arith.constant dense<0.000000e+00> : vector<8x16xf32>
    %640 = tpu.matmul %638, %639, %cst_202 {dimension_numbers = #tpu.dot_dimension_numbers<[1], [0], [0], [1], [0, 0, 1, 1], [], []>} : vector<8x8xf32>, vector<8x16xf32>, vector<8x16xf32> -> vector<8x16xf32>
    %641 = vector.extract_strided_slice %621 {offsets = [0, 16], sizes = [8, 16], strides = [1, 1]} : vector<8x64xf32> to vector<8x16xf32>
    %642 = vector.extract_strided_slice %622 {offsets = [0, 16], sizes = [8, 16], strides = [1, 1]} : vector<8x64xf32> to vector<8x16xf32>
    %cst_203 = arith.constant dense<0.000000e+00> : vector<8x8xf32>
    %643 = tpu.matmul %641, %642, %cst_203 {dimension_numbers = #tpu.dot_dimension_numbers<[1], [1], [0], [0], [0, 0, 1, 0], [], []>} : vector<8x16xf32>, vector<8x16xf32>, vector<8x8xf32> -> vector<8x8xf32>
    %cst_204 = arith.constant 2.500000e-01 : f32
    %644 = vector.broadcast %cst_204 : f32 to vector<8x8xf32>
    %645 = arith.mulf %643, %644 : vector<8x8xf32>
    %646 = arith.addf %645, %44 : vector<8x8xf32>
    %cst_205 = arith.constant dense<0xFF800000> : vector<8xf32>
    %647 = vector.multi_reduction <maximumf>, %646, %cst_205 [1] : vector<8x8xf32> to vector<8xf32>
    %648 = vector.shape_cast %647 : vector<8xf32> to vector<8x1xf32>
    %649 = vector.broadcast %648 : vector<8x1xf32> to vector<8x8xf32>
    %650 = arith.subf %646, %649 : vector<8x8xf32>
    %651 = math.exp %650 : vector<8x8xf32>
    %cst_206 = arith.constant dense<0.000000e+00> : vector<8xf32>
    %652 = vector.multi_reduction <add>, %651, %cst_206 [1] : vector<8x8xf32> to vector<8xf32>
    %653 = vector.shape_cast %652 : vector<8xf32> to vector<8x1xf32>
    %654 = vector.broadcast %653 : vector<8x1xf32> to vector<8x8xf32>
    %655 = arith.divf %651, %654 : vector<8x8xf32>
    %656 = vector.extract_strided_slice %623 {offsets = [0, 16], sizes = [8, 16], strides = [1, 1]} : vector<8x64xf32> to vector<8x16xf32>
    %cst_207 = arith.constant dense<0.000000e+00> : vector<8x16xf32>
    %657 = tpu.matmul %655, %656, %cst_207 {dimension_numbers = #tpu.dot_dimension_numbers<[1], [0], [0], [1], [0, 0, 1, 1], [], []>} : vector<8x8xf32>, vector<8x16xf32>, vector<8x16xf32> -> vector<8x16xf32>
    %658 = vector.extract_strided_slice %621 {offsets = [0, 32], sizes = [8, 16], strides = [1, 1]} : vector<8x64xf32> to vector<8x16xf32>
    %659 = vector.extract_strided_slice %622 {offsets = [0, 32], sizes = [8, 16], strides = [1, 1]} : vector<8x64xf32> to vector<8x16xf32>
    %cst_208 = arith.constant dense<0.000000e+00> : vector<8x8xf32>
    %660 = tpu.matmul %658, %659, %cst_208 {dimension_numbers = #tpu.dot_dimension_numbers<[1], [1], [0], [0], [0, 0, 1, 0], [], []>} : vector<8x16xf32>, vector<8x16xf32>, vector<8x8xf32> -> vector<8x8xf32>
    %cst_209 = arith.constant 2.500000e-01 : f32
    %661 = vector.broadcast %cst_209 : f32 to vector<8x8xf32>
    %662 = arith.mulf %660, %661 : vector<8x8xf32>
    %663 = arith.addf %662, %44 : vector<8x8xf32>
    %cst_210 = arith.constant dense<0xFF800000> : vector<8xf32>
    %664 = vector.multi_reduction <maximumf>, %663, %cst_210 [1] : vector<8x8xf32> to vector<8xf32>
    %665 = vector.shape_cast %664 : vector<8xf32> to vector<8x1xf32>
    %666 = vector.broadcast %665 : vector<8x1xf32> to vector<8x8xf32>
    %667 = arith.subf %663, %666 : vector<8x8xf32>
    %668 = math.exp %667 : vector<8x8xf32>
    %cst_211 = arith.constant dense<0.000000e+00> : vector<8xf32>
    %669 = vector.multi_reduction <add>, %668, %cst_211 [1] : vector<8x8xf32> to vector<8xf32>
    %670 = vector.shape_cast %669 : vector<8xf32> to vector<8x1xf32>
    %671 = vector.broadcast %670 : vector<8x1xf32> to vector<8x8xf32>
    %672 = arith.divf %668, %671 : vector<8x8xf32>
    %673 = vector.extract_strided_slice %623 {offsets = [0, 32], sizes = [8, 16], strides = [1, 1]} : vector<8x64xf32> to vector<8x16xf32>
    %cst_212 = arith.constant dense<0.000000e+00> : vector<8x16xf32>
    %674 = tpu.matmul %672, %673, %cst_212 {dimension_numbers = #tpu.dot_dimension_numbers<[1], [0], [0], [1], [0, 0, 1, 1], [], []>} : vector<8x8xf32>, vector<8x16xf32>, vector<8x16xf32> -> vector<8x16xf32>
    %675 = vector.extract_strided_slice %621 {offsets = [0, 48], sizes = [8, 16], strides = [1, 1]} : vector<8x64xf32> to vector<8x16xf32>
    %676 = vector.extract_strided_slice %622 {offsets = [0, 48], sizes = [8, 16], strides = [1, 1]} : vector<8x64xf32> to vector<8x16xf32>
    %cst_213 = arith.constant dense<0.000000e+00> : vector<8x8xf32>
    %677 = tpu.matmul %675, %676, %cst_213 {dimension_numbers = #tpu.dot_dimension_numbers<[1], [1], [0], [0], [0, 0, 1, 0], [], []>} : vector<8x16xf32>, vector<8x16xf32>, vector<8x8xf32> -> vector<8x8xf32>
    %cst_214 = arith.constant 2.500000e-01 : f32
    %678 = vector.broadcast %cst_214 : f32 to vector<8x8xf32>
    %679 = arith.mulf %677, %678 : vector<8x8xf32>
    %680 = arith.addf %679, %44 : vector<8x8xf32>
    %cst_215 = arith.constant dense<0xFF800000> : vector<8xf32>
    %681 = vector.multi_reduction <maximumf>, %680, %cst_215 [1] : vector<8x8xf32> to vector<8xf32>
    %682 = vector.shape_cast %681 : vector<8xf32> to vector<8x1xf32>
    %683 = vector.broadcast %682 : vector<8x1xf32> to vector<8x8xf32>
    %684 = arith.subf %680, %683 : vector<8x8xf32>
    %685 = math.exp %684 : vector<8x8xf32>
    %cst_216 = arith.constant dense<0.000000e+00> : vector<8xf32>
    %686 = vector.multi_reduction <add>, %685, %cst_216 [1] : vector<8x8xf32> to vector<8xf32>
    %687 = vector.shape_cast %686 : vector<8xf32> to vector<8x1xf32>
    %688 = vector.broadcast %687 : vector<8x1xf32> to vector<8x8xf32>
    %689 = arith.divf %685, %688 : vector<8x8xf32>
    %690 = vector.extract_strided_slice %623 {offsets = [0, 48], sizes = [8, 16], strides = [1, 1]} : vector<8x64xf32> to vector<8x16xf32>
    %cst_217 = arith.constant dense<0.000000e+00> : vector<8x16xf32>
    %691 = tpu.matmul %689, %690, %cst_217 {dimension_numbers = #tpu.dot_dimension_numbers<[1], [0], [0], [1], [0, 0, 1, 1], [], []>} : vector<8x8xf32>, vector<8x16xf32>, vector<8x16xf32> -> vector<8x16xf32>
    %692 = tpu.concatenate %640, %657, %674, %691 in 1 : vector<8x16xf32>, vector<8x16xf32>, vector<8x16xf32>, vector<8x16xf32> -> vector<8x64xf32>
    %693 = tpu.concatenate %620, %692 in 0 : vector<8x64xf32>, vector<8x64xf32> -> vector<16x64xf32>
    %c0_218 = arith.constant 0 : index
    %c0_219 = arith.constant 0 : index
    %c0_220 = arith.constant 0 : index
    %694 = vector.load %arg13[%c0_218, %c0_219, %c0_220] : memref<2x64x64xf32, #tpu.memory_space<vmem>>, vector<1x64x64xf32>
    %695 = vector.shape_cast %694 : vector<1x64x64xf32> to vector<64x64xf32>
    %cst_221 = arith.constant dense<0.000000e+00> : vector<16x64xf32>
    %696 = tpu.matmul %693, %695, %cst_221 {dimension_numbers = #tpu.dot_dimension_numbers<[1], [0], [0], [1], [0, 0, 1, 1], [], []>} : vector<16x64xf32>, vector<64x64xf32>, vector<16x64xf32> -> vector<16x64xf32>
    %697 = vector.extract_strided_slice %539 {offsets = [1, 0], sizes = [1, 64], strides = [1, 1]} : vector<13x192xf32> to vector<1x64xf32>
    %698 = vector.broadcast %697 : vector<1x64xf32> to vector<16x64xf32>
    %699 = arith.addf %696, %698 : vector<16x64xf32>
    %700 = arith.addf %25, %699 : vector<16x64xf32>
    %701 = vector.extract_strided_slice %539 {offsets = [7, 0], sizes = [1, 64], strides = [1, 1]} : vector<13x192xf32> to vector<1x64xf32>
    %702 = vector.extract_strided_slice %539 {offsets = [8, 0], sizes = [1, 64], strides = [1, 1]} : vector<13x192xf32> to vector<1x64xf32>
    %cst_222 = arith.constant dense<0.000000e+00> : vector<16xf32>
    %703 = vector.multi_reduction <add>, %700, %cst_222 [1] : vector<16x64xf32> to vector<16xf32>
    %704 = vector.shape_cast %703 : vector<16xf32> to vector<16x1xf32>
    %cst_223 = arith.constant 6.400000e+01 : f32
    %705 = vector.broadcast %cst_223 : f32 to vector<16x1xf32>
    %706 = arith.divf %704, %705 : vector<16x1xf32>
    %707 = vector.broadcast %706 : vector<16x1xf32> to vector<16x64xf32>
    %708 = arith.subf %700, %707 : vector<16x64xf32>
    %709 = arith.mulf %708, %708 : vector<16x64xf32>
    %cst_224 = arith.constant dense<0.000000e+00> : vector<16xf32>
    %710 = vector.multi_reduction <add>, %709, %cst_224 [1] : vector<16x64xf32> to vector<16xf32>
    %711 = vector.shape_cast %710 : vector<16xf32> to vector<16x1xf32>
    %cst_225 = arith.constant 6.400000e+01 : f32
    %712 = vector.broadcast %cst_225 : f32 to vector<16x1xf32>
    %713 = arith.divf %711, %712 : vector<16x1xf32>
    %714 = vector.broadcast %706 : vector<16x1xf32> to vector<16x64xf32>
    %715 = arith.subf %700, %714 : vector<16x64xf32>
    %cst_226 = arith.constant 9.99999974E-6 : f32
    %716 = vector.broadcast %cst_226 : f32 to vector<16x1xf32>
    %717 = arith.addf %713, %716 : vector<16x1xf32>
    %718 = math.rsqrt %717 : vector<16x1xf32>
    %719 = vector.broadcast %718 : vector<16x1xf32> to vector<16x64xf32>
    %720 = arith.mulf %715, %719 : vector<16x64xf32>
    %721 = vector.broadcast %701 : vector<1x64xf32> to vector<16x64xf32>
    %722 = arith.mulf %720, %721 : vector<16x64xf32>
    %723 = vector.broadcast %702 : vector<1x64xf32> to vector<16x64xf32>
    %724 = arith.addf %722, %723 : vector<16x64xf32>
    %c0_227 = arith.constant 0 : index
    %c0_228 = arith.constant 0 : index
    %c0_229 = arith.constant 0 : index
    %725 = vector.load %arg14[%c0_227, %c0_228, %c0_229] : memref<2x64x64xf32, #tpu.memory_space<vmem>>, vector<1x64x64xf32>
    %726 = vector.shape_cast %725 : vector<1x64x64xf32> to vector<64x64xf32>
    %cst_230 = arith.constant dense<0.000000e+00> : vector<16x64xf32>
    %727 = tpu.matmul %724, %726, %cst_230 {dimension_numbers = #tpu.dot_dimension_numbers<[1], [0], [0], [1], [0, 0, 1, 1], [], []>} : vector<16x64xf32>, vector<64x64xf32>, vector<16x64xf32> -> vector<16x64xf32>
    %728 = vector.extract_strided_slice %539 {offsets = [2, 0], sizes = [1, 64], strides = [1, 1]} : vector<13x192xf32> to vector<1x64xf32>
    %729 = vector.broadcast %728 : vector<1x64xf32> to vector<16x64xf32>
    %730 = arith.addf %727, %729 : vector<16x64xf32>
    %c0_231 = arith.constant 0 : index
    %c0_232 = arith.constant 0 : index
    %c0_233 = arith.constant 0 : index
    %731 = vector.load %arg15[%c0_231, %c0_232, %c0_233] : memref<2x64x128xf32, #tpu.memory_space<vmem>>, vector<1x64x128xf32>
    %732 = vector.shape_cast %731 : vector<1x64x128xf32> to vector<64x128xf32>
    %cst_234 = arith.constant dense<0.000000e+00> : vector<20x128xf32>
    %733 = tpu.matmul %537, %732, %cst_234 {dimension_numbers = #tpu.dot_dimension_numbers<[1], [0], [0], [1], [0, 0, 1, 1], [], []>} : vector<20x64xf32>, vector<64x128xf32>, vector<20x128xf32> -> vector<20x128xf32>
    %734 = vector.extract_strided_slice %539 {offsets = [3, 0], sizes = [1, 128], strides = [1, 1]} : vector<13x192xf32> to vector<1x128xf32>
    %735 = vector.broadcast %734 : vector<1x128xf32> to vector<20x128xf32>
    %736 = arith.addf %733, %735 : vector<20x128xf32>
    %737 = vector.extract_strided_slice %736 {offsets = [0, 0], sizes = [20, 64], strides = [1, 1]} : vector<20x128xf32> to vector<20x64xf32>
    %738 = vector.extract_strided_slice %736 {offsets = [0, 64], sizes = [20, 64], strides = [1, 1]} : vector<20x128xf32> to vector<20x64xf32>
    %739 = vector.extract_strided_slice %730 {offsets = [0, 0], sizes = [8, 64], strides = [1, 1]} : vector<16x64xf32> to vector<8x64xf32>
    %740 = vector.extract_strided_slice %737 {offsets = [0, 0], sizes = [10, 64], strides = [1, 1]} : vector<20x64xf32> to vector<10x64xf32>
    %741 = vector.extract_strided_slice %738 {offsets = [0, 0], sizes = [10, 64], strides = [1, 1]} : vector<20x64xf32> to vector<10x64xf32>
    %742 = vector.extract_strided_slice %739 {offsets = [0, 0], sizes = [8, 16], strides = [1, 1]} : vector<8x64xf32> to vector<8x16xf32>
    %743 = vector.extract_strided_slice %740 {offsets = [0, 0], sizes = [10, 16], strides = [1, 1]} : vector<10x64xf32> to vector<10x16xf32>
    %cst_235 = arith.constant dense<0.000000e+00> : vector<8x10xf32>
    %744 = tpu.matmul %742, %743, %cst_235 {dimension_numbers = #tpu.dot_dimension_numbers<[1], [1], [0], [0], [0, 0, 1, 0], [], []>} : vector<8x16xf32>, vector<10x16xf32>, vector<8x10xf32> -> vector<8x10xf32>
    %cst_236 = arith.constant 2.500000e-01 : f32
    %745 = vector.broadcast %cst_236 : f32 to vector<8x10xf32>
    %746 = arith.mulf %744, %745 : vector<8x10xf32>
    %cst_237 = arith.constant dense<0xFF800000> : vector<8xf32>
    %747 = vector.multi_reduction <maximumf>, %746, %cst_237 [1] : vector<8x10xf32> to vector<8xf32>
    %748 = vector.shape_cast %747 : vector<8xf32> to vector<8x1xf32>
    %749 = vector.broadcast %748 : vector<8x1xf32> to vector<8x10xf32>
    %750 = arith.subf %746, %749 : vector<8x10xf32>
    %751 = math.exp %750 : vector<8x10xf32>
    %cst_238 = arith.constant dense<0.000000e+00> : vector<8xf32>
    %752 = vector.multi_reduction <add>, %751, %cst_238 [1] : vector<8x10xf32> to vector<8xf32>
    %753 = vector.shape_cast %752 : vector<8xf32> to vector<8x1xf32>
    %754 = vector.broadcast %753 : vector<8x1xf32> to vector<8x10xf32>
    %755 = arith.divf %751, %754 : vector<8x10xf32>
    %756 = vector.extract_strided_slice %741 {offsets = [0, 0], sizes = [10, 16], strides = [1, 1]} : vector<10x64xf32> to vector<10x16xf32>
    %cst_239 = arith.constant dense<0.000000e+00> : vector<8x16xf32>
    %757 = tpu.matmul %755, %756, %cst_239 {dimension_numbers = #tpu.dot_dimension_numbers<[1], [0], [0], [1], [0, 0, 1, 1], [], []>} : vector<8x10xf32>, vector<10x16xf32>, vector<8x16xf32> -> vector<8x16xf32>
    %758 = vector.extract_strided_slice %739 {offsets = [0, 16], sizes = [8, 16], strides = [1, 1]} : vector<8x64xf32> to vector<8x16xf32>
    %759 = vector.extract_strided_slice %740 {offsets = [0, 16], sizes = [10, 16], strides = [1, 1]} : vector<10x64xf32> to vector<10x16xf32>
    %cst_240 = arith.constant dense<0.000000e+00> : vector<8x10xf32>
    %760 = tpu.matmul %758, %759, %cst_240 {dimension_numbers = #tpu.dot_dimension_numbers<[1], [1], [0], [0], [0, 0, 1, 0], [], []>} : vector<8x16xf32>, vector<10x16xf32>, vector<8x10xf32> -> vector<8x10xf32>
    %cst_241 = arith.constant 2.500000e-01 : f32
    %761 = vector.broadcast %cst_241 : f32 to vector<8x10xf32>
    %762 = arith.mulf %760, %761 : vector<8x10xf32>
    %cst_242 = arith.constant dense<0xFF800000> : vector<8xf32>
    %763 = vector.multi_reduction <maximumf>, %762, %cst_242 [1] : vector<8x10xf32> to vector<8xf32>
    %764 = vector.shape_cast %763 : vector<8xf32> to vector<8x1xf32>
    %765 = vector.broadcast %764 : vector<8x1xf32> to vector<8x10xf32>
    %766 = arith.subf %762, %765 : vector<8x10xf32>
    %767 = math.exp %766 : vector<8x10xf32>
    %cst_243 = arith.constant dense<0.000000e+00> : vector<8xf32>
    %768 = vector.multi_reduction <add>, %767, %cst_243 [1] : vector<8x10xf32> to vector<8xf32>
    %769 = vector.shape_cast %768 : vector<8xf32> to vector<8x1xf32>
    %770 = vector.broadcast %769 : vector<8x1xf32> to vector<8x10xf32>
    %771 = arith.divf %767, %770 : vector<8x10xf32>
    %772 = vector.extract_strided_slice %741 {offsets = [0, 16], sizes = [10, 16], strides = [1, 1]} : vector<10x64xf32> to vector<10x16xf32>
    %cst_244 = arith.constant dense<0.000000e+00> : vector<8x16xf32>
    %773 = tpu.matmul %771, %772, %cst_244 {dimension_numbers = #tpu.dot_dimension_numbers<[1], [0], [0], [1], [0, 0, 1, 1], [], []>} : vector<8x10xf32>, vector<10x16xf32>, vector<8x16xf32> -> vector<8x16xf32>
    %774 = vector.extract_strided_slice %739 {offsets = [0, 32], sizes = [8, 16], strides = [1, 1]} : vector<8x64xf32> to vector<8x16xf32>
    %775 = vector.extract_strided_slice %740 {offsets = [0, 32], sizes = [10, 16], strides = [1, 1]} : vector<10x64xf32> to vector<10x16xf32>
    %cst_245 = arith.constant dense<0.000000e+00> : vector<8x10xf32>
    %776 = tpu.matmul %774, %775, %cst_245 {dimension_numbers = #tpu.dot_dimension_numbers<[1], [1], [0], [0], [0, 0, 1, 0], [], []>} : vector<8x16xf32>, vector<10x16xf32>, vector<8x10xf32> -> vector<8x10xf32>
    %cst_246 = arith.constant 2.500000e-01 : f32
    %777 = vector.broadcast %cst_246 : f32 to vector<8x10xf32>
    %778 = arith.mulf %776, %777 : vector<8x10xf32>
    %cst_247 = arith.constant dense<0xFF800000> : vector<8xf32>
    %779 = vector.multi_reduction <maximumf>, %778, %cst_247 [1] : vector<8x10xf32> to vector<8xf32>
    %780 = vector.shape_cast %779 : vector<8xf32> to vector<8x1xf32>
    %781 = vector.broadcast %780 : vector<8x1xf32> to vector<8x10xf32>
    %782 = arith.subf %778, %781 : vector<8x10xf32>
    %783 = math.exp %782 : vector<8x10xf32>
    %cst_248 = arith.constant dense<0.000000e+00> : vector<8xf32>
    %784 = vector.multi_reduction <add>, %783, %cst_248 [1] : vector<8x10xf32> to vector<8xf32>
    %785 = vector.shape_cast %784 : vector<8xf32> to vector<8x1xf32>
    %786 = vector.broadcast %785 : vector<8x1xf32> to vector<8x10xf32>
    %787 = arith.divf %783, %786 : vector<8x10xf32>
    %788 = vector.extract_strided_slice %741 {offsets = [0, 32], sizes = [10, 16], strides = [1, 1]} : vector<10x64xf32> to vector<10x16xf32>
    %cst_249 = arith.constant dense<0.000000e+00> : vector<8x16xf32>
    %789 = tpu.matmul %787, %788, %cst_249 {dimension_numbers = #tpu.dot_dimension_numbers<[1], [0], [0], [1], [0, 0, 1, 1], [], []>} : vector<8x10xf32>, vector<10x16xf32>, vector<8x16xf32> -> vector<8x16xf32>
    %790 = vector.extract_strided_slice %739 {offsets = [0, 48], sizes = [8, 16], strides = [1, 1]} : vector<8x64xf32> to vector<8x16xf32>
    %791 = vector.extract_strided_slice %740 {offsets = [0, 48], sizes = [10, 16], strides = [1, 1]} : vector<10x64xf32> to vector<10x16xf32>
    %cst_250 = arith.constant dense<0.000000e+00> : vector<8x10xf32>
    %792 = tpu.matmul %790, %791, %cst_250 {dimension_numbers = #tpu.dot_dimension_numbers<[1], [1], [0], [0], [0, 0, 1, 0], [], []>} : vector<8x16xf32>, vector<10x16xf32>, vector<8x10xf32> -> vector<8x10xf32>
    %cst_251 = arith.constant 2.500000e-01 : f32
    %793 = vector.broadcast %cst_251 : f32 to vector<8x10xf32>
    %794 = arith.mulf %792, %793 : vector<8x10xf32>
    %cst_252 = arith.constant dense<0xFF800000> : vector<8xf32>
    %795 = vector.multi_reduction <maximumf>, %794, %cst_252 [1] : vector<8x10xf32> to vector<8xf32>
    %796 = vector.shape_cast %795 : vector<8xf32> to vector<8x1xf32>
    %797 = vector.broadcast %796 : vector<8x1xf32> to vector<8x10xf32>
    %798 = arith.subf %794, %797 : vector<8x10xf32>
    %799 = math.exp %798 : vector<8x10xf32>
    %cst_253 = arith.constant dense<0.000000e+00> : vector<8xf32>
    %800 = vector.multi_reduction <add>, %799, %cst_253 [1] : vector<8x10xf32> to vector<8xf32>
    %801 = vector.shape_cast %800 : vector<8xf32> to vector<8x1xf32>
    %802 = vector.broadcast %801 : vector<8x1xf32> to vector<8x10xf32>
    %803 = arith.divf %799, %802 : vector<8x10xf32>
    %804 = vector.extract_strided_slice %741 {offsets = [0, 48], sizes = [10, 16], strides = [1, 1]} : vector<10x64xf32> to vector<10x16xf32>
    %cst_254 = arith.constant dense<0.000000e+00> : vector<8x16xf32>
    %805 = tpu.matmul %803, %804, %cst_254 {dimension_numbers = #tpu.dot_dimension_numbers<[1], [0], [0], [1], [0, 0, 1, 1], [], []>} : vector<8x10xf32>, vector<10x16xf32>, vector<8x16xf32> -> vector<8x16xf32>
    %806 = tpu.concatenate %757, %773, %789, %805 in 1 : vector<8x16xf32>, vector<8x16xf32>, vector<8x16xf32>, vector<8x16xf32> -> vector<8x64xf32>
    %807 = vector.extract_strided_slice %730 {offsets = [8, 0], sizes = [8, 64], strides = [1, 1]} : vector<16x64xf32> to vector<8x64xf32>
    %808 = vector.extract_strided_slice %737 {offsets = [10, 0], sizes = [10, 64], strides = [1, 1]} : vector<20x64xf32> to vector<10x64xf32>
    %809 = vector.extract_strided_slice %738 {offsets = [10, 0], sizes = [10, 64], strides = [1, 1]} : vector<20x64xf32> to vector<10x64xf32>
    %810 = vector.extract_strided_slice %807 {offsets = [0, 0], sizes = [8, 16], strides = [1, 1]} : vector<8x64xf32> to vector<8x16xf32>
    %811 = vector.extract_strided_slice %808 {offsets = [0, 0], sizes = [10, 16], strides = [1, 1]} : vector<10x64xf32> to vector<10x16xf32>
    %cst_255 = arith.constant dense<0.000000e+00> : vector<8x10xf32>
    %812 = tpu.matmul %810, %811, %cst_255 {dimension_numbers = #tpu.dot_dimension_numbers<[1], [1], [0], [0], [0, 0, 1, 0], [], []>} : vector<8x16xf32>, vector<10x16xf32>, vector<8x10xf32> -> vector<8x10xf32>
    %cst_256 = arith.constant 2.500000e-01 : f32
    %813 = vector.broadcast %cst_256 : f32 to vector<8x10xf32>
    %814 = arith.mulf %812, %813 : vector<8x10xf32>
    %cst_257 = arith.constant dense<0xFF800000> : vector<8xf32>
    %815 = vector.multi_reduction <maximumf>, %814, %cst_257 [1] : vector<8x10xf32> to vector<8xf32>
    %816 = vector.shape_cast %815 : vector<8xf32> to vector<8x1xf32>
    %817 = vector.broadcast %816 : vector<8x1xf32> to vector<8x10xf32>
    %818 = arith.subf %814, %817 : vector<8x10xf32>
    %819 = math.exp %818 : vector<8x10xf32>
    %cst_258 = arith.constant dense<0.000000e+00> : vector<8xf32>
    %820 = vector.multi_reduction <add>, %819, %cst_258 [1] : vector<8x10xf32> to vector<8xf32>
    %821 = vector.shape_cast %820 : vector<8xf32> to vector<8x1xf32>
    %822 = vector.broadcast %821 : vector<8x1xf32> to vector<8x10xf32>
    %823 = arith.divf %819, %822 : vector<8x10xf32>
    %824 = vector.extract_strided_slice %809 {offsets = [0, 0], sizes = [10, 16], strides = [1, 1]} : vector<10x64xf32> to vector<10x16xf32>
    %cst_259 = arith.constant dense<0.000000e+00> : vector<8x16xf32>
    %825 = tpu.matmul %823, %824, %cst_259 {dimension_numbers = #tpu.dot_dimension_numbers<[1], [0], [0], [1], [0, 0, 1, 1], [], []>} : vector<8x10xf32>, vector<10x16xf32>, vector<8x16xf32> -> vector<8x16xf32>
    %826 = vector.extract_strided_slice %807 {offsets = [0, 16], sizes = [8, 16], strides = [1, 1]} : vector<8x64xf32> to vector<8x16xf32>
    %827 = vector.extract_strided_slice %808 {offsets = [0, 16], sizes = [10, 16], strides = [1, 1]} : vector<10x64xf32> to vector<10x16xf32>
    %cst_260 = arith.constant dense<0.000000e+00> : vector<8x10xf32>
    %828 = tpu.matmul %826, %827, %cst_260 {dimension_numbers = #tpu.dot_dimension_numbers<[1], [1], [0], [0], [0, 0, 1, 0], [], []>} : vector<8x16xf32>, vector<10x16xf32>, vector<8x10xf32> -> vector<8x10xf32>
    %cst_261 = arith.constant 2.500000e-01 : f32
    %829 = vector.broadcast %cst_261 : f32 to vector<8x10xf32>
    %830 = arith.mulf %828, %829 : vector<8x10xf32>
    %cst_262 = arith.constant dense<0xFF800000> : vector<8xf32>
    %831 = vector.multi_reduction <maximumf>, %830, %cst_262 [1] : vector<8x10xf32> to vector<8xf32>
    %832 = vector.shape_cast %831 : vector<8xf32> to vector<8x1xf32>
    %833 = vector.broadcast %832 : vector<8x1xf32> to vector<8x10xf32>
    %834 = arith.subf %830, %833 : vector<8x10xf32>
    %835 = math.exp %834 : vector<8x10xf32>
    %cst_263 = arith.constant dense<0.000000e+00> : vector<8xf32>
    %836 = vector.multi_reduction <add>, %835, %cst_263 [1] : vector<8x10xf32> to vector<8xf32>
    %837 = vector.shape_cast %836 : vector<8xf32> to vector<8x1xf32>
    %838 = vector.broadcast %837 : vector<8x1xf32> to vector<8x10xf32>
    %839 = arith.divf %835, %838 : vector<8x10xf32>
    %840 = vector.extract_strided_slice %809 {offsets = [0, 16], sizes = [10, 16], strides = [1, 1]} : vector<10x64xf32> to vector<10x16xf32>
    %cst_264 = arith.constant dense<0.000000e+00> : vector<8x16xf32>
    %841 = tpu.matmul %839, %840, %cst_264 {dimension_numbers = #tpu.dot_dimension_numbers<[1], [0], [0], [1], [0, 0, 1, 1], [], []>} : vector<8x10xf32>, vector<10x16xf32>, vector<8x16xf32> -> vector<8x16xf32>
    %842 = vector.extract_strided_slice %807 {offsets = [0, 32], sizes = [8, 16], strides = [1, 1]} : vector<8x64xf32> to vector<8x16xf32>
    %843 = vector.extract_strided_slice %808 {offsets = [0, 32], sizes = [10, 16], strides = [1, 1]} : vector<10x64xf32> to vector<10x16xf32>
    %cst_265 = arith.constant dense<0.000000e+00> : vector<8x10xf32>
    %844 = tpu.matmul %842, %843, %cst_265 {dimension_numbers = #tpu.dot_dimension_numbers<[1], [1], [0], [0], [0, 0, 1, 0], [], []>} : vector<8x16xf32>, vector<10x16xf32>, vector<8x10xf32> -> vector<8x10xf32>
    %cst_266 = arith.constant 2.500000e-01 : f32
    %845 = vector.broadcast %cst_266 : f32 to vector<8x10xf32>
    %846 = arith.mulf %844, %845 : vector<8x10xf32>
    %cst_267 = arith.constant dense<0xFF800000> : vector<8xf32>
    %847 = vector.multi_reduction <maximumf>, %846, %cst_267 [1] : vector<8x10xf32> to vector<8xf32>
    %848 = vector.shape_cast %847 : vector<8xf32> to vector<8x1xf32>
    %849 = vector.broadcast %848 : vector<8x1xf32> to vector<8x10xf32>
    %850 = arith.subf %846, %849 : vector<8x10xf32>
    %851 = math.exp %850 : vector<8x10xf32>
    %cst_268 = arith.constant dense<0.000000e+00> : vector<8xf32>
    %852 = vector.multi_reduction <add>, %851, %cst_268 [1] : vector<8x10xf32> to vector<8xf32>
    %853 = vector.shape_cast %852 : vector<8xf32> to vector<8x1xf32>
    %854 = vector.broadcast %853 : vector<8x1xf32> to vector<8x10xf32>
    %855 = arith.divf %851, %854 : vector<8x10xf32>
    %856 = vector.extract_strided_slice %809 {offsets = [0, 32], sizes = [10, 16], strides = [1, 1]} : vector<10x64xf32> to vector<10x16xf32>
    %cst_269 = arith.constant dense<0.000000e+00> : vector<8x16xf32>
    %857 = tpu.matmul %855, %856, %cst_269 {dimension_numbers = #tpu.dot_dimension_numbers<[1], [0], [0], [1], [0, 0, 1, 1], [], []>} : vector<8x10xf32>, vector<10x16xf32>, vector<8x16xf32> -> vector<8x16xf32>
    %858 = vector.extract_strided_slice %807 {offsets = [0, 48], sizes = [8, 16], strides = [1, 1]} : vector<8x64xf32> to vector<8x16xf32>
    %859 = vector.extract_strided_slice %808 {offsets = [0, 48], sizes = [10, 16], strides = [1, 1]} : vector<10x64xf32> to vector<10x16xf32>
    %cst_270 = arith.constant dense<0.000000e+00> : vector<8x10xf32>
    %860 = tpu.matmul %858, %859, %cst_270 {dimension_numbers = #tpu.dot_dimension_numbers<[1], [1], [0], [0], [0, 0, 1, 0], [], []>} : vector<8x16xf32>, vector<10x16xf32>, vector<8x10xf32> -> vector<8x10xf32>
    %cst_271 = arith.constant 2.500000e-01 : f32
    %861 = vector.broadcast %cst_271 : f32 to vector<8x10xf32>
    %862 = arith.mulf %860, %861 : vector<8x10xf32>
    %cst_272 = arith.constant dense<0xFF800000> : vector<8xf32>
    %863 = vector.multi_reduction <maximumf>, %862, %cst_272 [1] : vector<8x10xf32> to vector<8xf32>
    %864 = vector.shape_cast %863 : vector<8xf32> to vector<8x1xf32>
    %865 = vector.broadcast %864 : vector<8x1xf32> to vector<8x10xf32>
    %866 = arith.subf %862, %865 : vector<8x10xf32>
    %867 = math.exp %866 : vector<8x10xf32>
    %cst_273 = arith.constant dense<0.000000e+00> : vector<8xf32>
    %868 = vector.multi_reduction <add>, %867, %cst_273 [1] : vector<8x10xf32> to vector<8xf32>
    %869 = vector.shape_cast %868 : vector<8xf32> to vector<8x1xf32>
    %870 = vector.broadcast %869 : vector<8x1xf32> to vector<8x10xf32>
    %871 = arith.divf %867, %870 : vector<8x10xf32>
    %872 = vector.extract_strided_slice %809 {offsets = [0, 48], sizes = [10, 16], strides = [1, 1]} : vector<10x64xf32> to vector<10x16xf32>
    %cst_274 = arith.constant dense<0.000000e+00> : vector<8x16xf32>
    %873 = tpu.matmul %871, %872, %cst_274 {dimension_numbers = #tpu.dot_dimension_numbers<[1], [0], [0], [1], [0, 0, 1, 1], [], []>} : vector<8x10xf32>, vector<10x16xf32>, vector<8x16xf32> -> vector<8x16xf32>
    %874 = tpu.concatenate %825, %841, %857, %873 in 1 : vector<8x16xf32>, vector<8x16xf32>, vector<8x16xf32>, vector<8x16xf32> -> vector<8x64xf32>
    %875 = tpu.concatenate %806, %874 in 0 : vector<8x64xf32>, vector<8x64xf32> -> vector<16x64xf32>
    %c0_275 = arith.constant 0 : index
    %c0_276 = arith.constant 0 : index
    %c0_277 = arith.constant 0 : index
    %876 = vector.load %arg16[%c0_275, %c0_276, %c0_277] : memref<2x64x64xf32, #tpu.memory_space<vmem>>, vector<1x64x64xf32>
    %877 = vector.shape_cast %876 : vector<1x64x64xf32> to vector<64x64xf32>
    %cst_278 = arith.constant dense<0.000000e+00> : vector<16x64xf32>
    %878 = tpu.matmul %875, %877, %cst_278 {dimension_numbers = #tpu.dot_dimension_numbers<[1], [0], [0], [1], [0, 0, 1, 1], [], []>} : vector<16x64xf32>, vector<64x64xf32>, vector<16x64xf32> -> vector<16x64xf32>
    %879 = vector.extract_strided_slice %539 {offsets = [4, 0], sizes = [1, 64], strides = [1, 1]} : vector<13x192xf32> to vector<1x64xf32>
    %880 = vector.broadcast %879 : vector<1x64xf32> to vector<16x64xf32>
    %881 = arith.addf %878, %880 : vector<16x64xf32>
    %882 = arith.addf %724, %881 : vector<16x64xf32>
    %883 = vector.extract_strided_slice %539 {offsets = [9, 0], sizes = [1, 64], strides = [1, 1]} : vector<13x192xf32> to vector<1x64xf32>
    %884 = vector.extract_strided_slice %539 {offsets = [10, 0], sizes = [1, 64], strides = [1, 1]} : vector<13x192xf32> to vector<1x64xf32>
    %cst_279 = arith.constant dense<0.000000e+00> : vector<16xf32>
    %885 = vector.multi_reduction <add>, %882, %cst_279 [1] : vector<16x64xf32> to vector<16xf32>
    %886 = vector.shape_cast %885 : vector<16xf32> to vector<16x1xf32>
    %cst_280 = arith.constant 6.400000e+01 : f32
    %887 = vector.broadcast %cst_280 : f32 to vector<16x1xf32>
    %888 = arith.divf %886, %887 : vector<16x1xf32>
    %889 = vector.broadcast %888 : vector<16x1xf32> to vector<16x64xf32>
    %890 = arith.subf %882, %889 : vector<16x64xf32>
    %891 = arith.mulf %890, %890 : vector<16x64xf32>
    %cst_281 = arith.constant dense<0.000000e+00> : vector<16xf32>
    %892 = vector.multi_reduction <add>, %891, %cst_281 [1] : vector<16x64xf32> to vector<16xf32>
    %893 = vector.shape_cast %892 : vector<16xf32> to vector<16x1xf32>
    %cst_282 = arith.constant 6.400000e+01 : f32
    %894 = vector.broadcast %cst_282 : f32 to vector<16x1xf32>
    %895 = arith.divf %893, %894 : vector<16x1xf32>
    %896 = vector.broadcast %888 : vector<16x1xf32> to vector<16x64xf32>
    %897 = arith.subf %882, %896 : vector<16x64xf32>
    %cst_283 = arith.constant 9.99999974E-6 : f32
    %898 = vector.broadcast %cst_283 : f32 to vector<16x1xf32>
    %899 = arith.addf %895, %898 : vector<16x1xf32>
    %900 = math.rsqrt %899 : vector<16x1xf32>
    %901 = vector.broadcast %900 : vector<16x1xf32> to vector<16x64xf32>
    %902 = arith.mulf %897, %901 : vector<16x64xf32>
    %903 = vector.broadcast %883 : vector<1x64xf32> to vector<16x64xf32>
    %904 = arith.mulf %902, %903 : vector<16x64xf32>
    %905 = vector.broadcast %884 : vector<1x64xf32> to vector<16x64xf32>
    %906 = arith.addf %904, %905 : vector<16x64xf32>
    %c0_284 = arith.constant 0 : index
    %c0_285 = arith.constant 0 : index
    %c0_286 = arith.constant 0 : index
    %907 = vector.load %arg17[%c0_284, %c0_285, %c0_286] : memref<2x64x128xf32, #tpu.memory_space<vmem>>, vector<1x64x128xf32>
    %908 = vector.shape_cast %907 : vector<1x64x128xf32> to vector<64x128xf32>
    %cst_287 = arith.constant dense<0.000000e+00> : vector<16x128xf32>
    %909 = tpu.matmul %906, %908, %cst_287 {dimension_numbers = #tpu.dot_dimension_numbers<[1], [0], [0], [1], [0, 0, 1, 1], [], []>} : vector<16x64xf32>, vector<64x128xf32>, vector<16x128xf32> -> vector<16x128xf32>
    %910 = vector.extract_strided_slice %539 {offsets = [5, 0], sizes = [1, 128], strides = [1, 1]} : vector<13x192xf32> to vector<1x128xf32>
    %911 = vector.broadcast %910 : vector<1x128xf32> to vector<16x128xf32>
    %912 = arith.addf %909, %911 : vector<16x128xf32>
    %cst_288 = arith.constant 0.000000e+00 : f32
    %913 = vector.broadcast %cst_288 : f32 to vector<16x128xf32>
    %914 = arith.maximumf %912, %913 : vector<16x128xf32>
    %c0_289 = arith.constant 0 : index
    %c0_290 = arith.constant 0 : index
    %c0_291 = arith.constant 0 : index
    %915 = vector.load %arg18[%c0_289, %c0_290, %c0_291] : memref<2x128x64xf32, #tpu.memory_space<vmem>>, vector<1x128x64xf32>
    %916 = vector.shape_cast %915 : vector<1x128x64xf32> to vector<128x64xf32>
    %cst_292 = arith.constant dense<0.000000e+00> : vector<16x64xf32>
    %917 = tpu.matmul %914, %916, %cst_292 {dimension_numbers = #tpu.dot_dimension_numbers<[1], [0], [0], [1], [0, 0, 1, 1], [], []>} : vector<16x128xf32>, vector<128x64xf32>, vector<16x64xf32> -> vector<16x64xf32>
    %918 = vector.extract_strided_slice %539 {offsets = [6, 0], sizes = [1, 64], strides = [1, 1]} : vector<13x192xf32> to vector<1x64xf32>
    %919 = vector.broadcast %918 : vector<1x64xf32> to vector<16x64xf32>
    %920 = arith.addf %917, %919 : vector<16x64xf32>
    %921 = arith.addf %906, %920 : vector<16x64xf32>
    %922 = vector.extract_strided_slice %539 {offsets = [11, 0], sizes = [1, 64], strides = [1, 1]} : vector<13x192xf32> to vector<1x64xf32>
    %923 = vector.extract_strided_slice %539 {offsets = [12, 0], sizes = [1, 64], strides = [1, 1]} : vector<13x192xf32> to vector<1x64xf32>
    %cst_293 = arith.constant dense<0.000000e+00> : vector<16xf32>
    %924 = vector.multi_reduction <add>, %921, %cst_293 [1] : vector<16x64xf32> to vector<16xf32>
    %925 = vector.shape_cast %924 : vector<16xf32> to vector<16x1xf32>
    %cst_294 = arith.constant 6.400000e+01 : f32
    %926 = vector.broadcast %cst_294 : f32 to vector<16x1xf32>
    %927 = arith.divf %925, %926 : vector<16x1xf32>
    %928 = vector.broadcast %927 : vector<16x1xf32> to vector<16x64xf32>
    %929 = arith.subf %921, %928 : vector<16x64xf32>
    %930 = arith.mulf %929, %929 : vector<16x64xf32>
    %cst_295 = arith.constant dense<0.000000e+00> : vector<16xf32>
    %931 = vector.multi_reduction <add>, %930, %cst_295 [1] : vector<16x64xf32> to vector<16xf32>
    %932 = vector.shape_cast %931 : vector<16xf32> to vector<16x1xf32>
    %cst_296 = arith.constant 6.400000e+01 : f32
    %933 = vector.broadcast %cst_296 : f32 to vector<16x1xf32>
    %934 = arith.divf %932, %933 : vector<16x1xf32>
    %935 = vector.broadcast %927 : vector<16x1xf32> to vector<16x64xf32>
    %936 = arith.subf %921, %935 : vector<16x64xf32>
    %cst_297 = arith.constant 9.99999974E-6 : f32
    %937 = vector.broadcast %cst_297 : f32 to vector<16x1xf32>
    %938 = arith.addf %934, %937 : vector<16x1xf32>
    %939 = math.rsqrt %938 : vector<16x1xf32>
    %940 = vector.broadcast %939 : vector<16x1xf32> to vector<16x64xf32>
    %941 = arith.mulf %936, %940 : vector<16x64xf32>
    %942 = vector.broadcast %922 : vector<1x64xf32> to vector<16x64xf32>
    %943 = arith.mulf %941, %942 : vector<16x64xf32>
    %944 = vector.broadcast %923 : vector<1x64xf32> to vector<16x64xf32>
    %945 = arith.addf %943, %944 : vector<16x64xf32>
    %c1_298 = arith.constant 1 : index
    %c0_299 = arith.constant 0 : index
    %c0_300 = arith.constant 0 : index
    %946 = vector.load %arg19[%c1_298, %c0_299, %c0_300] : memref<2x13x192xf32, #tpu.memory_space<vmem>>, vector<1x13x192xf32>
    %947 = vector.shape_cast %946 : vector<1x13x192xf32> to vector<13x192xf32>
    %c1_301 = arith.constant 1 : index
    %c0_302 = arith.constant 0 : index
    %c0_303 = arith.constant 0 : index
    %948 = vector.load %arg12[%c1_301, %c0_302, %c0_303] : memref<2x64x192xf32, #tpu.memory_space<vmem>>, vector<1x64x192xf32>
    %949 = vector.shape_cast %948 : vector<1x64x192xf32> to vector<64x192xf32>
    %cst_304 = arith.constant dense<0.000000e+00> : vector<16x192xf32>
    %950 = tpu.matmul %945, %949, %cst_304 {dimension_numbers = #tpu.dot_dimension_numbers<[1], [0], [0], [1], [0, 0, 1, 1], [], []>} : vector<16x64xf32>, vector<64x192xf32>, vector<16x192xf32> -> vector<16x192xf32>
    %951 = vector.extract_strided_slice %947 {offsets = [0, 0], sizes = [1, 192], strides = [1, 1]} : vector<13x192xf32> to vector<1x192xf32>
    %952 = vector.broadcast %951 : vector<1x192xf32> to vector<16x192xf32>
    %953 = arith.addf %950, %952 : vector<16x192xf32>
    %954 = vector.extract_strided_slice %953 {offsets = [0, 0], sizes = [16, 64], strides = [1, 1]} : vector<16x192xf32> to vector<16x64xf32>
    %955 = vector.extract_strided_slice %953 {offsets = [0, 64], sizes = [16, 64], strides = [1, 1]} : vector<16x192xf32> to vector<16x64xf32>
    %956 = vector.extract_strided_slice %953 {offsets = [0, 128], sizes = [16, 64], strides = [1, 1]} : vector<16x192xf32> to vector<16x64xf32>
    %957 = vector.extract_strided_slice %954 {offsets = [0, 0], sizes = [8, 64], strides = [1, 1]} : vector<16x64xf32> to vector<8x64xf32>
    %958 = vector.extract_strided_slice %955 {offsets = [0, 0], sizes = [8, 64], strides = [1, 1]} : vector<16x64xf32> to vector<8x64xf32>
    %959 = vector.extract_strided_slice %956 {offsets = [0, 0], sizes = [8, 64], strides = [1, 1]} : vector<16x64xf32> to vector<8x64xf32>
    %960 = vector.extract_strided_slice %957 {offsets = [0, 0], sizes = [8, 16], strides = [1, 1]} : vector<8x64xf32> to vector<8x16xf32>
    %961 = vector.extract_strided_slice %958 {offsets = [0, 0], sizes = [8, 16], strides = [1, 1]} : vector<8x64xf32> to vector<8x16xf32>
    %cst_305 = arith.constant dense<0.000000e+00> : vector<8x8xf32>
    %962 = tpu.matmul %960, %961, %cst_305 {dimension_numbers = #tpu.dot_dimension_numbers<[1], [1], [0], [0], [0, 0, 1, 0], [], []>} : vector<8x16xf32>, vector<8x16xf32>, vector<8x8xf32> -> vector<8x8xf32>
    %cst_306 = arith.constant 2.500000e-01 : f32
    %963 = vector.broadcast %cst_306 : f32 to vector<8x8xf32>
    %964 = arith.mulf %962, %963 : vector<8x8xf32>
    %965 = arith.addf %964, %44 : vector<8x8xf32>
    %cst_307 = arith.constant dense<0xFF800000> : vector<8xf32>
    %966 = vector.multi_reduction <maximumf>, %965, %cst_307 [1] : vector<8x8xf32> to vector<8xf32>
    %967 = vector.shape_cast %966 : vector<8xf32> to vector<8x1xf32>
    %968 = vector.broadcast %967 : vector<8x1xf32> to vector<8x8xf32>
    %969 = arith.subf %965, %968 : vector<8x8xf32>
    %970 = math.exp %969 : vector<8x8xf32>
    %cst_308 = arith.constant dense<0.000000e+00> : vector<8xf32>
    %971 = vector.multi_reduction <add>, %970, %cst_308 [1] : vector<8x8xf32> to vector<8xf32>
    %972 = vector.shape_cast %971 : vector<8xf32> to vector<8x1xf32>
    %973 = vector.broadcast %972 : vector<8x1xf32> to vector<8x8xf32>
    %974 = arith.divf %970, %973 : vector<8x8xf32>
    %975 = vector.extract_strided_slice %959 {offsets = [0, 0], sizes = [8, 16], strides = [1, 1]} : vector<8x64xf32> to vector<8x16xf32>
    %cst_309 = arith.constant dense<0.000000e+00> : vector<8x16xf32>
    %976 = tpu.matmul %974, %975, %cst_309 {dimension_numbers = #tpu.dot_dimension_numbers<[1], [0], [0], [1], [0, 0, 1, 1], [], []>} : vector<8x8xf32>, vector<8x16xf32>, vector<8x16xf32> -> vector<8x16xf32>
    %977 = vector.extract_strided_slice %957 {offsets = [0, 16], sizes = [8, 16], strides = [1, 1]} : vector<8x64xf32> to vector<8x16xf32>
    %978 = vector.extract_strided_slice %958 {offsets = [0, 16], sizes = [8, 16], strides = [1, 1]} : vector<8x64xf32> to vector<8x16xf32>
    %cst_310 = arith.constant dense<0.000000e+00> : vector<8x8xf32>
    %979 = tpu.matmul %977, %978, %cst_310 {dimension_numbers = #tpu.dot_dimension_numbers<[1], [1], [0], [0], [0, 0, 1, 0], [], []>} : vector<8x16xf32>, vector<8x16xf32>, vector<8x8xf32> -> vector<8x8xf32>
    %cst_311 = arith.constant 2.500000e-01 : f32
    %980 = vector.broadcast %cst_311 : f32 to vector<8x8xf32>
    %981 = arith.mulf %979, %980 : vector<8x8xf32>
    %982 = arith.addf %981, %44 : vector<8x8xf32>
    %cst_312 = arith.constant dense<0xFF800000> : vector<8xf32>
    %983 = vector.multi_reduction <maximumf>, %982, %cst_312 [1] : vector<8x8xf32> to vector<8xf32>
    %984 = vector.shape_cast %983 : vector<8xf32> to vector<8x1xf32>
    %985 = vector.broadcast %984 : vector<8x1xf32> to vector<8x8xf32>
    %986 = arith.subf %982, %985 : vector<8x8xf32>
    %987 = math.exp %986 : vector<8x8xf32>
    %cst_313 = arith.constant dense<0.000000e+00> : vector<8xf32>
    %988 = vector.multi_reduction <add>, %987, %cst_313 [1] : vector<8x8xf32> to vector<8xf32>
    %989 = vector.shape_cast %988 : vector<8xf32> to vector<8x1xf32>
    %990 = vector.broadcast %989 : vector<8x1xf32> to vector<8x8xf32>
    %991 = arith.divf %987, %990 : vector<8x8xf32>
    %992 = vector.extract_strided_slice %959 {offsets = [0, 16], sizes = [8, 16], strides = [1, 1]} : vector<8x64xf32> to vector<8x16xf32>
    %cst_314 = arith.constant dense<0.000000e+00> : vector<8x16xf32>
    %993 = tpu.matmul %991, %992, %cst_314 {dimension_numbers = #tpu.dot_dimension_numbers<[1], [0], [0], [1], [0, 0, 1, 1], [], []>} : vector<8x8xf32>, vector<8x16xf32>, vector<8x16xf32> -> vector<8x16xf32>
    %994 = vector.extract_strided_slice %957 {offsets = [0, 32], sizes = [8, 16], strides = [1, 1]} : vector<8x64xf32> to vector<8x16xf32>
    %995 = vector.extract_strided_slice %958 {offsets = [0, 32], sizes = [8, 16], strides = [1, 1]} : vector<8x64xf32> to vector<8x16xf32>
    %cst_315 = arith.constant dense<0.000000e+00> : vector<8x8xf32>
    %996 = tpu.matmul %994, %995, %cst_315 {dimension_numbers = #tpu.dot_dimension_numbers<[1], [1], [0], [0], [0, 0, 1, 0], [], []>} : vector<8x16xf32>, vector<8x16xf32>, vector<8x8xf32> -> vector<8x8xf32>
    %cst_316 = arith.constant 2.500000e-01 : f32
    %997 = vector.broadcast %cst_316 : f32 to vector<8x8xf32>
    %998 = arith.mulf %996, %997 : vector<8x8xf32>
    %999 = arith.addf %998, %44 : vector<8x8xf32>
    %cst_317 = arith.constant dense<0xFF800000> : vector<8xf32>
    %1000 = vector.multi_reduction <maximumf>, %999, %cst_317 [1] : vector<8x8xf32> to vector<8xf32>
    %1001 = vector.shape_cast %1000 : vector<8xf32> to vector<8x1xf32>
    %1002 = vector.broadcast %1001 : vector<8x1xf32> to vector<8x8xf32>
    %1003 = arith.subf %999, %1002 : vector<8x8xf32>
    %1004 = math.exp %1003 : vector<8x8xf32>
    %cst_318 = arith.constant dense<0.000000e+00> : vector<8xf32>
    %1005 = vector.multi_reduction <add>, %1004, %cst_318 [1] : vector<8x8xf32> to vector<8xf32>
    %1006 = vector.shape_cast %1005 : vector<8xf32> to vector<8x1xf32>
    %1007 = vector.broadcast %1006 : vector<8x1xf32> to vector<8x8xf32>
    %1008 = arith.divf %1004, %1007 : vector<8x8xf32>
    %1009 = vector.extract_strided_slice %959 {offsets = [0, 32], sizes = [8, 16], strides = [1, 1]} : vector<8x64xf32> to vector<8x16xf32>
    %cst_319 = arith.constant dense<0.000000e+00> : vector<8x16xf32>
    %1010 = tpu.matmul %1008, %1009, %cst_319 {dimension_numbers = #tpu.dot_dimension_numbers<[1], [0], [0], [1], [0, 0, 1, 1], [], []>} : vector<8x8xf32>, vector<8x16xf32>, vector<8x16xf32> -> vector<8x16xf32>
    %1011 = vector.extract_strided_slice %957 {offsets = [0, 48], sizes = [8, 16], strides = [1, 1]} : vector<8x64xf32> to vector<8x16xf32>
    %1012 = vector.extract_strided_slice %958 {offsets = [0, 48], sizes = [8, 16], strides = [1, 1]} : vector<8x64xf32> to vector<8x16xf32>
    %cst_320 = arith.constant dense<0.000000e+00> : vector<8x8xf32>
    %1013 = tpu.matmul %1011, %1012, %cst_320 {dimension_numbers = #tpu.dot_dimension_numbers<[1], [1], [0], [0], [0, 0, 1, 0], [], []>} : vector<8x16xf32>, vector<8x16xf32>, vector<8x8xf32> -> vector<8x8xf32>
    %cst_321 = arith.constant 2.500000e-01 : f32
    %1014 = vector.broadcast %cst_321 : f32 to vector<8x8xf32>
    %1015 = arith.mulf %1013, %1014 : vector<8x8xf32>
    %1016 = arith.addf %1015, %44 : vector<8x8xf32>
    %cst_322 = arith.constant dense<0xFF800000> : vector<8xf32>
    %1017 = vector.multi_reduction <maximumf>, %1016, %cst_322 [1] : vector<8x8xf32> to vector<8xf32>
    %1018 = vector.shape_cast %1017 : vector<8xf32> to vector<8x1xf32>
    %1019 = vector.broadcast %1018 : vector<8x1xf32> to vector<8x8xf32>
    %1020 = arith.subf %1016, %1019 : vector<8x8xf32>
    %1021 = math.exp %1020 : vector<8x8xf32>
    %cst_323 = arith.constant dense<0.000000e+00> : vector<8xf32>
    %1022 = vector.multi_reduction <add>, %1021, %cst_323 [1] : vector<8x8xf32> to vector<8xf32>
    %1023 = vector.shape_cast %1022 : vector<8xf32> to vector<8x1xf32>
    %1024 = vector.broadcast %1023 : vector<8x1xf32> to vector<8x8xf32>
    %1025 = arith.divf %1021, %1024 : vector<8x8xf32>
    %1026 = vector.extract_strided_slice %959 {offsets = [0, 48], sizes = [8, 16], strides = [1, 1]} : vector<8x64xf32> to vector<8x16xf32>
    %cst_324 = arith.constant dense<0.000000e+00> : vector<8x16xf32>
    %1027 = tpu.matmul %1025, %1026, %cst_324 {dimension_numbers = #tpu.dot_dimension_numbers<[1], [0], [0], [1], [0, 0, 1, 1], [], []>} : vector<8x8xf32>, vector<8x16xf32>, vector<8x16xf32> -> vector<8x16xf32>
    %1028 = tpu.concatenate %976, %993, %1010, %1027 in 1 : vector<8x16xf32>, vector<8x16xf32>, vector<8x16xf32>, vector<8x16xf32> -> vector<8x64xf32>
    %1029 = vector.extract_strided_slice %954 {offsets = [8, 0], sizes = [8, 64], strides = [1, 1]} : vector<16x64xf32> to vector<8x64xf32>
    %1030 = vector.extract_strided_slice %955 {offsets = [8, 0], sizes = [8, 64], strides = [1, 1]} : vector<16x64xf32> to vector<8x64xf32>
    %1031 = vector.extract_strided_slice %956 {offsets = [8, 0], sizes = [8, 64], strides = [1, 1]} : vector<16x64xf32> to vector<8x64xf32>
    %1032 = vector.extract_strided_slice %1029 {offsets = [0, 0], sizes = [8, 16], strides = [1, 1]} : vector<8x64xf32> to vector<8x16xf32>
    %1033 = vector.extract_strided_slice %1030 {offsets = [0, 0], sizes = [8, 16], strides = [1, 1]} : vector<8x64xf32> to vector<8x16xf32>
    %cst_325 = arith.constant dense<0.000000e+00> : vector<8x8xf32>
    %1034 = tpu.matmul %1032, %1033, %cst_325 {dimension_numbers = #tpu.dot_dimension_numbers<[1], [1], [0], [0], [0, 0, 1, 0], [], []>} : vector<8x16xf32>, vector<8x16xf32>, vector<8x8xf32> -> vector<8x8xf32>
    %cst_326 = arith.constant 2.500000e-01 : f32
    %1035 = vector.broadcast %cst_326 : f32 to vector<8x8xf32>
    %1036 = arith.mulf %1034, %1035 : vector<8x8xf32>
    %1037 = arith.addf %1036, %44 : vector<8x8xf32>
    %cst_327 = arith.constant dense<0xFF800000> : vector<8xf32>
    %1038 = vector.multi_reduction <maximumf>, %1037, %cst_327 [1] : vector<8x8xf32> to vector<8xf32>
    %1039 = vector.shape_cast %1038 : vector<8xf32> to vector<8x1xf32>
    %1040 = vector.broadcast %1039 : vector<8x1xf32> to vector<8x8xf32>
    %1041 = arith.subf %1037, %1040 : vector<8x8xf32>
    %1042 = math.exp %1041 : vector<8x8xf32>
    %cst_328 = arith.constant dense<0.000000e+00> : vector<8xf32>
    %1043 = vector.multi_reduction <add>, %1042, %cst_328 [1] : vector<8x8xf32> to vector<8xf32>
    %1044 = vector.shape_cast %1043 : vector<8xf32> to vector<8x1xf32>
    %1045 = vector.broadcast %1044 : vector<8x1xf32> to vector<8x8xf32>
    %1046 = arith.divf %1042, %1045 : vector<8x8xf32>
    %1047 = vector.extract_strided_slice %1031 {offsets = [0, 0], sizes = [8, 16], strides = [1, 1]} : vector<8x64xf32> to vector<8x16xf32>
    %cst_329 = arith.constant dense<0.000000e+00> : vector<8x16xf32>
    %1048 = tpu.matmul %1046, %1047, %cst_329 {dimension_numbers = #tpu.dot_dimension_numbers<[1], [0], [0], [1], [0, 0, 1, 1], [], []>} : vector<8x8xf32>, vector<8x16xf32>, vector<8x16xf32> -> vector<8x16xf32>
    %1049 = vector.extract_strided_slice %1029 {offsets = [0, 16], sizes = [8, 16], strides = [1, 1]} : vector<8x64xf32> to vector<8x16xf32>
    %1050 = vector.extract_strided_slice %1030 {offsets = [0, 16], sizes = [8, 16], strides = [1, 1]} : vector<8x64xf32> to vector<8x16xf32>
    %cst_330 = arith.constant dense<0.000000e+00> : vector<8x8xf32>
    %1051 = tpu.matmul %1049, %1050, %cst_330 {dimension_numbers = #tpu.dot_dimension_numbers<[1], [1], [0], [0], [0, 0, 1, 0], [], []>} : vector<8x16xf32>, vector<8x16xf32>, vector<8x8xf32> -> vector<8x8xf32>
    %cst_331 = arith.constant 2.500000e-01 : f32
    %1052 = vector.broadcast %cst_331 : f32 to vector<8x8xf32>
    %1053 = arith.mulf %1051, %1052 : vector<8x8xf32>
    %1054 = arith.addf %1053, %44 : vector<8x8xf32>
    %cst_332 = arith.constant dense<0xFF800000> : vector<8xf32>
    %1055 = vector.multi_reduction <maximumf>, %1054, %cst_332 [1] : vector<8x8xf32> to vector<8xf32>
    %1056 = vector.shape_cast %1055 : vector<8xf32> to vector<8x1xf32>
    %1057 = vector.broadcast %1056 : vector<8x1xf32> to vector<8x8xf32>
    %1058 = arith.subf %1054, %1057 : vector<8x8xf32>
    %1059 = math.exp %1058 : vector<8x8xf32>
    %cst_333 = arith.constant dense<0.000000e+00> : vector<8xf32>
    %1060 = vector.multi_reduction <add>, %1059, %cst_333 [1] : vector<8x8xf32> to vector<8xf32>
    %1061 = vector.shape_cast %1060 : vector<8xf32> to vector<8x1xf32>
    %1062 = vector.broadcast %1061 : vector<8x1xf32> to vector<8x8xf32>
    %1063 = arith.divf %1059, %1062 : vector<8x8xf32>
    %1064 = vector.extract_strided_slice %1031 {offsets = [0, 16], sizes = [8, 16], strides = [1, 1]} : vector<8x64xf32> to vector<8x16xf32>
    %cst_334 = arith.constant dense<0.000000e+00> : vector<8x16xf32>
    %1065 = tpu.matmul %1063, %1064, %cst_334 {dimension_numbers = #tpu.dot_dimension_numbers<[1], [0], [0], [1], [0, 0, 1, 1], [], []>} : vector<8x8xf32>, vector<8x16xf32>, vector<8x16xf32> -> vector<8x16xf32>
    %1066 = vector.extract_strided_slice %1029 {offsets = [0, 32], sizes = [8, 16], strides = [1, 1]} : vector<8x64xf32> to vector<8x16xf32>
    %1067 = vector.extract_strided_slice %1030 {offsets = [0, 32], sizes = [8, 16], strides = [1, 1]} : vector<8x64xf32> to vector<8x16xf32>
    %cst_335 = arith.constant dense<0.000000e+00> : vector<8x8xf32>
    %1068 = tpu.matmul %1066, %1067, %cst_335 {dimension_numbers = #tpu.dot_dimension_numbers<[1], [1], [0], [0], [0, 0, 1, 0], [], []>} : vector<8x16xf32>, vector<8x16xf32>, vector<8x8xf32> -> vector<8x8xf32>
    %cst_336 = arith.constant 2.500000e-01 : f32
    %1069 = vector.broadcast %cst_336 : f32 to vector<8x8xf32>
    %1070 = arith.mulf %1068, %1069 : vector<8x8xf32>
    %1071 = arith.addf %1070, %44 : vector<8x8xf32>
    %cst_337 = arith.constant dense<0xFF800000> : vector<8xf32>
    %1072 = vector.multi_reduction <maximumf>, %1071, %cst_337 [1] : vector<8x8xf32> to vector<8xf32>
    %1073 = vector.shape_cast %1072 : vector<8xf32> to vector<8x1xf32>
    %1074 = vector.broadcast %1073 : vector<8x1xf32> to vector<8x8xf32>
    %1075 = arith.subf %1071, %1074 : vector<8x8xf32>
    %1076 = math.exp %1075 : vector<8x8xf32>
    %cst_338 = arith.constant dense<0.000000e+00> : vector<8xf32>
    %1077 = vector.multi_reduction <add>, %1076, %cst_338 [1] : vector<8x8xf32> to vector<8xf32>
    %1078 = vector.shape_cast %1077 : vector<8xf32> to vector<8x1xf32>
    %1079 = vector.broadcast %1078 : vector<8x1xf32> to vector<8x8xf32>
    %1080 = arith.divf %1076, %1079 : vector<8x8xf32>
    %1081 = vector.extract_strided_slice %1031 {offsets = [0, 32], sizes = [8, 16], strides = [1, 1]} : vector<8x64xf32> to vector<8x16xf32>
    %cst_339 = arith.constant dense<0.000000e+00> : vector<8x16xf32>
    %1082 = tpu.matmul %1080, %1081, %cst_339 {dimension_numbers = #tpu.dot_dimension_numbers<[1], [0], [0], [1], [0, 0, 1, 1], [], []>} : vector<8x8xf32>, vector<8x16xf32>, vector<8x16xf32> -> vector<8x16xf32>
    %1083 = vector.extract_strided_slice %1029 {offsets = [0, 48], sizes = [8, 16], strides = [1, 1]} : vector<8x64xf32> to vector<8x16xf32>
    %1084 = vector.extract_strided_slice %1030 {offsets = [0, 48], sizes = [8, 16], strides = [1, 1]} : vector<8x64xf32> to vector<8x16xf32>
    %cst_340 = arith.constant dense<0.000000e+00> : vector<8x8xf32>
    %1085 = tpu.matmul %1083, %1084, %cst_340 {dimension_numbers = #tpu.dot_dimension_numbers<[1], [1], [0], [0], [0, 0, 1, 0], [], []>} : vector<8x16xf32>, vector<8x16xf32>, vector<8x8xf32> -> vector<8x8xf32>
    %cst_341 = arith.constant 2.500000e-01 : f32
    %1086 = vector.broadcast %cst_341 : f32 to vector<8x8xf32>
    %1087 = arith.mulf %1085, %1086 : vector<8x8xf32>
    %1088 = arith.addf %1087, %44 : vector<8x8xf32>
    %cst_342 = arith.constant dense<0xFF800000> : vector<8xf32>
    %1089 = vector.multi_reduction <maximumf>, %1088, %cst_342 [1] : vector<8x8xf32> to vector<8xf32>
    %1090 = vector.shape_cast %1089 : vector<8xf32> to vector<8x1xf32>
    %1091 = vector.broadcast %1090 : vector<8x1xf32> to vector<8x8xf32>
    %1092 = arith.subf %1088, %1091 : vector<8x8xf32>
    %1093 = math.exp %1092 : vector<8x8xf32>
    %cst_343 = arith.constant dense<0.000000e+00> : vector<8xf32>
    %1094 = vector.multi_reduction <add>, %1093, %cst_343 [1] : vector<8x8xf32> to vector<8xf32>
    %1095 = vector.shape_cast %1094 : vector<8xf32> to vector<8x1xf32>
    %1096 = vector.broadcast %1095 : vector<8x1xf32> to vector<8x8xf32>
    %1097 = arith.divf %1093, %1096 : vector<8x8xf32>
    %1098 = vector.extract_strided_slice %1031 {offsets = [0, 48], sizes = [8, 16], strides = [1, 1]} : vector<8x64xf32> to vector<8x16xf32>
    %cst_344 = arith.constant dense<0.000000e+00> : vector<8x16xf32>
    %1099 = tpu.matmul %1097, %1098, %cst_344 {dimension_numbers = #tpu.dot_dimension_numbers<[1], [0], [0], [1], [0, 0, 1, 1], [], []>} : vector<8x8xf32>, vector<8x16xf32>, vector<8x16xf32> -> vector<8x16xf32>
    %1100 = tpu.concatenate %1048, %1065, %1082, %1099 in 1 : vector<8x16xf32>, vector<8x16xf32>, vector<8x16xf32>, vector<8x16xf32> -> vector<8x64xf32>
    %1101 = tpu.concatenate %1028, %1100 in 0 : vector<8x64xf32>, vector<8x64xf32> -> vector<16x64xf32>
    %c1_345 = arith.constant 1 : index
    %c0_346 = arith.constant 0 : index
    %c0_347 = arith.constant 0 : index
    %1102 = vector.load %arg13[%c1_345, %c0_346, %c0_347] : memref<2x64x64xf32, #tpu.memory_space<vmem>>, vector<1x64x64xf32>
    %1103 = vector.shape_cast %1102 : vector<1x64x64xf32> to vector<64x64xf32>
    %cst_348 = arith.constant dense<0.000000e+00> : vector<16x64xf32>
    %1104 = tpu.matmul %1101, %1103, %cst_348 {dimension_numbers = #tpu.dot_dimension_numbers<[1], [0], [0], [1], [0, 0, 1, 1], [], []>} : vector<16x64xf32>, vector<64x64xf32>, vector<16x64xf32> -> vector<16x64xf32>
    %1105 = vector.extract_strided_slice %947 {offsets = [1, 0], sizes = [1, 64], strides = [1, 1]} : vector<13x192xf32> to vector<1x64xf32>
    %1106 = vector.broadcast %1105 : vector<1x64xf32> to vector<16x64xf32>
    %1107 = arith.addf %1104, %1106 : vector<16x64xf32>
    %1108 = arith.addf %945, %1107 : vector<16x64xf32>
    %1109 = vector.extract_strided_slice %947 {offsets = [7, 0], sizes = [1, 64], strides = [1, 1]} : vector<13x192xf32> to vector<1x64xf32>
    %1110 = vector.extract_strided_slice %947 {offsets = [8, 0], sizes = [1, 64], strides = [1, 1]} : vector<13x192xf32> to vector<1x64xf32>
    %cst_349 = arith.constant dense<0.000000e+00> : vector<16xf32>
    %1111 = vector.multi_reduction <add>, %1108, %cst_349 [1] : vector<16x64xf32> to vector<16xf32>
    %1112 = vector.shape_cast %1111 : vector<16xf32> to vector<16x1xf32>
    %cst_350 = arith.constant 6.400000e+01 : f32
    %1113 = vector.broadcast %cst_350 : f32 to vector<16x1xf32>
    %1114 = arith.divf %1112, %1113 : vector<16x1xf32>
    %1115 = vector.broadcast %1114 : vector<16x1xf32> to vector<16x64xf32>
    %1116 = arith.subf %1108, %1115 : vector<16x64xf32>
    %1117 = arith.mulf %1116, %1116 : vector<16x64xf32>
    %cst_351 = arith.constant dense<0.000000e+00> : vector<16xf32>
    %1118 = vector.multi_reduction <add>, %1117, %cst_351 [1] : vector<16x64xf32> to vector<16xf32>
    %1119 = vector.shape_cast %1118 : vector<16xf32> to vector<16x1xf32>
    %cst_352 = arith.constant 6.400000e+01 : f32
    %1120 = vector.broadcast %cst_352 : f32 to vector<16x1xf32>
    %1121 = arith.divf %1119, %1120 : vector<16x1xf32>
    %1122 = vector.broadcast %1114 : vector<16x1xf32> to vector<16x64xf32>
    %1123 = arith.subf %1108, %1122 : vector<16x64xf32>
    %cst_353 = arith.constant 9.99999974E-6 : f32
    %1124 = vector.broadcast %cst_353 : f32 to vector<16x1xf32>
    %1125 = arith.addf %1121, %1124 : vector<16x1xf32>
    %1126 = math.rsqrt %1125 : vector<16x1xf32>
    %1127 = vector.broadcast %1126 : vector<16x1xf32> to vector<16x64xf32>
    %1128 = arith.mulf %1123, %1127 : vector<16x64xf32>
    %1129 = vector.broadcast %1109 : vector<1x64xf32> to vector<16x64xf32>
    %1130 = arith.mulf %1128, %1129 : vector<16x64xf32>
    %1131 = vector.broadcast %1110 : vector<1x64xf32> to vector<16x64xf32>
    %1132 = arith.addf %1130, %1131 : vector<16x64xf32>
    %c1_354 = arith.constant 1 : index
    %c0_355 = arith.constant 0 : index
    %c0_356 = arith.constant 0 : index
    %1133 = vector.load %arg14[%c1_354, %c0_355, %c0_356] : memref<2x64x64xf32, #tpu.memory_space<vmem>>, vector<1x64x64xf32>
    %1134 = vector.shape_cast %1133 : vector<1x64x64xf32> to vector<64x64xf32>
    %cst_357 = arith.constant dense<0.000000e+00> : vector<16x64xf32>
    %1135 = tpu.matmul %1132, %1134, %cst_357 {dimension_numbers = #tpu.dot_dimension_numbers<[1], [0], [0], [1], [0, 0, 1, 1], [], []>} : vector<16x64xf32>, vector<64x64xf32>, vector<16x64xf32> -> vector<16x64xf32>
    %1136 = vector.extract_strided_slice %947 {offsets = [2, 0], sizes = [1, 64], strides = [1, 1]} : vector<13x192xf32> to vector<1x64xf32>
    %1137 = vector.broadcast %1136 : vector<1x64xf32> to vector<16x64xf32>
    %1138 = arith.addf %1135, %1137 : vector<16x64xf32>
    %c1_358 = arith.constant 1 : index
    %c0_359 = arith.constant 0 : index
    %c0_360 = arith.constant 0 : index
    %1139 = vector.load %arg15[%c1_358, %c0_359, %c0_360] : memref<2x64x128xf32, #tpu.memory_space<vmem>>, vector<1x64x128xf32>
    %1140 = vector.shape_cast %1139 : vector<1x64x128xf32> to vector<64x128xf32>
    %cst_361 = arith.constant dense<0.000000e+00> : vector<20x128xf32>
    %1141 = tpu.matmul %537, %1140, %cst_361 {dimension_numbers = #tpu.dot_dimension_numbers<[1], [0], [0], [1], [0, 0, 1, 1], [], []>} : vector<20x64xf32>, vector<64x128xf32>, vector<20x128xf32> -> vector<20x128xf32>
    %1142 = vector.extract_strided_slice %947 {offsets = [3, 0], sizes = [1, 128], strides = [1, 1]} : vector<13x192xf32> to vector<1x128xf32>
    %1143 = vector.broadcast %1142 : vector<1x128xf32> to vector<20x128xf32>
    %1144 = arith.addf %1141, %1143 : vector<20x128xf32>
    %1145 = vector.extract_strided_slice %1144 {offsets = [0, 0], sizes = [20, 64], strides = [1, 1]} : vector<20x128xf32> to vector<20x64xf32>
    %1146 = vector.extract_strided_slice %1144 {offsets = [0, 64], sizes = [20, 64], strides = [1, 1]} : vector<20x128xf32> to vector<20x64xf32>
    %1147 = vector.extract_strided_slice %1138 {offsets = [0, 0], sizes = [8, 64], strides = [1, 1]} : vector<16x64xf32> to vector<8x64xf32>
    %1148 = vector.extract_strided_slice %1145 {offsets = [0, 0], sizes = [10, 64], strides = [1, 1]} : vector<20x64xf32> to vector<10x64xf32>
    %1149 = vector.extract_strided_slice %1146 {offsets = [0, 0], sizes = [10, 64], strides = [1, 1]} : vector<20x64xf32> to vector<10x64xf32>
    %1150 = vector.extract_strided_slice %1147 {offsets = [0, 0], sizes = [8, 16], strides = [1, 1]} : vector<8x64xf32> to vector<8x16xf32>
    %1151 = vector.extract_strided_slice %1148 {offsets = [0, 0], sizes = [10, 16], strides = [1, 1]} : vector<10x64xf32> to vector<10x16xf32>
    %cst_362 = arith.constant dense<0.000000e+00> : vector<8x10xf32>
    %1152 = tpu.matmul %1150, %1151, %cst_362 {dimension_numbers = #tpu.dot_dimension_numbers<[1], [1], [0], [0], [0, 0, 1, 0], [], []>} : vector<8x16xf32>, vector<10x16xf32>, vector<8x10xf32> -> vector<8x10xf32>
    %cst_363 = arith.constant 2.500000e-01 : f32
    %1153 = vector.broadcast %cst_363 : f32 to vector<8x10xf32>
    %1154 = arith.mulf %1152, %1153 : vector<8x10xf32>
    %cst_364 = arith.constant dense<0xFF800000> : vector<8xf32>
    %1155 = vector.multi_reduction <maximumf>, %1154, %cst_364 [1] : vector<8x10xf32> to vector<8xf32>
    %1156 = vector.shape_cast %1155 : vector<8xf32> to vector<8x1xf32>
    %1157 = vector.broadcast %1156 : vector<8x1xf32> to vector<8x10xf32>
    %1158 = arith.subf %1154, %1157 : vector<8x10xf32>
    %1159 = math.exp %1158 : vector<8x10xf32>
    %cst_365 = arith.constant dense<0.000000e+00> : vector<8xf32>
    %1160 = vector.multi_reduction <add>, %1159, %cst_365 [1] : vector<8x10xf32> to vector<8xf32>
    %1161 = vector.shape_cast %1160 : vector<8xf32> to vector<8x1xf32>
    %1162 = vector.broadcast %1161 : vector<8x1xf32> to vector<8x10xf32>
    %1163 = arith.divf %1159, %1162 : vector<8x10xf32>
    %1164 = vector.extract_strided_slice %1149 {offsets = [0, 0], sizes = [10, 16], strides = [1, 1]} : vector<10x64xf32> to vector<10x16xf32>
    %cst_366 = arith.constant dense<0.000000e+00> : vector<8x16xf32>
    %1165 = tpu.matmul %1163, %1164, %cst_366 {dimension_numbers = #tpu.dot_dimension_numbers<[1], [0], [0], [1], [0, 0, 1, 1], [], []>} : vector<8x10xf32>, vector<10x16xf32>, vector<8x16xf32> -> vector<8x16xf32>
    %1166 = vector.extract_strided_slice %1147 {offsets = [0, 16], sizes = [8, 16], strides = [1, 1]} : vector<8x64xf32> to vector<8x16xf32>
    %1167 = vector.extract_strided_slice %1148 {offsets = [0, 16], sizes = [10, 16], strides = [1, 1]} : vector<10x64xf32> to vector<10x16xf32>
    %cst_367 = arith.constant dense<0.000000e+00> : vector<8x10xf32>
    %1168 = tpu.matmul %1166, %1167, %cst_367 {dimension_numbers = #tpu.dot_dimension_numbers<[1], [1], [0], [0], [0, 0, 1, 0], [], []>} : vector<8x16xf32>, vector<10x16xf32>, vector<8x10xf32> -> vector<8x10xf32>
    %cst_368 = arith.constant 2.500000e-01 : f32
    %1169 = vector.broadcast %cst_368 : f32 to vector<8x10xf32>
    %1170 = arith.mulf %1168, %1169 : vector<8x10xf32>
    %cst_369 = arith.constant dense<0xFF800000> : vector<8xf32>
    %1171 = vector.multi_reduction <maximumf>, %1170, %cst_369 [1] : vector<8x10xf32> to vector<8xf32>
    %1172 = vector.shape_cast %1171 : vector<8xf32> to vector<8x1xf32>
    %1173 = vector.broadcast %1172 : vector<8x1xf32> to vector<8x10xf32>
    %1174 = arith.subf %1170, %1173 : vector<8x10xf32>
    %1175 = math.exp %1174 : vector<8x10xf32>
    %cst_370 = arith.constant dense<0.000000e+00> : vector<8xf32>
    %1176 = vector.multi_reduction <add>, %1175, %cst_370 [1] : vector<8x10xf32> to vector<8xf32>
    %1177 = vector.shape_cast %1176 : vector<8xf32> to vector<8x1xf32>
    %1178 = vector.broadcast %1177 : vector<8x1xf32> to vector<8x10xf32>
    %1179 = arith.divf %1175, %1178 : vector<8x10xf32>
    %1180 = vector.extract_strided_slice %1149 {offsets = [0, 16], sizes = [10, 16], strides = [1, 1]} : vector<10x64xf32> to vector<10x16xf32>
    %cst_371 = arith.constant dense<0.000000e+00> : vector<8x16xf32>
    %1181 = tpu.matmul %1179, %1180, %cst_371 {dimension_numbers = #tpu.dot_dimension_numbers<[1], [0], [0], [1], [0, 0, 1, 1], [], []>} : vector<8x10xf32>, vector<10x16xf32>, vector<8x16xf32> -> vector<8x16xf32>
    %1182 = vector.extract_strided_slice %1147 {offsets = [0, 32], sizes = [8, 16], strides = [1, 1]} : vector<8x64xf32> to vector<8x16xf32>
    %1183 = vector.extract_strided_slice %1148 {offsets = [0, 32], sizes = [10, 16], strides = [1, 1]} : vector<10x64xf32> to vector<10x16xf32>
    %cst_372 = arith.constant dense<0.000000e+00> : vector<8x10xf32>
    %1184 = tpu.matmul %1182, %1183, %cst_372 {dimension_numbers = #tpu.dot_dimension_numbers<[1], [1], [0], [0], [0, 0, 1, 0], [], []>} : vector<8x16xf32>, vector<10x16xf32>, vector<8x10xf32> -> vector<8x10xf32>
    %cst_373 = arith.constant 2.500000e-01 : f32
    %1185 = vector.broadcast %cst_373 : f32 to vector<8x10xf32>
    %1186 = arith.mulf %1184, %1185 : vector<8x10xf32>
    %cst_374 = arith.constant dense<0xFF800000> : vector<8xf32>
    %1187 = vector.multi_reduction <maximumf>, %1186, %cst_374 [1] : vector<8x10xf32> to vector<8xf32>
    %1188 = vector.shape_cast %1187 : vector<8xf32> to vector<8x1xf32>
    %1189 = vector.broadcast %1188 : vector<8x1xf32> to vector<8x10xf32>
    %1190 = arith.subf %1186, %1189 : vector<8x10xf32>
    %1191 = math.exp %1190 : vector<8x10xf32>
    %cst_375 = arith.constant dense<0.000000e+00> : vector<8xf32>
    %1192 = vector.multi_reduction <add>, %1191, %cst_375 [1] : vector<8x10xf32> to vector<8xf32>
    %1193 = vector.shape_cast %1192 : vector<8xf32> to vector<8x1xf32>
    %1194 = vector.broadcast %1193 : vector<8x1xf32> to vector<8x10xf32>
    %1195 = arith.divf %1191, %1194 : vector<8x10xf32>
    %1196 = vector.extract_strided_slice %1149 {offsets = [0, 32], sizes = [10, 16], strides = [1, 1]} : vector<10x64xf32> to vector<10x16xf32>
    %cst_376 = arith.constant dense<0.000000e+00> : vector<8x16xf32>
    %1197 = tpu.matmul %1195, %1196, %cst_376 {dimension_numbers = #tpu.dot_dimension_numbers<[1], [0], [0], [1], [0, 0, 1, 1], [], []>} : vector<8x10xf32>, vector<10x16xf32>, vector<8x16xf32> -> vector<8x16xf32>
    %1198 = vector.extract_strided_slice %1147 {offsets = [0, 48], sizes = [8, 16], strides = [1, 1]} : vector<8x64xf32> to vector<8x16xf32>
    %1199 = vector.extract_strided_slice %1148 {offsets = [0, 48], sizes = [10, 16], strides = [1, 1]} : vector<10x64xf32> to vector<10x16xf32>
    %cst_377 = arith.constant dense<0.000000e+00> : vector<8x10xf32>
    %1200 = tpu.matmul %1198, %1199, %cst_377 {dimension_numbers = #tpu.dot_dimension_numbers<[1], [1], [0], [0], [0, 0, 1, 0], [], []>} : vector<8x16xf32>, vector<10x16xf32>, vector<8x10xf32> -> vector<8x10xf32>
    %cst_378 = arith.constant 2.500000e-01 : f32
    %1201 = vector.broadcast %cst_378 : f32 to vector<8x10xf32>
    %1202 = arith.mulf %1200, %1201 : vector<8x10xf32>
    %cst_379 = arith.constant dense<0xFF800000> : vector<8xf32>
    %1203 = vector.multi_reduction <maximumf>, %1202, %cst_379 [1] : vector<8x10xf32> to vector<8xf32>
    %1204 = vector.shape_cast %1203 : vector<8xf32> to vector<8x1xf32>
    %1205 = vector.broadcast %1204 : vector<8x1xf32> to vector<8x10xf32>
    %1206 = arith.subf %1202, %1205 : vector<8x10xf32>
    %1207 = math.exp %1206 : vector<8x10xf32>
    %cst_380 = arith.constant dense<0.000000e+00> : vector<8xf32>
    %1208 = vector.multi_reduction <add>, %1207, %cst_380 [1] : vector<8x10xf32> to vector<8xf32>
    %1209 = vector.shape_cast %1208 : vector<8xf32> to vector<8x1xf32>
    %1210 = vector.broadcast %1209 : vector<8x1xf32> to vector<8x10xf32>
    %1211 = arith.divf %1207, %1210 : vector<8x10xf32>
    %1212 = vector.extract_strided_slice %1149 {offsets = [0, 48], sizes = [10, 16], strides = [1, 1]} : vector<10x64xf32> to vector<10x16xf32>
    %cst_381 = arith.constant dense<0.000000e+00> : vector<8x16xf32>
    %1213 = tpu.matmul %1211, %1212, %cst_381 {dimension_numbers = #tpu.dot_dimension_numbers<[1], [0], [0], [1], [0, 0, 1, 1], [], []>} : vector<8x10xf32>, vector<10x16xf32>, vector<8x16xf32> -> vector<8x16xf32>
    %1214 = tpu.concatenate %1165, %1181, %1197, %1213 in 1 : vector<8x16xf32>, vector<8x16xf32>, vector<8x16xf32>, vector<8x16xf32> -> vector<8x64xf32>
    %1215 = vector.extract_strided_slice %1138 {offsets = [8, 0], sizes = [8, 64], strides = [1, 1]} : vector<16x64xf32> to vector<8x64xf32>
    %1216 = vector.extract_strided_slice %1145 {offsets = [10, 0], sizes = [10, 64], strides = [1, 1]} : vector<20x64xf32> to vector<10x64xf32>
    %1217 = vector.extract_strided_slice %1146 {offsets = [10, 0], sizes = [10, 64], strides = [1, 1]} : vector<20x64xf32> to vector<10x64xf32>
    %1218 = vector.extract_strided_slice %1215 {offsets = [0, 0], sizes = [8, 16], strides = [1, 1]} : vector<8x64xf32> to vector<8x16xf32>
    %1219 = vector.extract_strided_slice %1216 {offsets = [0, 0], sizes = [10, 16], strides = [1, 1]} : vector<10x64xf32> to vector<10x16xf32>
    %cst_382 = arith.constant dense<0.000000e+00> : vector<8x10xf32>
    %1220 = tpu.matmul %1218, %1219, %cst_382 {dimension_numbers = #tpu.dot_dimension_numbers<[1], [1], [0], [0], [0, 0, 1, 0], [], []>} : vector<8x16xf32>, vector<10x16xf32>, vector<8x10xf32> -> vector<8x10xf32>
    %cst_383 = arith.constant 2.500000e-01 : f32
    %1221 = vector.broadcast %cst_383 : f32 to vector<8x10xf32>
    %1222 = arith.mulf %1220, %1221 : vector<8x10xf32>
    %cst_384 = arith.constant dense<0xFF800000> : vector<8xf32>
    %1223 = vector.multi_reduction <maximumf>, %1222, %cst_384 [1] : vector<8x10xf32> to vector<8xf32>
    %1224 = vector.shape_cast %1223 : vector<8xf32> to vector<8x1xf32>
    %1225 = vector.broadcast %1224 : vector<8x1xf32> to vector<8x10xf32>
    %1226 = arith.subf %1222, %1225 : vector<8x10xf32>
    %1227 = math.exp %1226 : vector<8x10xf32>
    %cst_385 = arith.constant dense<0.000000e+00> : vector<8xf32>
    %1228 = vector.multi_reduction <add>, %1227, %cst_385 [1] : vector<8x10xf32> to vector<8xf32>
    %1229 = vector.shape_cast %1228 : vector<8xf32> to vector<8x1xf32>
    %1230 = vector.broadcast %1229 : vector<8x1xf32> to vector<8x10xf32>
    %1231 = arith.divf %1227, %1230 : vector<8x10xf32>
    %1232 = vector.extract_strided_slice %1217 {offsets = [0, 0], sizes = [10, 16], strides = [1, 1]} : vector<10x64xf32> to vector<10x16xf32>
    %cst_386 = arith.constant dense<0.000000e+00> : vector<8x16xf32>
    %1233 = tpu.matmul %1231, %1232, %cst_386 {dimension_numbers = #tpu.dot_dimension_numbers<[1], [0], [0], [1], [0, 0, 1, 1], [], []>} : vector<8x10xf32>, vector<10x16xf32>, vector<8x16xf32> -> vector<8x16xf32>
    %1234 = vector.extract_strided_slice %1215 {offsets = [0, 16], sizes = [8, 16], strides = [1, 1]} : vector<8x64xf32> to vector<8x16xf32>
    %1235 = vector.extract_strided_slice %1216 {offsets = [0, 16], sizes = [10, 16], strides = [1, 1]} : vector<10x64xf32> to vector<10x16xf32>
    %cst_387 = arith.constant dense<0.000000e+00> : vector<8x10xf32>
    %1236 = tpu.matmul %1234, %1235, %cst_387 {dimension_numbers = #tpu.dot_dimension_numbers<[1], [1], [0], [0], [0, 0, 1, 0], [], []>} : vector<8x16xf32>, vector<10x16xf32>, vector<8x10xf32> -> vector<8x10xf32>
    %cst_388 = arith.constant 2.500000e-01 : f32
    %1237 = vector.broadcast %cst_388 : f32 to vector<8x10xf32>
    %1238 = arith.mulf %1236, %1237 : vector<8x10xf32>
    %cst_389 = arith.constant dense<0xFF800000> : vector<8xf32>
    %1239 = vector.multi_reduction <maximumf>, %1238, %cst_389 [1] : vector<8x10xf32> to vector<8xf32>
    %1240 = vector.shape_cast %1239 : vector<8xf32> to vector<8x1xf32>
    %1241 = vector.broadcast %1240 : vector<8x1xf32> to vector<8x10xf32>
    %1242 = arith.subf %1238, %1241 : vector<8x10xf32>
    %1243 = math.exp %1242 : vector<8x10xf32>
    %cst_390 = arith.constant dense<0.000000e+00> : vector<8xf32>
    %1244 = vector.multi_reduction <add>, %1243, %cst_390 [1] : vector<8x10xf32> to vector<8xf32>
    %1245 = vector.shape_cast %1244 : vector<8xf32> to vector<8x1xf32>
    %1246 = vector.broadcast %1245 : vector<8x1xf32> to vector<8x10xf32>
    %1247 = arith.divf %1243, %1246 : vector<8x10xf32>
    %1248 = vector.extract_strided_slice %1217 {offsets = [0, 16], sizes = [10, 16], strides = [1, 1]} : vector<10x64xf32> to vector<10x16xf32>
    %cst_391 = arith.constant dense<0.000000e+00> : vector<8x16xf32>
    %1249 = tpu.matmul %1247, %1248, %cst_391 {dimension_numbers = #tpu.dot_dimension_numbers<[1], [0], [0], [1], [0, 0, 1, 1], [], []>} : vector<8x10xf32>, vector<10x16xf32>, vector<8x16xf32> -> vector<8x16xf32>
    %1250 = vector.extract_strided_slice %1215 {offsets = [0, 32], sizes = [8, 16], strides = [1, 1]} : vector<8x64xf32> to vector<8x16xf32>
    %1251 = vector.extract_strided_slice %1216 {offsets = [0, 32], sizes = [10, 16], strides = [1, 1]} : vector<10x64xf32> to vector<10x16xf32>
    %cst_392 = arith.constant dense<0.000000e+00> : vector<8x10xf32>
    %1252 = tpu.matmul %1250, %1251, %cst_392 {dimension_numbers = #tpu.dot_dimension_numbers<[1], [1], [0], [0], [0, 0, 1, 0], [], []>} : vector<8x16xf32>, vector<10x16xf32>, vector<8x10xf32> -> vector<8x10xf32>
    %cst_393 = arith.constant 2.500000e-01 : f32
    %1253 = vector.broadcast %cst_393 : f32 to vector<8x10xf32>
    %1254 = arith.mulf %1252, %1253 : vector<8x10xf32>
    %cst_394 = arith.constant dense<0xFF800000> : vector<8xf32>
    %1255 = vector.multi_reduction <maximumf>, %1254, %cst_394 [1] : vector<8x10xf32> to vector<8xf32>
    %1256 = vector.shape_cast %1255 : vector<8xf32> to vector<8x1xf32>
    %1257 = vector.broadcast %1256 : vector<8x1xf32> to vector<8x10xf32>
    %1258 = arith.subf %1254, %1257 : vector<8x10xf32>
    %1259 = math.exp %1258 : vector<8x10xf32>
    %cst_395 = arith.constant dense<0.000000e+00> : vector<8xf32>
    %1260 = vector.multi_reduction <add>, %1259, %cst_395 [1] : vector<8x10xf32> to vector<8xf32>
    %1261 = vector.shape_cast %1260 : vector<8xf32> to vector<8x1xf32>
    %1262 = vector.broadcast %1261 : vector<8x1xf32> to vector<8x10xf32>
    %1263 = arith.divf %1259, %1262 : vector<8x10xf32>
    %1264 = vector.extract_strided_slice %1217 {offsets = [0, 32], sizes = [10, 16], strides = [1, 1]} : vector<10x64xf32> to vector<10x16xf32>
    %cst_396 = arith.constant dense<0.000000e+00> : vector<8x16xf32>
    %1265 = tpu.matmul %1263, %1264, %cst_396 {dimension_numbers = #tpu.dot_dimension_numbers<[1], [0], [0], [1], [0, 0, 1, 1], [], []>} : vector<8x10xf32>, vector<10x16xf32>, vector<8x16xf32> -> vector<8x16xf32>
    %1266 = vector.extract_strided_slice %1215 {offsets = [0, 48], sizes = [8, 16], strides = [1, 1]} : vector<8x64xf32> to vector<8x16xf32>
    %1267 = vector.extract_strided_slice %1216 {offsets = [0, 48], sizes = [10, 16], strides = [1, 1]} : vector<10x64xf32> to vector<10x16xf32>
    %cst_397 = arith.constant dense<0.000000e+00> : vector<8x10xf32>
    %1268 = tpu.matmul %1266, %1267, %cst_397 {dimension_numbers = #tpu.dot_dimension_numbers<[1], [1], [0], [0], [0, 0, 1, 0], [], []>} : vector<8x16xf32>, vector<10x16xf32>, vector<8x10xf32> -> vector<8x10xf32>
    %cst_398 = arith.constant 2.500000e-01 : f32
    %1269 = vector.broadcast %cst_398 : f32 to vector<8x10xf32>
    %1270 = arith.mulf %1268, %1269 : vector<8x10xf32>
    %cst_399 = arith.constant dense<0xFF800000> : vector<8xf32>
    %1271 = vector.multi_reduction <maximumf>, %1270, %cst_399 [1] : vector<8x10xf32> to vector<8xf32>
    %1272 = vector.shape_cast %1271 : vector<8xf32> to vector<8x1xf32>
    %1273 = vector.broadcast %1272 : vector<8x1xf32> to vector<8x10xf32>
    %1274 = arith.subf %1270, %1273 : vector<8x10xf32>
    %1275 = math.exp %1274 : vector<8x10xf32>
    %cst_400 = arith.constant dense<0.000000e+00> : vector<8xf32>
    %1276 = vector.multi_reduction <add>, %1275, %cst_400 [1] : vector<8x10xf32> to vector<8xf32>
    %1277 = vector.shape_cast %1276 : vector<8xf32> to vector<8x1xf32>
    %1278 = vector.broadcast %1277 : vector<8x1xf32> to vector<8x10xf32>
    %1279 = arith.divf %1275, %1278 : vector<8x10xf32>
    %1280 = vector.extract_strided_slice %1217 {offsets = [0, 48], sizes = [10, 16], strides = [1, 1]} : vector<10x64xf32> to vector<10x16xf32>
    %cst_401 = arith.constant dense<0.000000e+00> : vector<8x16xf32>
    %1281 = tpu.matmul %1279, %1280, %cst_401 {dimension_numbers = #tpu.dot_dimension_numbers<[1], [0], [0], [1], [0, 0, 1, 1], [], []>} : vector<8x10xf32>, vector<10x16xf32>, vector<8x16xf32> -> vector<8x16xf32>
    %1282 = tpu.concatenate %1233, %1249, %1265, %1281 in 1 : vector<8x16xf32>, vector<8x16xf32>, vector<8x16xf32>, vector<8x16xf32> -> vector<8x64xf32>
    %1283 = tpu.concatenate %1214, %1282 in 0 : vector<8x64xf32>, vector<8x64xf32> -> vector<16x64xf32>
    %c1_402 = arith.constant 1 : index
    %c0_403 = arith.constant 0 : index
    %c0_404 = arith.constant 0 : index
    %1284 = vector.load %arg16[%c1_402, %c0_403, %c0_404] : memref<2x64x64xf32, #tpu.memory_space<vmem>>, vector<1x64x64xf32>
    %1285 = vector.shape_cast %1284 : vector<1x64x64xf32> to vector<64x64xf32>
    %cst_405 = arith.constant dense<0.000000e+00> : vector<16x64xf32>
    %1286 = tpu.matmul %1283, %1285, %cst_405 {dimension_numbers = #tpu.dot_dimension_numbers<[1], [0], [0], [1], [0, 0, 1, 1], [], []>} : vector<16x64xf32>, vector<64x64xf32>, vector<16x64xf32> -> vector<16x64xf32>
    %1287 = vector.extract_strided_slice %947 {offsets = [4, 0], sizes = [1, 64], strides = [1, 1]} : vector<13x192xf32> to vector<1x64xf32>
    %1288 = vector.broadcast %1287 : vector<1x64xf32> to vector<16x64xf32>
    %1289 = arith.addf %1286, %1288 : vector<16x64xf32>
    %1290 = arith.addf %1132, %1289 : vector<16x64xf32>
    %1291 = vector.extract_strided_slice %947 {offsets = [9, 0], sizes = [1, 64], strides = [1, 1]} : vector<13x192xf32> to vector<1x64xf32>
    %1292 = vector.extract_strided_slice %947 {offsets = [10, 0], sizes = [1, 64], strides = [1, 1]} : vector<13x192xf32> to vector<1x64xf32>
    %cst_406 = arith.constant dense<0.000000e+00> : vector<16xf32>
    %1293 = vector.multi_reduction <add>, %1290, %cst_406 [1] : vector<16x64xf32> to vector<16xf32>
    %1294 = vector.shape_cast %1293 : vector<16xf32> to vector<16x1xf32>
    %cst_407 = arith.constant 6.400000e+01 : f32
    %1295 = vector.broadcast %cst_407 : f32 to vector<16x1xf32>
    %1296 = arith.divf %1294, %1295 : vector<16x1xf32>
    %1297 = vector.broadcast %1296 : vector<16x1xf32> to vector<16x64xf32>
    %1298 = arith.subf %1290, %1297 : vector<16x64xf32>
    %1299 = arith.mulf %1298, %1298 : vector<16x64xf32>
    %cst_408 = arith.constant dense<0.000000e+00> : vector<16xf32>
    %1300 = vector.multi_reduction <add>, %1299, %cst_408 [1] : vector<16x64xf32> to vector<16xf32>
    %1301 = vector.shape_cast %1300 : vector<16xf32> to vector<16x1xf32>
    %cst_409 = arith.constant 6.400000e+01 : f32
    %1302 = vector.broadcast %cst_409 : f32 to vector<16x1xf32>
    %1303 = arith.divf %1301, %1302 : vector<16x1xf32>
    %1304 = vector.broadcast %1296 : vector<16x1xf32> to vector<16x64xf32>
    %1305 = arith.subf %1290, %1304 : vector<16x64xf32>
    %cst_410 = arith.constant 9.99999974E-6 : f32
    %1306 = vector.broadcast %cst_410 : f32 to vector<16x1xf32>
    %1307 = arith.addf %1303, %1306 : vector<16x1xf32>
    %1308 = math.rsqrt %1307 : vector<16x1xf32>
    %1309 = vector.broadcast %1308 : vector<16x1xf32> to vector<16x64xf32>
    %1310 = arith.mulf %1305, %1309 : vector<16x64xf32>
    %1311 = vector.broadcast %1291 : vector<1x64xf32> to vector<16x64xf32>
    %1312 = arith.mulf %1310, %1311 : vector<16x64xf32>
    %1313 = vector.broadcast %1292 : vector<1x64xf32> to vector<16x64xf32>
    %1314 = arith.addf %1312, %1313 : vector<16x64xf32>
    %c1_411 = arith.constant 1 : index
    %c0_412 = arith.constant 0 : index
    %c0_413 = arith.constant 0 : index
    %1315 = vector.load %arg17[%c1_411, %c0_412, %c0_413] : memref<2x64x128xf32, #tpu.memory_space<vmem>>, vector<1x64x128xf32>
    %1316 = vector.shape_cast %1315 : vector<1x64x128xf32> to vector<64x128xf32>
    %cst_414 = arith.constant dense<0.000000e+00> : vector<16x128xf32>
    %1317 = tpu.matmul %1314, %1316, %cst_414 {dimension_numbers = #tpu.dot_dimension_numbers<[1], [0], [0], [1], [0, 0, 1, 1], [], []>} : vector<16x64xf32>, vector<64x128xf32>, vector<16x128xf32> -> vector<16x128xf32>
    %1318 = vector.extract_strided_slice %947 {offsets = [5, 0], sizes = [1, 128], strides = [1, 1]} : vector<13x192xf32> to vector<1x128xf32>
    %1319 = vector.broadcast %1318 : vector<1x128xf32> to vector<16x128xf32>
    %1320 = arith.addf %1317, %1319 : vector<16x128xf32>
    %cst_415 = arith.constant 0.000000e+00 : f32
    %1321 = vector.broadcast %cst_415 : f32 to vector<16x128xf32>
    %1322 = arith.maximumf %1320, %1321 : vector<16x128xf32>
    %c1_416 = arith.constant 1 : index
    %c0_417 = arith.constant 0 : index
    %c0_418 = arith.constant 0 : index
    %1323 = vector.load %arg18[%c1_416, %c0_417, %c0_418] : memref<2x128x64xf32, #tpu.memory_space<vmem>>, vector<1x128x64xf32>
    %1324 = vector.shape_cast %1323 : vector<1x128x64xf32> to vector<128x64xf32>
    %cst_419 = arith.constant dense<0.000000e+00> : vector<16x64xf32>
    %1325 = tpu.matmul %1322, %1324, %cst_419 {dimension_numbers = #tpu.dot_dimension_numbers<[1], [0], [0], [1], [0, 0, 1, 1], [], []>} : vector<16x128xf32>, vector<128x64xf32>, vector<16x64xf32> -> vector<16x64xf32>
    %1326 = vector.extract_strided_slice %947 {offsets = [6, 0], sizes = [1, 64], strides = [1, 1]} : vector<13x192xf32> to vector<1x64xf32>
    %1327 = vector.broadcast %1326 : vector<1x64xf32> to vector<16x64xf32>
    %1328 = arith.addf %1325, %1327 : vector<16x64xf32>
    %1329 = arith.addf %1314, %1328 : vector<16x64xf32>
    %1330 = vector.extract_strided_slice %947 {offsets = [11, 0], sizes = [1, 64], strides = [1, 1]} : vector<13x192xf32> to vector<1x64xf32>
    %1331 = vector.extract_strided_slice %947 {offsets = [12, 0], sizes = [1, 64], strides = [1, 1]} : vector<13x192xf32> to vector<1x64xf32>
    %cst_420 = arith.constant dense<0.000000e+00> : vector<16xf32>
    %1332 = vector.multi_reduction <add>, %1329, %cst_420 [1] : vector<16x64xf32> to vector<16xf32>
    %1333 = vector.shape_cast %1332 : vector<16xf32> to vector<16x1xf32>
    %cst_421 = arith.constant 6.400000e+01 : f32
    %1334 = vector.broadcast %cst_421 : f32 to vector<16x1xf32>
    %1335 = arith.divf %1333, %1334 : vector<16x1xf32>
    %1336 = vector.broadcast %1335 : vector<16x1xf32> to vector<16x64xf32>
    %1337 = arith.subf %1329, %1336 : vector<16x64xf32>
    %1338 = arith.mulf %1337, %1337 : vector<16x64xf32>
    %cst_422 = arith.constant dense<0.000000e+00> : vector<16xf32>
    %1339 = vector.multi_reduction <add>, %1338, %cst_422 [1] : vector<16x64xf32> to vector<16xf32>
    %1340 = vector.shape_cast %1339 : vector<16xf32> to vector<16x1xf32>
    %cst_423 = arith.constant 6.400000e+01 : f32
    %1341 = vector.broadcast %cst_423 : f32 to vector<16x1xf32>
    %1342 = arith.divf %1340, %1341 : vector<16x1xf32>
    %1343 = vector.broadcast %1335 : vector<16x1xf32> to vector<16x64xf32>
    %1344 = arith.subf %1329, %1343 : vector<16x64xf32>
    %cst_424 = arith.constant 9.99999974E-6 : f32
    %1345 = vector.broadcast %cst_424 : f32 to vector<16x1xf32>
    %1346 = arith.addf %1342, %1345 : vector<16x1xf32>
    %1347 = math.rsqrt %1346 : vector<16x1xf32>
    %1348 = vector.broadcast %1347 : vector<16x1xf32> to vector<16x64xf32>
    %1349 = arith.mulf %1344, %1348 : vector<16x64xf32>
    %1350 = vector.broadcast %1330 : vector<1x64xf32> to vector<16x64xf32>
    %1351 = arith.mulf %1349, %1350 : vector<16x64xf32>
    %1352 = vector.broadcast %1331 : vector<1x64xf32> to vector<16x64xf32>
    %1353 = arith.addf %1351, %1352 : vector<16x64xf32>
    %1354 = vector.extract_strided_slice %513 {offsets = [2, 0], sizes = [1, 64], strides = [1, 1]} : vector<5x128xf32> to vector<1x64xf32>
    %1355 = vector.extract_strided_slice %513 {offsets = [3, 0], sizes = [1, 64], strides = [1, 1]} : vector<5x128xf32> to vector<1x64xf32>
    %cst_425 = arith.constant dense<0.000000e+00> : vector<16xf32>
    %1356 = vector.multi_reduction <add>, %1353, %cst_425 [1] : vector<16x64xf32> to vector<16xf32>
    %1357 = vector.shape_cast %1356 : vector<16xf32> to vector<16x1xf32>
    %cst_426 = arith.constant 6.400000e+01 : f32
    %1358 = vector.broadcast %cst_426 : f32 to vector<16x1xf32>
    %1359 = arith.divf %1357, %1358 : vector<16x1xf32>
    %1360 = vector.broadcast %1359 : vector<16x1xf32> to vector<16x64xf32>
    %1361 = arith.subf %1353, %1360 : vector<16x64xf32>
    %1362 = arith.mulf %1361, %1361 : vector<16x64xf32>
    %cst_427 = arith.constant dense<0.000000e+00> : vector<16xf32>
    %1363 = vector.multi_reduction <add>, %1362, %cst_427 [1] : vector<16x64xf32> to vector<16xf32>
    %1364 = vector.shape_cast %1363 : vector<16xf32> to vector<16x1xf32>
    %cst_428 = arith.constant 6.400000e+01 : f32
    %1365 = vector.broadcast %cst_428 : f32 to vector<16x1xf32>
    %1366 = arith.divf %1364, %1365 : vector<16x1xf32>
    %1367 = vector.broadcast %1359 : vector<16x1xf32> to vector<16x64xf32>
    %1368 = arith.subf %1353, %1367 : vector<16x64xf32>
    %cst_429 = arith.constant 9.99999974E-6 : f32
    %1369 = vector.broadcast %cst_429 : f32 to vector<16x1xf32>
    %1370 = arith.addf %1366, %1369 : vector<16x1xf32>
    %1371 = math.rsqrt %1370 : vector<16x1xf32>
    %1372 = vector.broadcast %1371 : vector<16x1xf32> to vector<16x64xf32>
    %1373 = arith.mulf %1368, %1372 : vector<16x64xf32>
    %1374 = vector.broadcast %1354 : vector<1x64xf32> to vector<16x64xf32>
    %1375 = arith.mulf %1373, %1374 : vector<16x64xf32>
    %1376 = vector.broadcast %1355 : vector<1x64xf32> to vector<16x64xf32>
    %1377 = arith.addf %1375, %1376 : vector<16x64xf32>
    %c0_430 = arith.constant 0 : index
    %c0_431 = arith.constant 0 : index
    %1378 = vector.load %arg20[%c0_430, %c0_431] : memref<64x128xf32, #tpu.memory_space<vmem>>, vector<64x128xf32>
    %cst_432 = arith.constant dense<0.000000e+00> : vector<16x128xf32>
    %1379 = tpu.matmul %1377, %1378, %cst_432 {dimension_numbers = #tpu.dot_dimension_numbers<[1], [0], [0], [1], [0, 0, 1, 1], [], []>} : vector<16x64xf32>, vector<64x128xf32>, vector<16x128xf32> -> vector<16x128xf32>
    %1380 = vector.extract_strided_slice %513 {offsets = [4, 0], sizes = [1, 128], strides = [1, 1]} : vector<5x128xf32> to vector<1x128xf32>
    %1381 = vector.broadcast %1380 : vector<1x128xf32> to vector<16x128xf32>
    %1382 = arith.addf %1379, %1381 : vector<16x128xf32>
    %1383 = vector.shape_cast %1382 : vector<16x128xf32> to vector<2x8x128xf32>
    %c0_433 = arith.constant 0 : index
    %c0_434 = arith.constant 0 : index
    %c0_435 = arith.constant 0 : index
    %1384 = vector.load %arg22[%c0_433, %c0_434, %c0_435] : memref<2x8x128xf32, #tpu.memory_space<vmem>>, vector<2x8x128xf32>
    tpu.vector_store %arg22[%c0_433, %c0_434, %c0_435], %1383 {strides = array<i32>} : memref<2x8x128xf32, #tpu.memory_space<vmem>>, vector<2x8x128xf32>,
    return
  }
}

</mosaic_0001>

<llo_original>
// kernel: _forward.1
$region0: #{_forward.1}
  #allocation0 [shape = 'u32[]', space=smem, size = 0x4, offset = 0x4, fixed_abs, tag = 'smem constant byte address 0x4 - core index']
  #allocation1 [shape = 'u32[72,128]{1,0:T(1,128)}', space=vmem, size = 0x9000, scoped, tag = 'internal scratch']
  %s0 = inlined_call_operand.vmem [shape: s32[20,1], index: 0, kind: input, shape index: {}]
  %s1 = inlined_call_operand.vmem [shape: s32[16,1], index: 1, kind: input, shape index: {}]
  %s2 = inlined_call_operand.vmem [shape: s32[2,10], index: 2, kind: input, shape index: {}]
  %s3 = inlined_call_operand.hbm [shape: f32[37,64], index: 3, kind: input, shape index: {}]
  %s4 = inlined_call_operand.vmem [shape: f32[32,64], index: 4, kind: input, shape index: {}]
  %s5 = inlined_call_operand.hbm [shape: f32[41,64], index: 5, kind: input, shape index: {}]
  %s6 = inlined_call_operand.hbm [shape: f32[32,64], index: 6, kind: input, shape index: {}]
  %s7 = inlined_call_operand.vmem [shape: f32[2,64,192], index: 7, kind: input, shape index: {}]
  %s8 = inlined_call_operand.vmem [shape: f32[2,64,64], index: 8, kind: input, shape index: {}]
  %s9 = inlined_call_operand.hbm [shape: f32[2,64,128], index: 9, kind: input, shape index: {}]
  %s10 = inlined_call_operand.vmem [shape: f32[2,128,64], index: 10, kind: input, shape index: {}]
  %s11 = inlined_call_operand.hbm [shape: f32[2,8,192], index: 11, kind: input, shape index: {}]
  %s12 = inlined_call_operand.vmem [shape: f32[2,64,192], index: 12, kind: input, shape index: {}]
  %s13 = inlined_call_operand.hbm [shape: f32[2,64,64], index: 13, kind: input, shape index: {}]
  %s14 = inlined_call_operand.hbm [shape: f32[2,64,64], index: 14, kind: input, shape index: {}]
  %s15 = inlined_call_operand.hbm [shape: f32[2,64,128], index: 15, kind: input, shape index: {}]
  %s16 = inlined_call_operand.hbm [shape: f32[2,64,64], index: 16, kind: input, shape index: {}]
  %s17 = inlined_call_operand.hbm [shape: f32[2,64,128], index: 17, kind: input, shape index: {}]
  %s18 = inlined_call_operand.vmem [shape: f32[2,128,64], index: 18, kind: input, shape index: {}]
  %s19 = inlined_call_operand.vmem [shape: f32[2,13,192], index: 19, kind: input, shape index: {}]
  %s20 = inlined_call_operand.hbm [shape: f32[64,128], index: 20, kind: input, shape index: {}]
  %s21 = inlined_call_operand.hbm [shape: f32[5,128], index: 21, kind: input, shape index: {}]
  %s22 = inlined_call_operand.vmem [shape: f32[2,8,128], index: 22, kind: output, shape index: {}]
  %s23 = sld [smem:[#allocation0]]
  $region146: #{_forward.1} parent=0
    _
  %s25 = ssub.s32 1, %s23
  %s26 = scalar_select 0, %s25, %s23
  $region1: #{_forward.1} parent=0
    #allocation2 [shape = 'u8[20480]{0}', space=vmem, size = 0x5000, scoped, tag = 'input window, operand 3, single buffered']
    #allocation3 [shape = 's32[1]{0}', space=sflag, size = 0x4, scoped, tag = 'scoped memory for _forward.1']
    #allocation4 [shape = 'u8[24576]{0}', space=vmem, size = 0x6000, scoped, tag = 'input window, operand 5, single buffered']
    #allocation5 [shape = 's32[1]{0}', space=sflag, size = 0x4, scoped, tag = 'scoped memory for _forward.1']
    #allocation6 [shape = 'u8[16384]{0}', space=vmem, size = 0x4000, scoped, tag = 'input window, operand 6, single buffered']
    #allocation7 [shape = 'u8[65536]{0}', space=vmem, size = 0x10000, scoped, tag = 'input window, operand 9, single buffered']
    #allocation8 [shape = 's32[1]{0}', space=sflag, size = 0x4, scoped, tag = 'scoped memory for _forward.1']
    #allocation9 [shape = 'u8[16384]{0}', space=vmem, size = 0x4000, scoped, tag = 'input window, operand 11, single buffered']
    #allocation10 [shape = 'u8[65536]{0}', space=vmem, size = 0x10000, scoped, tag = 'input window, operand 13, single buffered']
    #allocation11 [shape = 's32[1]{0}', space=sflag, size = 0x4, scoped, tag = 'scoped memory for _forward.1']
    #allocation12 [shape = 'u8[65536]{0}', space=vmem, size = 0x10000, scoped, tag = 'input window, operand 14, single buffered']
    #allocation13 [shape = 'u8[65536]{0}', space=vmem, size = 0x10000, scoped, tag = 'input window, operand 15, single buffered']
    #allocation14 [shape = 's32[1]{0}', space=sflag, size = 0x4, scoped, tag = 'scoped memory for _forward.1']
    #allocation15 [shape = 'u8[65536]{0}', space=vmem, size = 0x10000, scoped, tag = 'input window, operand 16, single buffered']
    #allocation16 [shape = 'u8[65536]{0}', space=vmem, size = 0x10000, scoped, tag = 'input window, operand 17, single buffered']
    #allocation17 [shape = 's32[1]{0}', space=sflag, size = 0x4, scoped, tag = 'scoped memory for _forward.1']
    #allocation18 [shape = 'u8[32768]{0}', space=vmem, size = 0x8000, scoped, tag = 'input window, operand 20, single buffered']
    #allocation19 [shape = 'u8[4096]{0}', space=vmem, size = 0x1000, scoped, tag = 'input window, operand 21, single buffered']
    #allocation20 [shape = 's32[1]{0}', space=sflag, size = 0x4, scoped, tag = 'scoped memory for _forward.1']
    %27 = vsyncpa [#allocation3], 0
    %28 = vsyncpa [#allocation5], 0
    %29 = vsyncpa [#allocation8], 0
    %30 = vsyncpa [#allocation11], 0
    %31 = vsyncpa [#allocation14], 0
    %32 = vsyncpa [#allocation17], 0
    %33 = vsyncpa [#allocation20], 0
    // Predicated region
    $region2: #{_forward.1} parent=1 // pred_check
      _
    $region3: #{_forward.1} parent=1 // pred_check_branch
      %35 = sbr.rel (0) target = $region5
    $region4: #{_forward.1} parent=1 // pred_region
      _
    $region5: #{_forward.1} parent=1 // pred_fallthru
      _
    // Predicated region
    $region6: #{_forward.1} parent=1 // pred_check
      _
    $region7: #{_forward.1} parent=1 // pred_check_branch
      %37 = sbr.rel (0) target = $region9
    $region8: #{_forward.1} parent=1 // pred_region
      _
    $region9: #{_forward.1} parent=1 // pred_fallthru
      _
    // Predicated region
    $region10: #{_forward.1} parent=1 // pred_check
      _
    $region11: #{_forward.1} parent=1 // pred_check_branch
      %39 = sbr.rel (0) target = $region13
    $region12: #{_forward.1} parent=1 // pred_region
      _
    $region13: #{_forward.1} parent=1 // pred_fallthru
      _
    // Predicated region
    $region14: #{_forward.1} parent=1 // pred_check
      _
    $region15: #{_forward.1} parent=1 // pred_check_branch
      %41 = sbr.rel (0) target = $region17
    $region16: #{_forward.1} parent=1 // pred_region
      %43 = vsyncadd [#allocation3], 0
      %s44 = sshll.u32 %s3, 4
      %s45 = int_to_ptr.hbm [resolvable:$true] %s44
      %s46 = sshll.u32 [#allocation2], 4
      %s47 = int_to_ptr.vmem [resolvable:$true] %s46
      %52 = dma.hbm_to_vmem [thread:$0]  %s45, 640, %s47, [#allocation3], 128, 128, 8
    $region17: #{_forward.1} parent=1 // pred_fallthru
      _
    // Predicated region
    $region18: #{_forward.1} parent=1 // pred_check
      _
    $region19: #{_forward.1} parent=1 // pred_check_branch
      %54 = sbr.rel (0) target = $region21
    $region20: #{_forward.1} parent=1 // pred_region
      _
    $region21: #{_forward.1} parent=1 // pred_fallthru
      _
    // Predicated region
    $region22: #{_forward.1} parent=1 // pred_check
      _
    $region23: #{_forward.1} parent=1 // pred_check_branch
      %56 = sbr.rel (0) target = $region25
    $region24: #{_forward.1} parent=1 // pred_region
      %58 = vsyncadd [#allocation5], 0
      %s59 = sshll.u32 %s5, 4
      %s60 = int_to_ptr.hbm [resolvable:$true] %s59
      %s61 = sshll.u32 [#allocation4], 4
      %s62 = int_to_ptr.vmem [resolvable:$true] %s61
      %67 = dma.hbm_to_vmem [thread:$0]  %s60, 768, %s62, [#allocation5], 128, 128, 8
    $region25: #{_forward.1} parent=1 // pred_fallthru
      _
    // Predicated region
    $region26: #{_forward.1} parent=1 // pred_check
      _
    $region27: #{_forward.1} parent=1 // pred_check_branch
      %69 = sbr.rel (0) target = $region29
    $region28: #{_forward.1} parent=1 // pred_region
      %71 = vsyncadd [#allocation5], 0
      %s72 = sshll.u32 %s6, 4
      %s73 = int_to_ptr.hbm [resolvable:$true] %s72
      %s74 = sshll.u32 [#allocation6], 4
      %s75 = int_to_ptr.vmem [resolvable:$true] %s74
      %80 = dma.hbm_to_vmem [thread:$0]  %s73, 512, %s75, [#allocation5], 128, 128, 8
    $region29: #{_forward.1} parent=1 // pred_fallthru
      _
    // Predicated region
    $region30: #{_forward.1} parent=1 // pred_check
      _
    $region31: #{_forward.1} parent=1 // pred_check_branch
      %82 = sbr.rel (0) target = $region33
    $region32: #{_forward.1} parent=1 // pred_region
      _
    $region33: #{_forward.1} parent=1 // pred_fallthru
      _
    // Predicated region
    $region34: #{_forward.1} parent=1 // pred_check
      _
    $region35: #{_forward.1} parent=1 // pred_check_branch
      %84 = sbr.rel (0) target = $region37
    $region36: #{_forward.1} parent=1 // pred_region
      _
    $region37: #{_forward.1} parent=1 // pred_fallthru
      _
    // Predicated region
    $region38: #{_forward.1} parent=1 // pred_check
      _
    $region39: #{_forward.1} parent=1 // pred_check_branch
      %86 = sbr.rel (0) target = $region41
    $region40: #{_forward.1} parent=1 // pred_region
      %88 = vsyncadd [#allocation8], 0
      %s89 = sshll.u32 %s9, 4
      %s90 = int_to_ptr.hbm [resolvable:$true] %s89
      %s91 = sshll.u32 [#allocation7], 4
      %s92 = int_to_ptr.vmem [resolvable:$true] %s91
      %97 = dma.hbm_to_vmem [thread:$0]  %s90, 2048, %s92, [#allocation8], 128, 128, 8
    $region41: #{_forward.1} parent=1 // pred_fallthru
      _
    // Predicated region
    $region42: #{_forward.1} parent=1 // pred_check
      _
    $region43: #{_forward.1} parent=1 // pred_check_branch
      %99 = sbr.rel (0) target = $region45
    $region44: #{_forward.1} parent=1 // pred_region
      _
    $region45: #{_forward.1} parent=1 // pred_fallthru
      _
    // Predicated region
    $region46: #{_forward.1} parent=1 // pred_check
      _
    $region47: #{_forward.1} parent=1 // pred_check_branch
      %101 = sbr.rel (0) target = $region49
    $region48: #{_forward.1} parent=1 // pred_region
      %103 = vsyncadd [#allocation8], 0
      %s104 = sshll.u32 %s11, 4
      %s105 = int_to_ptr.hbm [resolvable:$true] %s104
      %s106 = sshll.u32 [#allocation9], 4
      %s107 = int_to_ptr.vmem [resolvable:$true] %s106
      %112 = dma.hbm_to_vmem [thread:$0]  %s105, 512, %s107, [#allocation8], 256, 256, 16
    $region49: #{_forward.1} parent=1 // pred_fallthru
      _
    // Predicated region
    $region50: #{_forward.1} parent=1 // pred_check
      _
    $region51: #{_forward.1} parent=1 // pred_check_branch
      %114 = sbr.rel (0) target = $region53
    $region52: #{_forward.1} parent=1 // pred_region
      _
    $region53: #{_forward.1} parent=1 // pred_fallthru
      _
    // Predicated region
    $region54: #{_forward.1} parent=1 // pred_check
      _
    $region55: #{_forward.1} parent=1 // pred_check_branch
      %116 = sbr.rel (0) target = $region57
    $region56: #{_forward.1} parent=1 // pred_region
      %118 = vsyncadd [#allocation11], 0
      %s119 = sshll.u32 %s13, 4
      %s120 = int_to_ptr.hbm [resolvable:$true] %s119
      %s121 = sshll.u32 [#allocation10], 4
      %s122 = int_to_ptr.vmem [resolvable:$true] %s121
      %127 = dma.hbm_to_vmem [thread:$0]  %s120, 2048, %s122, [#allocation11], 128, 128, 8
    $region57: #{_forward.1} parent=1 // pred_fallthru
      _
    // Predicated region
    $region58: #{_forward.1} parent=1 // pred_check
      _
    $region59: #{_forward.1} parent=1 // pred_check_branch
      %129 = sbr.rel (0) target = $region61
    $region60: #{_forward.1} parent=1 // pred_region
      %131 = vsyncadd [#allocation11], 0
      %s132 = sshll.u32 %s14, 4
      %s133 = int_to_ptr.hbm [resolvable:$true] %s132
      %s134 = sshll.u32 [#allocation12], 4
      %s135 = int_to_ptr.vmem [resolvable:$true] %s134
      %140 = dma.hbm_to_vmem [thread:$0]  %s133, 2048, %s135, [#allocation11], 128, 128, 8
    $region61: #{_forward.1} parent=1 // pred_fallthru
      _
    // Predicated region
    $region62: #{_forward.1} parent=1 // pred_check
      _
    $region63: #{_forward.1} parent=1 // pred_check_branch
      %142 = sbr.rel (0) target = $region65
    $region64: #{_forward.1} parent=1 // pred_region
      %144 = vsyncadd [#allocation14], 0
      %s145 = sshll.u32 %s15, 4
      %s146 = int_to_ptr.hbm [resolvable:$true] %s145
      %s147 = sshll.u32 [#allocation13], 4
      %s148 = int_to_ptr.vmem [resolvable:$true] %s147
      %153 = dma.hbm_to_vmem [thread:$0]  %s146, 2048, %s148, [#allocation14], 128, 128, 8
    $region65: #{_forward.1} parent=1 // pred_fallthru
      _
    // Predicated region
    $region66: #{_forward.1} parent=1 // pred_check
      _
    $region67: #{_forward.1} parent=1 // pred_check_branch
      %155 = sbr.rel (0) target = $region69
    $region68: #{_forward.1} parent=1 // pred_region
      %157 = vsyncadd [#allocation14], 0
      %s158 = sshll.u32 %s16, 4
      %s159 = int_to_ptr.hbm [resolvable:$true] %s158
      %s160 = sshll.u32 [#allocation15], 4
      %s161 = int_to_ptr.vmem [resolvable:$true] %s160
      %166 = dma.hbm_to_vmem [thread:$0]  %s159, 2048, %s161, [#allocation14], 128, 128, 8
    $region69: #{_forward.1} parent=1 // pred_fallthru
      _
    // Predicated region
    $region70: #{_forward.1} parent=1 // pred_check
      _
    $region71: #{_forward.1} parent=1 // pred_check_branch
      %168 = sbr.rel (0) target = $region73
    $region72: #{_forward.1} parent=1 // pred_region
      %170 = vsyncadd [#allocation17], 0
      %s171 = sshll.u32 %s17, 4
      %s172 = int_to_ptr.hbm [resolvable:$true] %s171
      %s173 = sshll.u32 [#allocation16], 4
      %s174 = int_to_ptr.vmem [resolvable:$true] %s173
      %179 = dma.hbm_to_vmem [thread:$0]  %s172, 2048, %s174, [#allocation17], 128, 128, 8
    $region73: #{_forward.1} parent=1 // pred_fallthru
      _
    // Predicated region
    $region74: #{_forward.1} parent=1 // pred_check
      _
    $region75: #{_forward.1} parent=1 // pred_check_branch
      %181 = sbr.rel (0) target = $region77
    $region76: #{_forward.1} parent=1 // pred_region
      _
    $region77: #{_forward.1} parent=1 // pred_fallthru
      _
    // Predicated region
    $region78: #{_forward.1} parent=1 // pred_check
      _
    $region79: #{_forward.1} parent=1 // pred_check_branch
      %183 = sbr.rel (0) target = $region81
    $region80: #{_forward.1} parent=1 // pred_region
      _
    $region81: #{_forward.1} parent=1 // pred_fallthru
      _
    // Predicated region
    $region82: #{_forward.1} parent=1 // pred_check
      _
    $region83: #{_forward.1} parent=1 // pred_check_branch
      %185 = sbr.rel (0) target = $region85
    $region84: #{_forward.1} parent=1 // pred_region
      %187 = vsyncadd [#allocation17], 0
      %s188 = sshll.u32 %s20, 4
      %s189 = int_to_ptr.hbm [resolvable:$true] %s188
      %s190 = sshll.u32 [#allocation18], 4
      %s191 = int_to_ptr.vmem [resolvable:$true] %s190
      %196 = dma.hbm_to_vmem [thread:$0]  %s189, 1024, %s191, [#allocation17], 128, 128, 8
    $region85: #{_forward.1} parent=1 // pred_fallthru
      _
    // Predicated region
    $region86: #{_forward.1} parent=1 // pred_check
      _
    $region87: #{_forward.1} parent=1 // pred_check_branch
      %198 = sbr.rel (0) target = $region89
    $region88: #{_forward.1} parent=1 // pred_region
      %200 = vsyncadd [#allocation20], 0
      %s202 = sshll.u32 %s21, 4
      %s203 = int_to_ptr.hbm [resolvable:$true] %s202
      %s204 = sshll.u32 [#allocation19], 4
      %s205 = int_to_ptr.vmem [resolvable:$true] %s204
      %207 = dma.hbm_to_vmem [thread:$0]  %s203, 128, %s205, [#allocation20]
    $region89: #{_forward.1} parent=1 // pred_fallthru
      _
    // Predicated region
    $region90: #{_forward.1} parent=1 // pred_check
      _
    $region91: #{_forward.1} parent=1 // pred_check_branch
      %209 = sbr.rel (0) target = $region93
    $region92: #{_forward.1} parent=1 // pred_region
      %211 = dma.done [#allocation3], 640
    $region93: #{_forward.1} parent=1 // pred_fallthru
      _
    // Predicated region
    $region94: #{_forward.1} parent=1 // pred_check
      _
    $region95: #{_forward.1} parent=1 // pred_check_branch
      %213 = sbr.rel (0) target = $region97
    $region96: #{_forward.1} parent=1 // pred_region
      %215 = dma.done [#allocation5], 768
    $region97: #{_forward.1} parent=1 // pred_fallthru
      _
    // Predicated region
    $region98: #{_forward.1} parent=1 // pred_check
      _
    $region99: #{_forward.1} parent=1 // pred_check_branch
      %217 = sbr.rel (0) target = $region101
    $region100: #{_forward.1} parent=1 // pred_region
      %219 = dma.done [#allocation5], 512
    $region101: #{_forward.1} parent=1 // pred_fallthru
      _
    // Predicated region
    $region102: #{_forward.1} parent=1 // pred_check
      _
    $region103: #{_forward.1} parent=1 // pred_check_branch
      %221 = sbr.rel (0) target = $region105
    $region104: #{_forward.1} parent=1 // pred_region
      %223 = dma.done [#allocation8], 2048
    $region105: #{_forward.1} parent=1 // pred_fallthru
      _
    // Predicated region
    $region106: #{_forward.1} parent=1 // pred_check
      _
    $region107: #{_forward.1} parent=1 // pred_check_branch
      %225 = sbr.rel (0) target = $region109
    $region108: #{_forward.1} parent=1 // pred_region
      %227 = dma.done [#allocation8], 512
    $region109: #{_forward.1} parent=1 // pred_fallthru
      _
    // Predicated region
    $region110: #{_forward.1} parent=1 // pred_check
      _
    $region111: #{_forward.1} parent=1 // pred_check_branch
      %229 = sbr.rel (0) target = $region113
    $region112: #{_forward.1} parent=1 // pred_region
      %231 = dma.done [#allocation11], 2048
    $region113: #{_forward.1} parent=1 // pred_fallthru
      _
    // Predicated region
    $region114: #{_forward.1} parent=1 // pred_check
      _
    $region115: #{_forward.1} parent=1 // pred_check_branch
      %233 = sbr.rel (0) target = $region117
    $region116: #{_forward.1} parent=1 // pred_region
      %235 = dma.done [#allocation11], 2048
    $region117: #{_forward.1} parent=1 // pred_fallthru
      _
    // Predicated region
    $region118: #{_forward.1} parent=1 // pred_check
      _
    $region119: #{_forward.1} parent=1 // pred_check_branch
      %237 = sbr.rel (0) target = $region121
    $region120: #{_forward.1} parent=1 // pred_region
      %239 = dma.done [#allocation14], 2048
    $region121: #{_forward.1} parent=1 // pred_fallthru
      _
    // Predicated region
    $region122: #{_forward.1} parent=1 // pred_check
      _
    $region123: #{_forward.1} parent=1 // pred_check_branch
      %241 = sbr.rel (0) target = $region125
    $region124: #{_forward.1} parent=1 // pred_region
      %243 = dma.done [#allocation14], 2048
    $region125: #{_forward.1} parent=1 // pred_fallthru
      _
    // Predicated region
    $region126: #{_forward.1} parent=1 // pred_check
      _
    $region127: #{_forward.1} parent=1 // pred_check_branch
      %245 = sbr.rel (0) target = $region129
    $region128: #{_forward.1} parent=1 // pred_region
      %247 = dma.done [#allocation17], 2048
    $region129: #{_forward.1} parent=1 // pred_fallthru
      _
    // Predicated region
    $region130: #{_forward.1} parent=1 // pred_check
      _
    $region131: #{_forward.1} parent=1 // pred_check_branch
      %249 = sbr.rel (0) target = $region133
    $region132: #{_forward.1} parent=1 // pred_region
      %251 = dma.done [#allocation17], 1024
    $region133: #{_forward.1} parent=1 // pred_fallthru
      _
    // Predicated region
    $region134: #{_forward.1} parent=1 // pred_check
      _
    $region135: #{_forward.1} parent=1 // pred_check_branch
      %253 = sbr.rel (0) target = $region137
    $region136: #{_forward.1} parent=1 // pred_region
      %255 = dma.done [#allocation20], 128
    $region137: #{_forward.1} parent=1 // pred_fallthru
      _
    %v256 = vld [vmem:[%s0] sm:$0xff]
    %v257 = vld [vmem:[%s0 + $0x8] sm:$0xff]
    %v258 = vld [vmem:[%s0 + $0x10] sm:$0xf]
    %v259 = vld [vmem:[#allocation2] sm:$0xff]
    %v260 = vld [vmem:[#allocation2 + $0x8] sm:$0xff]
    %v261 = vld [vmem:[#allocation2 + $0x10] sm:$0xff]
    %v262 = vld [vmem:[#allocation2 + $0x18] sm:$0xff]
    %v263 = vld [vmem:[#allocation2 + $0x20] sm:$0x1f]
    %v264 = vld [vmem:[%s4] sm:$0xff]
    %v265 = vld [vmem:[%s4 + $0x8] sm:$0xff]
    %v266 = vlaneseq
    %v267 = vand.u32 %v266, 127
    %268 = vset.pattern.permute.xlu0 0
    %269 = vperm.xlu0 %268, %v256
    %v270 = vpop.permute.xlu0 %269
    %271 = vset.pattern.permute.xlu0 0
    %272 = vperm.xlu0 %271, %v257
    %v273 = vpop.permute.xlu0 %272
    %274 = vset.pattern.permute.xlu0 0
    %275 = vperm.xlu0 %274, %v258
    %v276 = vpop.permute.xlu0 %275
    %vm277 = vcmp.eq.s32.totalorder %v270, %v267
    %vm278 = vcmp.eq.s32.totalorder %v273, %v267
    %vm279 = vcmp.eq.s32.totalorder %v276, %v267
    %v280 = vsel %vm277, 1.0, 0.0
    %v281 = vsel %vm278, 1.0, 0.0
    %v282 = vsel %vm279, 1.0, 0.0
    %vm285 = vcmask 1041408
    %v286 = vrot.slane %v264, 6
    %v287 = vrot.slane %v265, 6
    %v288 = vsel %vm285, %v286, %v287
    %v291 = vsel %vm285, %v265, %v286
    %vm292 = vcmask 302080
    %v294 = vsel %vm292, %v280, 0
    %v297 = vsel %vm292, %v281, 0
    %v300 = vsel %vm292, %v282, 0
    %vm302 = vcmask 1044480
    %v304 = vsel %vm302, %v263, 0
    %306 = vmatpush.msra.mxu0 0.0
    %307 = vmatpush.msra.mxu0 0.0
    %308 = vmatpush.msra.mxu0 0.0
    %309 = vmatpush.msra.mxu0 0.0
    %310 = vmatpush.msra.mxu0 0.0
    %311 = vmatpush.msra.mxu0 0.0
    %312 = vmatpush.msra.mxu0 0.0
    %313 = vmatpush.msra.mxu0 0.0
    %314 = vmatpush.msra.mxu0 0.0
    %315 = vmatpush.msra.mxu0 0.0
    %316 = vmatpush.msra.mxu0 0.0
    %317 = vmatpush.msra.mxu0 %v304
    %318 = vmatpush.msra.mxu0 %v262
    %319 = vmatpush.msra.mxu0 %v261
    %320 = vmatpush.msra.mxu0 %v260
    %321 = vmatpush.msra.mxu0 %v259
    %322 = vmatmul.f32.gmra.mxu0 %v294
    %v323 = vpop.f32.mrf.mxu0
    %v324 = vadd.f32 %v264, %v323
    %325 = vmatmul.f32.gmra.mxu0 %v297
    %v326 = vpop.f32.mrf.mxu0
    %v327 = vadd.f32 %v291, %v326
    %328 = vmatmul.f32.gmra.mxu0 %v300
    %v329 = vpop.f32.mrf.mxu0
    %v330 = vadd.f32 %v288, %v329
    %331 = vdwg.mxu0
    %v332 = vld [vmem:[%s1] sm:$0xff]
    %v333 = vld [vmem:[%s1 + $0x8] sm:$0xff]
    %v334 = vld [vmem:[#allocation4] sm:$0xff]
    %v335 = vld [vmem:[#allocation4 + $0x8] sm:$0xff]
    %v336 = vld [vmem:[#allocation4 + $0x10] sm:$0xff]
    %v337 = vld [vmem:[#allocation4 + $0x18] sm:$0xff]
    %v338 = vld [vmem:[#allocation4 + $0x20] sm:$0xff]
    %v339 = vld [vmem:[#allocation4 + $0x28] sm:$0x1]
    %v340 = vld [vmem:[#allocation6] sm:$0xff]
    %341 = vset.pattern.permute.xlu0 0
    %342 = vperm.xlu0 %341, %v332
    %v343 = vpop.permute.xlu0 %342
    %344 = vset.pattern.permute.xlu0 0
    %345 = vperm.xlu0 %344, %v333
    %v346 = vpop.permute.xlu0 %345
    %vm347 = vcmp.eq.s32.totalorder %v343, %v267
    %vm348 = vcmp.eq.s32.totalorder %v346, %v267
    %v349 = vsel %vm347, 1.0, 0.0
    %v350 = vsel %vm348, 1.0, 0.0
    %vm351 = vcmask 334848
    %v353 = vsel %vm351, %v349, 0
    %v356 = vsel %vm351, %v350, 0
    %vm358 = vcmask 1040384
    %v360 = vsel %vm358, %v339, 0
    %362 = vmatpush.msra.mxu0 0.0
    %363 = vmatpush.msra.mxu0 0.0
    %364 = vmatpush.msra.mxu0 0.0
    %365 = vmatpush.msra.mxu0 0.0
    %366 = vmatpush.msra.mxu0 0.0
    %367 = vmatpush.msra.mxu0 0.0
    %368 = vmatpush.msra.mxu0 0.0
    %369 = vmatpush.msra.mxu0 0.0
    %370 = vmatpush.msra.mxu0 0.0
    %371 = vmatpush.msra.mxu0 0.0
    %372 = vmatpush.msra.mxu0 %v360
    %373 = vmatpush.msra.mxu0 %v338
    %374 = vmatpush.msra.mxu0 %v337
    %375 = vmatpush.msra.mxu0 %v336
    %376 = vmatpush.msra.mxu0 %v335
    %377 = vmatpush.msra.mxu0 %v334
    %378 = vmatmul.f32.gmra.mxu0 %v353
    %v379 = vpop.f32.mrf.mxu0
    %v380 = vadd.f32 %v340, %v379
    %381 = vmatmul.f32.gmra.mxu0 %v356
    %v382 = vpop.f32.mrf.mxu0
    %v383 = vadd.f32 %v340, %v382
    %384 = vdwg.mxu0
    %v385 = vld [vmem:[%s2] sm:$0x3]
    %vm386 = vcmp.eq.s32.totalorder %v385, 1
    %v387 = vsel %vm386, -1e+30, 0.0
    %v388 = vlaneseq
    %v389 = vshrl.u32 %v388, 7
    %vm390 = vcmp.gt.s32.totalorder %v267, %v389
    %v391 = vsel %vm390, -1e+30, 0.0
    %v392 = vld [vmem:[#allocation9] sm:$0xff]
    %v393 = vld [vmem:[#allocation9 + $0x8] sm:$0xff]
    %v394 = vld [vmem:[%s7] sm:$0xff]
    %v395 = vld [vmem:[%s7 + $0x8] sm:$0xff]
    %v396 = vld [vmem:[%s7 + $0x10] sm:$0xff]
    %v397 = vld [vmem:[%s7 + $0x18] sm:$0xff]
    %v398 = vld [vmem:[%s7 + $0x20] sm:$0xff]
    %v399 = vld [vmem:[%s7 + $0x28] sm:$0xff]
    %v400 = vld [vmem:[%s7 + $0x30] sm:$0xff]
    %v401 = vld [vmem:[%s7 + $0x38] sm:$0xff]
    %v402 = vld [vmem:[%s7 + $0x40] sm:$0xff]
    %v403 = vld [vmem:[%s7 + $0x48] sm:$0xff]
    %v404 = vld [vmem:[%s7 + $0x50] sm:$0xff]
    %v405 = vld [vmem:[%s7 + $0x58] sm:$0xff]
    %v406 = vld [vmem:[%s7 + $0x60] sm:$0xff]
    %v407 = vld [vmem:[%s7 + $0x68] sm:$0xff]
    %v408 = vld [vmem:[%s7 + $0x70] sm:$0xff]
    %v409 = vld [vmem:[%s7 + $0x78] sm:$0xff]
    %v410 = vperm.slane %v392, 0
    %v411 = vperm.slane %v393, 0
    %vm412 = vcmask 523264
    %v414 = vsel %vm412, %v324, 0
    %v417 = vsel %vm412, %v327, 0
    %v420 = vsel %vm412, %v330, 0
    %422 = vmatpush.msra.mxu0 0.0
    %423 = vmatpush.msra.mxu0 0.0
    %424 = vmatpush.msra.mxu0 0.0
    %425 = vmatpush.msra.mxu0 0.0
    %426 = vmatpush.msra.mxu0 0.0
    %427 = vmatpush.msra.mxu0 0.0
    %428 = vmatpush.msra.mxu0 0.0
    %429 = vmatpush.msra.mxu0 0.0
    %430 = vmatpush.msra.mxu0 %v408
    %431 = vmatpush.msra.mxu0 %v406
    %432 = vmatpush.msra.mxu0 %v404
    %433 = vmatpush.msra.mxu0 %v402
    %434 = vmatpush.msra.mxu0 %v400
    %435 = vmatpush.msra.mxu0 %v398
    %436 = vmatpush.msra.mxu0 %v396
    %437 = vmatpush.msra.mxu0 %v394
    %438 = vmatmul.f32.gmra.mxu0 %v414
    %v439 = vpop.f32.mrf.mxu0
    %v440 = vadd.f32 %v410, %v439
    %441 = vmatmul.f32.gmra.mxu0 %v417
    %v442 = vpop.f32.mrf.mxu0
    %v443 = vadd.f32 %v410, %v442
    %444 = vmatmul.f32.gmra.mxu0 %v420
    %v445 = vpop.f32.mrf.mxu0
    %v446 = vadd.f32 %v410, %v445
    %447 = vdwg.mxu0
    %448 = vmatpush.msra.mxu0 0.0
    %449 = vmatpush.msra.mxu0 0.0
    %450 = vmatpush.msra.mxu0 0.0
    %451 = vmatpush.msra.mxu0 0.0
    %452 = vmatpush.msra.mxu0 0.0
    %453 = vmatpush.msra.mxu0 0.0
    %454 = vmatpush.msra.mxu0 0.0
    %455 = vmatpush.msra.mxu0 0.0
    %456 = vmatpush.msra.mxu0 %v409
    %457 = vmatpush.msra.mxu0 %v407
    %458 = vmatpush.msra.mxu0 %v405
    %459 = vmatpush.msra.mxu0 %v403
    %460 = vmatpush.msra.mxu0 %v401
    %461 = vmatpush.msra.mxu0 %v399
    %462 = vmatpush.msra.mxu0 %v397
    %463 = vmatpush.msra.mxu0 %v395
    %464 = vmatmul.f32.gmra.mxu0 %v414
    %v465 = vpop.f32.mrf.mxu0
    %v466 = vadd.f32 %v411, %v465
    %467 = vmatmul.f32.gmra.mxu0 %v417
    %v468 = vpop.f32.mrf.mxu0
    %v469 = vadd.f32 %v411, %v468
    %470 = vmatmul.f32.gmra.mxu0 %v420
    %v471 = vpop.f32.mrf.mxu0
    %v472 = vadd.f32 %v411, %v471
    %473 = vdwg.mxu0
    %476 = vrot.lane.b32.xlu0 %v440, 64
    %v477 = vpop.permute.xlu0 %476
    %478 = vrot.lane.b32.xlu0 %v443, 64
    %v479 = vpop.permute.xlu0 %478
    %vm480 = vcmask 130048
    %v481 = vsel %vm480, %v440, 0
    %v483 = vsel %vm480, %v443, 0
    %v485 = vsel %vm480, %v477, 0
    %v487 = vsel %vm480, %v479, 0
    %489 = vmatpush.xpose.msra.mxu0 0.0
    %490 = vmatpush.xpose.msra.mxu0 0.0
    %491 = vmatpush.xpose.msra.mxu0 0.0
    %492 = vmatpush.xpose.msra.mxu0 0.0
    %493 = vmatpush.xpose.msra.mxu0 0.0
    %494 = vmatpush.xpose.msra.mxu0 0.0
    %495 = vmatpush.xpose.msra.mxu0 0.0
    %496 = vmatpush.xpose.msra.mxu0 0.0
    %497 = vmatpush.xpose.msra.mxu0 0.0
    %498 = vmatpush.xpose.msra.mxu0 0.0
    %499 = vmatpush.xpose.msra.mxu0 0.0
    %500 = vmatpush.xpose.msra.mxu0 0.0
    %501 = vmatpush.xpose.msra.mxu0 0.0
    %502 = vmatpush.xpose.msra.mxu0 0.0
    %503 = vmatpush.xpose.msra.mxu0 %v487
    %504 = vmatpush.xpose.msra.mxu0 %v485
    %505 = vmatmul.f32.gmra.mxu0 %v481
    %v506 = vpop.f32.mrf.mxu0
    %v507 = vadd.f32 0.0, %v506
    %508 = vmatmul.f32.gmra.mxu0 %v483
    %v509 = vpop.f32.mrf.mxu0
    %v510 = vadd.f32 0.0, %v509
    %511 = vdwg.mxu0
    %v512 = vmul.f32 %v507, 0.25
    %v513 = vmul.f32 %v510, 0.25
    %v514 = vperm.slane %v387, 0
    %v515 = vadd.f32 %v512, %v514
    %v516 = vadd.f32 %v513, %v514
    %vm517 = vcmask 80896
    %v518 = vsel %vm517, %v515, -inf
    %519 = vmax.xlane.f32.xlu0 %v518
    %v520 = vpop.xlane.xlu0 %519
    %vm521 = vcmask 74752
    %v522 = vsel %vm521, %v516, -inf
    %523 = vmax.xlane.f32.xlu0 %v522
    %v524 = vpop.xlane.xlu0 %523
    %v525 = vsub.f32 %v515, %v520
    %v526 = vsub.f32 %v516, %v524
    %v527 = vmul.f32 %v525, 1.442695
    %v528 = vpow.pop %v527
    %v529 = vmul.f32 %v526, 1.442695
    %v530 = vpow.pop %v529
    %v531 = vsel %vm517, %v528, 0.0
    %532 = vadd.xlane.f32.xlu0 %v531
    %v533 = vpop.xlane.xlu0 %532
    %v534 = vsel %vm521, %v530, 0.0
    %535 = vadd.xlane.f32.xlu0 %v534
    %v536 = vpop.xlane.xlu0 %535
    %v537 = vrcp.pop %v533
    %v538 = vmul.f32 %v533, %v537
    %v539 = vsub.f32 1.0, %v538
    %v540 = vmul.f32 %v537, %v539
    %v541 = vadd.f32 %v537, %v540
    %vm542 = vweird.f32 %v533
    %vm543 = vweird.f32 %v537
    %vm544 = vmor %vm542, %vm543
    %v545 = vsel %vm544, %v537, %v541
    %v546 = vand.u32 2147483647, %v533
    %vm547 = vcmp.eq.f32.partialorder %v546, 8.507059e+37
    %v548 = vand.u32 %v533, 2147483648
    %v549 = vor.u32 1.1754944e-38, %v548
    %v550 = vsel %vm547, %v549, %v545
    %v551 = vmul.f32 %v528, %v550
    %v552 = vrcp.pop %v536
    %v553 = vmul.f32 %v536, %v552
    %v554 = vsub.f32 1.0, %v553
    %v555 = vmul.f32 %v552, %v554
    %v556 = vadd.f32 %v552, %v555
    %vm557 = vweird.f32 %v536
    %vm558 = vweird.f32 %v552
    %vm559 = vmor %vm557, %vm558
    %v560 = vsel %vm559, %v552, %v556
    %v561 = vand.u32 2147483647, %v536
    %vm562 = vcmp.eq.f32.partialorder %v561, 8.507059e+37
    %v563 = vand.u32 %v536, 2147483648
    %v564 = vor.u32 1.1754944e-38, %v563
    %v565 = vsel %vm562, %v564, %v560
    %v566 = vmul.f32 %v530, %v565
    %v568 = vsel %vm517, %v551, 0
    %v571 = vsel %vm517, %v566, 0
    %v574 = vsel %vm285, %v469, 0
    %576 = vmatpush.msra.mxu0 0.0
    %577 = vmatpush.msra.mxu0 0.0
    %578 = vmatpush.msra.mxu0 0.0
    %579 = vmatpush.msra.mxu0 0.0
    %580 = vmatpush.msra.mxu0 0.0
    %581 = vmatpush.msra.mxu0 0.0
    %582 = vmatpush.msra.mxu0 0.0
    %583 = vmatpush.msra.mxu0 0.0
    %584 = vmatpush.msra.mxu0 0.0
    %585 = vmatpush.msra.mxu0 0.0
    %586 = vmatpush.msra.mxu0 0.0
    %587 = vmatpush.msra.mxu0 0.0
    %588 = vmatpush.msra.mxu0 0.0
    %589 = vmatpush.msra.mxu0 0.0
    %590 = vmatpush.msra.mxu0 %v574
    %591 = vmatpush.msra.mxu0 %v466
    %592 = vmatmul.f32.gmra.mxu0 %v568
    %v593 = vpop.f32.mrf.mxu0
    %v594 = vadd.f32 0.0, %v593
    %595 = vmatmul.f32.gmra.mxu0 %v571
    %v596 = vpop.f32.mrf.mxu0
    %v597 = vadd.f32 0.0, %v596
    %598 = vdwg.mxu0
    %599 = vrot.lane.b32.xlu0 %v440, 112
    %v600 = vpop.permute.xlu0 %599
    %601 = vrot.lane.b32.xlu0 %v443, 112
    %v602 = vpop.permute.xlu0 %601
    %603 = vrot.lane.b32.xlu0 %v440, 48
    %v604 = vpop.permute.xlu0 %603
    %605 = vrot.lane.b32.xlu0 %v443, 48
    %v606 = vpop.permute.xlu0 %605
    %v607 = vsel %vm480, %v600, 0
    %v609 = vsel %vm480, %v602, 0
    %v611 = vsel %vm480, %v604, 0
    %v613 = vsel %vm480, %v606, 0
    %615 = vmatpush.xpose.msra.mxu0 0.0
    %616 = vmatpush.xpose.msra.mxu0 0.0
    %617 = vmatpush.xpose.msra.mxu0 0.0
    %618 = vmatpush.xpose.msra.mxu0 0.0
    %619 = vmatpush.xpose.msra.mxu0 0.0
    %620 = vmatpush.xpose.msra.mxu0 0.0
    %621 = vmatpush.xpose.msra.mxu0 0.0
    %622 = vmatpush.xpose.msra.mxu0 0.0
    %623 = vmatpush.xpose.msra.mxu0 0.0
    %624 = vmatpush.xpose.msra.mxu0 0.0
    %625 = vmatpush.xpose.msra.mxu0 0.0
    %626 = vmatpush.xpose.msra.mxu0 0.0
    %627 = vmatpush.xpose.msra.mxu0 0.0
    %628 = vmatpush.xpose.msra.mxu0 0.0
    %629 = vmatpush.xpose.msra.mxu0 %v613
    %630 = vmatpush.xpose.msra.mxu0 %v611
    %631 = vmatmul.f32.gmra.mxu0 %v607
    %v632 = vpop.f32.mrf.mxu0
    %v633 = vadd.f32 0.0, %v632
    %634 = vmatmul.f32.gmra.mxu0 %v609
    %v635 = vpop.f32.mrf.mxu0
    %v636 = vadd.f32 0.0, %v635
    %637 = vdwg.mxu0
    %v638 = vmul.f32 %v633, 0.25
    %v639 = vmul.f32 %v636, 0.25
    %v640 = vadd.f32 %v638, %v514
    %v641 = vadd.f32 %v639, %v514
    %v642 = vsel %vm517, %v640, -inf
    %643 = vmax.xlane.f32.xlu0 %v642
    %v644 = vpop.xlane.xlu0 %643
    %v645 = vsel %vm521, %v641, -inf
    %646 = vmax.xlane.f32.xlu0 %v645
    %v647 = vpop.xlane.xlu0 %646
    %v648 = vsub.f32 %v640, %v644
    %v649 = vsub.f32 %v641, %v647
    %v650 = vmul.f32 %v648, 1.442695
    %v651 = vpow.pop %v650
    %v652 = vmul.f32 %v649, 1.442695
    %v653 = vpow.pop %v652
    %v654 = vsel %vm517, %v651, 0.0
    %655 = vadd.xlane.f32.xlu0 %v654
    %v656 = vpop.xlane.xlu0 %655
    %v657 = vsel %vm521, %v653, 0.0
    %658 = vadd.xlane.f32.xlu0 %v657
    %v659 = vpop.xlane.xlu0 %658
    %v660 = vrcp.pop %v656
    %v661 = vmul.f32 %v656, %v660
    %v662 = vsub.f32 1.0, %v661
    %v663 = vmul.f32 %v660, %v662
    %v664 = vadd.f32 %v660, %v663
    %vm665 = vweird.f32 %v656
    %vm666 = vweird.f32 %v660
    %vm667 = vmor %vm665, %vm666
    %v668 = vsel %vm667, %v660, %v664
    %v669 = vand.u32 2147483647, %v656
    %vm670 = vcmp.eq.f32.partialorder %v669, 8.507059e+37
    %v671 = vand.u32 %v656, 2147483648
    %v672 = vor.u32 1.1754944e-38, %v671
    %v673 = vsel %vm670, %v672, %v668
    %v674 = vmul.f32 %v651, %v673
    %v675 = vrcp.pop %v659
    %v676 = vmul.f32 %v659, %v675
    %v677 = vsub.f32 1.0, %v676
    %v678 = vmul.f32 %v675, %v677
    %v679 = vadd.f32 %v675, %v678
    %vm680 = vweird.f32 %v659
    %vm681 = vweird.f32 %v675
    %vm682 = vmor %vm680, %vm681
    %v683 = vsel %vm682, %v675, %v679
    %v684 = vand.u32 2147483647, %v659
    %vm685 = vcmp.eq.f32.partialorder %v684, 8.507059e+37
    %v686 = vand.u32 %v659, 2147483648
    %v687 = vor.u32 1.1754944e-38, %v686
    %v688 = vsel %vm685, %v687, %v683
    %v689 = vmul.f32 %v653, %v688
    %691 = vrot.lane.b32.xlu0 %v466, 112
    %v692 = vpop.permute.xlu0 %691
    %693 = vrot.lane.b32.xlu0 %v469, 112
    %v694 = vpop.permute.xlu0 %693
    %v697 = vsel %vm517, %v674, 0
    %v700 = vsel %vm517, %v689, 0
    %v702 = vsel %vm285, %v694, 0
    %704 = vmatpush.msra.mxu0 0.0
    %705 = vmatpush.msra.mxu0 0.0
    %706 = vmatpush.msra.mxu0 0.0
    %707 = vmatpush.msra.mxu0 0.0
    %708 = vmatpush.msra.mxu0 0.0
    %709 = vmatpush.msra.mxu0 0.0
    %710 = vmatpush.msra.mxu0 0.0
    %711 = vmatpush.msra.mxu0 0.0
    %712 = vmatpush.msra.mxu0 0.0
    %713 = vmatpush.msra.mxu0 0.0
    %714 = vmatpush.msra.mxu0 0.0
    %715 = vmatpush.msra.mxu0 0.0
    %716 = vmatpush.msra.mxu0 0.0
    %717 = vmatpush.msra.mxu0 0.0
    %718 = vmatpush.msra.mxu0 %v702
    %719 = vmatpush.msra.mxu0 %v692
    %720 = vmatmul.f32.gmra.mxu0 %v697
    %v721 = vpop.f32.mrf.mxu0
    %v722 = vadd.f32 0.0, %v721
    %723 = vmatmul.f32.gmra.mxu0 %v700
    %v724 = vpop.f32.mrf.mxu0
    %v725 = vadd.f32 0.0, %v724
    %726 = vdwg.mxu0
    %727 = vrot.lane.b32.xlu0 %v440, 96
    %v728 = vpop.permute.xlu0 %727
    %729 = vrot.lane.b32.xlu0 %v443, 96
    %v730 = vpop.permute.xlu0 %729
    %731 = vrot.lane.b32.xlu0 %v440, 32
    %v732 = vpop.permute.xlu0 %731
    %733 = vrot.lane.b32.xlu0 %v443, 32
    %v734 = vpop.permute.xlu0 %733
    %v735 = vsel %vm480, %v728, 0
    %v737 = vsel %vm480, %v730, 0
    %v739 = vsel %vm480, %v732, 0
    %v741 = vsel %vm480, %v734, 0
    %743 = vmatpush.xpose.msra.mxu0 0.0
    %744 = vmatpush.xpose.msra.mxu0 0.0
    %745 = vmatpush.xpose.msra.mxu0 0.0
    %746 = vmatpush.xpose.msra.mxu0 0.0
    %747 = vmatpush.xpose.msra.mxu0 0.0
    %748 = vmatpush.xpose.msra.mxu0 0.0
    %749 = vmatpush.xpose.msra.mxu0 0.0
    %750 = vmatpush.xpose.msra.mxu0 0.0
    %751 = vmatpush.xpose.msra.mxu0 0.0
    %752 = vmatpush.xpose.msra.mxu0 0.0
    %753 = vmatpush.xpose.msra.mxu0 0.0
    %754 = vmatpush.xpose.msra.mxu0 0.0
    %755 = vmatpush.xpose.msra.mxu0 0.0
    %756 = vmatpush.xpose.msra.mxu0 0.0
    %757 = vmatpush.xpose.msra.mxu0 %v741
    %758 = vmatpush.xpose.msra.mxu0 %v739
    %759 = vmatmul.f32.gmra.mxu0 %v735
    %v760 = vpop.f32.mrf.mxu0
    %v761 = vadd.f32 0.0, %v760
    %762 = vmatmul.f32.gmra.mxu0 %v737
    %v763 = vpop.f32.mrf.mxu0
    %v764 = vadd.f32 0.0, %v763
    %765 = vdwg.mxu0
    %v766 = vmul.f32 %v761, 0.25
    %v767 = vmul.f32 %v764, 0.25
    %v768 = vadd.f32 %v766, %v514
    %v769 = vadd.f32 %v767, %v514
    %v770 = vsel %vm517, %v768, -inf
    %771 = vmax.xlane.f32.xlu0 %v770
    %v772 = vpop.xlane.xlu0 %771
    %v773 = vsel %vm521, %v769, -inf
    %774 = vmax.xlane.f32.xlu0 %v773
    %v775 = vpop.xlane.xlu0 %774
    %v776 = vsub.f32 %v768, %v772
    %v777 = vsub.f32 %v769, %v775
    %v778 = vmul.f32 %v776, 1.442695
    %v779 = vpow.pop %v778
    %v780 = vmul.f32 %v777, 1.442695
    %v781 = vpow.pop %v780
    %v782 = vsel %vm517, %v779, 0.0
    %783 = vadd.xlane.f32.xlu0 %v782
    %v784 = vpop.xlane.xlu0 %783
    %v785 = vsel %vm521, %v781, 0.0
    %786 = vadd.xlane.f32.xlu0 %v785
    %v787 = vpop.xlane.xlu0 %786
    %v788 = vrcp.pop %v784
    %v789 = vmul.f32 %v784, %v788
    %v790 = vsub.f32 1.0, %v789
    %v791 = vmul.f32 %v788, %v790
    %v792 = vadd.f32 %v788, %v791
    %vm793 = vweird.f32 %v784
    %vm794 = vweird.f32 %v788
    %vm795 = vmor %vm793, %vm794
    %v796 = vsel %vm795, %v788, %v792
    %v797 = vand.u32 2147483647, %v784
    %vm798 = vcmp.eq.f32.partialorder %v797, 8.507059e+37
    %v799 = vand.u32 %v784, 2147483648
    %v800 = vor.u32 1.1754944e-38, %v799
    %v801 = vsel %vm798, %v800, %v796
    %v802 = vmul.f32 %v779, %v801
    %v803 = vrcp.pop %v787
    %v804 = vmul.f32 %v787, %v803
    %v805 = vsub.f32 1.0, %v804
    %v806 = vmul.f32 %v803, %v805
    %v807 = vadd.f32 %v803, %v806
    %vm808 = vweird.f32 %v787
    %vm809 = vweird.f32 %v803
    %vm810 = vmor %vm808, %vm809
    %v811 = vsel %vm810, %v803, %v807
    %v812 = vand.u32 2147483647, %v787
    %vm813 = vcmp.eq.f32.partialorder %v812, 8.507059e+37
    %v814 = vand.u32 %v787, 2147483648
    %v815 = vor.u32 1.1754944e-38, %v814
    %v816 = vsel %vm813, %v815, %v811
    %v817 = vmul.f32 %v781, %v816
    %818 = vrot.lane.b32.xlu0 %v466, 96
    %v819 = vpop.permute.xlu0 %818
    %820 = vrot.lane.b32.xlu0 %v469, 96
    %v821 = vpop.permute.xlu0 %820
    %v824 = vsel %vm517, %v802, 0
    %v827 = vsel %vm517, %v817, 0
    %v829 = vsel %vm285, %v821, 0
    %831 = vmatpush.msra.mxu0 0.0
    %832 = vmatpush.msra.mxu0 0.0
    %833 = vmatpush.msra.mxu0 0.0
    %834 = vmatpush.msra.mxu0 0.0
    %835 = vmatpush.msra.mxu0 0.0
    %836 = vmatpush.msra.mxu0 0.0
    %837 = vmatpush.msra.mxu0 0.0
    %838 = vmatpush.msra.mxu0 0.0
    %839 = vmatpush.msra.mxu0 0.0
    %840 = vmatpush.msra.mxu0 0.0
    %841 = vmatpush.msra.mxu0 0.0
    %842 = vmatpush.msra.mxu0 0.0
    %843 = vmatpush.msra.mxu0 0.0
    %844 = vmatpush.msra.mxu0 0.0
    %845 = vmatpush.msra.mxu0 %v829
    %846 = vmatpush.msra.mxu0 %v819
    %847 = vmatmul.f32.gmra.mxu0 %v824
    %v848 = vpop.f32.mrf.mxu0
    %v849 = vadd.f32 0.0, %v848
    %850 = vmatmul.f32.gmra.mxu0 %v827
    %v851 = vpop.f32.mrf.mxu0
    %v852 = vadd.f32 0.0, %v851
    %853 = vdwg.mxu0
    %854 = vrot.lane.b32.xlu0 %v440, 80
    %v855 = vpop.permute.xlu0 %854
    %856 = vrot.lane.b32.xlu0 %v443, 80
    %v857 = vpop.permute.xlu0 %856
    %858 = vrot.lane.b32.xlu0 %v440, 16
    %v859 = vpop.permute.xlu0 %858
    %860 = vrot.lane.b32.xlu0 %v443, 16
    %v861 = vpop.permute.xlu0 %860
    %v862 = vsel %vm480, %v855, 0
    %v864 = vsel %vm480, %v857, 0
    %v866 = vsel %vm480, %v859, 0
    %v868 = vsel %vm480, %v861, 0
    %870 = vmatpush.xpose.msra.mxu0 0.0
    %871 = vmatpush.xpose.msra.mxu0 0.0
    %872 = vmatpush.xpose.msra.mxu0 0.0
    %873 = vmatpush.xpose.msra.mxu0 0.0
    %874 = vmatpush.xpose.msra.mxu0 0.0
    %875 = vmatpush.xpose.msra.mxu0 0.0
    %876 = vmatpush.xpose.msra.mxu0 0.0
    %877 = vmatpush.xpose.msra.mxu0 0.0
    %878 = vmatpush.xpose.msra.mxu0 0.0
    %879 = vmatpush.xpose.msra.mxu0 0.0
    %880 = vmatpush.xpose.msra.mxu0 0.0
    %881 = vmatpush.xpose.msra.mxu0 0.0
    %882 = vmatpush.xpose.msra.mxu0 0.0
    %883 = vmatpush.xpose.msra.mxu0 0.0
    %884 = vmatpush.xpose.msra.mxu0 %v868
    %885 = vmatpush.xpose.msra.mxu0 %v866
    %886 = vmatmul.f32.gmra.mxu0 %v862
    %v887 = vpop.f32.mrf.mxu0
    %v888 = vadd.f32 0.0, %v887
    %889 = vmatmul.f32.gmra.mxu0 %v864
    %v890 = vpop.f32.mrf.mxu0
    %v891 = vadd.f32 0.0, %v890
    %892 = vdwg.mxu0
    %v893 = vmul.f32 %v888, 0.25
    %v894 = vmul.f32 %v891, 0.25
    %v895 = vadd.f32 %v893, %v514
    %v896 = vadd.f32 %v894, %v514
    %v897 = vsel %vm517, %v895, -inf
    %898 = vmax.xlane.f32.xlu0 %v897
    %v899 = vpop.xlane.xlu0 %898
    %v900 = vsel %vm521, %v896, -inf
    %901 = vmax.xlane.f32.xlu0 %v900
    %v902 = vpop.xlane.xlu0 %901
    %v903 = vsub.f32 %v895, %v899
    %v904 = vsub.f32 %v896, %v902
    %v905 = vmul.f32 %v903, 1.442695
    %v906 = vpow.pop %v905
    %v907 = vmul.f32 %v904, 1.442695
    %v908 = vpow.pop %v907
    %v909 = vsel %vm517, %v906, 0.0
    %910 = vadd.xlane.f32.xlu0 %v909
    %v911 = vpop.xlane.xlu0 %910
    %v912 = vsel %vm521, %v908, 0.0
    %913 = vadd.xlane.f32.xlu0 %v912
    %v914 = vpop.xlane.xlu0 %913
    %v915 = vrcp.pop %v911
    %v916 = vmul.f32 %v911, %v915
    %v917 = vsub.f32 1.0, %v916
    %v918 = vmul.f32 %v915, %v917
    %v919 = vadd.f32 %v915, %v918
    %vm920 = vweird.f32 %v911
    %vm921 = vweird.f32 %v915
    %vm922 = vmor %vm920, %vm921
    %v923 = vsel %vm922, %v915, %v919
    %v924 = vand.u32 2147483647, %v911
    %vm925 = vcmp.eq.f32.partialorder %v924, 8.507059e+37
    %v926 = vand.u32 %v911, 2147483648
    %v927 = vor.u32 1.1754944e-38, %v926
    %v928 = vsel %vm925, %v927, %v923
    %v929 = vmul.f32 %v906, %v928
    %v930 = vrcp.pop %v914
    %v931 = vmul.f32 %v914, %v930
    %v932 = vsub.f32 1.0, %v931
    %v933 = vmul.f32 %v930, %v932
    %v934 = vadd.f32 %v930, %v933
    %vm935 = vweird.f32 %v914
    %vm936 = vweird.f32 %v930
    %vm937 = vmor %vm935, %vm936
    %v938 = vsel %vm937, %v930, %v934
    %v939 = vand.u32 2147483647, %v914
    %vm940 = vcmp.eq.f32.partialorder %v939, 8.507059e+37
    %v941 = vand.u32 %v914, 2147483648
    %v942 = vor.u32 1.1754944e-38, %v941
    %v943 = vsel %vm940, %v942, %v938
    %v944 = vmul.f32 %v908, %v943
    %945 = vrot.lane.b32.xlu0 %v466, 80
    %v946 = vpop.permute.xlu0 %945
    %947 = vrot.lane.b32.xlu0 %v469, 80
    %v948 = vpop.permute.xlu0 %947
    %v951 = vsel %vm517, %v929, 0
    %v954 = vsel %vm517, %v944, 0
    %v956 = vsel %vm285, %v948, 0
    %958 = vmatpush.msra.mxu0 0.0
    %959 = vmatpush.msra.mxu0 0.0
    %960 = vmatpush.msra.mxu0 0.0
    %961 = vmatpush.msra.mxu0 0.0
    %962 = vmatpush.msra.mxu0 0.0
    %963 = vmatpush.msra.mxu0 0.0
    %964 = vmatpush.msra.mxu0 0.0
    %965 = vmatpush.msra.mxu0 0.0
    %966 = vmatpush.msra.mxu0 0.0
    %967 = vmatpush.msra.mxu0 0.0
    %968 = vmatpush.msra.mxu0 0.0
    %969 = vmatpush.msra.mxu0 0.0
    %970 = vmatpush.msra.mxu0 0.0
    %971 = vmatpush.msra.mxu0 0.0
    %972 = vmatpush.msra.mxu0 %v956
    %973 = vmatpush.msra.mxu0 %v946
    %974 = vmatmul.f32.gmra.mxu0 %v951
    %v975 = vpop.f32.mrf.mxu0
    %v976 = vadd.f32 0.0, %v975
    %977 = vmatmul.f32.gmra.mxu0 %v954
    %v978 = vpop.f32.mrf.mxu0
    %v979 = vadd.f32 0.0, %v978
    %980 = vdwg.mxu0
    %983 = vrot.lane.b32.xlu0 %v722, 16
    %v984 = vpop.permute.xlu0 %983
    %985 = vrot.lane.b32.xlu0 %v725, 16
    %v986 = vpop.permute.xlu0 %985
    %991 = vrot.lane.b32.xlu0 %v849, 32
    %v992 = vpop.permute.xlu0 %991
    %993 = vrot.lane.b32.xlu0 %v852, 32
    %v994 = vpop.permute.xlu0 %993
    %999 = vrot.lane.b32.xlu0 %v976, 48
    %v1000 = vpop.permute.xlu0 %999
    %1001 = vrot.lane.b32.xlu0 %v979, 48
    %v1002 = vpop.permute.xlu0 %1001
    %v1005 = vsel %vm480, %v594, %v984
    %v1006 = vsel %vm480, %v597, %v986
    %vm1007 = vcmask 261120
    %v1008 = vsel %vm1007, %v1005, %v992
    %v1009 = vsel %vm1007, %v1006, %v994
    %vm1010 = vcmask 392192
    %v1011 = vsel %vm1010, %v1008, %v1000
    %v1012 = vsel %vm1010, %v1009, %v1002
    %vm1014 = vcmask 1045504
    %v1015 = vrot.slane %v443, 2
    %v1016 = vrot.slane %v446, 2
    %v1017 = vsel %vm1014, %v1015, %v1016
    %1018 = vrot.lane.b32.xlu0 %v1017, 64
    %v1019 = vpop.permute.xlu0 %1018
    %1020 = vrot.lane.b32.xlu0 %v1016, 64
    %v1021 = vpop.permute.xlu0 %1020
    %v1022 = vsel %vm480, %v1017, 0
    %v1024 = vsel %vm480, %v1016, 0
    %v1026 = vsel %vm480, %v1019, 0
    %v1028 = vsel %vm480, %v1021, 0
    %1030 = vmatpush.xpose.msra.mxu0 0.0
    %1031 = vmatpush.xpose.msra.mxu0 0.0
    %1032 = vmatpush.xpose.msra.mxu0 0.0
    %1033 = vmatpush.xpose.msra.mxu0 0.0
    %1034 = vmatpush.xpose.msra.mxu0 0.0
    %1035 = vmatpush.xpose.msra.mxu0 0.0
    %1036 = vmatpush.xpose.msra.mxu0 0.0
    %1037 = vmatpush.xpose.msra.mxu0 0.0
    %1038 = vmatpush.xpose.msra.mxu0 0.0
    %1039 = vmatpush.xpose.msra.mxu0 0.0
    %1040 = vmatpush.xpose.msra.mxu0 0.0
    %1041 = vmatpush.xpose.msra.mxu0 0.0
    %1042 = vmatpush.xpose.msra.mxu0 0.0
    %1043 = vmatpush.xpose.msra.mxu0 0.0
    %1044 = vmatpush.xpose.msra.mxu0 %v1028
    %1045 = vmatpush.xpose.msra.mxu0 %v1026
    %1046 = vmatmul.f32.gmra.mxu0 %v1022
    %v1047 = vpop.f32.mrf.mxu0
    %v1048 = vadd.f32 0.0, %v1047
    %1049 = vmatmul.f32.gmra.mxu0 %v1024
    %v1050 = vpop.f32.mrf.mxu0
    %v1051 = vadd.f32 0.0, %v1050
    %1052 = vdwg.mxu0
    %v1053 = vmul.f32 %v1048, 0.25
    %v1054 = vmul.f32 %v1051, 0.25
    %v1055 = vperm.slane %v387, 1
    %v1056 = vadd.f32 %v1053, %v1055
    %v1057 = vadd.f32 %v1054, %v1055
    %v1058 = vsel %vm517, %v1056, -inf
    %1059 = vmax.xlane.f32.xlu0 %v1058
    %v1060 = vpop.xlane.xlu0 %1059
    %v1061 = vsel %vm521, %v1057, -inf
    %1062 = vmax.xlane.f32.xlu0 %v1061
    %v1063 = vpop.xlane.xlu0 %1062
    %v1064 = vsub.f32 %v1056, %v1060
    %v1065 = vsub.f32 %v1057, %v1063
    %v1066 = vmul.f32 %v1064, 1.442695
    %v1067 = vpow.pop %v1066
    %v1068 = vmul.f32 %v1065, 1.442695
    %v1069 = vpow.pop %v1068
    %v1070 = vsel %vm517, %v1067, 0.0
    %1071 = vadd.xlane.f32.xlu0 %v1070
    %v1072 = vpop.xlane.xlu0 %1071
    %v1073 = vsel %vm521, %v1069, 0.0
    %1074 = vadd.xlane.f32.xlu0 %v1073
    %v1075 = vpop.xlane.xlu0 %1074
    %v1076 = vrcp.pop %v1072
    %v1077 = vmul.f32 %v1072, %v1076
    %v1078 = vsub.f32 1.0, %v1077
    %v1079 = vmul.f32 %v1076, %v1078
    %v1080 = vadd.f32 %v1076, %v1079
    %vm1081 = vweird.f32 %v1072
    %vm1082 = vweird.f32 %v1076
    %vm1083 = vmor %vm1081, %vm1082
    %v1084 = vsel %vm1083, %v1076, %v1080
    %v1085 = vand.u32 2147483647, %v1072
    %vm1086 = vcmp.eq.f32.partialorder %v1085, 8.507059e+37
    %v1087 = vand.u32 %v1072, 2147483648
    %v1088 = vor.u32 1.1754944e-38, %v1087
    %v1089 = vsel %vm1086, %v1088, %v1084
    %v1090 = vmul.f32 %v1067, %v1089
    %v1091 = vrcp.pop %v1075
    %v1092 = vmul.f32 %v1075, %v1091
    %v1093 = vsub.f32 1.0, %v1092
    %v1094 = vmul.f32 %v1091, %v1093
    %v1095 = vadd.f32 %v1091, %v1094
    %vm1096 = vweird.f32 %v1075
    %vm1097 = vweird.f32 %v1091
    %vm1098 = vmor %vm1096, %vm1097
    %v1099 = vsel %vm1098, %v1091, %v1095
    %v1100 = vand.u32 2147483647, %v1075
    %vm1101 = vcmp.eq.f32.partialorder %v1100, 8.507059e+37
    %v1102 = vand.u32 %v1075, 2147483648
    %v1103 = vor.u32 1.1754944e-38, %v1102
    %v1104 = vsel %vm1101, %v1103, %v1099
    %v1105 = vmul.f32 %v1069, %v1104
    %v1107 = vrot.slane %v469, 2
    %v1108 = vrot.slane %v472, 2
    %v1109 = vsel %vm1014, %v1107, %v1108
    %v1112 = vsel %vm517, %v1090, 0
    %v1115 = vsel %vm517, %v1105, 0
    %v1117 = vsel %vm285, %v1108, 0
    %1119 = vmatpush.msra.mxu0 0.0
    %1120 = vmatpush.msra.mxu0 0.0
    %1121 = vmatpush.msra.mxu0 0.0
    %1122 = vmatpush.msra.mxu0 0.0
    %1123 = vmatpush.msra.mxu0 0.0
    %1124 = vmatpush.msra.mxu0 0.0
    %1125 = vmatpush.msra.mxu0 0.0
    %1126 = vmatpush.msra.mxu0 0.0
    %1127 = vmatpush.msra.mxu0 0.0
    %1128 = vmatpush.msra.mxu0 0.0
    %1129 = vmatpush.msra.mxu0 0.0
    %1130 = vmatpush.msra.mxu0 0.0
    %1131 = vmatpush.msra.mxu0 0.0
    %1132 = vmatpush.msra.mxu0 0.0
    %1133 = vmatpush.msra.mxu0 %v1117
    %1134 = vmatpush.msra.mxu0 %v1109
    %1135 = vmatmul.f32.gmra.mxu0 %v1112
    %v1136 = vpop.f32.mrf.mxu0
    %v1137 = vadd.f32 0.0, %v1136
    %1138 = vmatmul.f32.gmra.mxu0 %v1115
    %v1139 = vpop.f32.mrf.mxu0
    %v1140 = vadd.f32 0.0, %v1139
    %1141 = vdwg.mxu0
    %1142 = vrot.lane.b32.xlu0 %v1017, 112
    %v1143 = vpop.permute.xlu0 %1142
    %1144 = vrot.lane.b32.xlu0 %v1016, 112
    %v1145 = vpop.permute.xlu0 %1144
    %1146 = vrot.lane.b32.xlu0 %v1017, 48
    %v1147 = vpop.permute.xlu0 %1146
    %1148 = vrot.lane.b32.xlu0 %v1016, 48
    %v1149 = vpop.permute.xlu0 %1148
    %v1150 = vsel %vm480, %v1143, 0
    %v1152 = vsel %vm480, %v1145, 0
    %v1154 = vsel %vm480, %v1147, 0
    %v1156 = vsel %vm480, %v1149, 0
    %1158 = vmatpush.xpose.msra.mxu0 0.0
    %1159 = vmatpush.xpose.msra.mxu0 0.0
    %1160 = vmatpush.xpose.msra.mxu0 0.0
    %1161 = vmatpush.xpose.msra.mxu0 0.0
    %1162 = vmatpush.xpose.msra.mxu0 0.0
    %1163 = vmatpush.xpose.msra.mxu0 0.0
    %1164 = vmatpush.xpose.msra.mxu0 0.0
    %1165 = vmatpush.xpose.msra.mxu0 0.0
    %1166 = vmatpush.xpose.msra.mxu0 0.0
    %1167 = vmatpush.xpose.msra.mxu0 0.0
    %1168 = vmatpush.xpose.msra.mxu0 0.0
    %1169 = vmatpush.xpose.msra.mxu0 0.0
    %1170 = vmatpush.xpose.msra.mxu0 0.0
    %1171 = vmatpush.xpose.msra.mxu0 0.0
    %1172 = vmatpush.xpose.msra.mxu0 %v1156
    %1173 = vmatpush.xpose.msra.mxu0 %v1154
    %1174 = vmatmul.f32.gmra.mxu0 %v1150
    %v1175 = vpop.f32.mrf.mxu0
    %v1176 = vadd.f32 0.0, %v1175
    %1177 = vmatmul.f32.gmra.mxu0 %v1152
    %v1178 = vpop.f32.mrf.mxu0
    %v1179 = vadd.f32 0.0, %v1178
    %1180 = vdwg.mxu0
    %v1181 = vmul.f32 %v1176, 0.25
    %v1182 = vmul.f32 %v1179, 0.25
    %v1183 = vadd.f32 %v1181, %v1055
    %v1184 = vadd.f32 %v1182, %v1055
    %v1185 = vsel %vm517, %v1183, -inf
    %1186 = vmax.xlane.f32.xlu0 %v1185
    %v1187 = vpop.xlane.xlu0 %1186
    %v1188 = vsel %vm521, %v1184, -inf
    %1189 = vmax.xlane.f32.xlu0 %v1188
    %v1190 = vpop.xlane.xlu0 %1189
    %v1191 = vsub.f32 %v1183, %v1187
    %v1192 = vsub.f32 %v1184, %v1190
    %v1193 = vmul.f32 %v1191, 1.442695
    %v1194 = vpow.pop %v1193
    %v1195 = vmul.f32 %v1192, 1.442695
    %v1196 = vpow.pop %v1195
    %v1197 = vsel %vm517, %v1194, 0.0
    %1198 = vadd.xlane.f32.xlu0 %v1197
    %v1199 = vpop.xlane.xlu0 %1198
    %v1200 = vsel %vm521, %v1196, 0.0
    %1201 = vadd.xlane.f32.xlu0 %v1200
    %v1202 = vpop.xlane.xlu0 %1201
    %v1203 = vrcp.pop %v1199
    %v1204 = vmul.f32 %v1199, %v1203
    %v1205 = vsub.f32 1.0, %v1204
    %v1206 = vmul.f32 %v1203, %v1205
    %v1207 = vadd.f32 %v1203, %v1206
    %vm1208 = vweird.f32 %v1199
    %vm1209 = vweird.f32 %v1203
    %vm1210 = vmor %vm1208, %vm1209
    %v1211 = vsel %vm1210, %v1203, %v1207
    %v1212 = vand.u32 2147483647, %v1199
    %vm1213 = vcmp.eq.f32.partialorder %v1212, 8.507059e+37
    %v1214 = vand.u32 %v1199, 2147483648
    %v1215 = vor.u32 1.1754944e-38, %v1214
    %v1216 = vsel %vm1213, %v1215, %v1211
    %v1217 = vmul.f32 %v1194, %v1216
    %v1218 = vrcp.pop %v1202
    %v1219 = vmul.f32 %v1202, %v1218
    %v1220 = vsub.f32 1.0, %v1219
    %v1221 = vmul.f32 %v1218, %v1220
    %v1222 = vadd.f32 %v1218, %v1221
    %vm1223 = vweird.f32 %v1202
    %vm1224 = vweird.f32 %v1218
    %vm1225 = vmor %vm1223, %vm1224
    %v1226 = vsel %vm1225, %v1218, %v1222
    %v1227 = vand.u32 2147483647, %v1202
    %vm1228 = vcmp.eq.f32.partialorder %v1227, 8.507059e+37
    %v1229 = vand.u32 %v1202, 2147483648
    %v1230 = vor.u32 1.1754944e-38, %v1229
    %v1231 = vsel %vm1228, %v1230, %v1226
    %v1232 = vmul.f32 %v1196, %v1231
    %1233 = vrot.lane.b32.xlu0 %v1109, 112
    %v1234 = vpop.permute.xlu0 %1233
    %1235 = vrot.lane.b32.xlu0 %v1108, 112
    %v1236 = vpop.permute.xlu0 %1235
    %v1239 = vsel %vm517, %v1217, 0
    %v1242 = vsel %vm517, %v1232, 0
    %v1244 = vsel %vm285, %v1236, 0
    %1246 = vmatpush.msra.mxu0 0.0
    %1247 = vmatpush.msra.mxu0 0.0
    %1248 = vmatpush.msra.mxu0 0.0
    %1249 = vmatpush.msra.mxu0 0.0
    %1250 = vmatpush.msra.mxu0 0.0
    %1251 = vmatpush.msra.mxu0 0.0
    %1252 = vmatpush.msra.mxu0 0.0
    %1253 = vmatpush.msra.mxu0 0.0
    %1254 = vmatpush.msra.mxu0 0.0
    %1255 = vmatpush.msra.mxu0 0.0
    %1256 = vmatpush.msra.mxu0 0.0
    %1257 = vmatpush.msra.mxu0 0.0
    %1258 = vmatpush.msra.mxu0 0.0
    %1259 = vmatpush.msra.mxu0 0.0
    %1260 = vmatpush.msra.mxu0 %v1244
    %1261 = vmatpush.msra.mxu0 %v1234
    %1262 = vmatmul.f32.gmra.mxu0 %v1239
    %v1263 = vpop.f32.mrf.mxu0
    %v1264 = vadd.f32 0.0, %v1263
    %1265 = vmatmul.f32.gmra.mxu0 %v1242
    %v1266 = vpop.f32.mrf.mxu0
    %v1267 = vadd.f32 0.0, %v1266
    %1268 = vdwg.mxu0
    %1269 = vrot.lane.b32.xlu0 %v1017, 96
    %v1270 = vpop.permute.xlu0 %1269
    %1271 = vrot.lane.b32.xlu0 %v1016, 96
    %v1272 = vpop.permute.xlu0 %1271
    %1273 = vrot.lane.b32.xlu0 %v1017, 32
    %v1274 = vpop.permute.xlu0 %1273
    %1275 = vrot.lane.b32.xlu0 %v1016, 32
    %v1276 = vpop.permute.xlu0 %1275
    %v1277 = vsel %vm480, %v1270, 0
    %v1279 = vsel %vm480, %v1272, 0
    %v1281 = vsel %vm480, %v1274, 0
    %v1283 = vsel %vm480, %v1276, 0
    %1285 = vmatpush.xpose.msra.mxu0 0.0
    %1286 = vmatpush.xpose.msra.mxu0 0.0
    %1287 = vmatpush.xpose.msra.mxu0 0.0
    %1288 = vmatpush.xpose.msra.mxu0 0.0
    %1289 = vmatpush.xpose.msra.mxu0 0.0
    %1290 = vmatpush.xpose.msra.mxu0 0.0
    %1291 = vmatpush.xpose.msra.mxu0 0.0
    %1292 = vmatpush.xpose.msra.mxu0 0.0
    %1293 = vmatpush.xpose.msra.mxu0 0.0
    %1294 = vmatpush.xpose.msra.mxu0 0.0
    %1295 = vmatpush.xpose.msra.mxu0 0.0
    %1296 = vmatpush.xpose.msra.mxu0 0.0
    %1297 = vmatpush.xpose.msra.mxu0 0.0
    %1298 = vmatpush.xpose.msra.mxu0 0.0
    %1299 = vmatpush.xpose.msra.mxu0 %v1283
    %1300 = vmatpush.xpose.msra.mxu0 %v1281
    %1301 = vmatmul.f32.gmra.mxu0 %v1277
    %v1302 = vpop.f32.mrf.mxu0
    %v1303 = vadd.f32 0.0, %v1302
    %1304 = vmatmul.f32.gmra.mxu0 %v1279
    %v1305 = vpop.f32.mrf.mxu0
    %v1306 = vadd.f32 0.0, %v1305
    %1307 = vdwg.mxu0
    %v1308 = vmul.f32 %v1303, 0.25
    %v1309 = vmul.f32 %v1306, 0.25
    %v1310 = vadd.f32 %v1308, %v1055
    %v1311 = vadd.f32 %v1309, %v1055
    %v1312 = vsel %vm517, %v1310, -inf
    %1313 = vmax.xlane.f32.xlu0 %v1312
    %v1314 = vpop.xlane.xlu0 %1313
    %v1315 = vsel %vm521, %v1311, -inf
    %1316 = vmax.xlane.f32.xlu0 %v1315
    %v1317 = vpop.xlane.xlu0 %1316
    %v1318 = vsub.f32 %v1310, %v1314
    %v1319 = vsub.f32 %v1311, %v1317
    %v1320 = vmul.f32 %v1318, 1.442695
    %v1321 = vpow.pop %v1320
    %v1322 = vmul.f32 %v1319, 1.442695
    %v1323 = vpow.pop %v1322
    %v1324 = vsel %vm517, %v1321, 0.0
    %1325 = vadd.xlane.f32.xlu0 %v1324
    %v1326 = vpop.xlane.xlu0 %1325
    %v1327 = vsel %vm521, %v1323, 0.0
    %1328 = vadd.xlane.f32.xlu0 %v1327
    %v1329 = vpop.xlane.xlu0 %1328
    %v1330 = vrcp.pop %v1326
    %v1331 = vmul.f32 %v1326, %v1330
    %v1332 = vsub.f32 1.0, %v1331
    %v1333 = vmul.f32 %v1330, %v1332
    %v1334 = vadd.f32 %v1330, %v1333
    %vm1335 = vweird.f32 %v1326
    %vm1336 = vweird.f32 %v1330
    %vm1337 = vmor %vm1335, %vm1336
    %v1338 = vsel %vm1337, %v1330, %v1334
    %v1339 = vand.u32 2147483647, %v1326
    %vm1340 = vcmp.eq.f32.partialorder %v1339, 8.507059e+37
    %v1341 = vand.u32 %v1326, 2147483648
    %v1342 = vor.u32 1.1754944e-38, %v1341
    %v1343 = vsel %vm1340, %v1342, %v1338
    %v1344 = vmul.f32 %v1321, %v1343
    %v1345 = vrcp.pop %v1329
    %v1346 = vmul.f32 %v1329, %v1345
    %v1347 = vsub.f32 1.0, %v1346
    %v1348 = vmul.f32 %v1345, %v1347
    %v1349 = vadd.f32 %v1345, %v1348
    %vm1350 = vweird.f32 %v1329
    %vm1351 = vweird.f32 %v1345
    %vm1352 = vmor %vm1350, %vm1351
    %v1353 = vsel %vm1352, %v1345, %v1349
    %v1354 = vand.u32 2147483647, %v1329
    %vm1355 = vcmp.eq.f32.partialorder %v1354, 8.507059e+37
    %v1356 = vand.u32 %v1329, 2147483648
    %v1357 = vor.u32 1.1754944e-38, %v1356
    %v1358 = vsel %vm1355, %v1357, %v1353
    %v1359 = vmul.f32 %v1323, %v1358
    %1360 = vrot.lane.b32.xlu0 %v1109, 96
    %v1361 = vpop.permute.xlu0 %1360
    %1362 = vrot.lane.b32.xlu0 %v1108, 96
    %v1363 = vpop.permute.xlu0 %1362
    %v1366 = vsel %vm517, %v1344, 0
    %v1369 = vsel %vm517, %v1359, 0
    %v1371 = vsel %vm285, %v1363, 0
    %1373 = vmatpush.msra.mxu0 0.0
    %1374 = vmatpush.msra.mxu0 0.0
    %1375 = vmatpush.msra.mxu0 0.0
    %1376 = vmatpush.msra.mxu0 0.0
    %1377 = vmatpush.msra.mxu0 0.0
    %1378 = vmatpush.msra.mxu0 0.0
    %1379 = vmatpush.msra.mxu0 0.0
    %1380 = vmatpush.msra.mxu0 0.0
    %1381 = vmatpush.msra.mxu0 0.0
    %1382 = vmatpush.msra.mxu0 0.0
    %1383 = vmatpush.msra.mxu0 0.0
    %1384 = vmatpush.msra.mxu0 0.0
    %1385 = vmatpush.msra.mxu0 0.0
    %1386 = vmatpush.msra.mxu0 0.0
    %1387 = vmatpush.msra.mxu0 %v1371
    %1388 = vmatpush.msra.mxu0 %v1361
    %1389 = vmatmul.f32.gmra.mxu0 %v1366
    %v1390 = vpop.f32.mrf.mxu0
    %v1391 = vadd.f32 0.0, %v1390
    %1392 = vmatmul.f32.gmra.mxu0 %v1369
    %v1393 = vpop.f32.mrf.mxu0
    %v1394 = vadd.f32 0.0, %v1393
    %1395 = vdwg.mxu0
    %1396 = vrot.lane.b32.xlu0 %v1017, 80
    %v1397 = vpop.permute.xlu0 %1396
    %1398 = vrot.lane.b32.xlu0 %v1016, 80
    %v1399 = vpop.permute.xlu0 %1398
    %1400 = vrot.lane.b32.xlu0 %v1017, 16
    %v1401 = vpop.permute.xlu0 %1400
    %1402 = vrot.lane.b32.xlu0 %v1016, 16
    %v1403 = vpop.permute.xlu0 %1402
    %v1404 = vsel %vm480, %v1397, 0
    %v1406 = vsel %vm480, %v1399, 0
    %v1408 = vsel %vm480, %v1401, 0
    %v1410 = vsel %vm480, %v1403, 0
    %1412 = vmatpush.xpose.msra.mxu0 0.0
    %1413 = vmatpush.xpose.msra.mxu0 0.0
    %1414 = vmatpush.xpose.msra.mxu0 0.0
    %1415 = vmatpush.xpose.msra.mxu0 0.0
    %1416 = vmatpush.xpose.msra.mxu0 0.0
    %1417 = vmatpush.xpose.msra.mxu0 0.0
    %1418 = vmatpush.xpose.msra.mxu0 0.0
    %1419 = vmatpush.xpose.msra.mxu0 0.0
    %1420 = vmatpush.xpose.msra.mxu0 0.0
    %1421 = vmatpush.xpose.msra.mxu0 0.0
    %1422 = vmatpush.xpose.msra.mxu0 0.0
    %1423 = vmatpush.xpose.msra.mxu0 0.0
    %1424 = vmatpush.xpose.msra.mxu0 0.0
    %1425 = vmatpush.xpose.msra.mxu0 0.0
    %1426 = vmatpush.xpose.msra.mxu0 %v1410
    %1427 = vmatpush.xpose.msra.mxu0 %v1408
    %1428 = vmatmul.f32.gmra.mxu0 %v1404
    %v1429 = vpop.f32.mrf.mxu0
    %v1430 = vadd.f32 0.0, %v1429
    %1431 = vmatmul.f32.gmra.mxu0 %v1406
    %v1432 = vpop.f32.mrf.mxu0
    %v1433 = vadd.f32 0.0, %v1432
    %1434 = vdwg.mxu0
    %v1435 = vmul.f32 %v1430, 0.25
    %v1436 = vmul.f32 %v1433, 0.25
    %v1437 = vadd.f32 %v1435, %v1055
    %v1438 = vadd.f32 %v1436, %v1055
    %v1439 = vsel %vm517, %v1437, -inf
    %1440 = vmax.xlane.f32.xlu0 %v1439
    %v1441 = vpop.xlane.xlu0 %1440
    %v1442 = vsel %vm521, %v1438, -inf
    %1443 = vmax.xlane.f32.xlu0 %v1442
    %v1444 = vpop.xlane.xlu0 %1443
    %v1445 = vsub.f32 %v1437, %v1441
    %v1446 = vsub.f32 %v1438, %v1444
    %v1447 = vmul.f32 %v1445, 1.442695
    %v1448 = vpow.pop %v1447
    %v1449 = vmul.f32 %v1446, 1.442695
    %v1450 = vpow.pop %v1449
    %v1451 = vsel %vm517, %v1448, 0.0
    %1452 = vadd.xlane.f32.xlu0 %v1451
    %v1453 = vpop.xlane.xlu0 %1452
    %v1454 = vsel %vm521, %v1450, 0.0
    %1455 = vadd.xlane.f32.xlu0 %v1454
    %v1456 = vpop.xlane.xlu0 %1455
    %v1457 = vrcp.pop %v1453
    %v1458 = vmul.f32 %v1453, %v1457
    %v1459 = vsub.f32 1.0, %v1458
    %v1460 = vmul.f32 %v1457, %v1459
    %v1461 = vadd.f32 %v1457, %v1460
    %vm1462 = vweird.f32 %v1453
    %vm1463 = vweird.f32 %v1457
    %vm1464 = vmor %vm1462, %vm1463
    %v1465 = vsel %vm1464, %v1457, %v1461
    %v1466 = vand.u32 2147483647, %v1453
    %vm1467 = vcmp.eq.f32.partialorder %v1466, 8.507059e+37
    %v1468 = vand.u32 %v1453, 2147483648
    %v1469 = vor.u32 1.1754944e-38, %v1468
    %v1470 = vsel %vm1467, %v1469, %v1465
    %v1471 = vmul.f32 %v1448, %v1470
    %v1472 = vrcp.pop %v1456
    %v1473 = vmul.f32 %v1456, %v1472
    %v1474 = vsub.f32 1.0, %v1473
    %v1475 = vmul.f32 %v1472, %v1474
    %v1476 = vadd.f32 %v1472, %v1475
    %vm1477 = vweird.f32 %v1456
    %vm1478 = vweird.f32 %v1472
    %vm1479 = vmor %vm1477, %vm1478
    %v1480 = vsel %vm1479, %v1472, %v1476
    %v1481 = vand.u32 2147483647, %v1456
    %vm1482 = vcmp.eq.f32.partialorder %v1481, 8.507059e+37
    %v1483 = vand.u32 %v1456, 2147483648
    %v1484 = vor.u32 1.1754944e-38, %v1483
    %v1485 = vsel %vm1482, %v1484, %v1480
    %v1486 = vmul.f32 %v1450, %v1485
    %1487 = vrot.lane.b32.xlu0 %v1109, 80
    %v1488 = vpop.permute.xlu0 %1487
    %1489 = vrot.lane.b32.xlu0 %v1108, 80
    %v1490 = vpop.permute.xlu0 %1489
    %v1493 = vsel %vm517, %v1471, 0
    %v1496 = vsel %vm517, %v1486, 0
    %v1498 = vsel %vm285, %v1490, 0
    %1500 = vmatpush.msra.mxu0 0.0
    %1501 = vmatpush.msra.mxu0 0.0
    %1502 = vmatpush.msra.mxu0 0.0
    %1503 = vmatpush.msra.mxu0 0.0
    %1504 = vmatpush.msra.mxu0 0.0
    %1505 = vmatpush.msra.mxu0 0.0
    %1506 = vmatpush.msra.mxu0 0.0
    %1507 = vmatpush.msra.mxu0 0.0
    %1508 = vmatpush.msra.mxu0 0.0
    %1509 = vmatpush.msra.mxu0 0.0
    %1510 = vmatpush.msra.mxu0 0.0
    %1511 = vmatpush.msra.mxu0 0.0
    %1512 = vmatpush.msra.mxu0 0.0
    %1513 = vmatpush.msra.mxu0 0.0
    %1514 = vmatpush.msra.mxu0 %v1498
    %1515 = vmatpush.msra.mxu0 %v1488
    %1516 = vmatmul.f32.gmra.mxu0 %v1493
    %v1517 = vpop.f32.mrf.mxu0
    %v1518 = vadd.f32 0.0, %v1517
    %1519 = vmatmul.f32.gmra.mxu0 %v1496
    %v1520 = vpop.f32.mrf.mxu0
    %v1521 = vadd.f32 0.0, %v1520
    %1522 = vdwg.mxu0
    %1525 = vrot.lane.b32.xlu0 %v1264, 16
    %v1526 = vpop.permute.xlu0 %1525
    %1527 = vrot.lane.b32.xlu0 %v1267, 16
    %v1528 = vpop.permute.xlu0 %1527
    %1533 = vrot.lane.b32.xlu0 %v1391, 32
    %v1534 = vpop.permute.xlu0 %1533
    %1535 = vrot.lane.b32.xlu0 %v1394, 32
    %v1536 = vpop.permute.xlu0 %1535
    %1541 = vrot.lane.b32.xlu0 %v1518, 48
    %v1542 = vpop.permute.xlu0 %1541
    %1543 = vrot.lane.b32.xlu0 %v1521, 48
    %v1544 = vpop.permute.xlu0 %1543
    %v1547 = vsel %vm480, %v1137, %v1526
    %v1548 = vsel %vm480, %v1140, %v1528
    %v1549 = vsel %vm1007, %v1547, %v1534
    %v1550 = vsel %vm1007, %v1548, %v1536
    %v1551 = vsel %vm1010, %v1549, %v1542
    %v1552 = vsel %vm1010, %v1550, %v1544
    %v1555 = vrot.slane %v1551, 6
    %v1556 = vrot.slane %v1552, 6
    %v1557 = vsel %vm285, %v1555, %v1556
    %v1559 = vsel %vm285, %v1012, %v1555
    %v1560 = vld [vmem:[%s8] sm:$0xff]
    %v1561 = vld [vmem:[%s8 + $0x8] sm:$0xff]
    %v1562 = vld [vmem:[%s8 + $0x10] sm:$0xff]
    %v1563 = vld [vmem:[%s8 + $0x18] sm:$0xff]
    %v1564 = vld [vmem:[%s8 + $0x20] sm:$0xff]
    %v1565 = vld [vmem:[%s8 + $0x28] sm:$0xff]
    %v1566 = vld [vmem:[%s8 + $0x30] sm:$0xff]
    %v1567 = vld [vmem:[%s8 + $0x38] sm:$0xff]
    %v1568 = vperm.slane %v392, 1
    %v1570 = vsel %vm412, %v1011, 0
    %v1573 = vsel %vm412, %v1559, 0
    %v1575 = vsel %vm412, %v1557, 0
    %1577 = vmatpush.msra.mxu0 0.0
    %1578 = vmatpush.msra.mxu0 0.0
    %1579 = vmatpush.msra.mxu0 0.0
    %1580 = vmatpush.msra.mxu0 0.0
    %1581 = vmatpush.msra.mxu0 0.0
    %1582 = vmatpush.msra.mxu0 0.0
    %1583 = vmatpush.msra.mxu0 0.0
    %1584 = vmatpush.msra.mxu0 0.0
    %1585 = vmatpush.msra.mxu0 %v1567
    %1586 = vmatpush.msra.mxu0 %v1566
    %1587 = vmatpush.msra.mxu0 %v1565
    %1588 = vmatpush.msra.mxu0 %v1564
    %1589 = vmatpush.msra.mxu0 %v1563
    %1590 = vmatpush.msra.mxu0 %v1562
    %1591 = vmatpush.msra.mxu0 %v1561
    %1592 = vmatpush.msra.mxu0 %v1560
    %1593 = vmatmul.f32.gmra.mxu0 %v1570
    %v1594 = vpop.f32.mrf.mxu0
    %v1595 = vadd.f32 %v1568, %v1594
    %1596 = vmatmul.f32.gmra.mxu0 %v1573
    %v1597 = vpop.f32.mrf.mxu0
    %v1598 = vadd.f32 %v1568, %v1597
    %1599 = vmatmul.f32.gmra.mxu0 %v1575
    %v1600 = vpop.f32.mrf.mxu0
    %v1601 = vadd.f32 %v1568, %v1600
    %1602 = vdwg.mxu0
    %v1603 = vadd.f32 %v324, %v1595
    %v1604 = vadd.f32 %v327, %v1598
    %v1605 = vadd.f32 %v330, %v1601
    %v1606 = vsel %vm412, %v1603, 0.0
    %1607 = vadd.xlane.f32.xlu0 %v1606
    %v1608 = vpop.xlane.xlu0 %1607
    %v1609 = vsel %vm412, %v1604, 0.0
    %1610 = vadd.xlane.f32.xlu0 %v1609
    %v1611 = vpop.xlane.xlu0 %1610
    %vm1612 = vcmask 519168
    %v1613 = vsel %vm1612, %v1605, 0.0
    %1614 = vadd.xlane.f32.xlu0 %v1613
    %v1615 = vpop.xlane.xlu0 %1614
    %v1616 = vrcp.pop 64.0
    %v1617 = vmul.f32 64.0, %v1616
    %v1618 = vsub.f32 1.0, %v1617
    %v1619 = vmul.f32 %v1616, %v1618
    %v1620 = vadd.f32 %v1616, %v1619
    %vm1621 = vweird.f32 %v1616
    %v1622 = vsel %vm1621, %v1616, %v1620
    %v1623 = vmul.f32 %v1608, %v1622
    %v1624 = vmul.f32 %v1611, %v1622
    %v1625 = vmul.f32 %v1615, %v1622
    %v1626 = vsub.f32 %v1603, %v1623
    %v1627 = vsub.f32 %v1604, %v1624
    %v1628 = vsub.f32 %v1605, %v1625
    %v1629 = vmul.f32 %v1626, %v1626
    %v1630 = vmul.f32 %v1627, %v1627
    %v1631 = vmul.f32 %v1628, %v1628
    %v1632 = vsel %vm412, %v1629, 0.0
    %1633 = vadd.xlane.f32.xlu0 %v1632
    %v1634 = vpop.xlane.xlu0 %1633
    %v1635 = vsel %vm412, %v1630, 0.0
    %1636 = vadd.xlane.f32.xlu0 %v1635
    %v1637 = vpop.xlane.xlu0 %1636
    %v1638 = vsel %vm1612, %v1631, 0.0
    %1639 = vadd.xlane.f32.xlu0 %v1638
    %v1640 = vpop.xlane.xlu0 %1639
    %v1641 = vmul.f32 %v1634, %v1622
    %v1642 = vmul.f32 %v1637, %v1622
    %v1643 = vmul.f32 %v1640, %v1622
    %v1644 = vadd.f32 %v1641, 1e-05
    %v1645 = vadd.f32 %v1642, 1e-05
    %v1646 = vadd.f32 %v1643, 1e-05
    %v1647 = vrsqrt.pop %v1644
    %v1648 = vmul.f32 %v1647, %v1644
    %v1649 = vmul.f32 %v1648, %v1647
    %v1650 = vmul.f32 0.5, %v1649
    %v1651 = vsub.f32 1.5, %v1650
    %v1652 = vmul.f32 %v1647, %v1651
    %vm1653 = vweird.f32 %v1644
    %vm1654 = vweird.f32 %v1647
    %vm1655 = vmor %vm1653, %vm1654
    %v1656 = vsel %vm1655, %v1647, %v1652
    %v1657 = vrsqrt.pop %v1645
    %v1658 = vmul.f32 %v1657, %v1645
    %v1659 = vmul.f32 %v1658, %v1657
    %v1660 = vmul.f32 0.5, %v1659
    %v1661 = vsub.f32 1.5, %v1660
    %v1662 = vmul.f32 %v1657, %v1661
    %vm1663 = vweird.f32 %v1645
    %vm1664 = vweird.f32 %v1657
    %vm1665 = vmor %vm1663, %vm1664
    %v1666 = vsel %vm1665, %v1657, %v1662
    %v1667 = vrsqrt.pop %v1646
    %v1668 = vmul.f32 %v1667, %v1646
    %v1669 = vmul.f32 %v1668, %v1667
    %v1670 = vmul.f32 0.5, %v1669
    %v1671 = vsub.f32 1.5, %v1670
    %v1672 = vmul.f32 %v1667, %v1671
    %vm1673 = vweird.f32 %v1646
    %vm1674 = vweird.f32 %v1667
    %vm1675 = vmor %vm1673, %vm1674
    %v1676 = vsel %vm1675, %v1667, %v1672
    %v1677 = vmul.f32 %v1626, %v1656
    %v1678 = vmul.f32 %v1627, %v1666
    %v1679 = vmul.f32 %v1628, %v1676
    %v1680 = vperm.slane %v392, 4
    %v1681 = vmul.f32 %v1677, %v1680
    %v1682 = vmul.f32 %v1678, %v1680
    %v1683 = vmul.f32 %v1679, %v1680
    %v1684 = vperm.slane %v392, 5
    %v1685 = vadd.f32 %v1681, %v1684
    %v1686 = vadd.f32 %v1682, %v1684
    %v1687 = vadd.f32 %v1683, %v1684
    %v1688 = vld [vmem:[#allocation7] sm:$0xff]
    %v1689 = vld [vmem:[#allocation7 + $0x8] sm:$0xff]
    %v1690 = vld [vmem:[#allocation7 + $0x10] sm:$0xff]
    %v1691 = vld [vmem:[#allocation7 + $0x18] sm:$0xff]
    %v1692 = vld [vmem:[#allocation7 + $0x20] sm:$0xff]
    %v1693 = vld [vmem:[#allocation7 + $0x28] sm:$0xff]
    %v1694 = vld [vmem:[#allocation7 + $0x30] sm:$0xff]
    %v1695 = vld [vmem:[#allocation7 + $0x38] sm:$0xff]
    %v1696 = vperm.slane %v392, 2
    %v1698 = vsel %vm412, %v1685, 0
    %v1701 = vsel %vm412, %v1686, 0
    %v1704 = vsel %vm412, %v1687, 0
    %1706 = vmatpush.msra.mxu0 0.0
    %1707 = vmatpush.msra.mxu0 0.0
    %1708 = vmatpush.msra.mxu0 0.0
    %1709 = vmatpush.msra.mxu0 0.0
    %1710 = vmatpush.msra.mxu0 0.0
    %1711 = vmatpush.msra.mxu0 0.0
    %1712 = vmatpush.msra.mxu0 0.0
    %1713 = vmatpush.msra.mxu0 0.0
    %1714 = vmatpush.msra.mxu0 %v1695
    %1715 = vmatpush.msra.mxu0 %v1694
    %1716 = vmatpush.msra.mxu0 %v1693
    %1717 = vmatpush.msra.mxu0 %v1692
    %1718 = vmatpush.msra.mxu0 %v1691
    %1719 = vmatpush.msra.mxu0 %v1690
    %1720 = vmatpush.msra.mxu0 %v1689
    %1721 = vmatpush.msra.mxu0 %v1688
    %1722 = vmatmul.f32.gmra.mxu0 %v1698
    %v1723 = vpop.f32.mrf.mxu0
    %v1724 = vadd.f32 %v1696, %v1723
    %1725 = vmatmul.f32.gmra.mxu0 %v1701
    %v1726 = vpop.f32.mrf.mxu0
    %v1727 = vadd.f32 %v1696, %v1726
    %1728 = vmatmul.f32.gmra.mxu0 %v1704
    %v1729 = vpop.f32.mrf.mxu0
    %v1730 = vadd.f32 %v1696, %v1729
    %1731 = vdwg.mxu0
    %v1732 = vmax.f32 %v1724, 0.0
    %v1733 = vmax.f32 %v1727, 0.0
    %v1734 = vmax.f32 %v1730, 0.0
    %v1735 = vld [vmem:[%s10] sm:$0xff]
    %v1736 = vld [vmem:[%s10 + $0x8] sm:$0xff]
    %v1737 = vld [vmem:[%s10 + $0x10] sm:$0xff]
    %v1738 = vld [vmem:[%s10 + $0x18] sm:$0xff]
    %v1739 = vld [vmem:[%s10 + $0x20] sm:$0xff]
    %v1740 = vld [vmem:[%s10 + $0x28] sm:$0xff]
    %v1741 = vld [vmem:[%s10 + $0x30] sm:$0xff]
    %v1742 = vld [vmem:[%s10 + $0x38] sm:$0xff]
    %v1743 = vld [vmem:[%s10 + $0x40] sm:$0xff]
    %v1744 = vld [vmem:[%s10 + $0x48] sm:$0xff]
    %v1745 = vld [vmem:[%s10 + $0x50] sm:$0xff]
    %v1746 = vld [vmem:[%s10 + $0x58] sm:$0xff]
    %v1747 = vld [vmem:[%s10 + $0x60] sm:$0xff]
    %v1748 = vld [vmem:[%s10 + $0x68] sm:$0xff]
    %v1749 = vld [vmem:[%s10 + $0x70] sm:$0xff]
    %v1750 = vld [vmem:[%s10 + $0x78] sm:$0xff]
    %v1751 = vperm.slane %v392, 3
    %1752 = vmatpush.msra.mxu0 %v1750
    %1753 = vmatpush.msra.mxu0 %v1749
    %1754 = vmatpush.msra.mxu0 %v1748
    %1755 = vmatpush.msra.mxu0 %v1747
    %1756 = vmatpush.msra.mxu0 %v1746
    %1757 = vmatpush.msra.mxu0 %v1745
    %1758 = vmatpush.msra.mxu0 %v1744
    %1759 = vmatpush.msra.mxu0 %v1743
    %1760 = vmatpush.msra.mxu0 %v1742
    %1761 = vmatpush.msra.mxu0 %v1741
    %1762 = vmatpush.msra.mxu0 %v1740
    %1763 = vmatpush.msra.mxu0 %v1739
    %1764 = vmatpush.msra.mxu0 %v1738
    %1765 = vmatpush.msra.mxu0 %v1737
    %1766 = vmatpush.msra.mxu0 %v1736
    %1767 = vmatpush.msra.mxu0 %v1735
    %1768 = vmatmul.f32.gmra.mxu0 %v1732
    %v1769 = vpop.f32.mrf.mxu0
    %v1770 = vadd.f32 %v1751, %v1769
    %1771 = vmatmul.f32.gmra.mxu0 %v1733
    %v1772 = vpop.f32.mrf.mxu0
    %v1773 = vadd.f32 %v1751, %v1772
    %1774 = vmatmul.f32.gmra.mxu0 %v1734
    %v1775 = vpop.f32.mrf.mxu0
    %v1776 = vadd.f32 %v1751, %v1775
    %1777 = vdwg.mxu0
    %v1778 = vadd.f32 %v1685, %v1770
    %v1779 = vadd.f32 %v1686, %v1773
    %v1780 = vadd.f32 %v1687, %v1776
    %v1781 = vsel %vm412, %v1778, 0.0
    %1782 = vadd.xlane.f32.xlu0 %v1781
    %v1783 = vpop.xlane.xlu0 %1782
    %v1784 = vsel %vm412, %v1779, 0.0
    %1785 = vadd.xlane.f32.xlu0 %v1784
    %v1786 = vpop.xlane.xlu0 %1785
    %v1787 = vsel %vm1612, %v1780, 0.0
    %1788 = vadd.xlane.f32.xlu0 %v1787
    %v1789 = vpop.xlane.xlu0 %1788
    %v1790 = vmul.f32 %v1783, %v1622
    %v1791 = vmul.f32 %v1786, %v1622
    %v1792 = vmul.f32 %v1789, %v1622
    %v1793 = vsub.f32 %v1778, %v1790
    %v1794 = vsub.f32 %v1779, %v1791
    %v1795 = vsub.f32 %v1780, %v1792
    %v1796 = vmul.f32 %v1793, %v1793
    %v1797 = vmul.f32 %v1794, %v1794
    %v1798 = vmul.f32 %v1795, %v1795
    %v1799 = vsel %vm412, %v1796, 0.0
    %1800 = vadd.xlane.f32.xlu0 %v1799
    %v1801 = vpop.xlane.xlu0 %1800
    %v1802 = vsel %vm412, %v1797, 0.0
    %1803 = vadd.xlane.f32.xlu0 %v1802
    %v1804 = vpop.xlane.xlu0 %1803
    %v1805 = vsel %vm1612, %v1798, 0.0
    %1806 = vadd.xlane.f32.xlu0 %v1805
    %v1807 = vpop.xlane.xlu0 %1806
    %v1808 = vmul.f32 %v1801, %v1622
    %v1809 = vmul.f32 %v1804, %v1622
    %v1810 = vmul.f32 %v1807, %v1622
    %v1811 = vadd.f32 %v1808, 1e-05
    %v1812 = vadd.f32 %v1809, 1e-05
    %v1813 = vadd.f32 %v1810, 1e-05
    %v1814 = vrsqrt.pop %v1811
    %v1815 = vmul.f32 %v1814, %v1811
    %v1816 = vmul.f32 %v1815, %v1814
    %v1817 = vmul.f32 0.5, %v1816
    %v1818 = vsub.f32 1.5, %v1817
    %v1819 = vmul.f32 %v1814, %v1818
    %vm1820 = vweird.f32 %v1811
    %vm1821 = vweird.f32 %v1814
    %vm1822 = vmor %vm1820, %vm1821
    %v1823 = vsel %vm1822, %v1814, %v1819
    %v1824 = vrsqrt.pop %v1812
    %v1825 = vmul.f32 %v1824, %v1812
    %v1826 = vmul.f32 %v1825, %v1824
    %v1827 = vmul.f32 0.5, %v1826
    %v1828 = vsub.f32 1.5, %v1827
    %v1829 = vmul.f32 %v1824, %v1828
    %vm1830 = vweird.f32 %v1812
    %vm1831 = vweird.f32 %v1824
    %vm1832 = vmor %vm1830, %vm1831
    %v1833 = vsel %vm1832, %v1824, %v1829
    %v1834 = vrsqrt.pop %v1813
    %v1835 = vmul.f32 %v1834, %v1813
    %v1836 = vmul.f32 %v1835, %v1834
    %v1837 = vmul.f32 0.5, %v1836
    %v1838 = vsub.f32 1.5, %v1837
    %v1839 = vmul.f32 %v1834, %v1838
    %vm1840 = vweird.f32 %v1813
    %vm1841 = vweird.f32 %v1834
    %vm1842 = vmor %vm1840, %vm1841
    %v1843 = vsel %vm1842, %v1834, %v1839
    %v1844 = vmul.f32 %v1793, %v1823
    %v1845 = vmul.f32 %v1794, %v1833
    %v1846 = vmul.f32 %v1795, %v1843
    %v1847 = vperm.slane %v392, 6
    %v1848 = vmul.f32 %v1844, %v1847
    %v1849 = vmul.f32 %v1845, %v1847
    %v1850 = vmul.f32 %v1846, %v1847
    %v1851 = vperm.slane %v392, 7
    %v1852 = vadd.f32 %v1848, %v1851
    %v1853 = vadd.f32 %v1849, %v1851
    %v1854 = vadd.f32 %v1850, %v1851
    %s1855 = scalar_lea.vmem [#allocation9], 16
    %v1856 = vld [vmem:[%s1855] sm:$0xff]
    %v1857 = vld [vmem:[%s1855 + $0x8] sm:$0xff]
    %s1858 = scalar_lea.vmem %s7, 128
    %v1859 = vld [vmem:[%s1858] sm:$0xff]
    %v1860 = vld [vmem:[%s1858 + $0x8] sm:$0xff]
    %v1861 = vld [vmem:[%s1858 + $0x10] sm:$0xff]
    %v1862 = vld [vmem:[%s1858 + $0x18] sm:$0xff]
    %v1863 = vld [vmem:[%s1858 + $0x20] sm:$0xff]
    %v1864 = vld [vmem:[%s1858 + $0x28] sm:$0xff]
    %v1865 = vld [vmem:[%s1858 + $0x30] sm:$0xff]
    %v1866 = vld [vmem:[%s1858 + $0x38] sm:$0xff]
    %v1867 = vld [vmem:[%s1858 + $0x40] sm:$0xff]
    %v1868 = vld [vmem:[%s1858 + $0x48] sm:$0xff]
    %v1869 = vld [vmem:[%s1858 + $0x50] sm:$0xff]
    %v1870 = vld [vmem:[%s1858 + $0x58] sm:$0xff]
    %v1871 = vld [vmem:[%s1858 + $0x60] sm:$0xff]
    %v1872 = vld [vmem:[%s1858 + $0x68] sm:$0xff]
    %v1873 = vld [vmem:[%s1858 + $0x70] sm:$0xff]
    %v1874 = vld [vmem:[%s1858 + $0x78] sm:$0xff]
    %v1875 = vperm.slane %v1856, 0
    %v1876 = vperm.slane %v1857, 0
    %v1878 = vsel %vm412, %v1852, 0
    %v1881 = vsel %vm412, %v1853, 0
    %v1884 = vsel %vm412, %v1854, 0
    %1886 = vmatpush.msra.mxu0 0.0
    %1887 = vmatpush.msra.mxu0 0.0
    %1888 = vmatpush.msra.mxu0 0.0
    %1889 = vmatpush.msra.mxu0 0.0
    %1890 = vmatpush.msra.mxu0 0.0
    %1891 = vmatpush.msra.mxu0 0.0
    %1892 = vmatpush.msra.mxu0 0.0
    %1893 = vmatpush.msra.mxu0 0.0
    %1894 = vmatpush.msra.mxu0 %v1873
    %1895 = vmatpush.msra.mxu0 %v1871
    %1896 = vmatpush.msra.mxu0 %v1869
    %1897 = vmatpush.msra.mxu0 %v1867
    %1898 = vmatpush.msra.mxu0 %v1865
    %1899 = vmatpush.msra.mxu0 %v1863
    %1900 = vmatpush.msra.mxu0 %v1861
    %1901 = vmatpush.msra.mxu0 %v1859
    %1902 = vmatmul.f32.gmra.mxu0 %v1878
    %v1903 = vpop.f32.mrf.mxu0
    %v1904 = vadd.f32 %v1875, %v1903
    %1905 = vmatmul.f32.gmra.mxu0 %v1881
    %v1906 = vpop.f32.mrf.mxu0
    %v1907 = vadd.f32 %v1875, %v1906
    %1908 = vmatmul.f32.gmra.mxu0 %v1884
    %v1909 = vpop.f32.mrf.mxu0
    %v1910 = vadd.f32 %v1875, %v1909
    %1911 = vdwg.mxu0
    %1912 = vmatpush.msra.mxu0 0.0
    %1913 = vmatpush.msra.mxu0 0.0
    %1914 = vmatpush.msra.mxu0 0.0
    %1915 = vmatpush.msra.mxu0 0.0
    %1916 = vmatpush.msra.mxu0 0.0
    %1917 = vmatpush.msra.mxu0 0.0
    %1918 = vmatpush.msra.mxu0 0.0
    %1919 = vmatpush.msra.mxu0 0.0
    %1920 = vmatpush.msra.mxu0 %v1874
    %1921 = vmatpush.msra.mxu0 %v1872
    %1922 = vmatpush.msra.mxu0 %v1870
    %1923 = vmatpush.msra.mxu0 %v1868
    %1924 = vmatpush.msra.mxu0 %v1866
    %1925 = vmatpush.msra.mxu0 %v1864
    %1926 = vmatpush.msra.mxu0 %v1862
    %1927 = vmatpush.msra.mxu0 %v1860
    %1928 = vmatmul.f32.gmra.mxu0 %v1878
    %v1929 = vpop.f32.mrf.mxu0
    %v1930 = vadd.f32 %v1876, %v1929
    %1931 = vmatmul.f32.gmra.mxu0 %v1881
    %v1932 = vpop.f32.mrf.mxu0
    %v1933 = vadd.f32 %v1876, %v1932
    %1934 = vmatmul.f32.gmra.mxu0 %v1884
    %v1935 = vpop.f32.mrf.mxu0
    %v1936 = vadd.f32 %v1876, %v1935
    %1937 = vdwg.mxu0
    %1940 = vrot.lane.b32.xlu0 %v1904, 64
    %v1941 = vpop.permute.xlu0 %1940
    %1942 = vrot.lane.b32.xlu0 %v1907, 64
    %v1943 = vpop.permute.xlu0 %1942
    %v1944 = vsel %vm480, %v1904, 0
    %v1946 = vsel %vm480, %v1907, 0
    %v1948 = vsel %vm480, %v1941, 0
    %v1950 = vsel %vm480, %v1943, 0
    %1952 = vmatpush.xpose.msra.mxu0 0.0
    %1953 = vmatpush.xpose.msra.mxu0 0.0
    %1954 = vmatpush.xpose.msra.mxu0 0.0
    %1955 = vmatpush.xpose.msra.mxu0 0.0
    %1956 = vmatpush.xpose.msra.mxu0 0.0
    %1957 = vmatpush.xpose.msra.mxu0 0.0
    %1958 = vmatpush.xpose.msra.mxu0 0.0
    %1959 = vmatpush.xpose.msra.mxu0 0.0
    %1960 = vmatpush.xpose.msra.mxu0 0.0
    %1961 = vmatpush.xpose.msra.mxu0 0.0
    %1962 = vmatpush.xpose.msra.mxu0 0.0
    %1963 = vmatpush.xpose.msra.mxu0 0.0
    %1964 = vmatpush.xpose.msra.mxu0 0.0
    %1965 = vmatpush.xpose.msra.mxu0 0.0
    %1966 = vmatpush.xpose.msra.mxu0 %v1950
    %1967 = vmatpush.xpose.msra.mxu0 %v1948
    %1968 = vmatmul.f32.gmra.mxu0 %v1944
    %v1969 = vpop.f32.mrf.mxu0
    %v1970 = vadd.f32 0.0, %v1969
    %1971 = vmatmul.f32.gmra.mxu0 %v1946
    %v1972 = vpop.f32.mrf.mxu0
    %v1973 = vadd.f32 0.0, %v1972
    %1974 = vdwg.mxu0
    %v1975 = vmul.f32 %v1970, 0.25
    %v1976 = vmul.f32 %v1973, 0.25
    %v1977 = vadd.f32 %v1975, %v514
    %v1978 = vadd.f32 %v1976, %v514
    %v1979 = vsel %vm517, %v1977, -inf
    %1980 = vmax.xlane.f32.xlu0 %v1979
    %v1981 = vpop.xlane.xlu0 %1980
    %v1982 = vsel %vm521, %v1978, -inf
    %1983 = vmax.xlane.f32.xlu0 %v1982
    %v1984 = vpop.xlane.xlu0 %1983
    %v1985 = vsub.f32 %v1977, %v1981
    %v1986 = vsub.f32 %v1978, %v1984
    %v1987 = vmul.f32 %v1985, 1.442695
    %v1988 = vpow.pop %v1987
    %v1989 = vmul.f32 %v1986, 1.442695
    %v1990 = vpow.pop %v1989
    %v1991 = vsel %vm517, %v1988, 0.0
    %1992 = vadd.xlane.f32.xlu0 %v1991
    %v1993 = vpop.xlane.xlu0 %1992
    %v1994 = vsel %vm521, %v1990, 0.0
    %1995 = vadd.xlane.f32.xlu0 %v1994
    %v1996 = vpop.xlane.xlu0 %1995
    %v1997 = vrcp.pop %v1993
    %v1998 = vmul.f32 %v1993, %v1997
    %v1999 = vsub.f32 1.0, %v1998
    %v2000 = vmul.f32 %v1997, %v1999
    %v2001 = vadd.f32 %v1997, %v2000
    %vm2002 = vweird.f32 %v1993
    %vm2003 = vweird.f32 %v1997
    %vm2004 = vmor %vm2002, %vm2003
    %v2005 = vsel %vm2004, %v1997, %v2001
    %v2006 = vand.u32 2147483647, %v1993
    %vm2007 = vcmp.eq.f32.partialorder %v2006, 8.507059e+37
    %v2008 = vand.u32 %v1993, 2147483648
    %v2009 = vor.u32 1.1754944e-38, %v2008
    %v2010 = vsel %vm2007, %v2009, %v2005
    %v2011 = vmul.f32 %v1988, %v2010
    %v2012 = vrcp.pop %v1996
    %v2013 = vmul.f32 %v1996, %v2012
    %v2014 = vsub.f32 1.0, %v2013
    %v2015 = vmul.f32 %v2012, %v2014
    %v2016 = vadd.f32 %v2012, %v2015
    %vm2017 = vweird.f32 %v1996
    %vm2018 = vweird.f32 %v2012
    %vm2019 = vmor %vm2017, %vm2018
    %v2020 = vsel %vm2019, %v2012, %v2016
    %v2021 = vand.u32 2147483647, %v1996
    %vm2022 = vcmp.eq.f32.partialorder %v2021, 8.507059e+37
    %v2023 = vand.u32 %v1996, 2147483648
    %v2024 = vor.u32 1.1754944e-38, %v2023
    %v2025 = vsel %vm2022, %v2024, %v2020
    %v2026 = vmul.f32 %v1990, %v2025
    %v2028 = vsel %vm517, %v2011, 0
    %v2031 = vsel %vm517, %v2026, 0
    %v2034 = vsel %vm285, %v1933, 0
    %2036 = vmatpush.msra.mxu0 0.0
    %2037 = vmatpush.msra.mxu0 0.0
    %2038 = vmatpush.msra.mxu0 0.0
    %2039 = vmatpush.msra.mxu0 0.0
    %2040 = vmatpush.msra.mxu0 0.0
    %2041 = vmatpush.msra.mxu0 0.0
    %2042 = vmatpush.msra.mxu0 0.0
    %2043 = vmatpush.msra.mxu0 0.0
    %2044 = vmatpush.msra.mxu0 0.0
    %2045 = vmatpush.msra.mxu0 0.0
    %2046 = vmatpush.msra.mxu0 0.0
    %2047 = vmatpush.msra.mxu0 0.0
    %2048 = vmatpush.msra.mxu0 0.0
    %2049 = vmatpush.msra.mxu0 0.0
    %2050 = vmatpush.msra.mxu0 %v2034
    %2051 = vmatpush.msra.mxu0 %v1930
    %2052 = vmatmul.f32.gmra.mxu0 %v2028
    %v2053 = vpop.f32.mrf.mxu0
    %v2054 = vadd.f32 0.0, %v2053
    %2055 = vmatmul.f32.gmra.mxu0 %v2031
    %v2056 = vpop.f32.mrf.mxu0
    %v2057 = vadd.f32 0.0, %v2056
    %2058 = vdwg.mxu0
    %2059 = vrot.lane.b32.xlu0 %v1904, 112
    %v2060 = vpop.permute.xlu0 %2059
    %2061 = vrot.lane.b32.xlu0 %v1907, 112
    %v2062 = vpop.permute.xlu0 %2061
    %2063 = vrot.lane.b32.xlu0 %v1904, 48
    %v2064 = vpop.permute.xlu0 %2063
    %2065 = vrot.lane.b32.xlu0 %v1907, 48
    %v2066 = vpop.permute.xlu0 %2065
    %v2067 = vsel %vm480, %v2060, 0
    %v2069 = vsel %vm480, %v2062, 0
    %v2071 = vsel %vm480, %v2064, 0
    %v2073 = vsel %vm480, %v2066, 0
    %2075 = vmatpush.xpose.msra.mxu0 0.0
    %2076 = vmatpush.xpose.msra.mxu0 0.0
    %2077 = vmatpush.xpose.msra.mxu0 0.0
    %2078 = vmatpush.xpose.msra.mxu0 0.0
    %2079 = vmatpush.xpose.msra.mxu0 0.0
    %2080 = vmatpush.xpose.msra.mxu0 0.0
    %2081 = vmatpush.xpose.msra.mxu0 0.0
    %2082 = vmatpush.xpose.msra.mxu0 0.0
    %2083 = vmatpush.xpose.msra.mxu0 0.0
    %2084 = vmatpush.xpose.msra.mxu0 0.0
    %2085 = vmatpush.xpose.msra.mxu0 0.0
    %2086 = vmatpush.xpose.msra.mxu0 0.0
    %2087 = vmatpush.xpose.msra.mxu0 0.0
    %2088 = vmatpush.xpose.msra.mxu0 0.0
    %2089 = vmatpush.xpose.msra.mxu0 %v2073
    %2090 = vmatpush.xpose.msra.mxu0 %v2071
    %2091 = vmatmul.f32.gmra.mxu0 %v2067
    %v2092 = vpop.f32.mrf.mxu0
    %v2093 = vadd.f32 0.0, %v2092
    %2094 = vmatmul.f32.gmra.mxu0 %v2069
    %v2095 = vpop.f32.mrf.mxu0
    %v2096 = vadd.f32 0.0, %v2095
    %2097 = vdwg.mxu0
    %v2098 = vmul.f32 %v2093, 0.25
    %v2099 = vmul.f32 %v2096, 0.25
    %v2100 = vadd.f32 %v2098, %v514
    %v2101 = vadd.f32 %v2099, %v514
    %v2102 = vsel %vm517, %v2100, -inf
    %2103 = vmax.xlane.f32.xlu0 %v2102
    %v2104 = vpop.xlane.xlu0 %2103
    %v2105 = vsel %vm521, %v2101, -inf
    %2106 = vmax.xlane.f32.xlu0 %v2105
    %v2107 = vpop.xlane.xlu0 %2106
    %v2108 = vsub.f32 %v2100, %v2104
    %v2109 = vsub.f32 %v2101, %v2107
    %v2110 = vmul.f32 %v2108, 1.442695
    %v2111 = vpow.pop %v2110
    %v2112 = vmul.f32 %v2109, 1.442695
    %v2113 = vpow.pop %v2112
    %v2114 = vsel %vm517, %v2111, 0.0
    %2115 = vadd.xlane.f32.xlu0 %v2114
    %v2116 = vpop.xlane.xlu0 %2115
    %v2117 = vsel %vm521, %v2113, 0.0
    %2118 = vadd.xlane.f32.xlu0 %v2117
    %v2119 = vpop.xlane.xlu0 %2118
    %v2120 = vrcp.pop %v2116
    %v2121 = vmul.f32 %v2116, %v2120
    %v2122 = vsub.f32 1.0, %v2121
    %v2123 = vmul.f32 %v2120, %v2122
    %v2124 = vadd.f32 %v2120, %v2123
    %vm2125 = vweird.f32 %v2116
    %vm2126 = vweird.f32 %v2120
    %vm2127 = vmor %vm2125, %vm2126
    %v2128 = vsel %vm2127, %v2120, %v2124
    %v2129 = vand.u32 2147483647, %v2116
    %vm2130 = vcmp.eq.f32.partialorder %v2129, 8.507059e+37
    %v2131 = vand.u32 %v2116, 2147483648
    %v2132 = vor.u32 1.1754944e-38, %v2131
    %v2133 = vsel %vm2130, %v2132, %v2128
    %v2134 = vmul.f32 %v2111, %v2133
    %v2135 = vrcp.pop %v2119
    %v2136 = vmul.f32 %v2119, %v2135
    %v2137 = vsub.f32 1.0, %v2136
    %v2138 = vmul.f32 %v2135, %v2137
    %v2139 = vadd.f32 %v2135, %v2138
    %vm2140 = vweird.f32 %v2119
    %vm2141 = vweird.f32 %v2135
    %vm2142 = vmor %vm2140, %vm2141
    %v2143 = vsel %vm2142, %v2135, %v2139
    %v2144 = vand.u32 2147483647, %v2119
    %vm2145 = vcmp.eq.f32.partialorder %v2144, 8.507059e+37
    %v2146 = vand.u32 %v2119, 2147483648
    %v2147 = vor.u32 1.1754944e-38, %v2146
    %v2148 = vsel %vm2145, %v2147, %v2143
    %v2149 = vmul.f32 %v2113, %v2148
    %2151 = vrot.lane.b32.xlu0 %v1930, 112
    %v2152 = vpop.permute.xlu0 %2151
    %2153 = vrot.lane.b32.xlu0 %v1933, 112
    %v2154 = vpop.permute.xlu0 %2153
    %v2157 = vsel %vm517, %v2134, 0
    %v2160 = vsel %vm517, %v2149, 0
    %v2162 = vsel %vm285, %v2154, 0
    %2164 = vmatpush.msra.mxu0 0.0
    %2165 = vmatpush.msra.mxu0 0.0
    %2166 = vmatpush.msra.mxu0 0.0
    %2167 = vmatpush.msra.mxu0 0.0
    %2168 = vmatpush.msra.mxu0 0.0
    %2169 = vmatpush.msra.mxu0 0.0
    %2170 = vmatpush.msra.mxu0 0.0
    %2171 = vmatpush.msra.mxu0 0.0
    %2172 = vmatpush.msra.mxu0 0.0
    %2173 = vmatpush.msra.mxu0 0.0
    %2174 = vmatpush.msra.mxu0 0.0
    %2175 = vmatpush.msra.mxu0 0.0
    %2176 = vmatpush.msra.mxu0 0.0
    %2177 = vmatpush.msra.mxu0 0.0
    %2178 = vmatpush.msra.mxu0 %v2162
    %2179 = vmatpush.msra.mxu0 %v2152
    %2180 = vmatmul.f32.gmra.mxu0 %v2157
    %v2181 = vpop.f32.mrf.mxu0
    %v2182 = vadd.f32 0.0, %v2181
    %2183 = vmatmul.f32.gmra.mxu0 %v2160
    %v2184 = vpop.f32.mrf.mxu0
    %v2185 = vadd.f32 0.0, %v2184
    %2186 = vdwg.mxu0
    %2187 = vrot.lane.b32.xlu0 %v1904, 96
    %v2188 = vpop.permute.xlu0 %2187
    %2189 = vrot.lane.b32.xlu0 %v1907, 96
    %v2190 = vpop.permute.xlu0 %2189
    %2191 = vrot.lane.b32.xlu0 %v1904, 32
    %v2192 = vpop.permute.xlu0 %2191
    %2193 = vrot.lane.b32.xlu0 %v1907, 32
    %v2194 = vpop.permute.xlu0 %2193
    %v2195 = vsel %vm480, %v2188, 0
    %v2197 = vsel %vm480, %v2190, 0
    %v2199 = vsel %vm480, %v2192, 0
    %v2201 = vsel %vm480, %v2194, 0
    %2203 = vmatpush.xpose.msra.mxu0 0.0
    %2204 = vmatpush.xpose.msra.mxu0 0.0
    %2205 = vmatpush.xpose.msra.mxu0 0.0
    %2206 = vmatpush.xpose.msra.mxu0 0.0
    %2207 = vmatpush.xpose.msra.mxu0 0.0
    %2208 = vmatpush.xpose.msra.mxu0 0.0
    %2209 = vmatpush.xpose.msra.mxu0 0.0
    %2210 = vmatpush.xpose.msra.mxu0 0.0
    %2211 = vmatpush.xpose.msra.mxu0 0.0
    %2212 = vmatpush.xpose.msra.mxu0 0.0
    %2213 = vmatpush.xpose.msra.mxu0 0.0
    %2214 = vmatpush.xpose.msra.mxu0 0.0
    %2215 = vmatpush.xpose.msra.mxu0 0.0
    %2216 = vmatpush.xpose.msra.mxu0 0.0
    %2217 = vmatpush.xpose.msra.mxu0 %v2201
    %2218 = vmatpush.xpose.msra.mxu0 %v2199
    %2219 = vmatmul.f32.gmra.mxu0 %v2195
    %v2220 = vpop.f32.mrf.mxu0
    %v2221 = vadd.f32 0.0, %v2220
    %2222 = vmatmul.f32.gmra.mxu0 %v2197
    %v2223 = vpop.f32.mrf.mxu0
    %v2224 = vadd.f32 0.0, %v2223
    %2225 = vdwg.mxu0
    %v2226 = vmul.f32 %v2221, 0.25
    %v2227 = vmul.f32 %v2224, 0.25
    %v2228 = vadd.f32 %v2226, %v514
    %v2229 = vadd.f32 %v2227, %v514
    %v2230 = vsel %vm517, %v2228, -inf
    %2231 = vmax.xlane.f32.xlu0 %v2230
    %v2232 = vpop.xlane.xlu0 %2231
    %v2233 = vsel %vm521, %v2229, -inf
    %2234 = vmax.xlane.f32.xlu0 %v2233
    %v2235 = vpop.xlane.xlu0 %2234
    %v2236 = vsub.f32 %v2228, %v2232
    %v2237 = vsub.f32 %v2229, %v2235
    %v2238 = vmul.f32 %v2236, 1.442695
    %v2239 = vpow.pop %v2238
    %v2240 = vmul.f32 %v2237, 1.442695
    %v2241 = vpow.pop %v2240
    %v2242 = vsel %vm517, %v2239, 0.0
    %2243 = vadd.xlane.f32.xlu0 %v2242
    %v2244 = vpop.xlane.xlu0 %2243
    %v2245 = vsel %vm521, %v2241, 0.0
    %2246 = vadd.xlane.f32.xlu0 %v2245
    %v2247 = vpop.xlane.xlu0 %2246
    %v2248 = vrcp.pop %v2244
    %v2249 = vmul.f32 %v2244, %v2248
    %v2250 = vsub.f32 1.0, %v2249
    %v2251 = vmul.f32 %v2248, %v2250
    %v2252 = vadd.f32 %v2248, %v2251
    %vm2253 = vweird.f32 %v2244
    %vm2254 = vweird.f32 %v2248
    %vm2255 = vmor %vm2253, %vm2254
    %v2256 = vsel %vm2255, %v2248, %v2252
    %v2257 = vand.u32 2147483647, %v2244
    %vm2258 = vcmp.eq.f32.partialorder %v2257, 8.507059e+37
    %v2259 = vand.u32 %v2244, 2147483648
    %v2260 = vor.u32 1.1754944e-38, %v2259
    %v2261 = vsel %vm2258, %v2260, %v2256
    %v2262 = vmul.f32 %v2239, %v2261
    %v2263 = vrcp.pop %v2247
    %v2264 = vmul.f32 %v2247, %v2263
    %v2265 = vsub.f32 1.0, %v2264
    %v2266 = vmul.f32 %v2263, %v2265
    %v2267 = vadd.f32 %v2263, %v2266
    %vm2268 = vweird.f32 %v2247
    %vm2269 = vweird.f32 %v2263
    %vm2270 = vmor %vm2268, %vm2269
    %v2271 = vsel %vm2270, %v2263, %v2267
    %v2272 = vand.u32 2147483647, %v2247
    %vm2273 = vcmp.eq.f32.partialorder %v2272, 8.507059e+37
    %v2274 = vand.u32 %v2247, 2147483648
    %v2275 = vor.u32 1.1754944e-38, %v2274
    %v2276 = vsel %vm2273, %v2275, %v2271
    %v2277 = vmul.f32 %v2241, %v2276
    %2278 = vrot.lane.b32.xlu0 %v1930, 96
    %v2279 = vpop.permute.xlu0 %2278
    %2280 = vrot.lane.b32.xlu0 %v1933, 96
    %v2281 = vpop.permute.xlu0 %2280
    %v2284 = vsel %vm517, %v2262, 0
    %v2287 = vsel %vm517, %v2277, 0
    %v2289 = vsel %vm285, %v2281, 0
    %2291 = vmatpush.msra.mxu0 0.0
    %2292 = vmatpush.msra.mxu0 0.0
    %2293 = vmatpush.msra.mxu0 0.0
    %2294 = vmatpush.msra.mxu0 0.0
    %2295 = vmatpush.msra.mxu0 0.0
    %2296 = vmatpush.msra.mxu0 0.0
    %2297 = vmatpush.msra.mxu0 0.0
    %2298 = vmatpush.msra.mxu0 0.0
    %2299 = vmatpush.msra.mxu0 0.0
    %2300 = vmatpush.msra.mxu0 0.0
    %2301 = vmatpush.msra.mxu0 0.0
    %2302 = vmatpush.msra.mxu0 0.0
    %2303 = vmatpush.msra.mxu0 0.0
    %2304 = vmatpush.msra.mxu0 0.0
    %2305 = vmatpush.msra.mxu0 %v2289
    %2306 = vmatpush.msra.mxu0 %v2279
    %2307 = vmatmul.f32.gmra.mxu0 %v2284
    %v2308 = vpop.f32.mrf.mxu0
    %v2309 = vadd.f32 0.0, %v2308
    %2310 = vmatmul.f32.gmra.mxu0 %v2287
    %v2311 = vpop.f32.mrf.mxu0
    %v2312 = vadd.f32 0.0, %v2311
    %2313 = vdwg.mxu0
    %2314 = vrot.lane.b32.xlu0 %v1904, 80
    %v2315 = vpop.permute.xlu0 %2314
    %2316 = vrot.lane.b32.xlu0 %v1907, 80
    %v2317 = vpop.permute.xlu0 %2316
    %2318 = vrot.lane.b32.xlu0 %v1904, 16
    %v2319 = vpop.permute.xlu0 %2318
    %2320 = vrot.lane.b32.xlu0 %v1907, 16
    %v2321 = vpop.permute.xlu0 %2320
    %v2322 = vsel %vm480, %v2315, 0
    %v2324 = vsel %vm480, %v2317, 0
    %v2326 = vsel %vm480, %v2319, 0
    %v2328 = vsel %vm480, %v2321, 0
    %2330 = vmatpush.xpose.msra.mxu0 0.0
    %2331 = vmatpush.xpose.msra.mxu0 0.0
    %2332 = vmatpush.xpose.msra.mxu0 0.0
    %2333 = vmatpush.xpose.msra.mxu0 0.0
    %2334 = vmatpush.xpose.msra.mxu0 0.0
    %2335 = vmatpush.xpose.msra.mxu0 0.0
    %2336 = vmatpush.xpose.msra.mxu0 0.0
    %2337 = vmatpush.xpose.msra.mxu0 0.0
    %2338 = vmatpush.xpose.msra.mxu0 0.0
    %2339 = vmatpush.xpose.msra.mxu0 0.0
    %2340 = vmatpush.xpose.msra.mxu0 0.0
    %2341 = vmatpush.xpose.msra.mxu0 0.0
    %2342 = vmatpush.xpose.msra.mxu0 0.0
    %2343 = vmatpush.xpose.msra.mxu0 0.0
    %2344 = vmatpush.xpose.msra.mxu0 %v2328
    %2345 = vmatpush.xpose.msra.mxu0 %v2326
    %2346 = vmatmul.f32.gmra.mxu0 %v2322
    %v2347 = vpop.f32.mrf.mxu0
    %v2348 = vadd.f32 0.0, %v2347
    %2349 = vmatmul.f32.gmra.mxu0 %v2324
    %v2350 = vpop.f32.mrf.mxu0
    %v2351 = vadd.f32 0.0, %v2350
    %2352 = vdwg.mxu0
    %v2353 = vmul.f32 %v2348, 0.25
    %v2354 = vmul.f32 %v2351, 0.25
    %v2355 = vadd.f32 %v2353, %v514
    %v2356 = vadd.f32 %v2354, %v514
    %v2357 = vsel %vm517, %v2355, -inf
    %2358 = vmax.xlane.f32.xlu0 %v2357
    %v2359 = vpop.xlane.xlu0 %2358
    %v2360 = vsel %vm521, %v2356, -inf
    %2361 = vmax.xlane.f32.xlu0 %v2360
    %v2362 = vpop.xlane.xlu0 %2361
    %v2363 = vsub.f32 %v2355, %v2359
    %v2364 = vsub.f32 %v2356, %v2362
    %v2365 = vmul.f32 %v2363, 1.442695
    %v2366 = vpow.pop %v2365
    %v2367 = vmul.f32 %v2364, 1.442695
    %v2368 = vpow.pop %v2367
    %v2369 = vsel %vm517, %v2366, 0.0
    %2370 = vadd.xlane.f32.xlu0 %v2369
    %v2371 = vpop.xlane.xlu0 %2370
    %v2372 = vsel %vm521, %v2368, 0.0
    %2373 = vadd.xlane.f32.xlu0 %v2372
    %v2374 = vpop.xlane.xlu0 %2373
    %v2375 = vrcp.pop %v2371
    %v2376 = vmul.f32 %v2371, %v2375
    %v2377 = vsub.f32 1.0, %v2376
    %v2378 = vmul.f32 %v2375, %v2377
    %v2379 = vadd.f32 %v2375, %v2378
    %vm2380 = vweird.f32 %v2371
    %vm2381 = vweird.f32 %v2375
    %vm2382 = vmor %vm2380, %vm2381
    %v2383 = vsel %vm2382, %v2375, %v2379
    %v2384 = vand.u32 2147483647, %v2371
    %vm2385 = vcmp.eq.f32.partialorder %v2384, 8.507059e+37
    %v2386 = vand.u32 %v2371, 2147483648
    %v2387 = vor.u32 1.1754944e-38, %v2386
    %v2388 = vsel %vm2385, %v2387, %v2383
    %v2389 = vmul.f32 %v2366, %v2388
    %v2390 = vrcp.pop %v2374
    %v2391 = vmul.f32 %v2374, %v2390
    %v2392 = vsub.f32 1.0, %v2391
    %v2393 = vmul.f32 %v2390, %v2392
    %v2394 = vadd.f32 %v2390, %v2393
    %vm2395 = vweird.f32 %v2374
    %vm2396 = vweird.f32 %v2390
    %vm2397 = vmor %vm2395, %vm2396
    %v2398 = vsel %vm2397, %v2390, %v2394
    %v2399 = vand.u32 2147483647, %v2374
    %vm2400 = vcmp.eq.f32.partialorder %v2399, 8.507059e+37
    %v2401 = vand.u32 %v2374, 2147483648
    %v2402 = vor.u32 1.1754944e-38, %v2401
    %v2403 = vsel %vm2400, %v2402, %v2398
    %v2404 = vmul.f32 %v2368, %v2403
    %2405 = vrot.lane.b32.xlu0 %v1930, 80
    %v2406 = vpop.permute.xlu0 %2405
    %2407 = vrot.lane.b32.xlu0 %v1933, 80
    %v2408 = vpop.permute.xlu0 %2407
    %v2411 = vsel %vm517, %v2389, 0
    %v2414 = vsel %vm517, %v2404, 0
    %v2416 = vsel %vm285, %v2408, 0
    %2418 = vmatpush.msra.mxu0 0.0
    %2419 = vmatpush.msra.mxu0 0.0
    %2420 = vmatpush.msra.mxu0 0.0
    %2421 = vmatpush.msra.mxu0 0.0
    %2422 = vmatpush.msra.mxu0 0.0
    %2423 = vmatpush.msra.mxu0 0.0
    %2424 = vmatpush.msra.mxu0 0.0
    %2425 = vmatpush.msra.mxu0 0.0
    %2426 = vmatpush.msra.mxu0 0.0
    %2427 = vmatpush.msra.mxu0 0.0
    %2428 = vmatpush.msra.mxu0 0.0
    %2429 = vmatpush.msra.mxu0 0.0
    %2430 = vmatpush.msra.mxu0 0.0
    %2431 = vmatpush.msra.mxu0 0.0
    %2432 = vmatpush.msra.mxu0 %v2416
    %2433 = vmatpush.msra.mxu0 %v2406
    %2434 = vmatmul.f32.gmra.mxu0 %v2411
    %v2435 = vpop.f32.mrf.mxu0
    %v2436 = vadd.f32 0.0, %v2435
    %2437 = vmatmul.f32.gmra.mxu0 %v2414
    %v2438 = vpop.f32.mrf.mxu0
    %v2439 = vadd.f32 0.0, %v2438
    %2440 = vdwg.mxu0
    %2443 = vrot.lane.b32.xlu0 %v2182, 16
    %v2444 = vpop.permute.xlu0 %2443
    %2445 = vrot.lane.b32.xlu0 %v2185, 16
    %v2446 = vpop.permute.xlu0 %2445
    %2451 = vrot.lane.b32.xlu0 %v2309, 32
    %v2452 = vpop.permute.xlu0 %2451
    %2453 = vrot.lane.b32.xlu0 %v2312, 32
    %v2454 = vpop.permute.xlu0 %2453
    %2459 = vrot.lane.b32.xlu0 %v2436, 48
    %v2460 = vpop.permute.xlu0 %2459
    %2461 = vrot.lane.b32.xlu0 %v2439, 48
    %v2462 = vpop.permute.xlu0 %2461
    %v2465 = vsel %vm480, %v2054, %v2444
    %v2466 = vsel %vm480, %v2057, %v2446
    %v2467 = vsel %vm1007, %v2465, %v2452
    %v2468 = vsel %vm1007, %v2466, %v2454
    %v2469 = vsel %vm1010, %v2467, %v2460
    %v2470 = vsel %vm1010, %v2468, %v2462
    %v2472 = vrot.slane %v1907, 2
    %v2473 = vrot.slane %v1910, 2
    %v2474 = vsel %vm1014, %v2472, %v2473
    %2475 = vrot.lane.b32.xlu0 %v2474, 64
    %v2476 = vpop.permute.xlu0 %2475
    %2477 = vrot.lane.b32.xlu0 %v2473, 64
    %v2478 = vpop.permute.xlu0 %2477
    %v2479 = vsel %vm480, %v2474, 0
    %v2481 = vsel %vm480, %v2473, 0
    %v2483 = vsel %vm480, %v2476, 0
    %v2485 = vsel %vm480, %v2478, 0
    %2487 = vmatpush.xpose.msra.mxu0 0.0
    %2488 = vmatpush.xpose.msra.mxu0 0.0
    %2489 = vmatpush.xpose.msra.mxu0 0.0
    %2490 = vmatpush.xpose.msra.mxu0 0.0
    %2491 = vmatpush.xpose.msra.mxu0 0.0
    %2492 = vmatpush.xpose.msra.mxu0 0.0
    %2493 = vmatpush.xpose.msra.mxu0 0.0
    %2494 = vmatpush.xpose.msra.mxu0 0.0
    %2495 = vmatpush.xpose.msra.mxu0 0.0
    %2496 = vmatpush.xpose.msra.mxu0 0.0
    %2497 = vmatpush.xpose.msra.mxu0 0.0
    %2498 = vmatpush.xpose.msra.mxu0 0.0
    %2499 = vmatpush.xpose.msra.mxu0 0.0
    %2500 = vmatpush.xpose.msra.mxu0 0.0
    %2501 = vmatpush.xpose.msra.mxu0 %v2485
    %2502 = vmatpush.xpose.msra.mxu0 %v2483
    %2503 = vmatmul.f32.gmra.mxu0 %v2479
    %v2504 = vpop.f32.mrf.mxu0
    %v2505 = vadd.f32 0.0, %v2504
    %2506 = vmatmul.f32.gmra.mxu0 %v2481
    %v2507 = vpop.f32.mrf.mxu0
    %v2508 = vadd.f32 0.0, %v2507
    %2509 = vdwg.mxu0
    %v2510 = vmul.f32 %v2505, 0.25
    %v2511 = vmul.f32 %v2508, 0.25
    %v2512 = vadd.f32 %v2510, %v1055
    %v2513 = vadd.f32 %v2511, %v1055
    %v2514 = vsel %vm517, %v2512, -inf
    %2515 = vmax.xlane.f32.xlu0 %v2514
    %v2516 = vpop.xlane.xlu0 %2515
    %v2517 = vsel %vm521, %v2513, -inf
    %2518 = vmax.xlane.f32.xlu0 %v2517
    %v2519 = vpop.xlane.xlu0 %2518
    %v2520 = vsub.f32 %v2512, %v2516
    %v2521 = vsub.f32 %v2513, %v2519
    %v2522 = vmul.f32 %v2520, 1.442695
    %v2523 = vpow.pop %v2522
    %v2524 = vmul.f32 %v2521, 1.442695
    %v2525 = vpow.pop %v2524
    %v2526 = vsel %vm517, %v2523, 0.0
    %2527 = vadd.xlane.f32.xlu0 %v2526
    %v2528 = vpop.xlane.xlu0 %2527
    %v2529 = vsel %vm521, %v2525, 0.0
    %2530 = vadd.xlane.f32.xlu0 %v2529
    %v2531 = vpop.xlane.xlu0 %2530
    %v2532 = vrcp.pop %v2528
    %v2533 = vmul.f32 %v2528, %v2532
    %v2534 = vsub.f32 1.0, %v2533
    %v2535 = vmul.f32 %v2532, %v2534
    %v2536 = vadd.f32 %v2532, %v2535
    %vm2537 = vweird.f32 %v2528
    %vm2538 = vweird.f32 %v2532
    %vm2539 = vmor %vm2537, %vm2538
    %v2540 = vsel %vm2539, %v2532, %v2536
    %v2541 = vand.u32 2147483647, %v2528
    %vm2542 = vcmp.eq.f32.partialorder %v2541, 8.507059e+37
    %v2543 = vand.u32 %v2528, 2147483648
    %v2544 = vor.u32 1.1754944e-38, %v2543
    %v2545 = vsel %vm2542, %v2544, %v2540
    %v2546 = vmul.f32 %v2523, %v2545
    %v2547 = vrcp.pop %v2531
    %v2548 = vmul.f32 %v2531, %v2547
    %v2549 = vsub.f32 1.0, %v2548
    %v2550 = vmul.f32 %v2547, %v2549
    %v2551 = vadd.f32 %v2547, %v2550
    %vm2552 = vweird.f32 %v2531
    %vm2553 = vweird.f32 %v2547
    %vm2554 = vmor %vm2552, %vm2553
    %v2555 = vsel %vm2554, %v2547, %v2551
    %v2556 = vand.u32 2147483647, %v2531
    %vm2557 = vcmp.eq.f32.partialorder %v2556, 8.507059e+37
    %v2558 = vand.u32 %v2531, 2147483648
    %v2559 = vor.u32 1.1754944e-38, %v2558
    %v2560 = vsel %vm2557, %v2559, %v2555
    %v2561 = vmul.f32 %v2525, %v2560
    %v2563 = vrot.slane %v1933, 2
    %v2564 = vrot.slane %v1936, 2
    %v2565 = vsel %vm1014, %v2563, %v2564
    %v2568 = vsel %vm517, %v2546, 0
    %v2571 = vsel %vm517, %v2561, 0
    %v2573 = vsel %vm285, %v2564, 0
    %2575 = vmatpush.msra.mxu0 0.0
    %2576 = vmatpush.msra.mxu0 0.0
    %2577 = vmatpush.msra.mxu0 0.0
    %2578 = vmatpush.msra.mxu0 0.0
    %2579 = vmatpush.msra.mxu0 0.0
    %2580 = vmatpush.msra.mxu0 0.0
    %2581 = vmatpush.msra.mxu0 0.0
    %2582 = vmatpush.msra.mxu0 0.0
    %2583 = vmatpush.msra.mxu0 0.0
    %2584 = vmatpush.msra.mxu0 0.0
    %2585 = vmatpush.msra.mxu0 0.0
    %2586 = vmatpush.msra.mxu0 0.0
    %2587 = vmatpush.msra.mxu0 0.0
    %2588 = vmatpush.msra.mxu0 0.0
    %2589 = vmatpush.msra.mxu0 %v2573
    %2590 = vmatpush.msra.mxu0 %v2565
    %2591 = vmatmul.f32.gmra.mxu0 %v2568
    %v2592 = vpop.f32.mrf.mxu0
    %v2593 = vadd.f32 0.0, %v2592
    %2594 = vmatmul.f32.gmra.mxu0 %v2571
    %v2595 = vpop.f32.mrf.mxu0
    %v2596 = vadd.f32 0.0, %v2595
    %2597 = vdwg.mxu0
    %2598 = vrot.lane.b32.xlu0 %v2474, 112
    %v2599 = vpop.permute.xlu0 %2598
    %2600 = vrot.lane.b32.xlu0 %v2473, 112
    %v2601 = vpop.permute.xlu0 %2600
    %2602 = vrot.lane.b32.xlu0 %v2474, 48
    %v2603 = vpop.permute.xlu0 %2602
    %2604 = vrot.lane.b32.xlu0 %v2473, 48
    %v2605 = vpop.permute.xlu0 %2604
    %v2606 = vsel %vm480, %v2599, 0
    %v2608 = vsel %vm480, %v2601, 0
    %v2610 = vsel %vm480, %v2603, 0
    %v2612 = vsel %vm480, %v2605, 0
    %2614 = vmatpush.xpose.msra.mxu0 0.0
    %2615 = vmatpush.xpose.msra.mxu0 0.0
    %2616 = vmatpush.xpose.msra.mxu0 0.0
    %2617 = vmatpush.xpose.msra.mxu0 0.0
    %2618 = vmatpush.xpose.msra.mxu0 0.0
    %2619 = vmatpush.xpose.msra.mxu0 0.0
    %2620 = vmatpush.xpose.msra.mxu0 0.0
    %2621 = vmatpush.xpose.msra.mxu0 0.0
    %2622 = vmatpush.xpose.msra.mxu0 0.0
    %2623 = vmatpush.xpose.msra.mxu0 0.0
    %2624 = vmatpush.xpose.msra.mxu0 0.0
    %2625 = vmatpush.xpose.msra.mxu0 0.0
    %2626 = vmatpush.xpose.msra.mxu0 0.0
    %2627 = vmatpush.xpose.msra.mxu0 0.0
    %2628 = vmatpush.xpose.msra.mxu0 %v2612
    %2629 = vmatpush.xpose.msra.mxu0 %v2610
    %2630 = vmatmul.f32.gmra.mxu0 %v2606
    %v2631 = vpop.f32.mrf.mxu0
    %v2632 = vadd.f32 0.0, %v2631
    %2633 = vmatmul.f32.gmra.mxu0 %v2608
    %v2634 = vpop.f32.mrf.mxu0
    %v2635 = vadd.f32 0.0, %v2634
    %2636 = vdwg.mxu0
    %v2637 = vmul.f32 %v2632, 0.25
    %v2638 = vmul.f32 %v2635, 0.25
    %v2639 = vadd.f32 %v2637, %v1055
    %v2640 = vadd.f32 %v2638, %v1055
    %v2641 = vsel %vm517, %v2639, -inf
    %2642 = vmax.xlane.f32.xlu0 %v2641
    %v2643 = vpop.xlane.xlu0 %2642
    %v2644 = vsel %vm521, %v2640, -inf
    %2645 = vmax.xlane.f32.xlu0 %v2644
    %v2646 = vpop.xlane.xlu0 %2645
    %v2647 = vsub.f32 %v2639, %v2643
    %v2648 = vsub.f32 %v2640, %v2646
    %v2649 = vmul.f32 %v2647, 1.442695
    %v2650 = vpow.pop %v2649
    %v2651 = vmul.f32 %v2648, 1.442695
    %v2652 = vpow.pop %v2651
    %v2653 = vsel %vm517, %v2650, 0.0
    %2654 = vadd.xlane.f32.xlu0 %v2653
    %v2655 = vpop.xlane.xlu0 %2654
    %v2656 = vsel %vm521, %v2652, 0.0
    %2657 = vadd.xlane.f32.xlu0 %v2656
    %v2658 = vpop.xlane.xlu0 %2657
    %v2659 = vrcp.pop %v2655
    %v2660 = vmul.f32 %v2655, %v2659
    %v2661 = vsub.f32 1.0, %v2660
    %v2662 = vmul.f32 %v2659, %v2661
    %v2663 = vadd.f32 %v2659, %v2662
    %vm2664 = vweird.f32 %v2655
    %vm2665 = vweird.f32 %v2659
    %vm2666 = vmor %vm2664, %vm2665
    %v2667 = vsel %vm2666, %v2659, %v2663
    %v2668 = vand.u32 2147483647, %v2655
    %vm2669 = vcmp.eq.f32.partialorder %v2668, 8.507059e+37
    %v2670 = vand.u32 %v2655, 2147483648
    %v2671 = vor.u32 1.1754944e-38, %v2670
    %v2672 = vsel %vm2669, %v2671, %v2667
    %v2673 = vmul.f32 %v2650, %v2672
    %v2674 = vrcp.pop %v2658
    %v2675 = vmul.f32 %v2658, %v2674
    %v2676 = vsub.f32 1.0, %v2675
    %v2677 = vmul.f32 %v2674, %v2676
    %v2678 = vadd.f32 %v2674, %v2677
    %vm2679 = vweird.f32 %v2658
    %vm2680 = vweird.f32 %v2674
    %vm2681 = vmor %vm2679, %vm2680
    %v2682 = vsel %vm2681, %v2674, %v2678
    %v2683 = vand.u32 2147483647, %v2658
    %vm2684 = vcmp.eq.f32.partialorder %v2683, 8.507059e+37
    %v2685 = vand.u32 %v2658, 2147483648
    %v2686 = vor.u32 1.1754944e-38, %v2685
    %v2687 = vsel %vm2684, %v2686, %v2682
    %v2688 = vmul.f32 %v2652, %v2687
    %2689 = vrot.lane.b32.xlu0 %v2565, 112
    %v2690 = vpop.permute.xlu0 %2689
    %2691 = vrot.lane.b32.xlu0 %v2564, 112
    %v2692 = vpop.permute.xlu0 %2691
    %v2695 = vsel %vm517, %v2673, 0
    %v2698 = vsel %vm517, %v2688, 0
    %v2700 = vsel %vm285, %v2692, 0
    %2702 = vmatpush.msra.mxu0 0.0
    %2703 = vmatpush.msra.mxu0 0.0
    %2704 = vmatpush.msra.mxu0 0.0
    %2705 = vmatpush.msra.mxu0 0.0
    %2706 = vmatpush.msra.mxu0 0.0
    %2707 = vmatpush.msra.mxu0 0.0
    %2708 = vmatpush.msra.mxu0 0.0
    %2709 = vmatpush.msra.mxu0 0.0
    %2710 = vmatpush.msra.mxu0 0.0
    %2711 = vmatpush.msra.mxu0 0.0
    %2712 = vmatpush.msra.mxu0 0.0
    %2713 = vmatpush.msra.mxu0 0.0
    %2714 = vmatpush.msra.mxu0 0.0
    %2715 = vmatpush.msra.mxu0 0.0
    %2716 = vmatpush.msra.mxu0 %v2700
    %2717 = vmatpush.msra.mxu0 %v2690
    %2718 = vmatmul.f32.gmra.mxu0 %v2695
    %v2719 = vpop.f32.mrf.mxu0
    %v2720 = vadd.f32 0.0, %v2719
    %2721 = vmatmul.f32.gmra.mxu0 %v2698
    %v2722 = vpop.f32.mrf.mxu0
    %v2723 = vadd.f32 0.0, %v2722
    %2724 = vdwg.mxu0
    %2725 = vrot.lane.b32.xlu0 %v2474, 96
    %v2726 = vpop.permute.xlu0 %2725
    %2727 = vrot.lane.b32.xlu0 %v2473, 96
    %v2728 = vpop.permute.xlu0 %2727
    %2729 = vrot.lane.b32.xlu0 %v2474, 32
    %v2730 = vpop.permute.xlu0 %2729
    %2731 = vrot.lane.b32.xlu0 %v2473, 32
    %v2732 = vpop.permute.xlu0 %2731
    %v2733 = vsel %vm480, %v2726, 0
    %v2735 = vsel %vm480, %v2728, 0
    %v2737 = vsel %vm480, %v2730, 0
    %v2739 = vsel %vm480, %v2732, 0
    %2741 = vmatpush.xpose.msra.mxu0 0.0
    %2742 = vmatpush.xpose.msra.mxu0 0.0
    %2743 = vmatpush.xpose.msra.mxu0 0.0
    %2744 = vmatpush.xpose.msra.mxu0 0.0
    %2745 = vmatpush.xpose.msra.mxu0 0.0
    %2746 = vmatpush.xpose.msra.mxu0 0.0
    %2747 = vmatpush.xpose.msra.mxu0 0.0
    %2748 = vmatpush.xpose.msra.mxu0 0.0
    %2749 = vmatpush.xpose.msra.mxu0 0.0
    %2750 = vmatpush.xpose.msra.mxu0 0.0
    %2751 = vmatpush.xpose.msra.mxu0 0.0
    %2752 = vmatpush.xpose.msra.mxu0 0.0
    %2753 = vmatpush.xpose.msra.mxu0 0.0
    %2754 = vmatpush.xpose.msra.mxu0 0.0
    %2755 = vmatpush.xpose.msra.mxu0 %v2739
    %2756 = vmatpush.xpose.msra.mxu0 %v2737
    %2757 = vmatmul.f32.gmra.mxu0 %v2733
    %v2758 = vpop.f32.mrf.mxu0
    %v2759 = vadd.f32 0.0, %v2758
    %2760 = vmatmul.f32.gmra.mxu0 %v2735
    %v2761 = vpop.f32.mrf.mxu0
    %v2762 = vadd.f32 0.0, %v2761
    %2763 = vdwg.mxu0
    %v2764 = vmul.f32 %v2759, 0.25
    %v2765 = vmul.f32 %v2762, 0.25
    %v2766 = vadd.f32 %v2764, %v1055
    %v2767 = vadd.f32 %v2765, %v1055
    %v2768 = vsel %vm517, %v2766, -inf
    %2769 = vmax.xlane.f32.xlu0 %v2768
    %v2770 = vpop.xlane.xlu0 %2769
    %v2771 = vsel %vm521, %v2767, -inf
    %2772 = vmax.xlane.f32.xlu0 %v2771
    %v2773 = vpop.xlane.xlu0 %2772
    %v2774 = vsub.f32 %v2766, %v2770
    %v2775 = vsub.f32 %v2767, %v2773
    %v2776 = vmul.f32 %v2774, 1.442695
    %v2777 = vpow.pop %v2776
    %v2778 = vmul.f32 %v2775, 1.442695
    %v2779 = vpow.pop %v2778
    %v2780 = vsel %vm517, %v2777, 0.0
    %2781 = vadd.xlane.f32.xlu0 %v2780
    %v2782 = vpop.xlane.xlu0 %2781
    %v2783 = vsel %vm521, %v2779, 0.0
    %2784 = vadd.xlane.f32.xlu0 %v2783
    %v2785 = vpop.xlane.xlu0 %2784
    %v2786 = vrcp.pop %v2782
    %v2787 = vmul.f32 %v2782, %v2786
    %v2788 = vsub.f32 1.0, %v2787
    %v2789 = vmul.f32 %v2786, %v2788
    %v2790 = vadd.f32 %v2786, %v2789
    %vm2791 = vweird.f32 %v2782
    %vm2792 = vweird.f32 %v2786
    %vm2793 = vmor %vm2791, %vm2792
    %v2794 = vsel %vm2793, %v2786, %v2790
    %v2795 = vand.u32 2147483647, %v2782
    %vm2796 = vcmp.eq.f32.partialorder %v2795, 8.507059e+37
    %v2797 = vand.u32 %v2782, 2147483648
    %v2798 = vor.u32 1.1754944e-38, %v2797
    %v2799 = vsel %vm2796, %v2798, %v2794
    %v2800 = vmul.f32 %v2777, %v2799
    %v2801 = vrcp.pop %v2785
    %v2802 = vmul.f32 %v2785, %v2801
    %v2803 = vsub.f32 1.0, %v2802
    %v2804 = vmul.f32 %v2801, %v2803
    %v2805 = vadd.f32 %v2801, %v2804
    %vm2806 = vweird.f32 %v2785
    %vm2807 = vweird.f32 %v2801
    %vm2808 = vmor %vm2806, %vm2807
    %v2809 = vsel %vm2808, %v2801, %v2805
    %v2810 = vand.u32 2147483647, %v2785
    %vm2811 = vcmp.eq.f32.partialorder %v2810, 8.507059e+37
    %v2812 = vand.u32 %v2785, 2147483648
    %v2813 = vor.u32 1.1754944e-38, %v2812
    %v2814 = vsel %vm2811, %v2813, %v2809
    %v2815 = vmul.f32 %v2779, %v2814
    %2816 = vrot.lane.b32.xlu0 %v2565, 96
    %v2817 = vpop.permute.xlu0 %2816
    %2818 = vrot.lane.b32.xlu0 %v2564, 96
    %v2819 = vpop.permute.xlu0 %2818
    %v2822 = vsel %vm517, %v2800, 0
    %v2825 = vsel %vm517, %v2815, 0
    %v2827 = vsel %vm285, %v2819, 0
    %2829 = vmatpush.msra.mxu0 0.0
    %2830 = vmatpush.msra.mxu0 0.0
    %2831 = vmatpush.msra.mxu0 0.0
    %2832 = vmatpush.msra.mxu0 0.0
    %2833 = vmatpush.msra.mxu0 0.0
    %2834 = vmatpush.msra.mxu0 0.0
    %2835 = vmatpush.msra.mxu0 0.0
    %2836 = vmatpush.msra.mxu0 0.0
    %2837 = vmatpush.msra.mxu0 0.0
    %2838 = vmatpush.msra.mxu0 0.0
    %2839 = vmatpush.msra.mxu0 0.0
    %2840 = vmatpush.msra.mxu0 0.0
    %2841 = vmatpush.msra.mxu0 0.0
    %2842 = vmatpush.msra.mxu0 0.0
    %2843 = vmatpush.msra.mxu0 %v2827
    %2844 = vmatpush.msra.mxu0 %v2817
    %2845 = vmatmul.f32.gmra.mxu0 %v2822
    %v2846 = vpop.f32.mrf.mxu0
    %v2847 = vadd.f32 0.0, %v2846
    %2848 = vmatmul.f32.gmra.mxu0 %v2825
    %v2849 = vpop.f32.mrf.mxu0
    %v2850 = vadd.f32 0.0, %v2849
    %2851 = vdwg.mxu0
    %2852 = vrot.lane.b32.xlu0 %v2474, 80
    %v2853 = vpop.permute.xlu0 %2852
    %2854 = vrot.lane.b32.xlu0 %v2473, 80
    %v2855 = vpop.permute.xlu0 %2854
    %2856 = vrot.lane.b32.xlu0 %v2474, 16
    %v2857 = vpop.permute.xlu0 %2856
    %2858 = vrot.lane.b32.xlu0 %v2473, 16
    %v2859 = vpop.permute.xlu0 %2858
    %v2860 = vsel %vm480, %v2853, 0
    %v2862 = vsel %vm480, %v2855, 0
    %v2864 = vsel %vm480, %v2857, 0
    %v2866 = vsel %vm480, %v2859, 0
    %2868 = vmatpush.xpose.msra.mxu0 0.0
    %2869 = vmatpush.xpose.msra.mxu0 0.0
    %2870 = vmatpush.xpose.msra.mxu0 0.0
    %2871 = vmatpush.xpose.msra.mxu0 0.0
    %2872 = vmatpush.xpose.msra.mxu0 0.0
    %2873 = vmatpush.xpose.msra.mxu0 0.0
    %2874 = vmatpush.xpose.msra.mxu0 0.0
    %2875 = vmatpush.xpose.msra.mxu0 0.0
    %2876 = vmatpush.xpose.msra.mxu0 0.0
    %2877 = vmatpush.xpose.msra.mxu0 0.0
    %2878 = vmatpush.xpose.msra.mxu0 0.0
    %2879 = vmatpush.xpose.msra.mxu0 0.0
    %2880 = vmatpush.xpose.msra.mxu0 0.0
    %2881 = vmatpush.xpose.msra.mxu0 0.0
    %2882 = vmatpush.xpose.msra.mxu0 %v2866
    %2883 = vmatpush.xpose.msra.mxu0 %v2864
    %2884 = vmatmul.f32.gmra.mxu0 %v2860
    %v2885 = vpop.f32.mrf.mxu0
    %v2886 = vadd.f32 0.0, %v2885
    %2887 = vmatmul.f32.gmra.mxu0 %v2862
    %v2888 = vpop.f32.mrf.mxu0
    %v2889 = vadd.f32 0.0, %v2888
    %2890 = vdwg.mxu0
    %v2891 = vmul.f32 %v2886, 0.25
    %v2892 = vmul.f32 %v2889, 0.25
    %v2893 = vadd.f32 %v2891, %v1055
    %v2894 = vadd.f32 %v2892, %v1055
    %v2895 = vsel %vm517, %v2893, -inf
    %2896 = vmax.xlane.f32.xlu0 %v2895
    %v2897 = vpop.xlane.xlu0 %2896
    %v2898 = vsel %vm521, %v2894, -inf
    %2899 = vmax.xlane.f32.xlu0 %v2898
    %v2900 = vpop.xlane.xlu0 %2899
    %v2901 = vsub.f32 %v2893, %v2897
    %v2902 = vsub.f32 %v2894, %v2900
    %v2903 = vmul.f32 %v2901, 1.442695
    %v2904 = vpow.pop %v2903
    %v2905 = vmul.f32 %v2902, 1.442695
    %v2906 = vpow.pop %v2905
    %v2907 = vsel %vm517, %v2904, 0.0
    %2908 = vadd.xlane.f32.xlu0 %v2907
    %v2909 = vpop.xlane.xlu0 %2908
    %v2910 = vsel %vm521, %v2906, 0.0
    %2911 = vadd.xlane.f32.xlu0 %v2910
    %v2912 = vpop.xlane.xlu0 %2911
    %v2913 = vrcp.pop %v2909
    %v2914 = vmul.f32 %v2909, %v2913
    %v2915 = vsub.f32 1.0, %v2914
    %v2916 = vmul.f32 %v2913, %v2915
    %v2917 = vadd.f32 %v2913, %v2916
    %vm2918 = vweird.f32 %v2909
    %vm2919 = vweird.f32 %v2913
    %vm2920 = vmor %vm2918, %vm2919
    %v2921 = vsel %vm2920, %v2913, %v2917
    %v2922 = vand.u32 2147483647, %v2909
    %vm2923 = vcmp.eq.f32.partialorder %v2922, 8.507059e+37
    %v2924 = vand.u32 %v2909, 2147483648
    %v2925 = vor.u32 1.1754944e-38, %v2924
    %v2926 = vsel %vm2923, %v2925, %v2921
    %v2927 = vmul.f32 %v2904, %v2926
    %v2928 = vrcp.pop %v2912
    %v2929 = vmul.f32 %v2912, %v2928
    %v2930 = vsub.f32 1.0, %v2929
    %v2931 = vmul.f32 %v2928, %v2930
    %v2932 = vadd.f32 %v2928, %v2931
    %vm2933 = vweird.f32 %v2912
    %vm2934 = vweird.f32 %v2928
    %vm2935 = vmor %vm2933, %vm2934
    %v2936 = vsel %vm2935, %v2928, %v2932
    %v2937 = vand.u32 2147483647, %v2912
    %vm2938 = vcmp.eq.f32.partialorder %v2937, 8.507059e+37
    %v2939 = vand.u32 %v2912, 2147483648
    %v2940 = vor.u32 1.1754944e-38, %v2939
    %v2941 = vsel %vm2938, %v2940, %v2936
    %v2942 = vmul.f32 %v2906, %v2941
    %2943 = vrot.lane.b32.xlu0 %v2565, 80
    %v2944 = vpop.permute.xlu0 %2943
    %2945 = vrot.lane.b32.xlu0 %v2564, 80
    %v2946 = vpop.permute.xlu0 %2945
    %v2949 = vsel %vm517, %v2927, 0
    %v2952 = vsel %vm517, %v2942, 0
    %v2954 = vsel %vm285, %v2946, 0
    %2956 = vmatpush.msra.mxu0 0.0
    %2957 = vmatpush.msra.mxu0 0.0
    %2958 = vmatpush.msra.mxu0 0.0
    %2959 = vmatpush.msra.mxu0 0.0
    %2960 = vmatpush.msra.mxu0 0.0
    %2961 = vmatpush.msra.mxu0 0.0
    %2962 = vmatpush.msra.mxu0 0.0
    %2963 = vmatpush.msra.mxu0 0.0
    %2964 = vmatpush.msra.mxu0 0.0
    %2965 = vmatpush.msra.mxu0 0.0
    %2966 = vmatpush.msra.mxu0 0.0
    %2967 = vmatpush.msra.mxu0 0.0
    %2968 = vmatpush.msra.mxu0 0.0
    %2969 = vmatpush.msra.mxu0 0.0
    %2970 = vmatpush.msra.mxu0 %v2954
    %2971 = vmatpush.msra.mxu0 %v2944
    %2972 = vmatmul.f32.gmra.mxu0 %v2949
    %v2973 = vpop.f32.mrf.mxu0
    %v2974 = vadd.f32 0.0, %v2973
    %2975 = vmatmul.f32.gmra.mxu0 %v2952
    %v2976 = vpop.f32.mrf.mxu0
    %v2977 = vadd.f32 0.0, %v2976
    %2978 = vdwg.mxu0
    %2981 = vrot.lane.b32.xlu0 %v2720, 16
    %v2982 = vpop.permute.xlu0 %2981
    %2983 = vrot.lane.b32.xlu0 %v2723, 16
    %v2984 = vpop.permute.xlu0 %2983
    %2989 = vrot.lane.b32.xlu0 %v2847, 32
    %v2990 = vpop.permute.xlu0 %2989
    %2991 = vrot.lane.b32.xlu0 %v2850, 32
    %v2992 = vpop.permute.xlu0 %2991
    %2997 = vrot.lane.b32.xlu0 %v2974, 48
    %v2998 = vpop.permute.xlu0 %2997
    %2999 = vrot.lane.b32.xlu0 %v2977, 48
    %v3000 = vpop.permute.xlu0 %2999
    %v3003 = vsel %vm480, %v2593, %v2982
    %v3004 = vsel %vm480, %v2596, %v2984
    %v3005 = vsel %vm1007, %v3003, %v2990
    %v3006 = vsel %vm1007, %v3004, %v2992
    %v3007 = vsel %vm1010, %v3005, %v2998
    %v3008 = vsel %vm1010, %v3006, %v3000
    %v3011 = vrot.slane %v3007, 6
    %v3012 = vrot.slane %v3008, 6
    %v3013 = vsel %vm285, %v3011, %v3012
    %v3015 = vsel %vm285, %v2470, %v3011
    %s3016 = scalar_lea.vmem %s8, 64
    %v3017 = vld [vmem:[%s3016] sm:$0xff]
    %v3018 = vld [vmem:[%s3016 + $0x8] sm:$0xff]
    %v3019 = vld [vmem:[%s3016 + $0x10] sm:$0xff]
    %v3020 = vld [vmem:[%s3016 + $0x18] sm:$0xff]
    %v3021 = vld [vmem:[%s3016 + $0x20] sm:$0xff]
    %v3022 = vld [vmem:[%s3016 + $0x28] sm:$0xff]
    %v3023 = vld [vmem:[%s3016 + $0x30] sm:$0xff]
    %v3024 = vld [vmem:[%s3016 + $0x38] sm:$0xff]
    %v3025 = vperm.slane %v1856, 1
    %v3027 = vsel %vm412, %v2469, 0
    %v3030 = vsel %vm412, %v3015, 0
    %v3032 = vsel %vm412, %v3013, 0
    %3034 = vmatpush.msra.mxu0 0.0
    %3035 = vmatpush.msra.mxu0 0.0
    %3036 = vmatpush.msra.mxu0 0.0
    %3037 = vmatpush.msra.mxu0 0.0
    %3038 = vmatpush.msra.mxu0 0.0
    %3039 = vmatpush.msra.mxu0 0.0
    %3040 = vmatpush.msra.mxu0 0.0
    %3041 = vmatpush.msra.mxu0 0.0
    %3042 = vmatpush.msra.mxu0 %v3024
    %3043 = vmatpush.msra.mxu0 %v3023
    %3044 = vmatpush.msra.mxu0 %v3022
    %3045 = vmatpush.msra.mxu0 %v3021
    %3046 = vmatpush.msra.mxu0 %v3020
    %3047 = vmatpush.msra.mxu0 %v3019
    %3048 = vmatpush.msra.mxu0 %v3018
    %3049 = vmatpush.msra.mxu0 %v3017
    %3050 = vmatmul.f32.gmra.mxu0 %v3027
    %v3051 = vpop.f32.mrf.mxu0
    %v3052 = vadd.f32 %v3025, %v3051
    %3053 = vmatmul.f32.gmra.mxu0 %v3030
    %v3054 = vpop.f32.mrf.mxu0
    %v3055 = vadd.f32 %v3025, %v3054
    %3056 = vmatmul.f32.gmra.mxu0 %v3032
    %v3057 = vpop.f32.mrf.mxu0
    %v3058 = vadd.f32 %v3025, %v3057
    %3059 = vdwg.mxu0
    %v3060 = vadd.f32 %v1852, %v3052
    %v3061 = vadd.f32 %v1853, %v3055
    %v3062 = vadd.f32 %v1854, %v3058
    %v3063 = vsel %vm412, %v3060, 0.0
    %3064 = vadd.xlane.f32.xlu0 %v3063
    %v3065 = vpop.xlane.xlu0 %3064
    %v3066 = vsel %vm412, %v3061, 0.0
    %3067 = vadd.xlane.f32.xlu0 %v3066
    %v3068 = vpop.xlane.xlu0 %3067
    %v3069 = vsel %vm1612, %v3062, 0.0
    %3070 = vadd.xlane.f32.xlu0 %v3069
    %v3071 = vpop.xlane.xlu0 %3070
    %v3072 = vmul.f32 %v3065, %v1622
    %v3073 = vmul.f32 %v3068, %v1622
    %v3074 = vmul.f32 %v3071, %v1622
    %v3075 = vsub.f32 %v3060, %v3072
    %v3076 = vsub.f32 %v3061, %v3073
    %v3077 = vsub.f32 %v3062, %v3074
    %v3078 = vmul.f32 %v3075, %v3075
    %v3079 = vmul.f32 %v3076, %v3076
    %v3080 = vmul.f32 %v3077, %v3077
    %v3081 = vsel %vm412, %v3078, 0.0
    %3082 = vadd.xlane.f32.xlu0 %v3081
    %v3083 = vpop.xlane.xlu0 %3082
    %v3084 = vsel %vm412, %v3079, 0.0
    %3085 = vadd.xlane.f32.xlu0 %v3084
    %v3086 = vpop.xlane.xlu0 %3085
    %v3087 = vsel %vm1612, %v3080, 0.0
    %3088 = vadd.xlane.f32.xlu0 %v3087
    %v3089 = vpop.xlane.xlu0 %3088
    %v3090 = vmul.f32 %v3083, %v1622
    %v3091 = vmul.f32 %v3086, %v1622
    %v3092 = vmul.f32 %v3089, %v1622
    %v3093 = vadd.f32 %v3090, 1e-05
    %v3094 = vadd.f32 %v3091, 1e-05
    %v3095 = vadd.f32 %v3092, 1e-05
    %v3096 = vrsqrt.pop %v3093
    %v3097 = vmul.f32 %v3096, %v3093
    %v3098 = vmul.f32 %v3097, %v3096
    %v3099 = vmul.f32 0.5, %v3098
    %v3100 = vsub.f32 1.5, %v3099
    %v3101 = vmul.f32 %v3096, %v3100
    %vm3102 = vweird.f32 %v3093
    %vm3103 = vweird.f32 %v3096
    %vm3104 = vmor %vm3102, %vm3103
    %v3105 = vsel %vm3104, %v3096, %v3101
    %v3106 = vrsqrt.pop %v3094
    %v3107 = vmul.f32 %v3106, %v3094
    %v3108 = vmul.f32 %v3107, %v3106
    %v3109 = vmul.f32 0.5, %v3108
    %v3110 = vsub.f32 1.5, %v3109
    %v3111 = vmul.f32 %v3106, %v3110
    %vm3112 = vweird.f32 %v3094
    %vm3113 = vweird.f32 %v3106
    %vm3114 = vmor %vm3112, %vm3113
    %v3115 = vsel %vm3114, %v3106, %v3111
    %v3116 = vrsqrt.pop %v3095
    %v3117 = vmul.f32 %v3116, %v3095
    %v3118 = vmul.f32 %v3117, %v3116
    %v3119 = vmul.f32 0.5, %v3118
    %v3120 = vsub.f32 1.5, %v3119
    %v3121 = vmul.f32 %v3116, %v3120
    %vm3122 = vweird.f32 %v3095
    %vm3123 = vweird.f32 %v3116
    %vm3124 = vmor %vm3122, %vm3123
    %v3125 = vsel %vm3124, %v3116, %v3121
    %v3126 = vmul.f32 %v3075, %v3105
    %v3127 = vmul.f32 %v3076, %v3115
    %v3128 = vmul.f32 %v3077, %v3125
    %v3129 = vperm.slane %v1856, 4
    %v3130 = vmul.f32 %v3126, %v3129
    %v3131 = vmul.f32 %v3127, %v3129
    %v3132 = vmul.f32 %v3128, %v3129
    %v3133 = vperm.slane %v1856, 5
    %v3134 = vadd.f32 %v3130, %v3133
    %v3135 = vadd.f32 %v3131, %v3133
    %v3136 = vadd.f32 %v3132, %v3133
    %s3137 = scalar_lea.vmem [#allocation7], 64
    %v3138 = vld [vmem:[%s3137] sm:$0xff]
    %v3139 = vld [vmem:[%s3137 + $0x8] sm:$0xff]
    %v3140 = vld [vmem:[%s3137 + $0x10] sm:$0xff]
    %v3141 = vld [vmem:[%s3137 + $0x18] sm:$0xff]
    %v3142 = vld [vmem:[%s3137 + $0x20] sm:$0xff]
    %v3143 = vld [vmem:[%s3137 + $0x28] sm:$0xff]
    %v3144 = vld [vmem:[%s3137 + $0x30] sm:$0xff]
    %v3145 = vld [vmem:[%s3137 + $0x38] sm:$0xff]
    %v3146 = vperm.slane %v1856, 2
    %v3148 = vsel %vm412, %v3134, 0
    %v3151 = vsel %vm412, %v3135, 0
    %v3154 = vsel %vm412, %v3136, 0
    %3156 = vmatpush.msra.mxu0 0.0
    %3157 = vmatpush.msra.mxu0 0.0
    %3158 = vmatpush.msra.mxu0 0.0
    %3159 = vmatpush.msra.mxu0 0.0
    %3160 = vmatpush.msra.mxu0 0.0
    %3161 = vmatpush.msra.mxu0 0.0
    %3162 = vmatpush.msra.mxu0 0.0
    %3163 = vmatpush.msra.mxu0 0.0
    %3164 = vmatpush.msra.mxu0 %v3145
    %3165 = vmatpush.msra.mxu0 %v3144
    %3166 = vmatpush.msra.mxu0 %v3143
    %3167 = vmatpush.msra.mxu0 %v3142
    %3168 = vmatpush.msra.mxu0 %v3141
    %3169 = vmatpush.msra.mxu0 %v3140
    %3170 = vmatpush.msra.mxu0 %v3139
    %3171 = vmatpush.msra.mxu0 %v3138
    %3172 = vmatmul.f32.gmra.mxu0 %v3148
    %v3173 = vpop.f32.mrf.mxu0
    %v3174 = vadd.f32 %v3146, %v3173
    %3175 = vmatmul.f32.gmra.mxu0 %v3151
    %v3176 = vpop.f32.mrf.mxu0
    %v3177 = vadd.f32 %v3146, %v3176
    %3178 = vmatmul.f32.gmra.mxu0 %v3154
    %v3179 = vpop.f32.mrf.mxu0
    %v3180 = vadd.f32 %v3146, %v3179
    %3181 = vdwg.mxu0
    %v3182 = vmax.f32 %v3174, 0.0
    %v3183 = vmax.f32 %v3177, 0.0
    %v3184 = vmax.f32 %v3180, 0.0
    %s3185 = scalar_lea.vmem %s10, 128
    %v3186 = vld [vmem:[%s3185] sm:$0xff]
    %v3187 = vld [vmem:[%s3185 + $0x8] sm:$0xff]
    %v3188 = vld [vmem:[%s3185 + $0x10] sm:$0xff]
    %v3189 = vld [vmem:[%s3185 + $0x18] sm:$0xff]
    %v3190 = vld [vmem:[%s3185 + $0x20] sm:$0xff]
    %v3191 = vld [vmem:[%s3185 + $0x28] sm:$0xff]
    %v3192 = vld [vmem:[%s3185 + $0x30] sm:$0xff]
    %v3193 = vld [vmem:[%s3185 + $0x38] sm:$0xff]
    %v3194 = vld [vmem:[%s3185 + $0x40] sm:$0xff]
    %v3195 = vld [vmem:[%s3185 + $0x48] sm:$0xff]
    %v3196 = vld [vmem:[%s3185 + $0x50] sm:$0xff]
    %v3197 = vld [vmem:[%s3185 + $0x58] sm:$0xff]
    %v3198 = vld [vmem:[%s3185 + $0x60] sm:$0xff]
    %v3199 = vld [vmem:[%s3185 + $0x68] sm:$0xff]
    %v3200 = vld [vmem:[%s3185 + $0x70] sm:$0xff]
    %v3201 = vld [vmem:[%s3185 + $0x78] sm:$0xff]
    %v3202 = vperm.slane %v1856, 3
    %3203 = vmatpush.msra.mxu0 %v3201
    %3204 = vmatpush.msra.mxu0 %v3200
    %3205 = vmatpush.msra.mxu0 %v3199
    %3206 = vmatpush.msra.mxu0 %v3198
    %3207 = vmatpush.msra.mxu0 %v3197
    %3208 = vmatpush.msra.mxu0 %v3196
    %3209 = vmatpush.msra.mxu0 %v3195
    %3210 = vmatpush.msra.mxu0 %v3194
    %3211 = vmatpush.msra.mxu0 %v3193
    %3212 = vmatpush.msra.mxu0 %v3192
    %3213 = vmatpush.msra.mxu0 %v3191
    %3214 = vmatpush.msra.mxu0 %v3190
    %3215 = vmatpush.msra.mxu0 %v3189
    %3216 = vmatpush.msra.mxu0 %v3188
    %3217 = vmatpush.msra.mxu0 %v3187
    %3218 = vmatpush.msra.mxu0 %v3186
    %3219 = vmatmul.f32.gmra.mxu0 %v3182
    %v3220 = vpop.f32.mrf.mxu0
    %v3221 = vadd.f32 %v3202, %v3220
    %3222 = vmatmul.f32.gmra.mxu0 %v3183
    %v3223 = vpop.f32.mrf.mxu0
    %v3224 = vadd.f32 %v3202, %v3223
    %3225 = vmatmul.f32.gmra.mxu0 %v3184
    %v3226 = vpop.f32.mrf.mxu0
    %v3227 = vadd.f32 %v3202, %v3226
    %3228 = vdwg.mxu0
    %v3229 = vadd.f32 %v3134, %v3221
    %v3230 = vadd.f32 %v3135, %v3224
    %v3231 = vadd.f32 %v3136, %v3227
    %v3232 = vsel %vm412, %v3229, 0.0
    %3233 = vadd.xlane.f32.xlu0 %v3232
    %v3234 = vpop.xlane.xlu0 %3233
    %v3235 = vsel %vm412, %v3230, 0.0
    %3236 = vadd.xlane.f32.xlu0 %v3235
    %v3237 = vpop.xlane.xlu0 %3236
    %v3238 = vsel %vm1612, %v3231, 0.0
    %3239 = vadd.xlane.f32.xlu0 %v3238
    %v3240 = vpop.xlane.xlu0 %3239
    %v3241 = vmul.f32 %v3234, %v1622
    %v3242 = vmul.f32 %v3237, %v1622
    %v3243 = vmul.f32 %v3240, %v1622
    %v3244 = vsub.f32 %v3229, %v3241
    %v3245 = vsub.f32 %v3230, %v3242
    %v3246 = vsub.f32 %v3231, %v3243
    %v3247 = vmul.f32 %v3244, %v3244
    %v3248 = vmul.f32 %v3245, %v3245
    %v3249 = vmul.f32 %v3246, %v3246
    %v3250 = vsel %vm412, %v3247, 0.0
    %3251 = vadd.xlane.f32.xlu0 %v3250
    %v3252 = vpop.xlane.xlu0 %3251
    %v3253 = vsel %vm412, %v3248, 0.0
    %3254 = vadd.xlane.f32.xlu0 %v3253
    %v3255 = vpop.xlane.xlu0 %3254
    %v3256 = vsel %vm1612, %v3249, 0.0
    %3257 = vadd.xlane.f32.xlu0 %v3256
    %v3258 = vpop.xlane.xlu0 %3257
    %v3259 = vmul.f32 %v3252, %v1622
    %v3260 = vmul.f32 %v3255, %v1622
    %v3261 = vmul.f32 %v3258, %v1622
    %v3262 = vadd.f32 %v3259, 1e-05
    %v3263 = vadd.f32 %v3260, 1e-05
    %v3264 = vadd.f32 %v3261, 1e-05
    %v3265 = vrsqrt.pop %v3262
    %v3266 = vmul.f32 %v3265, %v3262
    %v3267 = vmul.f32 %v3266, %v3265
    %v3268 = vmul.f32 0.5, %v3267
    %v3269 = vsub.f32 1.5, %v3268
    %v3270 = vmul.f32 %v3265, %v3269
    %vm3271 = vweird.f32 %v3262
    %vm3272 = vweird.f32 %v3265
    %vm3273 = vmor %vm3271, %vm3272
    %v3274 = vsel %vm3273, %v3265, %v3270
    %v3275 = vrsqrt.pop %v3263
    %v3276 = vmul.f32 %v3275, %v3263
    %v3277 = vmul.f32 %v3276, %v3275
    %v3278 = vmul.f32 0.5, %v3277
    %v3279 = vsub.f32 1.5, %v3278
    %v3280 = vmul.f32 %v3275, %v3279
    %vm3281 = vweird.f32 %v3263
    %vm3282 = vweird.f32 %v3275
    %vm3283 = vmor %vm3281, %vm3282
    %v3284 = vsel %vm3283, %v3275, %v3280
    %v3285 = vrsqrt.pop %v3264
    %v3286 = vmul.f32 %v3285, %v3264
    %v3287 = vmul.f32 %v3286, %v3285
    %v3288 = vmul.f32 0.5, %v3287
    %v3289 = vsub.f32 1.5, %v3288
    %v3290 = vmul.f32 %v3285, %v3289
    %vm3291 = vweird.f32 %v3264
    %vm3292 = vweird.f32 %v3285
    %vm3293 = vmor %vm3291, %vm3292
    %v3294 = vsel %vm3293, %v3285, %v3290
    %v3295 = vmul.f32 %v3244, %v3274
    %v3296 = vmul.f32 %v3245, %v3284
    %v3297 = vmul.f32 %v3246, %v3294
    %v3298 = vperm.slane %v1856, 6
    %v3299 = vmul.f32 %v3295, %v3298
    %v3300 = vmul.f32 %v3296, %v3298
    %v3301 = vmul.f32 %v3297, %v3298
    %v3302 = vperm.slane %v1856, 7
    %v3303 = vadd.f32 %v3299, %v3302
    %v3304 = vadd.f32 %v3300, %v3302
    %v3305 = vadd.f32 %v3301, %v3302
    %v3306 = vld [vmem:[#allocation19] sm:$0x1f]
    %v3307 = vsel %vm412, %v3303, 0.0
    %3308 = vadd.xlane.f32.xlu0 %v3307
    %v3309 = vpop.xlane.xlu0 %3308
    %v3310 = vsel %vm412, %v3304, 0.0
    %3311 = vadd.xlane.f32.xlu0 %v3310
    %v3312 = vpop.xlane.xlu0 %3311
    %v3313 = vsel %vm1612, %v3305, 0.0
    %3314 = vadd.xlane.f32.xlu0 %v3313
    %v3315 = vpop.xlane.xlu0 %3314
    %v3316 = vmul.f32 %v3309, %v1622
    %v3317 = vmul.f32 %v3312, %v1622
    %v3318 = vmul.f32 %v3315, %v1622
    %v3319 = vsub.f32 %v3303, %v3316
    %v3320 = vsub.f32 %v3304, %v3317
    %v3321 = vsub.f32 %v3305, %v3318
    %v3322 = vmul.f32 %v3319, %v3319
    %v3323 = vmul.f32 %v3320, %v3320
    %v3324 = vmul.f32 %v3321, %v3321
    %v3325 = vsel %vm412, %v3322, 0.0
    %3326 = vadd.xlane.f32.xlu0 %v3325
    %v3327 = vpop.xlane.xlu0 %3326
    %v3328 = vsel %vm412, %v3323, 0.0
    %3329 = vadd.xlane.f32.xlu0 %v3328
    %v3330 = vpop.xlane.xlu0 %3329
    %v3331 = vsel %vm1612, %v3324, 0.0
    %3332 = vadd.xlane.f32.xlu0 %v3331
    %v3333 = vpop.xlane.xlu0 %3332
    %v3334 = vmul.f32 %v3327, %v1622
    %v3335 = vmul.f32 %v3330, %v1622
    %v3336 = vmul.f32 %v3333, %v1622
    %v3337 = vadd.f32 %v3334, 1e-05
    %v3338 = vadd.f32 %v3335, 1e-05
    %v3339 = vadd.f32 %v3336, 1e-05
    %v3340 = vrsqrt.pop %v3337
    %v3341 = vmul.f32 %v3340, %v3337
    %v3342 = vmul.f32 %v3341, %v3340
    %v3343 = vmul.f32 0.5, %v3342
    %v3344 = vsub.f32 1.5, %v3343
    %v3345 = vmul.f32 %v3340, %v3344
    %vm3346 = vweird.f32 %v3337
    %vm3347 = vweird.f32 %v3340
    %vm3348 = vmor %vm3346, %vm3347
    %v3349 = vsel %vm3348, %v3340, %v3345
    %v3350 = vrsqrt.pop %v3338
    %v3351 = vmul.f32 %v3350, %v3338
    %v3352 = vmul.f32 %v3351, %v3350
    %v3353 = vmul.f32 0.5, %v3352
    %v3354 = vsub.f32 1.5, %v3353
    %v3355 = vmul.f32 %v3350, %v3354
    %vm3356 = vweird.f32 %v3338
    %vm3357 = vweird.f32 %v3350
    %vm3358 = vmor %vm3356, %vm3357
    %v3359 = vsel %vm3358, %v3350, %v3355
    %v3360 = vrsqrt.pop %v3339
    %v3361 = vmul.f32 %v3360, %v3339
    %v3362 = vmul.f32 %v3361, %v3360
    %v3363 = vmul.f32 0.5, %v3362
    %v3364 = vsub.f32 1.5, %v3363
    %v3365 = vmul.f32 %v3360, %v3364
    %vm3366 = vweird.f32 %v3339
    %vm3367 = vweird.f32 %v3360
    %vm3368 = vmor %vm3366, %vm3367
    %v3369 = vsel %vm3368, %v3360, %v3365
    %v3370 = vmul.f32 %v3319, %v3349
    %v3371 = vmul.f32 %v3320, %v3359
    %v3372 = vmul.f32 %v3321, %v3369
    %v3373 = vperm.slane %v3306, 0
    %v3374 = vmul.f32 %v3370, %v3373
    %v3375 = vmul.f32 %v3371, %v3373
    %v3376 = vmul.f32 %v3372, %v3373
    %v3377 = vperm.slane %v3306, 1
    %v3378 = vadd.f32 %v3374, %v3377
    %v3379 = vadd.f32 %v3375, %v3377
    %v3380 = vadd.f32 %v3376, %v3377
    %v3381 = vld [vmem:[%s19] sm:$0xff]
    %v3382 = vld [vmem:[%s19 + $0x8] sm:$0xff]
    %v3383 = vld [vmem:[%s19 + $0x10] sm:$0x1f]
    %v3384 = vld [vmem:[%s12] sm:$0xff]
    %v3385 = vld [vmem:[%s12 + $0x8] sm:$0xff]
    %v3386 = vld [vmem:[%s12 + $0x10] sm:$0xff]
    %v3387 = vld [vmem:[%s12 + $0x18] sm:$0xff]
    %v3388 = vld [vmem:[%s12 + $0x20] sm:$0xff]
    %v3389 = vld [vmem:[%s12 + $0x28] sm:$0xff]
    %v3390 = vld [vmem:[%s12 + $0x30] sm:$0xff]
    %v3391 = vld [vmem:[%s12 + $0x38] sm:$0xff]
    %v3392 = vld [vmem:[%s12 + $0x40] sm:$0xff]
    %v3393 = vld [vmem:[%s12 + $0x48] sm:$0xff]
    %v3394 = vld [vmem:[%s12 + $0x50] sm:$0xff]
    %v3395 = vld [vmem:[%s12 + $0x58] sm:$0xff]
    %v3396 = vld [vmem:[%s12 + $0x60] sm:$0xff]
    %v3397 = vld [vmem:[%s12 + $0x68] sm:$0xff]
    %v3398 = vld [vmem:[%s12 + $0x70] sm:$0xff]
    %v3399 = vld [vmem:[%s12 + $0x78] sm:$0xff]
    %v3400 = vperm.slane %v3381, 0
    %v3401 = vperm.slane %v3382, 0
    %v3403 = vsel %vm412, %v380, 0
    %v3406 = vsel %vm412, %v383, 0
    %3408 = vmatpush.msra.mxu0 0.0
    %3409 = vmatpush.msra.mxu0 0.0
    %3410 = vmatpush.msra.mxu0 0.0
    %3411 = vmatpush.msra.mxu0 0.0
    %3412 = vmatpush.msra.mxu0 0.0
    %3413 = vmatpush.msra.mxu0 0.0
    %3414 = vmatpush.msra.mxu0 0.0
    %3415 = vmatpush.msra.mxu0 0.0
    %3416 = vmatpush.msra.mxu0 %v3398
    %3417 = vmatpush.msra.mxu0 %v3396
    %3418 = vmatpush.msra.mxu0 %v3394
    %3419 = vmatpush.msra.mxu0 %v3392
    %3420 = vmatpush.msra.mxu0 %v3390
    %3421 = vmatpush.msra.mxu0 %v3388
    %3422 = vmatpush.msra.mxu0 %v3386
    %3423 = vmatpush.msra.mxu0 %v3384
    %3424 = vmatmul.f32.gmra.mxu0 %v3403
    %v3425 = vpop.f32.mrf.mxu0
    %v3426 = vadd.f32 %v3400, %v3425
    %3427 = vmatmul.f32.gmra.mxu0 %v3406
    %v3428 = vpop.f32.mrf.mxu0
    %v3429 = vadd.f32 %v3400, %v3428
    %3430 = vdwg.mxu0
    %3431 = vmatpush.msra.mxu0 0.0
    %3432 = vmatpush.msra.mxu0 0.0
    %3433 = vmatpush.msra.mxu0 0.0
    %3434 = vmatpush.msra.mxu0 0.0
    %3435 = vmatpush.msra.mxu0 0.0
    %3436 = vmatpush.msra.mxu0 0.0
    %3437 = vmatpush.msra.mxu0 0.0
    %3438 = vmatpush.msra.mxu0 0.0
    %3439 = vmatpush.msra.mxu0 %v3399
    %3440 = vmatpush.msra.mxu0 %v3397
    %3441 = vmatpush.msra.mxu0 %v3395
    %3442 = vmatpush.msra.mxu0 %v3393
    %3443 = vmatpush.msra.mxu0 %v3391
    %3444 = vmatpush.msra.mxu0 %v3389
    %3445 = vmatpush.msra.mxu0 %v3387
    %3446 = vmatpush.msra.mxu0 %v3385
    %3447 = vmatmul.f32.gmra.mxu0 %v3403
    %v3448 = vpop.f32.mrf.mxu0
    %v3449 = vadd.f32 %v3401, %v3448
    %3450 = vmatmul.f32.gmra.mxu0 %v3406
    %v3451 = vpop.f32.mrf.mxu0
    %v3452 = vadd.f32 %v3401, %v3451
    %3453 = vdwg.mxu0
    %3455 = vrot.lane.b32.xlu0 %v3426, 64
    %v3456 = vpop.permute.xlu0 %3455
    %v3457 = vsel %vm480, %v3426, 0
    %v3459 = vsel %vm480, %v3456, 0
    %3461 = vmatpush.xpose.msra.mxu0 0.0
    %3462 = vmatpush.xpose.msra.mxu0 0.0
    %3463 = vmatpush.xpose.msra.mxu0 0.0
    %3464 = vmatpush.xpose.msra.mxu0 0.0
    %3465 = vmatpush.xpose.msra.mxu0 0.0
    %3466 = vmatpush.xpose.msra.mxu0 0.0
    %3467 = vmatpush.xpose.msra.mxu0 0.0
    %3468 = vmatpush.xpose.msra.mxu0 0.0
    %3469 = vmatpush.xpose.msra.mxu0 0.0
    %3470 = vmatpush.xpose.msra.mxu0 0.0
    %3471 = vmatpush.xpose.msra.mxu0 0.0
    %3472 = vmatpush.xpose.msra.mxu0 0.0
    %3473 = vmatpush.xpose.msra.mxu0 0.0
    %3474 = vmatpush.xpose.msra.mxu0 0.0
    %3475 = vmatpush.xpose.msra.mxu0 0.0
    %3476 = vmatpush.xpose.msra.mxu0 %v3459
    %3477 = vmatmul.f32.gmra.mxu0 %v3457
    %v3478 = vpop.f32.mrf.mxu0
    %v3479 = vadd.f32 0.0, %v3478
    %3480 = vdwg.mxu0
    %v3481 = vmul.f32 %v3479, 0.25
    %v3482 = vadd.f32 %v3481, %v391
    %vm3483 = vcmask 64512
    %v3484 = vsel %vm3483, %v3482, -inf
    %3485 = vmax.xlane.f32.xlu0 %v3484
    %v3486 = vpop.xlane.xlu0 %3485
    %v3487 = vsub.f32 %v3482, %v3486
    %v3488 = vmul.f32 %v3487, 1.442695
    %v3489 = vpow.pop %v3488
    %v3490 = vsel %vm3483, %v3489, 0.0
    %3491 = vadd.xlane.f32.xlu0 %v3490
    %v3492 = vpop.xlane.xlu0 %3491
    %v3493 = vrcp.pop %v3492
    %v3494 = vmul.f32 %v3492, %v3493
    %v3495 = vsub.f32 1.0, %v3494
    %v3496 = vmul.f32 %v3493, %v3495
    %v3497 = vadd.f32 %v3493, %v3496
    %vm3498 = vweird.f32 %v3492
    %vm3499 = vweird.f32 %v3493
    %vm3500 = vmor %vm3498, %vm3499
    %v3501 = vsel %vm3500, %v3493, %v3497
    %v3502 = vand.u32 2147483647, %v3492
    %vm3503 = vcmp.eq.f32.partialorder %v3502, 8.507059e+37
    %v3504 = vand.u32 %v3492, 2147483648
    %v3505 = vor.u32 1.1754944e-38, %v3504
    %v3506 = vsel %vm3503, %v3505, %v3501
    %v3507 = vmul.f32 %v3489, %v3506
    %v3509 = vsel %vm3483, %v3507, 0
    %3511 = vmatpush.msra.mxu0 0.0
    %3512 = vmatpush.msra.mxu0 0.0
    %3513 = vmatpush.msra.mxu0 0.0
    %3514 = vmatpush.msra.mxu0 0.0
    %3515 = vmatpush.msra.mxu0 0.0
    %3516 = vmatpush.msra.mxu0 0.0
    %3517 = vmatpush.msra.mxu0 0.0
    %3518 = vmatpush.msra.mxu0 0.0
    %3519 = vmatpush.msra.mxu0 0.0
    %3520 = vmatpush.msra.mxu0 0.0
    %3521 = vmatpush.msra.mxu0 0.0
    %3522 = vmatpush.msra.mxu0 0.0
    %3523 = vmatpush.msra.mxu0 0.0
    %3524 = vmatpush.msra.mxu0 0.0
    %3525 = vmatpush.msra.mxu0 0.0
    %3526 = vmatpush.msra.mxu0 %v3449
    %3527 = vmatmul.f32.gmra.mxu0 %v3509
    %v3528 = vpop.f32.mrf.mxu0
    %v3529 = vadd.f32 0.0, %v3528
    %3530 = vdwg.mxu0
    %3531 = vrot.lane.b32.xlu0 %v3426, 112
    %v3532 = vpop.permute.xlu0 %3531
    %3533 = vrot.lane.b32.xlu0 %v3426, 48
    %v3534 = vpop.permute.xlu0 %3533
    %v3535 = vsel %vm480, %v3532, 0
    %v3537 = vsel %vm480, %v3534, 0
    %3539 = vmatpush.xpose.msra.mxu0 0.0
    %3540 = vmatpush.xpose.msra.mxu0 0.0
    %3541 = vmatpush.xpose.msra.mxu0 0.0
    %3542 = vmatpush.xpose.msra.mxu0 0.0
    %3543 = vmatpush.xpose.msra.mxu0 0.0
    %3544 = vmatpush.xpose.msra.mxu0 0.0
    %3545 = vmatpush.xpose.msra.mxu0 0.0
    %3546 = vmatpush.xpose.msra.mxu0 0.0
    %3547 = vmatpush.xpose.msra.mxu0 0.0
    %3548 = vmatpush.xpose.msra.mxu0 0.0
    %3549 = vmatpush.xpose.msra.mxu0 0.0
    %3550 = vmatpush.xpose.msra.mxu0 0.0
    %3551 = vmatpush.xpose.msra.mxu0 0.0
    %3552 = vmatpush.xpose.msra.mxu0 0.0
    %3553 = vmatpush.xpose.msra.mxu0 0.0
    %3554 = vmatpush.xpose.msra.mxu0 %v3537
    %3555 = vmatmul.f32.gmra.mxu0 %v3535
    %v3556 = vpop.f32.mrf.mxu0
    %v3557 = vadd.f32 0.0, %v3556
    %3558 = vdwg.mxu0
    %v3559 = vmul.f32 %v3557, 0.25
    %v3560 = vadd.f32 %v3559, %v391
    %v3561 = vsel %vm3483, %v3560, -inf
    %3562 = vmax.xlane.f32.xlu0 %v3561
    %v3563 = vpop.xlane.xlu0 %3562
    %v3564 = vsub.f32 %v3560, %v3563
    %v3565 = vmul.f32 %v3564, 1.442695
    %v3566 = vpow.pop %v3565
    %v3567 = vsel %vm3483, %v3566, 0.0
    %3568 = vadd.xlane.f32.xlu0 %v3567
    %v3569 = vpop.xlane.xlu0 %3568
    %v3570 = vrcp.pop %v3569
    %v3571 = vmul.f32 %v3569, %v3570
    %v3572 = vsub.f32 1.0, %v3571
    %v3573 = vmul.f32 %v3570, %v3572
    %v3574 = vadd.f32 %v3570, %v3573
    %vm3575 = vweird.f32 %v3569
    %vm3576 = vweird.f32 %v3570
    %vm3577 = vmor %vm3575, %vm3576
    %v3578 = vsel %vm3577, %v3570, %v3574
    %v3579 = vand.u32 2147483647, %v3569
    %vm3580 = vcmp.eq.f32.partialorder %v3579, 8.507059e+37
    %v3581 = vand.u32 %v3569, 2147483648
    %v3582 = vor.u32 1.1754944e-38, %v3581
    %v3583 = vsel %vm3580, %v3582, %v3578
    %v3584 = vmul.f32 %v3566, %v3583
    %3586 = vrot.lane.b32.xlu0 %v3449, 112
    %v3587 = vpop.permute.xlu0 %3586
    %v3590 = vsel %vm3483, %v3584, 0
    %3592 = vmatpush.msra.mxu0 0.0
    %3593 = vmatpush.msra.mxu0 0.0
    %3594 = vmatpush.msra.mxu0 0.0
    %3595 = vmatpush.msra.mxu0 0.0
    %3596 = vmatpush.msra.mxu0 0.0
    %3597 = vmatpush.msra.mxu0 0.0
    %3598 = vmatpush.msra.mxu0 0.0
    %3599 = vmatpush.msra.mxu0 0.0
    %3600 = vmatpush.msra.mxu0 0.0
    %3601 = vmatpush.msra.mxu0 0.0
    %3602 = vmatpush.msra.mxu0 0.0
    %3603 = vmatpush.msra.mxu0 0.0
    %3604 = vmatpush.msra.mxu0 0.0
    %3605 = vmatpush.msra.mxu0 0.0
    %3606 = vmatpush.msra.mxu0 0.0
    %3607 = vmatpush.msra.mxu0 %v3587
    %3608 = vmatmul.f32.gmra.mxu0 %v3590
    %v3609 = vpop.f32.mrf.mxu0
    %v3610 = vadd.f32 0.0, %v3609
    %3611 = vdwg.mxu0
    %3612 = vrot.lane.b32.xlu0 %v3426, 96
    %v3613 = vpop.permute.xlu0 %3612
    %3614 = vrot.lane.b32.xlu0 %v3426, 32
    %v3615 = vpop.permute.xlu0 %3614
    %v3616 = vsel %vm480, %v3613, 0
    %v3618 = vsel %vm480, %v3615, 0
    %3620 = vmatpush.xpose.msra.mxu0 0.0
    %3621 = vmatpush.xpose.msra.mxu0 0.0
    %3622 = vmatpush.xpose.msra.mxu0 0.0
    %3623 = vmatpush.xpose.msra.mxu0 0.0
    %3624 = vmatpush.xpose.msra.mxu0 0.0
    %3625 = vmatpush.xpose.msra.mxu0 0.0
    %3626 = vmatpush.xpose.msra.mxu0 0.0
    %3627 = vmatpush.xpose.msra.mxu0 0.0
    %3628 = vmatpush.xpose.msra.mxu0 0.0
    %3629 = vmatpush.xpose.msra.mxu0 0.0
    %3630 = vmatpush.xpose.msra.mxu0 0.0
    %3631 = vmatpush.xpose.msra.mxu0 0.0
    %3632 = vmatpush.xpose.msra.mxu0 0.0
    %3633 = vmatpush.xpose.msra.mxu0 0.0
    %3634 = vmatpush.xpose.msra.mxu0 0.0
    %3635 = vmatpush.xpose.msra.mxu0 %v3618
    %3636 = vmatmul.f32.gmra.mxu0 %v3616
    %v3637 = vpop.f32.mrf.mxu0
    %v3638 = vadd.f32 0.0, %v3637
    %3639 = vdwg.mxu0
    %v3640 = vmul.f32 %v3638, 0.25
    %v3641 = vadd.f32 %v3640, %v391
    %v3642 = vsel %vm3483, %v3641, -inf
    %3643 = vmax.xlane.f32.xlu0 %v3642
    %v3644 = vpop.xlane.xlu0 %3643
    %v3645 = vsub.f32 %v3641, %v3644
    %v3646 = vmul.f32 %v3645, 1.442695
    %v3647 = vpow.pop %v3646
    %v3648 = vsel %vm3483, %v3647, 0.0
    %3649 = vadd.xlane.f32.xlu0 %v3648
    %v3650 = vpop.xlane.xlu0 %3649
    %v3651 = vrcp.pop %v3650
    %v3652 = vmul.f32 %v3650, %v3651
    %v3653 = vsub.f32 1.0, %v3652
    %v3654 = vmul.f32 %v3651, %v3653
    %v3655 = vadd.f32 %v3651, %v3654
    %vm3656 = vweird.f32 %v3650
    %vm3657 = vweird.f32 %v3651
    %vm3658 = vmor %vm3656, %vm3657
    %v3659 = vsel %vm3658, %v3651, %v3655
    %v3660 = vand.u32 2147483647, %v3650
    %vm3661 = vcmp.eq.f32.partialorder %v3660, 8.507059e+37
    %v3662 = vand.u32 %v3650, 2147483648
    %v3663 = vor.u32 1.1754944e-38, %v3662
    %v3664 = vsel %vm3661, %v3663, %v3659
    %v3665 = vmul.f32 %v3647, %v3664
    %3666 = vrot.lane.b32.xlu0 %v3449, 96
    %v3667 = vpop.permute.xlu0 %3666
    %v3670 = vsel %vm3483, %v3665, 0
    %3672 = vmatpush.msra.mxu0 0.0
    %3673 = vmatpush.msra.mxu0 0.0
    %3674 = vmatpush.msra.mxu0 0.0
    %3675 = vmatpush.msra.mxu0 0.0
    %3676 = vmatpush.msra.mxu0 0.0
    %3677 = vmatpush.msra.mxu0 0.0
    %3678 = vmatpush.msra.mxu0 0.0
    %3679 = vmatpush.msra.mxu0 0.0
    %3680 = vmatpush.msra.mxu0 0.0
    %3681 = vmatpush.msra.mxu0 0.0
    %3682 = vmatpush.msra.mxu0 0.0
    %3683 = vmatpush.msra.mxu0 0.0
    %3684 = vmatpush.msra.mxu0 0.0
    %3685 = vmatpush.msra.mxu0 0.0
    %3686 = vmatpush.msra.mxu0 0.0
    %3687 = vmatpush.msra.mxu0 %v3667
    %3688 = vmatmul.f32.gmra.mxu0 %v3670
    %v3689 = vpop.f32.mrf.mxu0
    %v3690 = vadd.f32 0.0, %v3689
    %3691 = vdwg.mxu0
    %3692 = vrot.lane.b32.xlu0 %v3426, 80
    %v3693 = vpop.permute.xlu0 %3692
    %3694 = vrot.lane.b32.xlu0 %v3426, 16
    %v3695 = vpop.permute.xlu0 %3694
    %v3696 = vsel %vm480, %v3693, 0
    %v3698 = vsel %vm480, %v3695, 0
    %3700 = vmatpush.xpose.msra.mxu0 0.0
    %3701 = vmatpush.xpose.msra.mxu0 0.0
    %3702 = vmatpush.xpose.msra.mxu0 0.0
    %3703 = vmatpush.xpose.msra.mxu0 0.0
    %3704 = vmatpush.xpose.msra.mxu0 0.0
    %3705 = vmatpush.xpose.msra.mxu0 0.0
    %3706 = vmatpush.xpose.msra.mxu0 0.0
    %3707 = vmatpush.xpose.msra.mxu0 0.0
    %3708 = vmatpush.xpose.msra.mxu0 0.0
    %3709 = vmatpush.xpose.msra.mxu0 0.0
    %3710 = vmatpush.xpose.msra.mxu0 0.0
    %3711 = vmatpush.xpose.msra.mxu0 0.0
    %3712 = vmatpush.xpose.msra.mxu0 0.0
    %3713 = vmatpush.xpose.msra.mxu0 0.0
    %3714 = vmatpush.xpose.msra.mxu0 0.0
    %3715 = vmatpush.xpose.msra.mxu0 %v3698
    %3716 = vmatmul.f32.gmra.mxu0 %v3696
    %v3717 = vpop.f32.mrf.mxu0
    %v3718 = vadd.f32 0.0, %v3717
    %3719 = vdwg.mxu0
    %v3720 = vmul.f32 %v3718, 0.25
    %v3721 = vadd.f32 %v3720, %v391
    %v3722 = vsel %vm3483, %v3721, -inf
    %3723 = vmax.xlane.f32.xlu0 %v3722
    %v3724 = vpop.xlane.xlu0 %3723
    %v3725 = vsub.f32 %v3721, %v3724
    %v3726 = vmul.f32 %v3725, 1.442695
    %v3727 = vpow.pop %v3726
    %v3728 = vsel %vm3483, %v3727, 0.0
    %3729 = vadd.xlane.f32.xlu0 %v3728
    %v3730 = vpop.xlane.xlu0 %3729
    %v3731 = vrcp.pop %v3730
    %v3732 = vmul.f32 %v3730, %v3731
    %v3733 = vsub.f32 1.0, %v3732
    %v3734 = vmul.f32 %v3731, %v3733
    %v3735 = vadd.f32 %v3731, %v3734
    %vm3736 = vweird.f32 %v3730
    %vm3737 = vweird.f32 %v3731
    %vm3738 = vmor %vm3736, %vm3737
    %v3739 = vsel %vm3738, %v3731, %v3735
    %v3740 = vand.u32 2147483647, %v3730
    %vm3741 = vcmp.eq.f32.partialorder %v3740, 8.507059e+37
    %v3742 = vand.u32 %v3730, 2147483648
    %v3743 = vor.u32 1.1754944e-38, %v3742
    %v3744 = vsel %vm3741, %v3743, %v3739
    %v3745 = vmul.f32 %v3727, %v3744
    %3746 = vrot.lane.b32.xlu0 %v3449, 80
    %v3747 = vpop.permute.xlu0 %3746
    %v3750 = vsel %vm3483, %v3745, 0
    %3752 = vmatpush.msra.mxu0 0.0
    %3753 = vmatpush.msra.mxu0 0.0
    %3754 = vmatpush.msra.mxu0 0.0
    %3755 = vmatpush.msra.mxu0 0.0
    %3756 = vmatpush.msra.mxu0 0.0
    %3757 = vmatpush.msra.mxu0 0.0
    %3758 = vmatpush.msra.mxu0 0.0
    %3759 = vmatpush.msra.mxu0 0.0
    %3760 = vmatpush.msra.mxu0 0.0
    %3761 = vmatpush.msra.mxu0 0.0
    %3762 = vmatpush.msra.mxu0 0.0
    %3763 = vmatpush.msra.mxu0 0.0
    %3764 = vmatpush.msra.mxu0 0.0
    %3765 = vmatpush.msra.mxu0 0.0
    %3766 = vmatpush.msra.mxu0 0.0
    %3767 = vmatpush.msra.mxu0 %v3747
    %3768 = vmatmul.f32.gmra.mxu0 %v3750
    %v3769 = vpop.f32.mrf.mxu0
    %v3770 = vadd.f32 0.0, %v3769
    %3771 = vdwg.mxu0
    %3773 = vrot.lane.b32.xlu0 %v3610, 16
    %v3774 = vpop.permute.xlu0 %3773
    %3777 = vrot.lane.b32.xlu0 %v3690, 32
    %v3778 = vpop.permute.xlu0 %3777
    %3781 = vrot.lane.b32.xlu0 %v3770, 48
    %v3782 = vpop.permute.xlu0 %3781
    %v3784 = vsel %vm480, %v3529, %v3774
    %v3785 = vsel %vm1007, %v3784, %v3778
    %v3786 = vsel %vm1010, %v3785, %v3782
    %3788 = vrot.lane.b32.xlu0 %v3429, 64
    %v3789 = vpop.permute.xlu0 %3788
    %v3790 = vsel %vm480, %v3429, 0
    %v3792 = vsel %vm480, %v3789, 0
    %3794 = vmatpush.xpose.msra.mxu0 0.0
    %3795 = vmatpush.xpose.msra.mxu0 0.0
    %3796 = vmatpush.xpose.msra.mxu0 0.0
    %3797 = vmatpush.xpose.msra.mxu0 0.0
    %3798 = vmatpush.xpose.msra.mxu0 0.0
    %3799 = vmatpush.xpose.msra.mxu0 0.0
    %3800 = vmatpush.xpose.msra.mxu0 0.0
    %3801 = vmatpush.xpose.msra.mxu0 0.0
    %3802 = vmatpush.xpose.msra.mxu0 0.0
    %3803 = vmatpush.xpose.msra.mxu0 0.0
    %3804 = vmatpush.xpose.msra.mxu0 0.0
    %3805 = vmatpush.xpose.msra.mxu0 0.0
    %3806 = vmatpush.xpose.msra.mxu0 0.0
    %3807 = vmatpush.xpose.msra.mxu0 0.0
    %3808 = vmatpush.xpose.msra.mxu0 0.0
    %3809 = vmatpush.xpose.msra.mxu0 %v3792
    %3810 = vmatmul.f32.gmra.mxu0 %v3790
    %v3811 = vpop.f32.mrf.mxu0
    %v3812 = vadd.f32 0.0, %v3811
    %3813 = vdwg.mxu0
    %v3814 = vmul.f32 %v3812, 0.25
    %v3815 = vadd.f32 %v3814, %v391
    %v3816 = vsel %vm3483, %v3815, -inf
    %3817 = vmax.xlane.f32.xlu0 %v3816
    %v3818 = vpop.xlane.xlu0 %3817
    %v3819 = vsub.f32 %v3815, %v3818
    %v3820 = vmul.f32 %v3819, 1.442695
    %v3821 = vpow.pop %v3820
    %v3822 = vsel %vm3483, %v3821, 0.0
    %3823 = vadd.xlane.f32.xlu0 %v3822
    %v3824 = vpop.xlane.xlu0 %3823
    %v3825 = vrcp.pop %v3824
    %v3826 = vmul.f32 %v3824, %v3825
    %v3827 = vsub.f32 1.0, %v3826
    %v3828 = vmul.f32 %v3825, %v3827
    %v3829 = vadd.f32 %v3825, %v3828
    %vm3830 = vweird.f32 %v3824
    %vm3831 = vweird.f32 %v3825
    %vm3832 = vmor %vm3830, %vm3831
    %v3833 = vsel %vm3832, %v3825, %v3829
    %v3834 = vand.u32 2147483647, %v3824
    %vm3835 = vcmp.eq.f32.partialorder %v3834, 8.507059e+37
    %v3836 = vand.u32 %v3824, 2147483648
    %v3837 = vor.u32 1.1754944e-38, %v3836
    %v3838 = vsel %vm3835, %v3837, %v3833
    %v3839 = vmul.f32 %v3821, %v3838
    %v3841 = vsel %vm3483, %v3839, 0
    %3843 = vmatpush.msra.mxu0 0.0
    %3844 = vmatpush.msra.mxu0 0.0
    %3845 = vmatpush.msra.mxu0 0.0
    %3846 = vmatpush.msra.mxu0 0.0
    %3847 = vmatpush.msra.mxu0 0.0
    %3848 = vmatpush.msra.mxu0 0.0
    %3849 = vmatpush.msra.mxu0 0.0
    %3850 = vmatpush.msra.mxu0 0.0
    %3851 = vmatpush.msra.mxu0 0.0
    %3852 = vmatpush.msra.mxu0 0.0
    %3853 = vmatpush.msra.mxu0 0.0
    %3854 = vmatpush.msra.mxu0 0.0
    %3855 = vmatpush.msra.mxu0 0.0
    %3856 = vmatpush.msra.mxu0 0.0
    %3857 = vmatpush.msra.mxu0 0.0
    %3858 = vmatpush.msra.mxu0 %v3452
    %3859 = vmatmul.f32.gmra.mxu0 %v3841
    %v3860 = vpop.f32.mrf.mxu0
    %v3861 = vadd.f32 0.0, %v3860
    %3862 = vdwg.mxu0
    %3863 = vrot.lane.b32.xlu0 %v3429, 112
    %v3864 = vpop.permute.xlu0 %3863
    %3865 = vrot.lane.b32.xlu0 %v3429, 48
    %v3866 = vpop.permute.xlu0 %3865
    %v3867 = vsel %vm480, %v3864, 0
    %v3869 = vsel %vm480, %v3866, 0
    %3871 = vmatpush.xpose.msra.mxu0 0.0
    %3872 = vmatpush.xpose.msra.mxu0 0.0
    %3873 = vmatpush.xpose.msra.mxu0 0.0
    %3874 = vmatpush.xpose.msra.mxu0 0.0
    %3875 = vmatpush.xpose.msra.mxu0 0.0
    %3876 = vmatpush.xpose.msra.mxu0 0.0
    %3877 = vmatpush.xpose.msra.mxu0 0.0
    %3878 = vmatpush.xpose.msra.mxu0 0.0
    %3879 = vmatpush.xpose.msra.mxu0 0.0
    %3880 = vmatpush.xpose.msra.mxu0 0.0
    %3881 = vmatpush.xpose.msra.mxu0 0.0
    %3882 = vmatpush.xpose.msra.mxu0 0.0
    %3883 = vmatpush.xpose.msra.mxu0 0.0
    %3884 = vmatpush.xpose.msra.mxu0 0.0
    %3885 = vmatpush.xpose.msra.mxu0 0.0
    %3886 = vmatpush.xpose.msra.mxu0 %v3869
    %3887 = vmatmul.f32.gmra.mxu0 %v3867
    %v3888 = vpop.f32.mrf.mxu0
    %v3889 = vadd.f32 0.0, %v3888
    %3890 = vdwg.mxu0
    %v3891 = vmul.f32 %v3889, 0.25
    %v3892 = vadd.f32 %v3891, %v391
    %v3893 = vsel %vm3483, %v3892, -inf
    %3894 = vmax.xlane.f32.xlu0 %v3893
    %v3895 = vpop.xlane.xlu0 %3894
    %v3896 = vsub.f32 %v3892, %v3895
    %v3897 = vmul.f32 %v3896, 1.442695
    %v3898 = vpow.pop %v3897
    %v3899 = vsel %vm3483, %v3898, 0.0
    %3900 = vadd.xlane.f32.xlu0 %v3899
    %v3901 = vpop.xlane.xlu0 %3900
    %v3902 = vrcp.pop %v3901
    %v3903 = vmul.f32 %v3901, %v3902
    %v3904 = vsub.f32 1.0, %v3903
    %v3905 = vmul.f32 %v3902, %v3904
    %v3906 = vadd.f32 %v3902, %v3905
    %vm3907 = vweird.f32 %v3901
    %vm3908 = vweird.f32 %v3902
    %vm3909 = vmor %vm3907, %vm3908
    %v3910 = vsel %vm3909, %v3902, %v3906
    %v3911 = vand.u32 2147483647, %v3901
    %vm3912 = vcmp.eq.f32.partialorder %v3911, 8.507059e+37
    %v3913 = vand.u32 %v3901, 2147483648
    %v3914 = vor.u32 1.1754944e-38, %v3913
    %v3915 = vsel %vm3912, %v3914, %v3910
    %v3916 = vmul.f32 %v3898, %v3915
    %3918 = vrot.lane.b32.xlu0 %v3452, 112
    %v3919 = vpop.permute.xlu0 %3918
    %v3922 = vsel %vm3483, %v3916, 0
    %3924 = vmatpush.msra.mxu0 0.0
    %3925 = vmatpush.msra.mxu0 0.0
    %3926 = vmatpush.msra.mxu0 0.0
    %3927 = vmatpush.msra.mxu0 0.0
    %3928 = vmatpush.msra.mxu0 0.0
    %3929 = vmatpush.msra.mxu0 0.0
    %3930 = vmatpush.msra.mxu0 0.0
    %3931 = vmatpush.msra.mxu0 0.0
    %3932 = vmatpush.msra.mxu0 0.0
    %3933 = vmatpush.msra.mxu0 0.0
    %3934 = vmatpush.msra.mxu0 0.0
    %3935 = vmatpush.msra.mxu0 0.0
    %3936 = vmatpush.msra.mxu0 0.0
    %3937 = vmatpush.msra.mxu0 0.0
    %3938 = vmatpush.msra.mxu0 0.0
    %3939 = vmatpush.msra.mxu0 %v3919
    %3940 = vmatmul.f32.gmra.mxu0 %v3922
    %v3941 = vpop.f32.mrf.mxu0
    %v3942 = vadd.f32 0.0, %v3941
    %3943 = vdwg.mxu0
    %3944 = vrot.lane.b32.xlu0 %v3429, 96
    %v3945 = vpop.permute.xlu0 %3944
    %3946 = vrot.lane.b32.xlu0 %v3429, 32
    %v3947 = vpop.permute.xlu0 %3946
    %v3948 = vsel %vm480, %v3945, 0
    %v3950 = vsel %vm480, %v3947, 0
    %3952 = vmatpush.xpose.msra.mxu0 0.0
    %3953 = vmatpush.xpose.msra.mxu0 0.0
    %3954 = vmatpush.xpose.msra.mxu0 0.0
    %3955 = vmatpush.xpose.msra.mxu0 0.0
    %3956 = vmatpush.xpose.msra.mxu0 0.0
    %3957 = vmatpush.xpose.msra.mxu0 0.0
    %3958 = vmatpush.xpose.msra.mxu0 0.0
    %3959 = vmatpush.xpose.msra.mxu0 0.0
    %3960 = vmatpush.xpose.msra.mxu0 0.0
    %3961 = vmatpush.xpose.msra.mxu0 0.0
    %3962 = vmatpush.xpose.msra.mxu0 0.0
    %3963 = vmatpush.xpose.msra.mxu0 0.0
    %3964 = vmatpush.xpose.msra.mxu0 0.0
    %3965 = vmatpush.xpose.msra.mxu0 0.0
    %3966 = vmatpush.xpose.msra.mxu0 0.0
    %3967 = vmatpush.xpose.msra.mxu0 %v3950
    %3968 = vmatmul.f32.gmra.mxu0 %v3948
    %v3969 = vpop.f32.mrf.mxu0
    %v3970 = vadd.f32 0.0, %v3969
    %3971 = vdwg.mxu0
    %v3972 = vmul.f32 %v3970, 0.25
    %v3973 = vadd.f32 %v3972, %v391
    %v3974 = vsel %vm3483, %v3973, -inf
    %3975 = vmax.xlane.f32.xlu0 %v3974
    %v3976 = vpop.xlane.xlu0 %3975
    %v3977 = vsub.f32 %v3973, %v3976
    %v3978 = vmul.f32 %v3977, 1.442695
    %v3979 = vpow.pop %v3978
    %v3980 = vsel %vm3483, %v3979, 0.0
    %3981 = vadd.xlane.f32.xlu0 %v3980
    %v3982 = vpop.xlane.xlu0 %3981
    %v3983 = vrcp.pop %v3982
    %v3984 = vmul.f32 %v3982, %v3983
    %v3985 = vsub.f32 1.0, %v3984
    %v3986 = vmul.f32 %v3983, %v3985
    %v3987 = vadd.f32 %v3983, %v3986
    %vm3988 = vweird.f32 %v3982
    %vm3989 = vweird.f32 %v3983
    %vm3990 = vmor %vm3988, %vm3989
    %v3991 = vsel %vm3990, %v3983, %v3987
    %v3992 = vand.u32 2147483647, %v3982
    %vm3993 = vcmp.eq.f32.partialorder %v3992, 8.507059e+37
    %v3994 = vand.u32 %v3982, 2147483648
    %v3995 = vor.u32 1.1754944e-38, %v3994
    %v3996 = vsel %vm3993, %v3995, %v3991
    %v3997 = vmul.f32 %v3979, %v3996
    %3998 = vrot.lane.b32.xlu0 %v3452, 96
    %v3999 = vpop.permute.xlu0 %3998
    %v4002 = vsel %vm3483, %v3997, 0
    %4004 = vmatpush.msra.mxu0 0.0
    %4005 = vmatpush.msra.mxu0 0.0
    %4006 = vmatpush.msra.mxu0 0.0
    %4007 = vmatpush.msra.mxu0 0.0
    %4008 = vmatpush.msra.mxu0 0.0
    %4009 = vmatpush.msra.mxu0 0.0
    %4010 = vmatpush.msra.mxu0 0.0
    %4011 = vmatpush.msra.mxu0 0.0
    %4012 = vmatpush.msra.mxu0 0.0
    %4013 = vmatpush.msra.mxu0 0.0
    %4014 = vmatpush.msra.mxu0 0.0
    %4015 = vmatpush.msra.mxu0 0.0
    %4016 = vmatpush.msra.mxu0 0.0
    %4017 = vmatpush.msra.mxu0 0.0
    %4018 = vmatpush.msra.mxu0 0.0
    %4019 = vmatpush.msra.mxu0 %v3999
    %4020 = vmatmul.f32.gmra.mxu0 %v4002
    %v4021 = vpop.f32.mrf.mxu0
    %v4022 = vadd.f32 0.0, %v4021
    %4023 = vdwg.mxu0
    %4024 = vrot.lane.b32.xlu0 %v3429, 80
    %v4025 = vpop.permute.xlu0 %4024
    %4026 = vrot.lane.b32.xlu0 %v3429, 16
    %v4027 = vpop.permute.xlu0 %4026
    %v4028 = vsel %vm480, %v4025, 0
    %v4030 = vsel %vm480, %v4027, 0
    %4032 = vmatpush.xpose.msra.mxu0 0.0
    %4033 = vmatpush.xpose.msra.mxu0 0.0
    %4034 = vmatpush.xpose.msra.mxu0 0.0
    %4035 = vmatpush.xpose.msra.mxu0 0.0
    %4036 = vmatpush.xpose.msra.mxu0 0.0
    %4037 = vmatpush.xpose.msra.mxu0 0.0
    %4038 = vmatpush.xpose.msra.mxu0 0.0
    %4039 = vmatpush.xpose.msra.mxu0 0.0
    %4040 = vmatpush.xpose.msra.mxu0 0.0
    %4041 = vmatpush.xpose.msra.mxu0 0.0
    %4042 = vmatpush.xpose.msra.mxu0 0.0
    %4043 = vmatpush.xpose.msra.mxu0 0.0
    %4044 = vmatpush.xpose.msra.mxu0 0.0
    %4045 = vmatpush.xpose.msra.mxu0 0.0
    %4046 = vmatpush.xpose.msra.mxu0 0.0
    %4047 = vmatpush.xpose.msra.mxu0 %v4030
    %4048 = vmatmul.f32.gmra.mxu0 %v4028
    %v4049 = vpop.f32.mrf.mxu0
    %v4050 = vadd.f32 0.0, %v4049
    %4051 = vdwg.mxu0
    %v4052 = vmul.f32 %v4050, 0.25
    %v4053 = vadd.f32 %v4052, %v391
    %v4054 = vsel %vm3483, %v4053, -inf
    %4055 = vmax.xlane.f32.xlu0 %v4054
    %v4056 = vpop.xlane.xlu0 %4055
    %v4057 = vsub.f32 %v4053, %v4056
    %v4058 = vmul.f32 %v4057, 1.442695
    %v4059 = vpow.pop %v4058
    %v4060 = vsel %vm3483, %v4059, 0.0
    %4061 = vadd.xlane.f32.xlu0 %v4060
    %v4062 = vpop.xlane.xlu0 %4061
    %v4063 = vrcp.pop %v4062
    %v4064 = vmul.f32 %v4062, %v4063
    %v4065 = vsub.f32 1.0, %v4064
    %v4066 = vmul.f32 %v4063, %v4065
    %v4067 = vadd.f32 %v4063, %v4066
    %vm4068 = vweird.f32 %v4062
    %vm4069 = vweird.f32 %v4063
    %vm4070 = vmor %vm4068, %vm4069
    %v4071 = vsel %vm4070, %v4063, %v4067
    %v4072 = vand.u32 2147483647, %v4062
    %vm4073 = vcmp.eq.f32.partialorder %v4072, 8.507059e+37
    %v4074 = vand.u32 %v4062, 2147483648
    %v4075 = vor.u32 1.1754944e-38, %v4074
    %v4076 = vsel %vm4073, %v4075, %v4071
    %v4077 = vmul.f32 %v4059, %v4076
    %4078 = vrot.lane.b32.xlu0 %v3452, 80
    %v4079 = vpop.permute.xlu0 %4078
    %v4082 = vsel %vm3483, %v4077, 0
    %4084 = vmatpush.msra.mxu0 0.0
    %4085 = vmatpush.msra.mxu0 0.0
    %4086 = vmatpush.msra.mxu0 0.0
    %4087 = vmatpush.msra.mxu0 0.0
    %4088 = vmatpush.msra.mxu0 0.0
    %4089 = vmatpush.msra.mxu0 0.0
    %4090 = vmatpush.msra.mxu0 0.0
    %4091 = vmatpush.msra.mxu0 0.0
    %4092 = vmatpush.msra.mxu0 0.0
    %4093 = vmatpush.msra.mxu0 0.0
    %4094 = vmatpush.msra.mxu0 0.0
    %4095 = vmatpush.msra.mxu0 0.0
    %4096 = vmatpush.msra.mxu0 0.0
    %4097 = vmatpush.msra.mxu0 0.0
    %4098 = vmatpush.msra.mxu0 0.0
    %4099 = vmatpush.msra.mxu0 %v4079
    %4100 = vmatmul.f32.gmra.mxu0 %v4082
    %v4101 = vpop.f32.mrf.mxu0
    %v4102 = vadd.f32 0.0, %v4101
    %4103 = vdwg.mxu0
    %4105 = vrot.lane.b32.xlu0 %v3942, 16
    %v4106 = vpop.permute.xlu0 %4105
    %4109 = vrot.lane.b32.xlu0 %v4022, 32
    %v4110 = vpop.permute.xlu0 %4109
    %4113 = vrot.lane.b32.xlu0 %v4102, 48
    %v4114 = vpop.permute.xlu0 %4113
    %v4116 = vsel %vm480, %v3861, %v4106
    %v4117 = vsel %vm1007, %v4116, %v4110
    %v4118 = vsel %vm1010, %v4117, %v4114
    %v4119 = vld [vmem:[#allocation10] sm:$0xff]
    %v4120 = vld [vmem:[#allocation10 + $0x8] sm:$0xff]
    %v4121 = vld [vmem:[#allocation10 + $0x10] sm:$0xff]
    %v4122 = vld [vmem:[#allocation10 + $0x18] sm:$0xff]
    %v4123 = vld [vmem:[#allocation10 + $0x20] sm:$0xff]
    %v4124 = vld [vmem:[#allocation10 + $0x28] sm:$0xff]
    %v4125 = vld [vmem:[#allocation10 + $0x30] sm:$0xff]
    %v4126 = vld [vmem:[#allocation10 + $0x38] sm:$0xff]
    %v4127 = vperm.slane %v3381, 1
    %v4129 = vsel %vm412, %v3786, 0
    %v4132 = vsel %vm412, %v4118, 0
    %4134 = vmatpush.msra.mxu0 0.0
    %4135 = vmatpush.msra.mxu0 0.0
    %4136 = vmatpush.msra.mxu0 0.0
    %4137 = vmatpush.msra.mxu0 0.0
    %4138 = vmatpush.msra.mxu0 0.0
    %4139 = vmatpush.msra.mxu0 0.0
    %4140 = vmatpush.msra.mxu0 0.0
    %4141 = vmatpush.msra.mxu0 0.0
    %4142 = vmatpush.msra.mxu0 %v4126
    %4143 = vmatpush.msra.mxu0 %v4125
    %4144 = vmatpush.msra.mxu0 %v4124
    %4145 = vmatpush.msra.mxu0 %v4123
    %4146 = vmatpush.msra.mxu0 %v4122
    %4147 = vmatpush.msra.mxu0 %v4121
    %4148 = vmatpush.msra.mxu0 %v4120
    %4149 = vmatpush.msra.mxu0 %v4119
    %4150 = vmatmul.f32.gmra.mxu0 %v4129
    %v4151 = vpop.f32.mrf.mxu0
    %v4152 = vadd.f32 %v4127, %v4151
    %4153 = vmatmul.f32.gmra.mxu0 %v4132
    %v4154 = vpop.f32.mrf.mxu0
    %v4155 = vadd.f32 %v4127, %v4154
    %4156 = vdwg.mxu0
    %v4157 = vadd.f32 %v380, %v4152
    %v4158 = vadd.f32 %v383, %v4155
    %v4159 = vsel %vm412, %v4157, 0.0
    %4160 = vadd.xlane.f32.xlu0 %v4159
    %v4161 = vpop.xlane.xlu0 %4160
    %v4162 = vsel %vm412, %v4158, 0.0
    %4163 = vadd.xlane.f32.xlu0 %v4162
    %v4164 = vpop.xlane.xlu0 %4163
    %v4165 = vmul.f32 %v4161, %v1622
    %v4166 = vmul.f32 %v4164, %v1622
    %v4167 = vsub.f32 %v4157, %v4165
    %v4168 = vsub.f32 %v4158, %v4166
    %v4169 = vmul.f32 %v4167, %v4167
    %v4170 = vmul.f32 %v4168, %v4168
    %v4171 = vsel %vm412, %v4169, 0.0
    %4172 = vadd.xlane.f32.xlu0 %v4171
    %v4173 = vpop.xlane.xlu0 %4172
    %v4174 = vsel %vm412, %v4170, 0.0
    %4175 = vadd.xlane.f32.xlu0 %v4174
    %v4176 = vpop.xlane.xlu0 %4175
    %v4177 = vmul.f32 %v4173, %v1622
    %v4178 = vmul.f32 %v4176, %v1622
    %v4179 = vadd.f32 %v4177, 1e-05
    %v4180 = vadd.f32 %v4178, 1e-05
    %v4181 = vrsqrt.pop %v4179
    %v4182 = vmul.f32 %v4181, %v4179
    %v4183 = vmul.f32 %v4182, %v4181
    %v4184 = vmul.f32 0.5, %v4183
    %v4185 = vsub.f32 1.5, %v4184
    %v4186 = vmul.f32 %v4181, %v4185
    %vm4187 = vweird.f32 %v4179
    %vm4188 = vweird.f32 %v4181
    %vm4189 = vmor %vm4187, %vm4188
    %v4190 = vsel %vm4189, %v4181, %v4186
    %v4191 = vrsqrt.pop %v4180
    %v4192 = vmul.f32 %v4191, %v4180
    %v4193 = vmul.f32 %v4192, %v4191
    %v4194 = vmul.f32 0.5, %v4193
    %v4195 = vsub.f32 1.5, %v4194
    %v4196 = vmul.f32 %v4191, %v4195
    %vm4197 = vweird.f32 %v4180
    %vm4198 = vweird.f32 %v4191
    %vm4199 = vmor %vm4197, %vm4198
    %v4200 = vsel %vm4199, %v4191, %v4196
    %v4201 = vmul.f32 %v4167, %v4190
    %v4202 = vmul.f32 %v4168, %v4200
    %v4203 = vperm.slane %v3381, 7
    %v4204 = vmul.f32 %v4201, %v4203
    %v4205 = vmul.f32 %v4202, %v4203
    %v4206 = vperm.slane %v3383, 0
    %v4207 = vadd.f32 %v4204, %v4206
    %v4208 = vadd.f32 %v4205, %v4206
    %v4209 = vld [vmem:[#allocation12] sm:$0xff]
    %v4210 = vld [vmem:[#allocation12 + $0x8] sm:$0xff]
    %v4211 = vld [vmem:[#allocation12 + $0x10] sm:$0xff]
    %v4212 = vld [vmem:[#allocation12 + $0x18] sm:$0xff]
    %v4213 = vld [vmem:[#allocation12 + $0x20] sm:$0xff]
    %v4214 = vld [vmem:[#allocation12 + $0x28] sm:$0xff]
    %v4215 = vld [vmem:[#allocation12 + $0x30] sm:$0xff]
    %v4216 = vld [vmem:[#allocation12 + $0x38] sm:$0xff]
    %v4217 = vperm.slane %v3381, 2
    %v4219 = vsel %vm412, %v4207, 0
    %v4222 = vsel %vm412, %v4208, 0
    %4224 = vmatpush.msra.mxu0 0.0
    %4225 = vmatpush.msra.mxu0 0.0
    %4226 = vmatpush.msra.mxu0 0.0
    %4227 = vmatpush.msra.mxu0 0.0
    %4228 = vmatpush.msra.mxu0 0.0
    %4229 = vmatpush.msra.mxu0 0.0
    %4230 = vmatpush.msra.mxu0 0.0
    %4231 = vmatpush.msra.mxu0 0.0
    %4232 = vmatpush.msra.mxu0 %v4216
    %4233 = vmatpush.msra.mxu0 %v4215
    %4234 = vmatpush.msra.mxu0 %v4214
    %4235 = vmatpush.msra.mxu0 %v4213
    %4236 = vmatpush.msra.mxu0 %v4212
    %4237 = vmatpush.msra.mxu0 %v4211
    %4238 = vmatpush.msra.mxu0 %v4210
    %4239 = vmatpush.msra.mxu0 %v4209
    %4240 = vmatmul.f32.gmra.mxu0 %v4219
    %v4241 = vpop.f32.mrf.mxu0
    %v4242 = vadd.f32 %v4217, %v4241
    %4243 = vmatmul.f32.gmra.mxu0 %v4222
    %v4244 = vpop.f32.mrf.mxu0
    %v4245 = vadd.f32 %v4217, %v4244
    %4246 = vdwg.mxu0
    %v4247 = vld [vmem:[#allocation13] sm:$0xff]
    %v4248 = vld [vmem:[#allocation13 + $0x8] sm:$0xff]
    %v4249 = vld [vmem:[#allocation13 + $0x10] sm:$0xff]
    %v4250 = vld [vmem:[#allocation13 + $0x18] sm:$0xff]
    %v4251 = vld [vmem:[#allocation13 + $0x20] sm:$0xff]
    %v4252 = vld [vmem:[#allocation13 + $0x28] sm:$0xff]
    %v4253 = vld [vmem:[#allocation13 + $0x30] sm:$0xff]
    %v4254 = vld [vmem:[#allocation13 + $0x38] sm:$0xff]
    %v4255 = vperm.slane %v3381, 3
    %v4257 = vsel %vm412, %v3378, 0
    %v4260 = vsel %vm412, %v3379, 0
    %v4263 = vsel %vm412, %v3380, 0
    %4265 = vmatpush.msra.mxu0 0.0
    %4266 = vmatpush.msra.mxu0 0.0
    %4267 = vmatpush.msra.mxu0 0.0
    %4268 = vmatpush.msra.mxu0 0.0
    %4269 = vmatpush.msra.mxu0 0.0
    %4270 = vmatpush.msra.mxu0 0.0
    %4271 = vmatpush.msra.mxu0 0.0
    %4272 = vmatpush.msra.mxu0 0.0
    %4273 = vmatpush.msra.mxu0 %v4254
    %4274 = vmatpush.msra.mxu0 %v4253
    %4275 = vmatpush.msra.mxu0 %v4252
    %4276 = vmatpush.msra.mxu0 %v4251
    %4277 = vmatpush.msra.mxu0 %v4250
    %4278 = vmatpush.msra.mxu0 %v4249
    %4279 = vmatpush.msra.mxu0 %v4248
    %4280 = vmatpush.msra.mxu0 %v4247
    %4281 = vmatmul.f32.gmra.mxu0 %v4257
    %v4282 = vpop.f32.mrf.mxu0
    %v4283 = vadd.f32 %v4255, %v4282
    %4284 = vmatmul.f32.gmra.mxu0 %v4260
    %v4285 = vpop.f32.mrf.mxu0
    %v4286 = vadd.f32 %v4255, %v4285
    %4287 = vmatmul.f32.gmra.mxu0 %v4263
    %v4288 = vpop.f32.mrf.mxu0
    %v4289 = vadd.f32 %v4255, %v4288
    %4290 = vdwg.mxu0
    %v4292 = vsel %vm480, %v4242, 0
    %v4295 = vsel %vm480, %v4283, 0
    %v4298 = vsel %vm480, %v4286, 0
    %4300 = vmatpush.xpose.msra.mxu0 0.0
    %4301 = vmatpush.xpose.msra.mxu0 0.0
    %4302 = vmatpush.xpose.msra.mxu0 0.0
    %4303 = vmatpush.xpose.msra.mxu0 0.0
    %4304 = vmatpush.xpose.msra.mxu0 0.0
    %4305 = vmatpush.xpose.msra.mxu0 0.0
    %4306 = vmatpush.xpose.msra.mxu0 0.0
    %4307 = vmatpush.xpose.msra.mxu0 0.0
    %4308 = vmatpush.xpose.msra.mxu0 0.0
    %4309 = vmatpush.xpose.msra.mxu0 0.0
    %4310 = vmatpush.xpose.msra.mxu0 0.0
    %4311 = vmatpush.xpose.msra.mxu0 0.0
    %4312 = vmatpush.xpose.msra.mxu0 0.0
    %4313 = vmatpush.xpose.msra.mxu0 0.0
    %4314 = vmatpush.xpose.msra.mxu0 %v4298
    %4315 = vmatpush.xpose.msra.mxu0 %v4295
    %4316 = vmatmul.f32.gmra.mxu0 %v4292
    %v4317 = vpop.f32.mrf.mxu0
    %v4318 = vadd.f32 0.0, %v4317
    %4319 = vdwg.mxu0
    %v4320 = vmul.f32 %v4318, 0.25
    %v4321 = vsel %vm517, %v4320, -inf
    %4322 = vmax.xlane.f32.xlu0 %v4321
    %v4323 = vpop.xlane.xlu0 %4322
    %v4324 = vsub.f32 %v4320, %v4323
    %v4325 = vmul.f32 %v4324, 1.442695
    %v4326 = vpow.pop %v4325
    %v4327 = vsel %vm517, %v4326, 0.0
    %4328 = vadd.xlane.f32.xlu0 %v4327
    %v4329 = vpop.xlane.xlu0 %4328
    %v4330 = vrcp.pop %v4329
    %v4331 = vmul.f32 %v4329, %v4330
    %v4332 = vsub.f32 1.0, %v4331
    %v4333 = vmul.f32 %v4330, %v4332
    %v4334 = vadd.f32 %v4330, %v4333
    %vm4335 = vweird.f32 %v4329
    %vm4336 = vweird.f32 %v4330
    %vm4337 = vmor %vm4335, %vm4336
    %v4338 = vsel %vm4337, %v4330, %v4334
    %v4339 = vand.u32 2147483647, %v4329
    %vm4340 = vcmp.eq.f32.partialorder %v4339, 8.507059e+37
    %v4341 = vand.u32 %v4329, 2147483648
    %v4342 = vor.u32 1.1754944e-38, %v4341
    %v4343 = vsel %vm4340, %v4342, %v4338
    %v4344 = vmul.f32 %v4326, %v4343
    %4345 = vrot.lane.b32.xlu0 %v4283, 64
    %v4346 = vpop.permute.xlu0 %4345
    %4347 = vrot.lane.b32.xlu0 %v4286, 64
    %v4348 = vpop.permute.xlu0 %4347
    %v4351 = vsel %vm517, %v4344, 0
    %v4353 = vsel %vm285, %v4348, 0
    %4355 = vmatpush.msra.mxu0 0.0
    %4356 = vmatpush.msra.mxu0 0.0
    %4357 = vmatpush.msra.mxu0 0.0
    %4358 = vmatpush.msra.mxu0 0.0
    %4359 = vmatpush.msra.mxu0 0.0
    %4360 = vmatpush.msra.mxu0 0.0
    %4361 = vmatpush.msra.mxu0 0.0
    %4362 = vmatpush.msra.mxu0 0.0
    %4363 = vmatpush.msra.mxu0 0.0
    %4364 = vmatpush.msra.mxu0 0.0
    %4365 = vmatpush.msra.mxu0 0.0
    %4366 = vmatpush.msra.mxu0 0.0
    %4367 = vmatpush.msra.mxu0 0.0
    %4368 = vmatpush.msra.mxu0 0.0
    %4369 = vmatpush.msra.mxu0 %v4353
    %4370 = vmatpush.msra.mxu0 %v4346
    %4371 = vmatmul.f32.gmra.mxu0 %v4351
    %v4372 = vpop.f32.mrf.mxu0
    %v4373 = vadd.f32 0.0, %v4372
    %4374 = vdwg.mxu0
    %4375 = vrot.lane.b32.xlu0 %v4242, 112
    %v4376 = vpop.permute.xlu0 %4375
    %4377 = vrot.lane.b32.xlu0 %v4283, 112
    %v4378 = vpop.permute.xlu0 %4377
    %4379 = vrot.lane.b32.xlu0 %v4286, 112
    %v4380 = vpop.permute.xlu0 %4379
    %v4381 = vsel %vm480, %v4376, 0
    %v4383 = vsel %vm480, %v4378, 0
    %v4385 = vsel %vm480, %v4380, 0
    %4387 = vmatpush.xpose.msra.mxu0 0.0
    %4388 = vmatpush.xpose.msra.mxu0 0.0
    %4389 = vmatpush.xpose.msra.mxu0 0.0
    %4390 = vmatpush.xpose.msra.mxu0 0.0
    %4391 = vmatpush.xpose.msra.mxu0 0.0
    %4392 = vmatpush.xpose.msra.mxu0 0.0
    %4393 = vmatpush.xpose.msra.mxu0 0.0
    %4394 = vmatpush.xpose.msra.mxu0 0.0
    %4395 = vmatpush.xpose.msra.mxu0 0.0
    %4396 = vmatpush.xpose.msra.mxu0 0.0
    %4397 = vmatpush.xpose.msra.mxu0 0.0
    %4398 = vmatpush.xpose.msra.mxu0 0.0
    %4399 = vmatpush.xpose.msra.mxu0 0.0
    %4400 = vmatpush.xpose.msra.mxu0 0.0
    %4401 = vmatpush.xpose.msra.mxu0 %v4385
    %4402 = vmatpush.xpose.msra.mxu0 %v4383
    %4403 = vmatmul.f32.gmra.mxu0 %v4381
    %v4404 = vpop.f32.mrf.mxu0
    %v4405 = vadd.f32 0.0, %v4404
    %4406 = vdwg.mxu0
    %v4407 = vmul.f32 %v4405, 0.25
    %v4408 = vsel %vm517, %v4407, -inf
    %4409 = vmax.xlane.f32.xlu0 %v4408
    %v4410 = vpop.xlane.xlu0 %4409
    %v4411 = vsub.f32 %v4407, %v4410
    %v4412 = vmul.f32 %v4411, 1.442695
    %v4413 = vpow.pop %v4412
    %v4414 = vsel %vm517, %v4413, 0.0
    %4415 = vadd.xlane.f32.xlu0 %v4414
    %v4416 = vpop.xlane.xlu0 %4415
    %v4417 = vrcp.pop %v4416
    %v4418 = vmul.f32 %v4416, %v4417
    %v4419 = vsub.f32 1.0, %v4418
    %v4420 = vmul.f32 %v4417, %v4419
    %v4421 = vadd.f32 %v4417, %v4420
    %vm4422 = vweird.f32 %v4416
    %vm4423 = vweird.f32 %v4417
    %vm4424 = vmor %vm4422, %vm4423
    %v4425 = vsel %vm4424, %v4417, %v4421
    %v4426 = vand.u32 2147483647, %v4416
    %vm4427 = vcmp.eq.f32.partialorder %v4426, 8.507059e+37
    %v4428 = vand.u32 %v4416, 2147483648
    %v4429 = vor.u32 1.1754944e-38, %v4428
    %v4430 = vsel %vm4427, %v4429, %v4425
    %v4431 = vmul.f32 %v4413, %v4430
    %4432 = vrot.lane.b32.xlu0 %v4283, 48
    %v4433 = vpop.permute.xlu0 %4432
    %4434 = vrot.lane.b32.xlu0 %v4286, 48
    %v4435 = vpop.permute.xlu0 %4434
    %v4438 = vsel %vm517, %v4431, 0
    %v4440 = vsel %vm285, %v4435, 0
    %4442 = vmatpush.msra.mxu0 0.0
    %4443 = vmatpush.msra.mxu0 0.0
    %4444 = vmatpush.msra.mxu0 0.0
    %4445 = vmatpush.msra.mxu0 0.0
    %4446 = vmatpush.msra.mxu0 0.0
    %4447 = vmatpush.msra.mxu0 0.0
    %4448 = vmatpush.msra.mxu0 0.0
    %4449 = vmatpush.msra.mxu0 0.0
    %4450 = vmatpush.msra.mxu0 0.0
    %4451 = vmatpush.msra.mxu0 0.0
    %4452 = vmatpush.msra.mxu0 0.0
    %4453 = vmatpush.msra.mxu0 0.0
    %4454 = vmatpush.msra.mxu0 0.0
    %4455 = vmatpush.msra.mxu0 0.0
    %4456 = vmatpush.msra.mxu0 %v4440
    %4457 = vmatpush.msra.mxu0 %v4433
    %4458 = vmatmul.f32.gmra.mxu0 %v4438
    %v4459 = vpop.f32.mrf.mxu0
    %v4460 = vadd.f32 0.0, %v4459
    %4461 = vdwg.mxu0
    %4462 = vrot.lane.b32.xlu0 %v4242, 96
    %v4463 = vpop.permute.xlu0 %4462
    %4464 = vrot.lane.b32.xlu0 %v4283, 96
    %v4465 = vpop.permute.xlu0 %4464
    %4466 = vrot.lane.b32.xlu0 %v4286, 96
    %v4467 = vpop.permute.xlu0 %4466
    %v4468 = vsel %vm480, %v4463, 0
    %v4470 = vsel %vm480, %v4465, 0
    %v4472 = vsel %vm480, %v4467, 0
    %4474 = vmatpush.xpose.msra.mxu0 0.0
    %4475 = vmatpush.xpose.msra.mxu0 0.0
    %4476 = vmatpush.xpose.msra.mxu0 0.0
    %4477 = vmatpush.xpose.msra.mxu0 0.0
    %4478 = vmatpush.xpose.msra.mxu0 0.0
    %4479 = vmatpush.xpose.msra.mxu0 0.0
    %4480 = vmatpush.xpose.msra.mxu0 0.0
    %4481 = vmatpush.xpose.msra.mxu0 0.0
    %4482 = vmatpush.xpose.msra.mxu0 0.0
    %4483 = vmatpush.xpose.msra.mxu0 0.0
    %4484 = vmatpush.xpose.msra.mxu0 0.0
    %4485 = vmatpush.xpose.msra.mxu0 0.0
    %4486 = vmatpush.xpose.msra.mxu0 0.0
    %4487 = vmatpush.xpose.msra.mxu0 0.0
    %4488 = vmatpush.xpose.msra.mxu0 %v4472
    %4489 = vmatpush.xpose.msra.mxu0 %v4470
    %4490 = vmatmul.f32.gmra.mxu0 %v4468
    %v4491 = vpop.f32.mrf.mxu0
    %v4492 = vadd.f32 0.0, %v4491
    %4493 = vdwg.mxu0
    %v4494 = vmul.f32 %v4492, 0.25
    %v4495 = vsel %vm517, %v4494, -inf
    %4496 = vmax.xlane.f32.xlu0 %v4495
    %v4497 = vpop.xlane.xlu0 %4496
    %v4498 = vsub.f32 %v4494, %v4497
    %v4499 = vmul.f32 %v4498, 1.442695
    %v4500 = vpow.pop %v4499
    %v4501 = vsel %vm517, %v4500, 0.0
    %4502 = vadd.xlane.f32.xlu0 %v4501
    %v4503 = vpop.xlane.xlu0 %4502
    %v4504 = vrcp.pop %v4503
    %v4505 = vmul.f32 %v4503, %v4504
    %v4506 = vsub.f32 1.0, %v4505
    %v4507 = vmul.f32 %v4504, %v4506
    %v4508 = vadd.f32 %v4504, %v4507
    %vm4509 = vweird.f32 %v4503
    %vm4510 = vweird.f32 %v4504
    %vm4511 = vmor %vm4509, %vm4510
    %v4512 = vsel %vm4511, %v4504, %v4508
    %v4513 = vand.u32 2147483647, %v4503
    %vm4514 = vcmp.eq.f32.partialorder %v4513, 8.507059e+37
    %v4515 = vand.u32 %v4503, 2147483648
    %v4516 = vor.u32 1.1754944e-38, %v4515
    %v4517 = vsel %vm4514, %v4516, %v4512
    %v4518 = vmul.f32 %v4500, %v4517
    %4519 = vrot.lane.b32.xlu0 %v4283, 32
    %v4520 = vpop.permute.xlu0 %4519
    %4521 = vrot.lane.b32.xlu0 %v4286, 32
    %v4522 = vpop.permute.xlu0 %4521
    %v4525 = vsel %vm517, %v4518, 0
    %v4527 = vsel %vm285, %v4522, 0
    %4529 = vmatpush.msra.mxu0 0.0
    %4530 = vmatpush.msra.mxu0 0.0
    %4531 = vmatpush.msra.mxu0 0.0
    %4532 = vmatpush.msra.mxu0 0.0
    %4533 = vmatpush.msra.mxu0 0.0
    %4534 = vmatpush.msra.mxu0 0.0
    %4535 = vmatpush.msra.mxu0 0.0
    %4536 = vmatpush.msra.mxu0 0.0
    %4537 = vmatpush.msra.mxu0 0.0
    %4538 = vmatpush.msra.mxu0 0.0
    %4539 = vmatpush.msra.mxu0 0.0
    %4540 = vmatpush.msra.mxu0 0.0
    %4541 = vmatpush.msra.mxu0 0.0
    %4542 = vmatpush.msra.mxu0 0.0
    %4543 = vmatpush.msra.mxu0 %v4527
    %4544 = vmatpush.msra.mxu0 %v4520
    %4545 = vmatmul.f32.gmra.mxu0 %v4525
    %v4546 = vpop.f32.mrf.mxu0
    %v4547 = vadd.f32 0.0, %v4546
    %4548 = vdwg.mxu0
    %4549 = vrot.lane.b32.xlu0 %v4242, 80
    %v4550 = vpop.permute.xlu0 %4549
    %4551 = vrot.lane.b32.xlu0 %v4283, 80
    %v4552 = vpop.permute.xlu0 %4551
    %4553 = vrot.lane.b32.xlu0 %v4286, 80
    %v4554 = vpop.permute.xlu0 %4553
    %v4555 = vsel %vm480, %v4550, 0
    %v4557 = vsel %vm480, %v4552, 0
    %v4559 = vsel %vm480, %v4554, 0
    %4561 = vmatpush.xpose.msra.mxu0 0.0
    %4562 = vmatpush.xpose.msra.mxu0 0.0
    %4563 = vmatpush.xpose.msra.mxu0 0.0
    %4564 = vmatpush.xpose.msra.mxu0 0.0
    %4565 = vmatpush.xpose.msra.mxu0 0.0
    %4566 = vmatpush.xpose.msra.mxu0 0.0
    %4567 = vmatpush.xpose.msra.mxu0 0.0
    %4568 = vmatpush.xpose.msra.mxu0 0.0
    %4569 = vmatpush.xpose.msra.mxu0 0.0
    %4570 = vmatpush.xpose.msra.mxu0 0.0
    %4571 = vmatpush.xpose.msra.mxu0 0.0
    %4572 = vmatpush.xpose.msra.mxu0 0.0
    %4573 = vmatpush.xpose.msra.mxu0 0.0
    %4574 = vmatpush.xpose.msra.mxu0 0.0
    %4575 = vmatpush.xpose.msra.mxu0 %v4559
    %4576 = vmatpush.xpose.msra.mxu0 %v4557
    %4577 = vmatmul.f32.gmra.mxu0 %v4555
    %v4578 = vpop.f32.mrf.mxu0
    %v4579 = vadd.f32 0.0, %v4578
    %4580 = vdwg.mxu0
    %v4581 = vmul.f32 %v4579, 0.25
    %v4582 = vsel %vm517, %v4581, -inf
    %4583 = vmax.xlane.f32.xlu0 %v4582
    %v4584 = vpop.xlane.xlu0 %4583
    %v4585 = vsub.f32 %v4581, %v4584
    %v4586 = vmul.f32 %v4585, 1.442695
    %v4587 = vpow.pop %v4586
    %v4588 = vsel %vm517, %v4587, 0.0
    %4589 = vadd.xlane.f32.xlu0 %v4588
    %v4590 = vpop.xlane.xlu0 %4589
    %v4591 = vrcp.pop %v4590
    %v4592 = vmul.f32 %v4590, %v4591
    %v4593 = vsub.f32 1.0, %v4592
    %v4594 = vmul.f32 %v4591, %v4593
    %v4595 = vadd.f32 %v4591, %v4594
    %vm4596 = vweird.f32 %v4590
    %vm4597 = vweird.f32 %v4591
    %vm4598 = vmor %vm4596, %vm4597
    %v4599 = vsel %vm4598, %v4591, %v4595
    %v4600 = vand.u32 2147483647, %v4590
    %vm4601 = vcmp.eq.f32.partialorder %v4600, 8.507059e+37
    %v4602 = vand.u32 %v4590, 2147483648
    %v4603 = vor.u32 1.1754944e-38, %v4602
    %v4604 = vsel %vm4601, %v4603, %v4599
    %v4605 = vmul.f32 %v4587, %v4604
    %4606 = vrot.lane.b32.xlu0 %v4283, 16
    %v4607 = vpop.permute.xlu0 %4606
    %4608 = vrot.lane.b32.xlu0 %v4286, 16
    %v4609 = vpop.permute.xlu0 %4608
    %v4612 = vsel %vm517, %v4605, 0
    %v4614 = vsel %vm285, %v4609, 0
    %4616 = vmatpush.msra.mxu0 0.0
    %4617 = vmatpush.msra.mxu0 0.0
    %4618 = vmatpush.msra.mxu0 0.0
    %4619 = vmatpush.msra.mxu0 0.0
    %4620 = vmatpush.msra.mxu0 0.0
    %4621 = vmatpush.msra.mxu0 0.0
    %4622 = vmatpush.msra.mxu0 0.0
    %4623 = vmatpush.msra.mxu0 0.0
    %4624 = vmatpush.msra.mxu0 0.0
    %4625 = vmatpush.msra.mxu0 0.0
    %4626 = vmatpush.msra.mxu0 0.0
    %4627 = vmatpush.msra.mxu0 0.0
    %4628 = vmatpush.msra.mxu0 0.0
    %4629 = vmatpush.msra.mxu0 0.0
    %4630 = vmatpush.msra.mxu0 %v4614
    %4631 = vmatpush.msra.mxu0 %v4607
    %4632 = vmatmul.f32.gmra.mxu0 %v4612
    %v4633 = vpop.f32.mrf.mxu0
    %v4634 = vadd.f32 0.0, %v4633
    %4635 = vdwg.mxu0
    %4637 = vrot.lane.b32.xlu0 %v4460, 16
    %v4638 = vpop.permute.xlu0 %4637
    %4641 = vrot.lane.b32.xlu0 %v4547, 32
    %v4642 = vpop.permute.xlu0 %4641
    %4645 = vrot.lane.b32.xlu0 %v4634, 48
    %v4646 = vpop.permute.xlu0 %4645
    %v4648 = vsel %vm480, %v4373, %v4638
    %v4649 = vsel %vm1007, %v4648, %v4642
    %v4650 = vsel %vm1010, %v4649, %v4646
    %v4652 = vrot.slane %v4286, 2
    %v4653 = vrot.slane %v4289, 2
    %v4654 = vsel %vm1014, %v4652, %v4653
    %v4656 = vsel %vm480, %v4245, 0
    %v4658 = vsel %vm480, %v4654, 0
    %v4660 = vsel %vm480, %v4653, 0
    %4662 = vmatpush.xpose.msra.mxu0 0.0
    %4663 = vmatpush.xpose.msra.mxu0 0.0
    %4664 = vmatpush.xpose.msra.mxu0 0.0
    %4665 = vmatpush.xpose.msra.mxu0 0.0
    %4666 = vmatpush.xpose.msra.mxu0 0.0
    %4667 = vmatpush.xpose.msra.mxu0 0.0
    %4668 = vmatpush.xpose.msra.mxu0 0.0
    %4669 = vmatpush.xpose.msra.mxu0 0.0
    %4670 = vmatpush.xpose.msra.mxu0 0.0
    %4671 = vmatpush.xpose.msra.mxu0 0.0
    %4672 = vmatpush.xpose.msra.mxu0 0.0
    %4673 = vmatpush.xpose.msra.mxu0 0.0
    %4674 = vmatpush.xpose.msra.mxu0 0.0
    %4675 = vmatpush.xpose.msra.mxu0 0.0
    %4676 = vmatpush.xpose.msra.mxu0 %v4660
    %4677 = vmatpush.xpose.msra.mxu0 %v4658
    %4678 = vmatmul.f32.gmra.mxu0 %v4656
    %v4679 = vpop.f32.mrf.mxu0
    %v4680 = vadd.f32 0.0, %v4679
    %4681 = vdwg.mxu0
    %v4682 = vmul.f32 %v4680, 0.25
    %v4683 = vsel %vm517, %v4682, -inf
    %4684 = vmax.xlane.f32.xlu0 %v4683
    %v4685 = vpop.xlane.xlu0 %4684
    %v4686 = vsub.f32 %v4682, %v4685
    %v4687 = vmul.f32 %v4686, 1.442695
    %v4688 = vpow.pop %v4687
    %v4689 = vsel %vm517, %v4688, 0.0
    %4690 = vadd.xlane.f32.xlu0 %v4689
    %v4691 = vpop.xlane.xlu0 %4690
    %v4692 = vrcp.pop %v4691
    %v4693 = vmul.f32 %v4691, %v4692
    %v4694 = vsub.f32 1.0, %v4693
    %v4695 = vmul.f32 %v4692, %v4694
    %v4696 = vadd.f32 %v4692, %v4695
    %vm4697 = vweird.f32 %v4691
    %vm4698 = vweird.f32 %v4692
    %vm4699 = vmor %vm4697, %vm4698
    %v4700 = vsel %vm4699, %v4692, %v4696
    %v4701 = vand.u32 2147483647, %v4691
    %vm4702 = vcmp.eq.f32.partialorder %v4701, 8.507059e+37
    %v4703 = vand.u32 %v4691, 2147483648
    %v4704 = vor.u32 1.1754944e-38, %v4703
    %v4705 = vsel %vm4702, %v4704, %v4700
    %v4706 = vmul.f32 %v4688, %v4705
    %4707 = vrot.lane.b32.xlu0 %v4654, 64
    %v4708 = vpop.permute.xlu0 %4707
    %4709 = vrot.lane.b32.xlu0 %v4653, 64
    %v4710 = vpop.permute.xlu0 %4709
    %v4713 = vsel %vm517, %v4706, 0
    %v4715 = vsel %vm285, %v4710, 0
    %4717 = vmatpush.msra.mxu0 0.0
    %4718 = vmatpush.msra.mxu0 0.0
    %4719 = vmatpush.msra.mxu0 0.0
    %4720 = vmatpush.msra.mxu0 0.0
    %4721 = vmatpush.msra.mxu0 0.0
    %4722 = vmatpush.msra.mxu0 0.0
    %4723 = vmatpush.msra.mxu0 0.0
    %4724 = vmatpush.msra.mxu0 0.0
    %4725 = vmatpush.msra.mxu0 0.0
    %4726 = vmatpush.msra.mxu0 0.0
    %4727 = vmatpush.msra.mxu0 0.0
    %4728 = vmatpush.msra.mxu0 0.0
    %4729 = vmatpush.msra.mxu0 0.0
    %4730 = vmatpush.msra.mxu0 0.0
    %4731 = vmatpush.msra.mxu0 %v4715
    %4732 = vmatpush.msra.mxu0 %v4708
    %4733 = vmatmul.f32.gmra.mxu0 %v4713
    %v4734 = vpop.f32.mrf.mxu0
    %v4735 = vadd.f32 0.0, %v4734
    %4736 = vdwg.mxu0
    %4737 = vrot.lane.b32.xlu0 %v4245, 112
    %v4738 = vpop.permute.xlu0 %4737
    %4739 = vrot.lane.b32.xlu0 %v4654, 112
    %v4740 = vpop.permute.xlu0 %4739
    %4741 = vrot.lane.b32.xlu0 %v4653, 112
    %v4742 = vpop.permute.xlu0 %4741
    %v4743 = vsel %vm480, %v4738, 0
    %v4745 = vsel %vm480, %v4740, 0
    %v4747 = vsel %vm480, %v4742, 0
    %4749 = vmatpush.xpose.msra.mxu0 0.0
    %4750 = vmatpush.xpose.msra.mxu0 0.0
    %4751 = vmatpush.xpose.msra.mxu0 0.0
    %4752 = vmatpush.xpose.msra.mxu0 0.0
    %4753 = vmatpush.xpose.msra.mxu0 0.0
    %4754 = vmatpush.xpose.msra.mxu0 0.0
    %4755 = vmatpush.xpose.msra.mxu0 0.0
    %4756 = vmatpush.xpose.msra.mxu0 0.0
    %4757 = vmatpush.xpose.msra.mxu0 0.0
    %4758 = vmatpush.xpose.msra.mxu0 0.0
    %4759 = vmatpush.xpose.msra.mxu0 0.0
    %4760 = vmatpush.xpose.msra.mxu0 0.0
    %4761 = vmatpush.xpose.msra.mxu0 0.0
    %4762 = vmatpush.xpose.msra.mxu0 0.0
    %4763 = vmatpush.xpose.msra.mxu0 %v4747
    %4764 = vmatpush.xpose.msra.mxu0 %v4745
    %4765 = vmatmul.f32.gmra.mxu0 %v4743
    %v4766 = vpop.f32.mrf.mxu0
    %v4767 = vadd.f32 0.0, %v4766
    %4768 = vdwg.mxu0
    %v4769 = vmul.f32 %v4767, 0.25
    %v4770 = vsel %vm517, %v4769, -inf
    %4771 = vmax.xlane.f32.xlu0 %v4770
    %v4772 = vpop.xlane.xlu0 %4771
    %v4773 = vsub.f32 %v4769, %v4772
    %v4774 = vmul.f32 %v4773, 1.442695
    %v4775 = vpow.pop %v4774
    %v4776 = vsel %vm517, %v4775, 0.0
    %4777 = vadd.xlane.f32.xlu0 %v4776
    %v4778 = vpop.xlane.xlu0 %4777
    %v4779 = vrcp.pop %v4778
    %v4780 = vmul.f32 %v4778, %v4779
    %v4781 = vsub.f32 1.0, %v4780
    %v4782 = vmul.f32 %v4779, %v4781
    %v4783 = vadd.f32 %v4779, %v4782
    %vm4784 = vweird.f32 %v4778
    %vm4785 = vweird.f32 %v4779
    %vm4786 = vmor %vm4784, %vm4785
    %v4787 = vsel %vm4786, %v4779, %v4783
    %v4788 = vand.u32 2147483647, %v4778
    %vm4789 = vcmp.eq.f32.partialorder %v4788, 8.507059e+37
    %v4790 = vand.u32 %v4778, 2147483648
    %v4791 = vor.u32 1.1754944e-38, %v4790
    %v4792 = vsel %vm4789, %v4791, %v4787
    %v4793 = vmul.f32 %v4775, %v4792
    %4794 = vrot.lane.b32.xlu0 %v4654, 48
    %v4795 = vpop.permute.xlu0 %4794
    %4796 = vrot.lane.b32.xlu0 %v4653, 48
    %v4797 = vpop.permute.xlu0 %4796
    %v4800 = vsel %vm517, %v4793, 0
    %v4802 = vsel %vm285, %v4797, 0
    %4804 = vmatpush.msra.mxu0 0.0
    %4805 = vmatpush.msra.mxu0 0.0
    %4806 = vmatpush.msra.mxu0 0.0
    %4807 = vmatpush.msra.mxu0 0.0
    %4808 = vmatpush.msra.mxu0 0.0
    %4809 = vmatpush.msra.mxu0 0.0
    %4810 = vmatpush.msra.mxu0 0.0
    %4811 = vmatpush.msra.mxu0 0.0
    %4812 = vmatpush.msra.mxu0 0.0
    %4813 = vmatpush.msra.mxu0 0.0
    %4814 = vmatpush.msra.mxu0 0.0
    %4815 = vmatpush.msra.mxu0 0.0
    %4816 = vmatpush.msra.mxu0 0.0
    %4817 = vmatpush.msra.mxu0 0.0
    %4818 = vmatpush.msra.mxu0 %v4802
    %4819 = vmatpush.msra.mxu0 %v4795
    %4820 = vmatmul.f32.gmra.mxu0 %v4800
    %v4821 = vpop.f32.mrf.mxu0
    %v4822 = vadd.f32 0.0, %v4821
    %4823 = vdwg.mxu0
    %4824 = vrot.lane.b32.xlu0 %v4245, 96
    %v4825 = vpop.permute.xlu0 %4824
    %4826 = vrot.lane.b32.xlu0 %v4654, 96
    %v4827 = vpop.permute.xlu0 %4826
    %4828 = vrot.lane.b32.xlu0 %v4653, 96
    %v4829 = vpop.permute.xlu0 %4828
    %v4830 = vsel %vm480, %v4825, 0
    %v4832 = vsel %vm480, %v4827, 0
    %v4834 = vsel %vm480, %v4829, 0
    %4836 = vmatpush.xpose.msra.mxu0 0.0
    %4837 = vmatpush.xpose.msra.mxu0 0.0
    %4838 = vmatpush.xpose.msra.mxu0 0.0
    %4839 = vmatpush.xpose.msra.mxu0 0.0
    %4840 = vmatpush.xpose.msra.mxu0 0.0
    %4841 = vmatpush.xpose.msra.mxu0 0.0
    %4842 = vmatpush.xpose.msra.mxu0 0.0
    %4843 = vmatpush.xpose.msra.mxu0 0.0
    %4844 = vmatpush.xpose.msra.mxu0 0.0
    %4845 = vmatpush.xpose.msra.mxu0 0.0
    %4846 = vmatpush.xpose.msra.mxu0 0.0
    %4847 = vmatpush.xpose.msra.mxu0 0.0
    %4848 = vmatpush.xpose.msra.mxu0 0.0
    %4849 = vmatpush.xpose.msra.mxu0 0.0
    %4850 = vmatpush.xpose.msra.mxu0 %v4834
    %4851 = vmatpush.xpose.msra.mxu0 %v4832
    %4852 = vmatmul.f32.gmra.mxu0 %v4830
    %v4853 = vpop.f32.mrf.mxu0
    %v4854 = vadd.f32 0.0, %v4853
    %4855 = vdwg.mxu0
    %v4856 = vmul.f32 %v4854, 0.25
    %v4857 = vsel %vm517, %v4856, -inf
    %4858 = vmax.xlane.f32.xlu0 %v4857
    %v4859 = vpop.xlane.xlu0 %4858
    %v4860 = vsub.f32 %v4856, %v4859
    %v4861 = vmul.f32 %v4860, 1.442695
    %v4862 = vpow.pop %v4861
    %v4863 = vsel %vm517, %v4862, 0.0
    %4864 = vadd.xlane.f32.xlu0 %v4863
    %v4865 = vpop.xlane.xlu0 %4864
    %v4866 = vrcp.pop %v4865
    %v4867 = vmul.f32 %v4865, %v4866
    %v4868 = vsub.f32 1.0, %v4867
    %v4869 = vmul.f32 %v4866, %v4868
    %v4870 = vadd.f32 %v4866, %v4869
    %vm4871 = vweird.f32 %v4865
    %vm4872 = vweird.f32 %v4866
    %vm4873 = vmor %vm4871, %vm4872
    %v4874 = vsel %vm4873, %v4866, %v4870
    %v4875 = vand.u32 2147483647, %v4865
    %vm4876 = vcmp.eq.f32.partialorder %v4875, 8.507059e+37
    %v4877 = vand.u32 %v4865, 2147483648
    %v4878 = vor.u32 1.1754944e-38, %v4877
    %v4879 = vsel %vm4876, %v4878, %v4874
    %v4880 = vmul.f32 %v4862, %v4879
    %4881 = vrot.lane.b32.xlu0 %v4654, 32
    %v4882 = vpop.permute.xlu0 %4881
    %4883 = vrot.lane.b32.xlu0 %v4653, 32
    %v4884 = vpop.permute.xlu0 %4883
    %v4887 = vsel %vm517, %v4880, 0
    %v4889 = vsel %vm285, %v4884, 0
    %4891 = vmatpush.msra.mxu0 0.0
    %4892 = vmatpush.msra.mxu0 0.0
    %4893 = vmatpush.msra.mxu0 0.0
    %4894 = vmatpush.msra.mxu0 0.0
    %4895 = vmatpush.msra.mxu0 0.0
    %4896 = vmatpush.msra.mxu0 0.0
    %4897 = vmatpush.msra.mxu0 0.0
    %4898 = vmatpush.msra.mxu0 0.0
    %4899 = vmatpush.msra.mxu0 0.0
    %4900 = vmatpush.msra.mxu0 0.0
    %4901 = vmatpush.msra.mxu0 0.0
    %4902 = vmatpush.msra.mxu0 0.0
    %4903 = vmatpush.msra.mxu0 0.0
    %4904 = vmatpush.msra.mxu0 0.0
    %4905 = vmatpush.msra.mxu0 %v4889
    %4906 = vmatpush.msra.mxu0 %v4882
    %4907 = vmatmul.f32.gmra.mxu0 %v4887
    %v4908 = vpop.f32.mrf.mxu0
    %v4909 = vadd.f32 0.0, %v4908
    %4910 = vdwg.mxu0
    %4911 = vrot.lane.b32.xlu0 %v4245, 80
    %v4912 = vpop.permute.xlu0 %4911
    %4913 = vrot.lane.b32.xlu0 %v4654, 80
    %v4914 = vpop.permute.xlu0 %4913
    %4915 = vrot.lane.b32.xlu0 %v4653, 80
    %v4916 = vpop.permute.xlu0 %4915
    %v4917 = vsel %vm480, %v4912, 0
    %v4919 = vsel %vm480, %v4914, 0
    %v4921 = vsel %vm480, %v4916, 0
    %4923 = vmatpush.xpose.msra.mxu0 0.0
    %4924 = vmatpush.xpose.msra.mxu0 0.0
    %4925 = vmatpush.xpose.msra.mxu0 0.0
    %4926 = vmatpush.xpose.msra.mxu0 0.0
    %4927 = vmatpush.xpose.msra.mxu0 0.0
    %4928 = vmatpush.xpose.msra.mxu0 0.0
    %4929 = vmatpush.xpose.msra.mxu0 0.0
    %4930 = vmatpush.xpose.msra.mxu0 0.0
    %4931 = vmatpush.xpose.msra.mxu0 0.0
    %4932 = vmatpush.xpose.msra.mxu0 0.0
    %4933 = vmatpush.xpose.msra.mxu0 0.0
    %4934 = vmatpush.xpose.msra.mxu0 0.0
    %4935 = vmatpush.xpose.msra.mxu0 0.0
    %4936 = vmatpush.xpose.msra.mxu0 0.0
    %4937 = vmatpush.xpose.msra.mxu0 %v4921
    %4938 = vmatpush.xpose.msra.mxu0 %v4919
    %4939 = vmatmul.f32.gmra.mxu0 %v4917
    %v4940 = vpop.f32.mrf.mxu0
    %v4941 = vadd.f32 0.0, %v4940
    %4942 = vdwg.mxu0
    %v4943 = vmul.f32 %v4941, 0.25
    %v4944 = vsel %vm517, %v4943, -inf
    %4945 = vmax.xlane.f32.xlu0 %v4944
    %v4946 = vpop.xlane.xlu0 %4945
    %v4947 = vsub.f32 %v4943, %v4946
    %v4948 = vmul.f32 %v4947, 1.442695
    %v4949 = vpow.pop %v4948
    %v4950 = vsel %vm517, %v4949, 0.0
    %4951 = vadd.xlane.f32.xlu0 %v4950
    %v4952 = vpop.xlane.xlu0 %4951
    %v4953 = vrcp.pop %v4952
    %v4954 = vmul.f32 %v4952, %v4953
    %v4955 = vsub.f32 1.0, %v4954
    %v4956 = vmul.f32 %v4953, %v4955
    %v4957 = vadd.f32 %v4953, %v4956
    %vm4958 = vweird.f32 %v4952
    %vm4959 = vweird.f32 %v4953
    %vm4960 = vmor %vm4958, %vm4959
    %v4961 = vsel %vm4960, %v4953, %v4957
    %v4962 = vand.u32 2147483647, %v4952
    %vm4963 = vcmp.eq.f32.partialorder %v4962, 8.507059e+37
    %v4964 = vand.u32 %v4952, 2147483648
    %v4965 = vor.u32 1.1754944e-38, %v4964
    %v4966 = vsel %vm4963, %v4965, %v4961
    %v4967 = vmul.f32 %v4949, %v4966
    %4968 = vrot.lane.b32.xlu0 %v4654, 16
    %v4969 = vpop.permute.xlu0 %4968
    %4970 = vrot.lane.b32.xlu0 %v4653, 16
    %v4971 = vpop.permute.xlu0 %4970
    %v4974 = vsel %vm517, %v4967, 0
    %v4976 = vsel %vm285, %v4971, 0
    %4978 = vmatpush.msra.mxu0 0.0
    %4979 = vmatpush.msra.mxu0 0.0
    %4980 = vmatpush.msra.mxu0 0.0
    %4981 = vmatpush.msra.mxu0 0.0
    %4982 = vmatpush.msra.mxu0 0.0
    %4983 = vmatpush.msra.mxu0 0.0
    %4984 = vmatpush.msra.mxu0 0.0
    %4985 = vmatpush.msra.mxu0 0.0
    %4986 = vmatpush.msra.mxu0 0.0
    %4987 = vmatpush.msra.mxu0 0.0
    %4988 = vmatpush.msra.mxu0 0.0
    %4989 = vmatpush.msra.mxu0 0.0
    %4990 = vmatpush.msra.mxu0 0.0
    %4991 = vmatpush.msra.mxu0 0.0
    %4992 = vmatpush.msra.mxu0 %v4976
    %4993 = vmatpush.msra.mxu0 %v4969
    %4994 = vmatmul.f32.gmra.mxu0 %v4974
    %v4995 = vpop.f32.mrf.mxu0
    %v4996 = vadd.f32 0.0, %v4995
    %4997 = vdwg.mxu0
    %4999 = vrot.lane.b32.xlu0 %v4822, 16
    %v5000 = vpop.permute.xlu0 %4999
    %5003 = vrot.lane.b32.xlu0 %v4909, 32
    %v5004 = vpop.permute.xlu0 %5003
    %5007 = vrot.lane.b32.xlu0 %v4996, 48
    %v5008 = vpop.permute.xlu0 %5007
    %v5010 = vsel %vm480, %v4735, %v5000
    %v5011 = vsel %vm1007, %v5010, %v5004
    %v5012 = vsel %vm1010, %v5011, %v5008
    %v5013 = vld [vmem:[#allocation15] sm:$0xff]
    %v5014 = vld [vmem:[#allocation15 + $0x8] sm:$0xff]
    %v5015 = vld [vmem:[#allocation15 + $0x10] sm:$0xff]
    %v5016 = vld [vmem:[#allocation15 + $0x18] sm:$0xff]
    %v5017 = vld [vmem:[#allocation15 + $0x20] sm:$0xff]
    %v5018 = vld [vmem:[#allocation15 + $0x28] sm:$0xff]
    %v5019 = vld [vmem:[#allocation15 + $0x30] sm:$0xff]
    %v5020 = vld [vmem:[#allocation15 + $0x38] sm:$0xff]
    %v5021 = vperm.slane %v3381, 4
    %v5023 = vsel %vm412, %v4650, 0
    %v5026 = vsel %vm412, %v5012, 0
    %5028 = vmatpush.msra.mxu0 0.0
    %5029 = vmatpush.msra.mxu0 0.0
    %5030 = vmatpush.msra.mxu0 0.0
    %5031 = vmatpush.msra.mxu0 0.0
    %5032 = vmatpush.msra.mxu0 0.0
    %5033 = vmatpush.msra.mxu0 0.0
    %5034 = vmatpush.msra.mxu0 0.0
    %5035 = vmatpush.msra.mxu0 0.0
    %5036 = vmatpush.msra.mxu0 %v5020
    %5037 = vmatpush.msra.mxu0 %v5019
    %5038 = vmatpush.msra.mxu0 %v5018
    %5039 = vmatpush.msra.mxu0 %v5017
    %5040 = vmatpush.msra.mxu0 %v5016
    %5041 = vmatpush.msra.mxu0 %v5015
    %5042 = vmatpush.msra.mxu0 %v5014
    %5043 = vmatpush.msra.mxu0 %v5013
    %5044 = vmatmul.f32.gmra.mxu0 %v5023
    %v5045 = vpop.f32.mrf.mxu0
    %v5046 = vadd.f32 %v5021, %v5045
    %5047 = vmatmul.f32.gmra.mxu0 %v5026
    %v5048 = vpop.f32.mrf.mxu0
    %v5049 = vadd.f32 %v5021, %v5048
    %5050 = vdwg.mxu0
    %v5051 = vadd.f32 %v4207, %v5046
    %v5052 = vadd.f32 %v4208, %v5049
    %v5053 = vsel %vm412, %v5051, 0.0
    %5054 = vadd.xlane.f32.xlu0 %v5053
    %v5055 = vpop.xlane.xlu0 %5054
    %v5056 = vsel %vm412, %v5052, 0.0
    %5057 = vadd.xlane.f32.xlu0 %v5056
    %v5058 = vpop.xlane.xlu0 %5057
    %v5059 = vmul.f32 %v5055, %v1622
    %v5060 = vmul.f32 %v5058, %v1622
    %v5061 = vsub.f32 %v5051, %v5059
    %v5062 = vsub.f32 %v5052, %v5060
    %v5063 = vmul.f32 %v5061, %v5061
    %v5064 = vmul.f32 %v5062, %v5062
    %v5065 = vsel %vm412, %v5063, 0.0
    %5066 = vadd.xlane.f32.xlu0 %v5065
    %v5067 = vpop.xlane.xlu0 %5066
    %v5068 = vsel %vm412, %v5064, 0.0
    %5069 = vadd.xlane.f32.xlu0 %v5068
    %v5070 = vpop.xlane.xlu0 %5069
    %v5071 = vmul.f32 %v5067, %v1622
    %v5072 = vmul.f32 %v5070, %v1622
    %v5073 = vadd.f32 %v5071, 1e-05
    %v5074 = vadd.f32 %v5072, 1e-05
    %v5075 = vrsqrt.pop %v5073
    %v5076 = vmul.f32 %v5075, %v5073
    %v5077 = vmul.f32 %v5076, %v5075
    %v5078 = vmul.f32 0.5, %v5077
    %v5079 = vsub.f32 1.5, %v5078
    %v5080 = vmul.f32 %v5075, %v5079
    %vm5081 = vweird.f32 %v5073
    %vm5082 = vweird.f32 %v5075
    %vm5083 = vmor %vm5081, %vm5082
    %v5084 = vsel %vm5083, %v5075, %v5080
    %v5085 = vrsqrt.pop %v5074
    %v5086 = vmul.f32 %v5085, %v5074
    %v5087 = vmul.f32 %v5086, %v5085
    %v5088 = vmul.f32 0.5, %v5087
    %v5089 = vsub.f32 1.5, %v5088
    %v5090 = vmul.f32 %v5085, %v5089
    %vm5091 = vweird.f32 %v5074
    %vm5092 = vweird.f32 %v5085
    %vm5093 = vmor %vm5091, %vm5092
    %v5094 = vsel %vm5093, %v5085, %v5090
    %v5095 = vmul.f32 %v5061, %v5084
    %v5096 = vmul.f32 %v5062, %v5094
    %v5097 = vperm.slane %v3383, 1
    %v5098 = vmul.f32 %v5095, %v5097
    %v5099 = vmul.f32 %v5096, %v5097
    %v5100 = vperm.slane %v3383, 2
    %v5101 = vadd.f32 %v5098, %v5100
    %v5102 = vadd.f32 %v5099, %v5100
    %v5103 = vld [vmem:[#allocation16] sm:$0xff]
    %v5104 = vld [vmem:[#allocation16 + $0x8] sm:$0xff]
    %v5105 = vld [vmem:[#allocation16 + $0x10] sm:$0xff]
    %v5106 = vld [vmem:[#allocation16 + $0x18] sm:$0xff]
    %v5107 = vld [vmem:[#allocation16 + $0x20] sm:$0xff]
    %v5108 = vld [vmem:[#allocation16 + $0x28] sm:$0xff]
    %v5109 = vld [vmem:[#allocation16 + $0x30] sm:$0xff]
    %v5110 = vld [vmem:[#allocation16 + $0x38] sm:$0xff]
    %v5111 = vperm.slane %v3381, 5
    %v5113 = vsel %vm412, %v5101, 0
    %v5116 = vsel %vm412, %v5102, 0
    %5118 = vmatpush.msra.mxu0 0.0
    %5119 = vmatpush.msra.mxu0 0.0
    %5120 = vmatpush.msra.mxu0 0.0
    %5121 = vmatpush.msra.mxu0 0.0
    %5122 = vmatpush.msra.mxu0 0.0
    %5123 = vmatpush.msra.mxu0 0.0
    %5124 = vmatpush.msra.mxu0 0.0
    %5125 = vmatpush.msra.mxu0 0.0
    %5126 = vmatpush.msra.mxu0 %v5110
    %5127 = vmatpush.msra.mxu0 %v5109
    %5128 = vmatpush.msra.mxu0 %v5108
    %5129 = vmatpush.msra.mxu0 %v5107
    %5130 = vmatpush.msra.mxu0 %v5106
    %5131 = vmatpush.msra.mxu0 %v5105
    %5132 = vmatpush.msra.mxu0 %v5104
    %5133 = vmatpush.msra.mxu0 %v5103
    %5134 = vmatmul.f32.gmra.mxu0 %v5113
    %v5135 = vpop.f32.mrf.mxu0
    %v5136 = vadd.f32 %v5111, %v5135
    %5137 = vmatmul.f32.gmra.mxu0 %v5116
    %v5138 = vpop.f32.mrf.mxu0
    %v5139 = vadd.f32 %v5111, %v5138
    %5140 = vdwg.mxu0
    %v5141 = vmax.f32 %v5136, 0.0
    %v5142 = vmax.f32 %v5139, 0.0
    %v5143 = vld [vmem:[%s18] sm:$0xff]
    %v5144 = vld [vmem:[%s18 + $0x8] sm:$0xff]
    %v5145 = vld [vmem:[%s18 + $0x10] sm:$0xff]
    %v5146 = vld [vmem:[%s18 + $0x18] sm:$0xff]
    %v5147 = vld [vmem:[%s18 + $0x20] sm:$0xff]
    %v5148 = vld [vmem:[%s18 + $0x28] sm:$0xff]
    %v5149 = vld [vmem:[%s18 + $0x30] sm:$0xff]
    %v5150 = vld [vmem:[%s18 + $0x38] sm:$0xff]
    %v5151 = vld [vmem:[%s18 + $0x40] sm:$0xff]
    %v5152 = vld [vmem:[%s18 + $0x48] sm:$0xff]
    %v5153 = vld [vmem:[%s18 + $0x50] sm:$0xff]
    %v5154 = vld [vmem:[%s18 + $0x58] sm:$0xff]
    %v5155 = vld [vmem:[%s18 + $0x60] sm:$0xff]
    %v5156 = vld [vmem:[%s18 + $0x68] sm:$0xff]
    %v5157 = vld [vmem:[%s18 + $0x70] sm:$0xff]
    %v5158 = vld [vmem:[%s18 + $0x78] sm:$0xff]
    %v5159 = vperm.slane %v3381, 6
    %5160 = vmatpush.msra.mxu0 %v5158
    %5161 = vmatpush.msra.mxu0 %v5157
    %5162 = vmatpush.msra.mxu0 %v5156
    %5163 = vmatpush.msra.mxu0 %v5155
    %5164 = vmatpush.msra.mxu0 %v5154
    %5165 = vmatpush.msra.mxu0 %v5153
    %5166 = vmatpush.msra.mxu0 %v5152
    %5167 = vmatpush.msra.mxu0 %v5151
    %5168 = vmatpush.msra.mxu0 %v5150
    %5169 = vmatpush.msra.mxu0 %v5149
    %5170 = vmatpush.msra.mxu0 %v5148
    %5171 = vmatpush.msra.mxu0 %v5147
    %5172 = vmatpush.msra.mxu0 %v5146
    %5173 = vmatpush.msra.mxu0 %v5145
    %5174 = vmatpush.msra.mxu0 %v5144
    %5175 = vmatpush.msra.mxu0 %v5143
    %5176 = vmatmul.f32.gmra.mxu0 %v5141
    %v5177 = vpop.f32.mrf.mxu0
    %v5178 = vadd.f32 %v5159, %v5177
    %5179 = vmatmul.f32.gmra.mxu0 %v5142
    %v5180 = vpop.f32.mrf.mxu0
    %v5181 = vadd.f32 %v5159, %v5180
    %5182 = vdwg.mxu0
    %v5183 = vadd.f32 %v5101, %v5178
    %v5184 = vadd.f32 %v5102, %v5181
    %v5185 = vsel %vm412, %v5183, 0.0
    %5186 = vadd.xlane.f32.xlu0 %v5185
    %v5187 = vpop.xlane.xlu0 %5186
    %v5188 = vsel %vm412, %v5184, 0.0
    %5189 = vadd.xlane.f32.xlu0 %v5188
    %v5190 = vpop.xlane.xlu0 %5189
    %v5191 = vmul.f32 %v5187, %v1622
    %v5192 = vmul.f32 %v5190, %v1622
    %v5193 = vsub.f32 %v5183, %v5191
    %v5194 = vsub.f32 %v5184, %v5192
    %v5195 = vmul.f32 %v5193, %v5193
    %v5196 = vmul.f32 %v5194, %v5194
    %v5197 = vsel %vm412, %v5195, 0.0
    %5198 = vadd.xlane.f32.xlu0 %v5197
    %v5199 = vpop.xlane.xlu0 %5198
    %v5200 = vsel %vm412, %v5196, 0.0
    %5201 = vadd.xlane.f32.xlu0 %v5200
    %v5202 = vpop.xlane.xlu0 %5201
    %v5203 = vmul.f32 %v5199, %v1622
    %v5204 = vmul.f32 %v5202, %v1622
    %v5205 = vadd.f32 %v5203, 1e-05
    %v5206 = vadd.f32 %v5204, 1e-05
    %v5207 = vrsqrt.pop %v5205
    %v5208 = vmul.f32 %v5207, %v5205
    %v5209 = vmul.f32 %v5208, %v5207
    %v5210 = vmul.f32 0.5, %v5209
    %v5211 = vsub.f32 1.5, %v5210
    %v5212 = vmul.f32 %v5207, %v5211
    %vm5213 = vweird.f32 %v5205
    %vm5214 = vweird.f32 %v5207
    %vm5215 = vmor %vm5213, %vm5214
    %v5216 = vsel %vm5215, %v5207, %v5212
    %v5217 = vrsqrt.pop %v5206
    %v5218 = vmul.f32 %v5217, %v5206
    %v5219 = vmul.f32 %v5218, %v5217
    %v5220 = vmul.f32 0.5, %v5219
    %v5221 = vsub.f32 1.5, %v5220
    %v5222 = vmul.f32 %v5217, %v5221
    %vm5223 = vweird.f32 %v5206
    %vm5224 = vweird.f32 %v5217
    %vm5225 = vmor %vm5223, %vm5224
    %v5226 = vsel %vm5225, %v5217, %v5222
    %v5227 = vmul.f32 %v5193, %v5216
    %v5228 = vmul.f32 %v5194, %v5226
    %v5229 = vperm.slane %v3383, 3
    %v5230 = vmul.f32 %v5227, %v5229
    %v5231 = vmul.f32 %v5228, %v5229
    %v5232 = vperm.slane %v3383, 4
    %v5233 = vadd.f32 %v5230, %v5232
    %v5234 = vadd.f32 %v5231, %v5232
    %s5235 = scalar_lea.vmem %s19, 32
    %v5236 = vld [vmem:[%s5235] sm:$0xff]
    %v5237 = vld [vmem:[%s5235 + $0x8] sm:$0xff]
    %v5238 = vld [vmem:[%s5235 + $0x10] sm:$0x1f]
    %s5239 = scalar_lea.vmem %s12, 128
    %v5240 = vld [vmem:[%s5239] sm:$0xff]
    %v5241 = vld [vmem:[%s5239 + $0x8] sm:$0xff]
    %v5242 = vld [vmem:[%s5239 + $0x10] sm:$0xff]
    %v5243 = vld [vmem:[%s5239 + $0x18] sm:$0xff]
    %v5244 = vld [vmem:[%s5239 + $0x20] sm:$0xff]
    %v5245 = vld [vmem:[%s5239 + $0x28] sm:$0xff]
    %v5246 = vld [vmem:[%s5239 + $0x30] sm:$0xff]
    %v5247 = vld [vmem:[%s5239 + $0x38] sm:$0xff]
    %v5248 = vld [vmem:[%s5239 + $0x40] sm:$0xff]
    %v5249 = vld [vmem:[%s5239 + $0x48] sm:$0xff]
    %v5250 = vld [vmem:[%s5239 + $0x50] sm:$0xff]
    %v5251 = vld [vmem:[%s5239 + $0x58] sm:$0xff]
    %v5252 = vld [vmem:[%s5239 + $0x60] sm:$0xff]
    %v5253 = vld [vmem:[%s5239 + $0x68] sm:$0xff]
    %v5254 = vld [vmem:[%s5239 + $0x70] sm:$0xff]
    %v5255 = vld [vmem:[%s5239 + $0x78] sm:$0xff]
    %v5256 = vperm.slane %v5236, 0
    %v5257 = vperm.slane %v5237, 0
    %v5259 = vsel %vm412, %v5233, 0
    %v5262 = vsel %vm412, %v5234, 0
    %5264 = vmatpush.msra.mxu0 0.0
    %5265 = vmatpush.msra.mxu0 0.0
    %5266 = vmatpush.msra.mxu0 0.0
    %5267 = vmatpush.msra.mxu0 0.0
    %5268 = vmatpush.msra.mxu0 0.0
    %5269 = vmatpush.msra.mxu0 0.0
    %5270 = vmatpush.msra.mxu0 0.0
    %5271 = vmatpush.msra.mxu0 0.0
    %5272 = vmatpush.msra.mxu0 %v5254
    %5273 = vmatpush.msra.mxu0 %v5252
    %5274 = vmatpush.msra.mxu0 %v5250
    %5275 = vmatpush.msra.mxu0 %v5248
    %5276 = vmatpush.msra.mxu0 %v5246
    %5277 = vmatpush.msra.mxu0 %v5244
    %5278 = vmatpush.msra.mxu0 %v5242
    %5279 = vmatpush.msra.mxu0 %v5240
    %5280 = vmatmul.f32.gmra.mxu0 %v5259
    %v5281 = vpop.f32.mrf.mxu0
    %v5282 = vadd.f32 %v5256, %v5281
    %5283 = vmatmul.f32.gmra.mxu0 %v5262
    %v5284 = vpop.f32.mrf.mxu0
    %v5285 = vadd.f32 %v5256, %v5284
    %5286 = vdwg.mxu0
    %5287 = vmatpush.msra.mxu0 0.0
    %5288 = vmatpush.msra.mxu0 0.0
    %5289 = vmatpush.msra.mxu0 0.0
    %5290 = vmatpush.msra.mxu0 0.0
    %5291 = vmatpush.msra.mxu0 0.0
    %5292 = vmatpush.msra.mxu0 0.0
    %5293 = vmatpush.msra.mxu0 0.0
    %5294 = vmatpush.msra.mxu0 0.0
    %5295 = vmatpush.msra.mxu0 %v5255
    %5296 = vmatpush.msra.mxu0 %v5253
    %5297 = vmatpush.msra.mxu0 %v5251
    %5298 = vmatpush.msra.mxu0 %v5249
    %5299 = vmatpush.msra.mxu0 %v5247
    %5300 = vmatpush.msra.mxu0 %v5245
    %5301 = vmatpush.msra.mxu0 %v5243
    %5302 = vmatpush.msra.mxu0 %v5241
    %5303 = vmatmul.f32.gmra.mxu0 %v5259
    %v5304 = vpop.f32.mrf.mxu0
    %v5305 = vadd.f32 %v5257, %v5304
    %5306 = vmatmul.f32.gmra.mxu0 %v5262
    %v5307 = vpop.f32.mrf.mxu0
    %v5308 = vadd.f32 %v5257, %v5307
    %5309 = vdwg.mxu0
    %5311 = vrot.lane.b32.xlu0 %v5282, 64
    %v5312 = vpop.permute.xlu0 %5311
    %v5313 = vsel %vm480, %v5282, 0
    %v5315 = vsel %vm480, %v5312, 0
    %5317 = vmatpush.xpose.msra.mxu0 0.0
    %5318 = vmatpush.xpose.msra.mxu0 0.0
    %5319 = vmatpush.xpose.msra.mxu0 0.0
    %5320 = vmatpush.xpose.msra.mxu0 0.0
    %5321 = vmatpush.xpose.msra.mxu0 0.0
    %5322 = vmatpush.xpose.msra.mxu0 0.0
    %5323 = vmatpush.xpose.msra.mxu0 0.0
    %5324 = vmatpush.xpose.msra.mxu0 0.0
    %5325 = vmatpush.xpose.msra.mxu0 0.0
    %5326 = vmatpush.xpose.msra.mxu0 0.0
    %5327 = vmatpush.xpose.msra.mxu0 0.0
    %5328 = vmatpush.xpose.msra.mxu0 0.0
    %5329 = vmatpush.xpose.msra.mxu0 0.0
    %5330 = vmatpush.xpose.msra.mxu0 0.0
    %5331 = vmatpush.xpose.msra.mxu0 0.0
    %5332 = vmatpush.xpose.msra.mxu0 %v5315
    %5333 = vmatmul.f32.gmra.mxu0 %v5313
    %v5334 = vpop.f32.mrf.mxu0
    %v5335 = vadd.f32 0.0, %v5334
    %5336 = vdwg.mxu0
    %v5337 = vmul.f32 %v5335, 0.25
    %v5338 = vadd.f32 %v5337, %v391
    %v5339 = vsel %vm3483, %v5338, -inf
    %5340 = vmax.xlane.f32.xlu0 %v5339
    %v5341 = vpop.xlane.xlu0 %5340
    %v5342 = vsub.f32 %v5338, %v5341
    %v5343 = vmul.f32 %v5342, 1.442695
    %v5344 = vpow.pop %v5343
    %v5345 = vsel %vm3483, %v5344, 0.0
    %5346 = vadd.xlane.f32.xlu0 %v5345
    %v5347 = vpop.xlane.xlu0 %5346
    %v5348 = vrcp.pop %v5347
    %v5349 = vmul.f32 %v5347, %v5348
    %v5350 = vsub.f32 1.0, %v5349
    %v5351 = vmul.f32 %v5348, %v5350
    %v5352 = vadd.f32 %v5348, %v5351
    %vm5353 = vweird.f32 %v5347
    %vm5354 = vweird.f32 %v5348
    %vm5355 = vmor %vm5353, %vm5354
    %v5356 = vsel %vm5355, %v5348, %v5352
    %v5357 = vand.u32 2147483647, %v5347
    %vm5358 = vcmp.eq.f32.partialorder %v5357, 8.507059e+37
    %v5359 = vand.u32 %v5347, 2147483648
    %v5360 = vor.u32 1.1754944e-38, %v5359
    %v5361 = vsel %vm5358, %v5360, %v5356
    %v5362 = vmul.f32 %v5344, %v5361
    %v5364 = vsel %vm3483, %v5362, 0
    %5366 = vmatpush.msra.mxu0 0.0
    %5367 = vmatpush.msra.mxu0 0.0
    %5368 = vmatpush.msra.mxu0 0.0
    %5369 = vmatpush.msra.mxu0 0.0
    %5370 = vmatpush.msra.mxu0 0.0
    %5371 = vmatpush.msra.mxu0 0.0
    %5372 = vmatpush.msra.mxu0 0.0
    %5373 = vmatpush.msra.mxu0 0.0
    %5374 = vmatpush.msra.mxu0 0.0
    %5375 = vmatpush.msra.mxu0 0.0
    %5376 = vmatpush.msra.mxu0 0.0
    %5377 = vmatpush.msra.mxu0 0.0
    %5378 = vmatpush.msra.mxu0 0.0
    %5379 = vmatpush.msra.mxu0 0.0
    %5380 = vmatpush.msra.mxu0 0.0
    %5381 = vmatpush.msra.mxu0 %v5305
    %5382 = vmatmul.f32.gmra.mxu0 %v5364
    %v5383 = vpop.f32.mrf.mxu0
    %v5384 = vadd.f32 0.0, %v5383
    %5385 = vdwg.mxu0
    %5386 = vrot.lane.b32.xlu0 %v5282, 112
    %v5387 = vpop.permute.xlu0 %5386
    %5388 = vrot.lane.b32.xlu0 %v5282, 48
    %v5389 = vpop.permute.xlu0 %5388
    %v5390 = vsel %vm480, %v5387, 0
    %v5392 = vsel %vm480, %v5389, 0
    %5394 = vmatpush.xpose.msra.mxu0 0.0
    %5395 = vmatpush.xpose.msra.mxu0 0.0
    %5396 = vmatpush.xpose.msra.mxu0 0.0
    %5397 = vmatpush.xpose.msra.mxu0 0.0
    %5398 = vmatpush.xpose.msra.mxu0 0.0
    %5399 = vmatpush.xpose.msra.mxu0 0.0
    %5400 = vmatpush.xpose.msra.mxu0 0.0
    %5401 = vmatpush.xpose.msra.mxu0 0.0
    %5402 = vmatpush.xpose.msra.mxu0 0.0
    %5403 = vmatpush.xpose.msra.mxu0 0.0
    %5404 = vmatpush.xpose.msra.mxu0 0.0
    %5405 = vmatpush.xpose.msra.mxu0 0.0
    %5406 = vmatpush.xpose.msra.mxu0 0.0
    %5407 = vmatpush.xpose.msra.mxu0 0.0
    %5408 = vmatpush.xpose.msra.mxu0 0.0
    %5409 = vmatpush.xpose.msra.mxu0 %v5392
    %5410 = vmatmul.f32.gmra.mxu0 %v5390
    %v5411 = vpop.f32.mrf.mxu0
    %v5412 = vadd.f32 0.0, %v5411
    %5413 = vdwg.mxu0
    %v5414 = vmul.f32 %v5412, 0.25
    %v5415 = vadd.f32 %v5414, %v391
    %v5416 = vsel %vm3483, %v5415, -inf
    %5417 = vmax.xlane.f32.xlu0 %v5416
    %v5418 = vpop.xlane.xlu0 %5417
    %v5419 = vsub.f32 %v5415, %v5418
    %v5420 = vmul.f32 %v5419, 1.442695
    %v5421 = vpow.pop %v5420
    %v5422 = vsel %vm3483, %v5421, 0.0
    %5423 = vadd.xlane.f32.xlu0 %v5422
    %v5424 = vpop.xlane.xlu0 %5423
    %v5425 = vrcp.pop %v5424
    %v5426 = vmul.f32 %v5424, %v5425
    %v5427 = vsub.f32 1.0, %v5426
    %v5428 = vmul.f32 %v5425, %v5427
    %v5429 = vadd.f32 %v5425, %v5428
    %vm5430 = vweird.f32 %v5424
    %vm5431 = vweird.f32 %v5425
    %vm5432 = vmor %vm5430, %vm5431
    %v5433 = vsel %vm5432, %v5425, %v5429
    %v5434 = vand.u32 2147483647, %v5424
    %vm5435 = vcmp.eq.f32.partialorder %v5434, 8.507059e+37
    %v5436 = vand.u32 %v5424, 2147483648
    %v5437 = vor.u32 1.1754944e-38, %v5436
    %v5438 = vsel %vm5435, %v5437, %v5433
    %v5439 = vmul.f32 %v5421, %v5438
    %5441 = vrot.lane.b32.xlu0 %v5305, 112
    %v5442 = vpop.permute.xlu0 %5441
    %v5445 = vsel %vm3483, %v5439, 0
    %5447 = vmatpush.msra.mxu0 0.0
    %5448 = vmatpush.msra.mxu0 0.0
    %5449 = vmatpush.msra.mxu0 0.0
    %5450 = vmatpush.msra.mxu0 0.0
    %5451 = vmatpush.msra.mxu0 0.0
    %5452 = vmatpush.msra.mxu0 0.0
    %5453 = vmatpush.msra.mxu0 0.0
    %5454 = vmatpush.msra.mxu0 0.0
    %5455 = vmatpush.msra.mxu0 0.0
    %5456 = vmatpush.msra.mxu0 0.0
    %5457 = vmatpush.msra.mxu0 0.0
    %5458 = vmatpush.msra.mxu0 0.0
    %5459 = vmatpush.msra.mxu0 0.0
    %5460 = vmatpush.msra.mxu0 0.0
    %5461 = vmatpush.msra.mxu0 0.0
    %5462 = vmatpush.msra.mxu0 %v5442
    %5463 = vmatmul.f32.gmra.mxu0 %v5445
    %v5464 = vpop.f32.mrf.mxu0
    %v5465 = vadd.f32 0.0, %v5464
    %5466 = vdwg.mxu0
    %5467 = vrot.lane.b32.xlu0 %v5282, 96
    %v5468 = vpop.permute.xlu0 %5467
    %5469 = vrot.lane.b32.xlu0 %v5282, 32
    %v5470 = vpop.permute.xlu0 %5469
    %v5471 = vsel %vm480, %v5468, 0
    %v5473 = vsel %vm480, %v5470, 0
    %5475 = vmatpush.xpose.msra.mxu0 0.0
    %5476 = vmatpush.xpose.msra.mxu0 0.0
    %5477 = vmatpush.xpose.msra.mxu0 0.0
    %5478 = vmatpush.xpose.msra.mxu0 0.0
    %5479 = vmatpush.xpose.msra.mxu0 0.0
    %5480 = vmatpush.xpose.msra.mxu0 0.0
    %5481 = vmatpush.xpose.msra.mxu0 0.0
    %5482 = vmatpush.xpose.msra.mxu0 0.0
    %5483 = vmatpush.xpose.msra.mxu0 0.0
    %5484 = vmatpush.xpose.msra.mxu0 0.0
    %5485 = vmatpush.xpose.msra.mxu0 0.0
    %5486 = vmatpush.xpose.msra.mxu0 0.0
    %5487 = vmatpush.xpose.msra.mxu0 0.0
    %5488 = vmatpush.xpose.msra.mxu0 0.0
    %5489 = vmatpush.xpose.msra.mxu0 0.0
    %5490 = vmatpush.xpose.msra.mxu0 %v5473
    %5491 = vmatmul.f32.gmra.mxu0 %v5471
    %v5492 = vpop.f32.mrf.mxu0
    %v5493 = vadd.f32 0.0, %v5492
    %5494 = vdwg.mxu0
    %v5495 = vmul.f32 %v5493, 0.25
    %v5496 = vadd.f32 %v5495, %v391
    %v5497 = vsel %vm3483, %v5496, -inf
    %5498 = vmax.xlane.f32.xlu0 %v5497
    %v5499 = vpop.xlane.xlu0 %5498
    %v5500 = vsub.f32 %v5496, %v5499
    %v5501 = vmul.f32 %v5500, 1.442695
    %v5502 = vpow.pop %v5501
    %v5503 = vsel %vm3483, %v5502, 0.0
    %5504 = vadd.xlane.f32.xlu0 %v5503
    %v5505 = vpop.xlane.xlu0 %5504
    %v5506 = vrcp.pop %v5505
    %v5507 = vmul.f32 %v5505, %v5506
    %v5508 = vsub.f32 1.0, %v5507
    %v5509 = vmul.f32 %v5506, %v5508
    %v5510 = vadd.f32 %v5506, %v5509
    %vm5511 = vweird.f32 %v5505
    %vm5512 = vweird.f32 %v5506
    %vm5513 = vmor %vm5511, %vm5512
    %v5514 = vsel %vm5513, %v5506, %v5510
    %v5515 = vand.u32 2147483647, %v5505
    %vm5516 = vcmp.eq.f32.partialorder %v5515, 8.507059e+37
    %v5517 = vand.u32 %v5505, 2147483648
    %v5518 = vor.u32 1.1754944e-38, %v5517
    %v5519 = vsel %vm5516, %v5518, %v5514
    %v5520 = vmul.f32 %v5502, %v5519
    %5521 = vrot.lane.b32.xlu0 %v5305, 96
    %v5522 = vpop.permute.xlu0 %5521
    %v5525 = vsel %vm3483, %v5520, 0
    %5527 = vmatpush.msra.mxu0 0.0
    %5528 = vmatpush.msra.mxu0 0.0
    %5529 = vmatpush.msra.mxu0 0.0
    %5530 = vmatpush.msra.mxu0 0.0
    %5531 = vmatpush.msra.mxu0 0.0
    %5532 = vmatpush.msra.mxu0 0.0
    %5533 = vmatpush.msra.mxu0 0.0
    %5534 = vmatpush.msra.mxu0 0.0
    %5535 = vmatpush.msra.mxu0 0.0
    %5536 = vmatpush.msra.mxu0 0.0
    %5537 = vmatpush.msra.mxu0 0.0
    %5538 = vmatpush.msra.mxu0 0.0
    %5539 = vmatpush.msra.mxu0 0.0
    %5540 = vmatpush.msra.mxu0 0.0
    %5541 = vmatpush.msra.mxu0 0.0
    %5542 = vmatpush.msra.mxu0 %v5522
    %5543 = vmatmul.f32.gmra.mxu0 %v5525
    %v5544 = vpop.f32.mrf.mxu0
    %v5545 = vadd.f32 0.0, %v5544
    %5546 = vdwg.mxu0
    %5547 = vrot.lane.b32.xlu0 %v5282, 80
    %v5548 = vpop.permute.xlu0 %5547
    %5549 = vrot.lane.b32.xlu0 %v5282, 16
    %v5550 = vpop.permute.xlu0 %5549
    %v5551 = vsel %vm480, %v5548, 0
    %v5553 = vsel %vm480, %v5550, 0
    %5555 = vmatpush.xpose.msra.mxu0 0.0
    %5556 = vmatpush.xpose.msra.mxu0 0.0
    %5557 = vmatpush.xpose.msra.mxu0 0.0
    %5558 = vmatpush.xpose.msra.mxu0 0.0
    %5559 = vmatpush.xpose.msra.mxu0 0.0
    %5560 = vmatpush.xpose.msra.mxu0 0.0
    %5561 = vmatpush.xpose.msra.mxu0 0.0
    %5562 = vmatpush.xpose.msra.mxu0 0.0
    %5563 = vmatpush.xpose.msra.mxu0 0.0
    %5564 = vmatpush.xpose.msra.mxu0 0.0
    %5565 = vmatpush.xpose.msra.mxu0 0.0
    %5566 = vmatpush.xpose.msra.mxu0 0.0
    %5567 = vmatpush.xpose.msra.mxu0 0.0
    %5568 = vmatpush.xpose.msra.mxu0 0.0
    %5569 = vmatpush.xpose.msra.mxu0 0.0
    %5570 = vmatpush.xpose.msra.mxu0 %v5553
    %5571 = vmatmul.f32.gmra.mxu0 %v5551
    %v5572 = vpop.f32.mrf.mxu0
    %v5573 = vadd.f32 0.0, %v5572
    %5574 = vdwg.mxu0
    %v5575 = vmul.f32 %v5573, 0.25
    %v5576 = vadd.f32 %v5575, %v391
    %v5577 = vsel %vm3483, %v5576, -inf
    %5578 = vmax.xlane.f32.xlu0 %v5577
    %v5579 = vpop.xlane.xlu0 %5578
    %v5580 = vsub.f32 %v5576, %v5579
    %v5581 = vmul.f32 %v5580, 1.442695
    %v5582 = vpow.pop %v5581
    %v5583 = vsel %vm3483, %v5582, 0.0
    %5584 = vadd.xlane.f32.xlu0 %v5583
    %v5585 = vpop.xlane.xlu0 %5584
    %v5586 = vrcp.pop %v5585
    %v5587 = vmul.f32 %v5585, %v5586
    %v5588 = vsub.f32 1.0, %v5587
    %v5589 = vmul.f32 %v5586, %v5588
    %v5590 = vadd.f32 %v5586, %v5589
    %vm5591 = vweird.f32 %v5585
    %vm5592 = vweird.f32 %v5586
    %vm5593 = vmor %vm5591, %vm5592
    %v5594 = vsel %vm5593, %v5586, %v5590
    %v5595 = vand.u32 2147483647, %v5585
    %vm5596 = vcmp.eq.f32.partialorder %v5595, 8.507059e+37
    %v5597 = vand.u32 %v5585, 2147483648
    %v5598 = vor.u32 1.1754944e-38, %v5597
    %v5599 = vsel %vm5596, %v5598, %v5594
    %v5600 = vmul.f32 %v5582, %v5599
    %5601 = vrot.lane.b32.xlu0 %v5305, 80
    %v5602 = vpop.permute.xlu0 %5601
    %v5605 = vsel %vm3483, %v5600, 0
    %5607 = vmatpush.msra.mxu0 0.0
    %5608 = vmatpush.msra.mxu0 0.0
    %5609 = vmatpush.msra.mxu0 0.0
    %5610 = vmatpush.msra.mxu0 0.0
    %5611 = vmatpush.msra.mxu0 0.0
    %5612 = vmatpush.msra.mxu0 0.0
    %5613 = vmatpush.msra.mxu0 0.0
    %5614 = vmatpush.msra.mxu0 0.0
    %5615 = vmatpush.msra.mxu0 0.0
    %5616 = vmatpush.msra.mxu0 0.0
    %5617 = vmatpush.msra.mxu0 0.0
    %5618 = vmatpush.msra.mxu0 0.0
    %5619 = vmatpush.msra.mxu0 0.0
    %5620 = vmatpush.msra.mxu0 0.0
    %5621 = vmatpush.msra.mxu0 0.0
    %5622 = vmatpush.msra.mxu0 %v5602
    %5623 = vmatmul.f32.gmra.mxu0 %v5605
    %v5624 = vpop.f32.mrf.mxu0
    %v5625 = vadd.f32 0.0, %v5624
    %5626 = vdwg.mxu0
    %5628 = vrot.lane.b32.xlu0 %v5465, 16
    %v5629 = vpop.permute.xlu0 %5628
    %5632 = vrot.lane.b32.xlu0 %v5545, 32
    %v5633 = vpop.permute.xlu0 %5632
    %5636 = vrot.lane.b32.xlu0 %v5625, 48
    %v5637 = vpop.permute.xlu0 %5636
    %v5639 = vsel %vm480, %v5384, %v5629
    %v5640 = vsel %vm1007, %v5639, %v5633
    %v5641 = vsel %vm1010, %v5640, %v5637
    %5643 = vrot.lane.b32.xlu0 %v5285, 64
    %v5644 = vpop.permute.xlu0 %5643
    %v5645 = vsel %vm480, %v5285, 0
    %v5647 = vsel %vm480, %v5644, 0
    %5649 = vmatpush.xpose.msra.mxu0 0.0
    %5650 = vmatpush.xpose.msra.mxu0 0.0
    %5651 = vmatpush.xpose.msra.mxu0 0.0
    %5652 = vmatpush.xpose.msra.mxu0 0.0
    %5653 = vmatpush.xpose.msra.mxu0 0.0
    %5654 = vmatpush.xpose.msra.mxu0 0.0
    %5655 = vmatpush.xpose.msra.mxu0 0.0
    %5656 = vmatpush.xpose.msra.mxu0 0.0
    %5657 = vmatpush.xpose.msra.mxu0 0.0
    %5658 = vmatpush.xpose.msra.mxu0 0.0
    %5659 = vmatpush.xpose.msra.mxu0 0.0
    %5660 = vmatpush.xpose.msra.mxu0 0.0
    %5661 = vmatpush.xpose.msra.mxu0 0.0
    %5662 = vmatpush.xpose.msra.mxu0 0.0
    %5663 = vmatpush.xpose.msra.mxu0 0.0
    %5664 = vmatpush.xpose.msra.mxu0 %v5647
    %5665 = vmatmul.f32.gmra.mxu0 %v5645
    %v5666 = vpop.f32.mrf.mxu0
    %v5667 = vadd.f32 0.0, %v5666
    %5668 = vdwg.mxu0
    %v5669 = vmul.f32 %v5667, 0.25
    %v5670 = vadd.f32 %v5669, %v391
    %v5671 = vsel %vm3483, %v5670, -inf
    %5672 = vmax.xlane.f32.xlu0 %v5671
    %v5673 = vpop.xlane.xlu0 %5672
    %v5674 = vsub.f32 %v5670, %v5673
    %v5675 = vmul.f32 %v5674, 1.442695
    %v5676 = vpow.pop %v5675
    %v5677 = vsel %vm3483, %v5676, 0.0
    %5678 = vadd.xlane.f32.xlu0 %v5677
    %v5679 = vpop.xlane.xlu0 %5678
    %v5680 = vrcp.pop %v5679
    %v5681 = vmul.f32 %v5679, %v5680
    %v5682 = vsub.f32 1.0, %v5681
    %v5683 = vmul.f32 %v5680, %v5682
    %v5684 = vadd.f32 %v5680, %v5683
    %vm5685 = vweird.f32 %v5679
    %vm5686 = vweird.f32 %v5680
    %vm5687 = vmor %vm5685, %vm5686
    %v5688 = vsel %vm5687, %v5680, %v5684
    %v5689 = vand.u32 2147483647, %v5679
    %vm5690 = vcmp.eq.f32.partialorder %v5689, 8.507059e+37
    %v5691 = vand.u32 %v5679, 2147483648
    %v5692 = vor.u32 1.1754944e-38, %v5691
    %v5693 = vsel %vm5690, %v5692, %v5688
    %v5694 = vmul.f32 %v5676, %v5693
    %v5696 = vsel %vm3483, %v5694, 0
    %5698 = vmatpush.msra.mxu0 0.0
    %5699 = vmatpush.msra.mxu0 0.0
    %5700 = vmatpush.msra.mxu0 0.0
    %5701 = vmatpush.msra.mxu0 0.0
    %5702 = vmatpush.msra.mxu0 0.0
    %5703 = vmatpush.msra.mxu0 0.0
    %5704 = vmatpush.msra.mxu0 0.0
    %5705 = vmatpush.msra.mxu0 0.0
    %5706 = vmatpush.msra.mxu0 0.0
    %5707 = vmatpush.msra.mxu0 0.0
    %5708 = vmatpush.msra.mxu0 0.0
    %5709 = vmatpush.msra.mxu0 0.0
    %5710 = vmatpush.msra.mxu0 0.0
    %5711 = vmatpush.msra.mxu0 0.0
    %5712 = vmatpush.msra.mxu0 0.0
    %5713 = vmatpush.msra.mxu0 %v5308
    %5714 = vmatmul.f32.gmra.mxu0 %v5696
    %v5715 = vpop.f32.mrf.mxu0
    %v5716 = vadd.f32 0.0, %v5715
    %5717 = vdwg.mxu0
    %5718 = vrot.lane.b32.xlu0 %v5285, 112
    %v5719 = vpop.permute.xlu0 %5718
    %5720 = vrot.lane.b32.xlu0 %v5285, 48
    %v5721 = vpop.permute.xlu0 %5720
    %v5722 = vsel %vm480, %v5719, 0
    %v5724 = vsel %vm480, %v5721, 0
    %5726 = vmatpush.xpose.msra.mxu0 0.0
    %5727 = vmatpush.xpose.msra.mxu0 0.0
    %5728 = vmatpush.xpose.msra.mxu0 0.0
    %5729 = vmatpush.xpose.msra.mxu0 0.0
    %5730 = vmatpush.xpose.msra.mxu0 0.0
    %5731 = vmatpush.xpose.msra.mxu0 0.0
    %5732 = vmatpush.xpose.msra.mxu0 0.0
    %5733 = vmatpush.xpose.msra.mxu0 0.0
    %5734 = vmatpush.xpose.msra.mxu0 0.0
    %5735 = vmatpush.xpose.msra.mxu0 0.0
    %5736 = vmatpush.xpose.msra.mxu0 0.0
    %5737 = vmatpush.xpose.msra.mxu0 0.0
    %5738 = vmatpush.xpose.msra.mxu0 0.0
    %5739 = vmatpush.xpose.msra.mxu0 0.0
    %5740 = vmatpush.xpose.msra.mxu0 0.0
    %5741 = vmatpush.xpose.msra.mxu0 %v5724
    %5742 = vmatmul.f32.gmra.mxu0 %v5722
    %v5743 = vpop.f32.mrf.mxu0
    %v5744 = vadd.f32 0.0, %v5743
    %5745 = vdwg.mxu0
    %v5746 = vmul.f32 %v5744, 0.25
    %v5747 = vadd.f32 %v5746, %v391
    %v5748 = vsel %vm3483, %v5747, -inf
    %5749 = vmax.xlane.f32.xlu0 %v5748
    %v5750 = vpop.xlane.xlu0 %5749
    %v5751 = vsub.f32 %v5747, %v5750
    %v5752 = vmul.f32 %v5751, 1.442695
    %v5753 = vpow.pop %v5752
    %v5754 = vsel %vm3483, %v5753, 0.0
    %5755 = vadd.xlane.f32.xlu0 %v5754
    %v5756 = vpop.xlane.xlu0 %5755
    %v5757 = vrcp.pop %v5756
    %v5758 = vmul.f32 %v5756, %v5757
    %v5759 = vsub.f32 1.0, %v5758
    %v5760 = vmul.f32 %v5757, %v5759
    %v5761 = vadd.f32 %v5757, %v5760
    %vm5762 = vweird.f32 %v5756
    %vm5763 = vweird.f32 %v5757
    %vm5764 = vmor %vm5762, %vm5763
    %v5765 = vsel %vm5764, %v5757, %v5761
    %v5766 = vand.u32 2147483647, %v5756
    %vm5767 = vcmp.eq.f32.partialorder %v5766, 8.507059e+37
    %v5768 = vand.u32 %v5756, 2147483648
    %v5769 = vor.u32 1.1754944e-38, %v5768
    %v5770 = vsel %vm5767, %v5769, %v5765
    %v5771 = vmul.f32 %v5753, %v5770
    %5773 = vrot.lane.b32.xlu0 %v5308, 112
    %v5774 = vpop.permute.xlu0 %5773
    %v5777 = vsel %vm3483, %v5771, 0
    %5779 = vmatpush.msra.mxu0 0.0
    %5780 = vmatpush.msra.mxu0 0.0
    %5781 = vmatpush.msra.mxu0 0.0
    %5782 = vmatpush.msra.mxu0 0.0
    %5783 = vmatpush.msra.mxu0 0.0
    %5784 = vmatpush.msra.mxu0 0.0
    %5785 = vmatpush.msra.mxu0 0.0
    %5786 = vmatpush.msra.mxu0 0.0
    %5787 = vmatpush.msra.mxu0 0.0
    %5788 = vmatpush.msra.mxu0 0.0
    %5789 = vmatpush.msra.mxu0 0.0
    %5790 = vmatpush.msra.mxu0 0.0
    %5791 = vmatpush.msra.mxu0 0.0
    %5792 = vmatpush.msra.mxu0 0.0
    %5793 = vmatpush.msra.mxu0 0.0
    %5794 = vmatpush.msra.mxu0 %v5774
    %5795 = vmatmul.f32.gmra.mxu0 %v5777
    %v5796 = vpop.f32.mrf.mxu0
    %v5797 = vadd.f32 0.0, %v5796
    %5798 = vdwg.mxu0
    %5799 = vrot.lane.b32.xlu0 %v5285, 96
    %v5800 = vpop.permute.xlu0 %5799
    %5801 = vrot.lane.b32.xlu0 %v5285, 32
    %v5802 = vpop.permute.xlu0 %5801
    %v5803 = vsel %vm480, %v5800, 0
    %v5805 = vsel %vm480, %v5802, 0
    %5807 = vmatpush.xpose.msra.mxu0 0.0
    %5808 = vmatpush.xpose.msra.mxu0 0.0
    %5809 = vmatpush.xpose.msra.mxu0 0.0
    %5810 = vmatpush.xpose.msra.mxu0 0.0
    %5811 = vmatpush.xpose.msra.mxu0 0.0
    %5812 = vmatpush.xpose.msra.mxu0 0.0
    %5813 = vmatpush.xpose.msra.mxu0 0.0
    %5814 = vmatpush.xpose.msra.mxu0 0.0
    %5815 = vmatpush.xpose.msra.mxu0 0.0
    %5816 = vmatpush.xpose.msra.mxu0 0.0
    %5817 = vmatpush.xpose.msra.mxu0 0.0
    %5818 = vmatpush.xpose.msra.mxu0 0.0
    %5819 = vmatpush.xpose.msra.mxu0 0.0
    %5820 = vmatpush.xpose.msra.mxu0 0.0
    %5821 = vmatpush.xpose.msra.mxu0 0.0
    %5822 = vmatpush.xpose.msra.mxu0 %v5805
    %5823 = vmatmul.f32.gmra.mxu0 %v5803
    %v5824 = vpop.f32.mrf.mxu0
    %v5825 = vadd.f32 0.0, %v5824
    %5826 = vdwg.mxu0
    %v5827 = vmul.f32 %v5825, 0.25
    %v5828 = vadd.f32 %v5827, %v391
    %v5829 = vsel %vm3483, %v5828, -inf
    %5830 = vmax.xlane.f32.xlu0 %v5829
    %v5831 = vpop.xlane.xlu0 %5830
    %v5832 = vsub.f32 %v5828, %v5831
    %v5833 = vmul.f32 %v5832, 1.442695
    %v5834 = vpow.pop %v5833
    %v5835 = vsel %vm3483, %v5834, 0.0
    %5836 = vadd.xlane.f32.xlu0 %v5835
    %v5837 = vpop.xlane.xlu0 %5836
    %v5838 = vrcp.pop %v5837
    %v5839 = vmul.f32 %v5837, %v5838
    %v5840 = vsub.f32 1.0, %v5839
    %v5841 = vmul.f32 %v5838, %v5840
    %v5842 = vadd.f32 %v5838, %v5841
    %vm5843 = vweird.f32 %v5837
    %vm5844 = vweird.f32 %v5838
    %vm5845 = vmor %vm5843, %vm5844
    %v5846 = vsel %vm5845, %v5838, %v5842
    %v5847 = vand.u32 2147483647, %v5837
    %vm5848 = vcmp.eq.f32.partialorder %v5847, 8.507059e+37
    %v5849 = vand.u32 %v5837, 2147483648
    %v5850 = vor.u32 1.1754944e-38, %v5849
    %v5851 = vsel %vm5848, %v5850, %v5846
    %v5852 = vmul.f32 %v5834, %v5851
    %5853 = vrot.lane.b32.xlu0 %v5308, 96
    %v5854 = vpop.permute.xlu0 %5853
    %v5857 = vsel %vm3483, %v5852, 0
    %5859 = vmatpush.msra.mxu0 0.0
    %5860 = vmatpush.msra.mxu0 0.0
    %5861 = vmatpush.msra.mxu0 0.0
    %5862 = vmatpush.msra.mxu0 0.0
    %5863 = vmatpush.msra.mxu0 0.0
    %5864 = vmatpush.msra.mxu0 0.0
    %5865 = vmatpush.msra.mxu0 0.0
    %5866 = vmatpush.msra.mxu0 0.0
    %5867 = vmatpush.msra.mxu0 0.0
    %5868 = vmatpush.msra.mxu0 0.0
    %5869 = vmatpush.msra.mxu0 0.0
    %5870 = vmatpush.msra.mxu0 0.0
    %5871 = vmatpush.msra.mxu0 0.0
    %5872 = vmatpush.msra.mxu0 0.0
    %5873 = vmatpush.msra.mxu0 0.0
    %5874 = vmatpush.msra.mxu0 %v5854
    %5875 = vmatmul.f32.gmra.mxu0 %v5857
    %v5876 = vpop.f32.mrf.mxu0
    %v5877 = vadd.f32 0.0, %v5876
    %5878 = vdwg.mxu0
    %5879 = vrot.lane.b32.xlu0 %v5285, 80
    %v5880 = vpop.permute.xlu0 %5879
    %5881 = vrot.lane.b32.xlu0 %v5285, 16
    %v5882 = vpop.permute.xlu0 %5881
    %v5883 = vsel %vm480, %v5880, 0
    %v5885 = vsel %vm480, %v5882, 0
    %5887 = vmatpush.xpose.msra.mxu0 0.0
    %5888 = vmatpush.xpose.msra.mxu0 0.0
    %5889 = vmatpush.xpose.msra.mxu0 0.0
    %5890 = vmatpush.xpose.msra.mxu0 0.0
    %5891 = vmatpush.xpose.msra.mxu0 0.0
    %5892 = vmatpush.xpose.msra.mxu0 0.0
    %5893 = vmatpush.xpose.msra.mxu0 0.0
    %5894 = vmatpush.xpose.msra.mxu0 0.0
    %5895 = vmatpush.xpose.msra.mxu0 0.0
    %5896 = vmatpush.xpose.msra.mxu0 0.0
    %5897 = vmatpush.xpose.msra.mxu0 0.0
    %5898 = vmatpush.xpose.msra.mxu0 0.0
    %5899 = vmatpush.xpose.msra.mxu0 0.0
    %5900 = vmatpush.xpose.msra.mxu0 0.0
    %5901 = vmatpush.xpose.msra.mxu0 0.0
    %5902 = vmatpush.xpose.msra.mxu0 %v5885
    %5903 = vmatmul.f32.gmra.mxu0 %v5883
    %v5904 = vpop.f32.mrf.mxu0
    %v5905 = vadd.f32 0.0, %v5904
    %5906 = vdwg.mxu0
    %v5907 = vmul.f32 %v5905, 0.25
    %v5908 = vadd.f32 %v5907, %v391
    %v5909 = vsel %vm3483, %v5908, -inf
    %5910 = vmax.xlane.f32.xlu0 %v5909
    %v5911 = vpop.xlane.xlu0 %5910
    %v5912 = vsub.f32 %v5908, %v5911
    %v5913 = vmul.f32 %v5912, 1.442695
    %v5914 = vpow.pop %v5913
    %v5915 = vsel %vm3483, %v5914, 0.0
    %5916 = vadd.xlane.f32.xlu0 %v5915
    %v5917 = vpop.xlane.xlu0 %5916
    %v5918 = vrcp.pop %v5917
    %v5919 = vmul.f32 %v5917, %v5918
    %v5920 = vsub.f32 1.0, %v5919
    %v5921 = vmul.f32 %v5918, %v5920
    %v5922 = vadd.f32 %v5918, %v5921
    %vm5923 = vweird.f32 %v5917
    %vm5924 = vweird.f32 %v5918
    %vm5925 = vmor %vm5923, %vm5924
    %v5926 = vsel %vm5925, %v5918, %v5922
    %v5927 = vand.u32 2147483647, %v5917
    %vm5928 = vcmp.eq.f32.partialorder %v5927, 8.507059e+37
    %v5929 = vand.u32 %v5917, 2147483648
    %v5930 = vor.u32 1.1754944e-38, %v5929
    %v5931 = vsel %vm5928, %v5930, %v5926
    %v5932 = vmul.f32 %v5914, %v5931
    %5933 = vrot.lane.b32.xlu0 %v5308, 80
    %v5934 = vpop.permute.xlu0 %5933
    %v5937 = vsel %vm3483, %v5932, 0
    %5939 = vmatpush.msra.mxu0 0.0
    %5940 = vmatpush.msra.mxu0 0.0
    %5941 = vmatpush.msra.mxu0 0.0
    %5942 = vmatpush.msra.mxu0 0.0
    %5943 = vmatpush.msra.mxu0 0.0
    %5944 = vmatpush.msra.mxu0 0.0
    %5945 = vmatpush.msra.mxu0 0.0
    %5946 = vmatpush.msra.mxu0 0.0
    %5947 = vmatpush.msra.mxu0 0.0
    %5948 = vmatpush.msra.mxu0 0.0
    %5949 = vmatpush.msra.mxu0 0.0
    %5950 = vmatpush.msra.mxu0 0.0
    %5951 = vmatpush.msra.mxu0 0.0
    %5952 = vmatpush.msra.mxu0 0.0
    %5953 = vmatpush.msra.mxu0 0.0
    %5954 = vmatpush.msra.mxu0 %v5934
    %5955 = vmatmul.f32.gmra.mxu0 %v5937
    %v5956 = vpop.f32.mrf.mxu0
    %v5957 = vadd.f32 0.0, %v5956
    %5958 = vdwg.mxu0
    %5960 = vrot.lane.b32.xlu0 %v5797, 16
    %v5961 = vpop.permute.xlu0 %5960
    %5964 = vrot.lane.b32.xlu0 %v5877, 32
    %v5965 = vpop.permute.xlu0 %5964
    %5968 = vrot.lane.b32.xlu0 %v5957, 48
    %v5969 = vpop.permute.xlu0 %5968
    %v5971 = vsel %vm480, %v5716, %v5961
    %v5972 = vsel %vm1007, %v5971, %v5965
    %v5973 = vsel %vm1010, %v5972, %v5969
    %s5974 = scalar_lea.vmem [#allocation10], 64
    %v5975 = vld [vmem:[%s5974] sm:$0xff]
    %v5976 = vld [vmem:[%s5974 + $0x8] sm:$0xff]
    %v5977 = vld [vmem:[%s5974 + $0x10] sm:$0xff]
    %v5978 = vld [vmem:[%s5974 + $0x18] sm:$0xff]
    %v5979 = vld [vmem:[%s5974 + $0x20] sm:$0xff]
    %v5980 = vld [vmem:[%s5974 + $0x28] sm:$0xff]
    %v5981 = vld [vmem:[%s5974 + $0x30] sm:$0xff]
    %v5982 = vld [vmem:[%s5974 + $0x38] sm:$0xff]
    %v5983 = vperm.slane %v5236, 1
    %v5985 = vsel %vm412, %v5641, 0
    %v5988 = vsel %vm412, %v5973, 0
    %5990 = vmatpush.msra.mxu0 0.0
    %5991 = vmatpush.msra.mxu0 0.0
    %5992 = vmatpush.msra.mxu0 0.0
    %5993 = vmatpush.msra.mxu0 0.0
    %5994 = vmatpush.msra.mxu0 0.0
    %5995 = vmatpush.msra.mxu0 0.0
    %5996 = vmatpush.msra.mxu0 0.0
    %5997 = vmatpush.msra.mxu0 0.0
    %5998 = vmatpush.msra.mxu0 %v5982
    %5999 = vmatpush.msra.mxu0 %v5981
    %6000 = vmatpush.msra.mxu0 %v5980
    %6001 = vmatpush.msra.mxu0 %v5979
    %6002 = vmatpush.msra.mxu0 %v5978
    %6003 = vmatpush.msra.mxu0 %v5977
    %6004 = vmatpush.msra.mxu0 %v5976
    %6005 = vmatpush.msra.mxu0 %v5975
    %6006 = vmatmul.f32.gmra.mxu0 %v5985
    %v6007 = vpop.f32.mrf.mxu0
    %v6008 = vadd.f32 %v5983, %v6007
    %6009 = vmatmul.f32.gmra.mxu0 %v5988
    %v6010 = vpop.f32.mrf.mxu0
    %v6011 = vadd.f32 %v5983, %v6010
    %6012 = vdwg.mxu0
    %v6013 = vadd.f32 %v5233, %v6008
    %v6014 = vadd.f32 %v5234, %v6011
    %v6015 = vsel %vm412, %v6013, 0.0
    %6016 = vadd.xlane.f32.xlu0 %v6015
    %v6017 = vpop.xlane.xlu0 %6016
    %v6018 = vsel %vm412, %v6014, 0.0
    %6019 = vadd.xlane.f32.xlu0 %v6018
    %v6020 = vpop.xlane.xlu0 %6019
    %v6021 = vmul.f32 %v6017, %v1622
    %v6022 = vmul.f32 %v6020, %v1622
    %v6023 = vsub.f32 %v6013, %v6021
    %v6024 = vsub.f32 %v6014, %v6022
    %v6025 = vmul.f32 %v6023, %v6023
    %v6026 = vmul.f32 %v6024, %v6024
    %v6027 = vsel %vm412, %v6025, 0.0
    %6028 = vadd.xlane.f32.xlu0 %v6027
    %v6029 = vpop.xlane.xlu0 %6028
    %v6030 = vsel %vm412, %v6026, 0.0
    %6031 = vadd.xlane.f32.xlu0 %v6030
    %v6032 = vpop.xlane.xlu0 %6031
    %v6033 = vmul.f32 %v6029, %v1622
    %v6034 = vmul.f32 %v6032, %v1622
    %v6035 = vadd.f32 %v6033, 1e-05
    %v6036 = vadd.f32 %v6034, 1e-05
    %v6037 = vrsqrt.pop %v6035
    %v6038 = vmul.f32 %v6037, %v6035
    %v6039 = vmul.f32 %v6038, %v6037
    %v6040 = vmul.f32 0.5, %v6039
    %v6041 = vsub.f32 1.5, %v6040
    %v6042 = vmul.f32 %v6037, %v6041
    %vm6043 = vweird.f32 %v6035
    %vm6044 = vweird.f32 %v6037
    %vm6045 = vmor %vm6043, %vm6044
    %v6046 = vsel %vm6045, %v6037, %v6042
    %v6047 = vrsqrt.pop %v6036
    %v6048 = vmul.f32 %v6047, %v6036
    %v6049 = vmul.f32 %v6048, %v6047
    %v6050 = vmul.f32 0.5, %v6049
    %v6051 = vsub.f32 1.5, %v6050
    %v6052 = vmul.f32 %v6047, %v6051
    %vm6053 = vweird.f32 %v6036
    %vm6054 = vweird.f32 %v6047
    %vm6055 = vmor %vm6053, %vm6054
    %v6056 = vsel %vm6055, %v6047, %v6052
    %v6057 = vmul.f32 %v6023, %v6046
    %v6058 = vmul.f32 %v6024, %v6056
    %v6059 = vperm.slane %v5236, 7
    %v6060 = vmul.f32 %v6057, %v6059
    %v6061 = vmul.f32 %v6058, %v6059
    %v6062 = vperm.slane %v5238, 0
    %v6063 = vadd.f32 %v6060, %v6062
    %v6064 = vadd.f32 %v6061, %v6062
    %s6065 = scalar_lea.vmem [#allocation12], 64
    %v6066 = vld [vmem:[%s6065] sm:$0xff]
    %v6067 = vld [vmem:[%s6065 + $0x8] sm:$0xff]
    %v6068 = vld [vmem:[%s6065 + $0x10] sm:$0xff]
    %v6069 = vld [vmem:[%s6065 + $0x18] sm:$0xff]
    %v6070 = vld [vmem:[%s6065 + $0x20] sm:$0xff]
    %v6071 = vld [vmem:[%s6065 + $0x28] sm:$0xff]
    %v6072 = vld [vmem:[%s6065 + $0x30] sm:$0xff]
    %v6073 = vld [vmem:[%s6065 + $0x38] sm:$0xff]
    %v6074 = vperm.slane %v5236, 2
    %v6076 = vsel %vm412, %v6063, 0
    %v6079 = vsel %vm412, %v6064, 0
    %6081 = vmatpush.msra.mxu0 0.0
    %6082 = vmatpush.msra.mxu0 0.0
    %6083 = vmatpush.msra.mxu0 0.0
    %6084 = vmatpush.msra.mxu0 0.0
    %6085 = vmatpush.msra.mxu0 0.0
    %6086 = vmatpush.msra.mxu0 0.0
    %6087 = vmatpush.msra.mxu0 0.0
    %6088 = vmatpush.msra.mxu0 0.0
    %6089 = vmatpush.msra.mxu0 %v6073
    %6090 = vmatpush.msra.mxu0 %v6072
    %6091 = vmatpush.msra.mxu0 %v6071
    %6092 = vmatpush.msra.mxu0 %v6070
    %6093 = vmatpush.msra.mxu0 %v6069
    %6094 = vmatpush.msra.mxu0 %v6068
    %6095 = vmatpush.msra.mxu0 %v6067
    %6096 = vmatpush.msra.mxu0 %v6066
    %6097 = vmatmul.f32.gmra.mxu0 %v6076
    %v6098 = vpop.f32.mrf.mxu0
    %v6099 = vadd.f32 %v6074, %v6098
    %6100 = vmatmul.f32.gmra.mxu0 %v6079
    %v6101 = vpop.f32.mrf.mxu0
    %v6102 = vadd.f32 %v6074, %v6101
    %6103 = vdwg.mxu0
    %s6104 = scalar_lea.vmem [#allocation13], 64
    %v6105 = vld [vmem:[%s6104] sm:$0xff]
    %v6106 = vld [vmem:[%s6104 + $0x8] sm:$0xff]
    %v6107 = vld [vmem:[%s6104 + $0x10] sm:$0xff]
    %v6108 = vld [vmem:[%s6104 + $0x18] sm:$0xff]
    %v6109 = vld [vmem:[%s6104 + $0x20] sm:$0xff]
    %v6110 = vld [vmem:[%s6104 + $0x28] sm:$0xff]
    %v6111 = vld [vmem:[%s6104 + $0x30] sm:$0xff]
    %v6112 = vld [vmem:[%s6104 + $0x38] sm:$0xff]
    %v6113 = vperm.slane %v5236, 3
    %6114 = vmatpush.msra.mxu0 0.0
    %6115 = vmatpush.msra.mxu0 0.0
    %6116 = vmatpush.msra.mxu0 0.0
    %6117 = vmatpush.msra.mxu0 0.0
    %6118 = vmatpush.msra.mxu0 0.0
    %6119 = vmatpush.msra.mxu0 0.0
    %6120 = vmatpush.msra.mxu0 0.0
    %6121 = vmatpush.msra.mxu0 0.0
    %6122 = vmatpush.msra.mxu0 %v6112
    %6123 = vmatpush.msra.mxu0 %v6111
    %6124 = vmatpush.msra.mxu0 %v6110
    %6125 = vmatpush.msra.mxu0 %v6109
    %6126 = vmatpush.msra.mxu0 %v6108
    %6127 = vmatpush.msra.mxu0 %v6107
    %6128 = vmatpush.msra.mxu0 %v6106
    %6129 = vmatpush.msra.mxu0 %v6105
    %6130 = vmatmul.f32.gmra.mxu0 %v4257
    %v6131 = vpop.f32.mrf.mxu0
    %v6132 = vadd.f32 %v6113, %v6131
    %6133 = vmatmul.f32.gmra.mxu0 %v4260
    %v6134 = vpop.f32.mrf.mxu0
    %v6135 = vadd.f32 %v6113, %v6134
    %6136 = vmatmul.f32.gmra.mxu0 %v4263
    %v6137 = vpop.f32.mrf.mxu0
    %v6138 = vadd.f32 %v6113, %v6137
    %6139 = vdwg.mxu0
    %v6141 = vsel %vm480, %v6099, 0
    %v6144 = vsel %vm480, %v6132, 0
    %v6147 = vsel %vm480, %v6135, 0
    %6149 = vmatpush.xpose.msra.mxu0 0.0
    %6150 = vmatpush.xpose.msra.mxu0 0.0
    %6151 = vmatpush.xpose.msra.mxu0 0.0
    %6152 = vmatpush.xpose.msra.mxu0 0.0
    %6153 = vmatpush.xpose.msra.mxu0 0.0
    %6154 = vmatpush.xpose.msra.mxu0 0.0
    %6155 = vmatpush.xpose.msra.mxu0 0.0
    %6156 = vmatpush.xpose.msra.mxu0 0.0
    %6157 = vmatpush.xpose.msra.mxu0 0.0
    %6158 = vmatpush.xpose.msra.mxu0 0.0
    %6159 = vmatpush.xpose.msra.mxu0 0.0
    %6160 = vmatpush.xpose.msra.mxu0 0.0
    %6161 = vmatpush.xpose.msra.mxu0 0.0
    %6162 = vmatpush.xpose.msra.mxu0 0.0
    %6163 = vmatpush.xpose.msra.mxu0 %v6147
    %6164 = vmatpush.xpose.msra.mxu0 %v6144
    %6165 = vmatmul.f32.gmra.mxu0 %v6141
    %v6166 = vpop.f32.mrf.mxu0
    %v6167 = vadd.f32 0.0, %v6166
    %6168 = vdwg.mxu0
    %v6169 = vmul.f32 %v6167, 0.25
    %v6170 = vsel %vm517, %v6169, -inf
    %6171 = vmax.xlane.f32.xlu0 %v6170
    %v6172 = vpop.xlane.xlu0 %6171
    %v6173 = vsub.f32 %v6169, %v6172
    %v6174 = vmul.f32 %v6173, 1.442695
    %v6175 = vpow.pop %v6174
    %v6176 = vsel %vm517, %v6175, 0.0
    %6177 = vadd.xlane.f32.xlu0 %v6176
    %v6178 = vpop.xlane.xlu0 %6177
    %v6179 = vrcp.pop %v6178
    %v6180 = vmul.f32 %v6178, %v6179
    %v6181 = vsub.f32 1.0, %v6180
    %v6182 = vmul.f32 %v6179, %v6181
    %v6183 = vadd.f32 %v6179, %v6182
    %vm6184 = vweird.f32 %v6178
    %vm6185 = vweird.f32 %v6179
    %vm6186 = vmor %vm6184, %vm6185
    %v6187 = vsel %vm6186, %v6179, %v6183
    %v6188 = vand.u32 2147483647, %v6178
    %vm6189 = vcmp.eq.f32.partialorder %v6188, 8.507059e+37
    %v6190 = vand.u32 %v6178, 2147483648
    %v6191 = vor.u32 1.1754944e-38, %v6190
    %v6192 = vsel %vm6189, %v6191, %v6187
    %v6193 = vmul.f32 %v6175, %v6192
    %6194 = vrot.lane.b32.xlu0 %v6132, 64
    %v6195 = vpop.permute.xlu0 %6194
    %6196 = vrot.lane.b32.xlu0 %v6135, 64
    %v6197 = vpop.permute.xlu0 %6196
    %v6200 = vsel %vm517, %v6193, 0
    %v6202 = vsel %vm285, %v6197, 0
    %6204 = vmatpush.msra.mxu0 0.0
    %6205 = vmatpush.msra.mxu0 0.0
    %6206 = vmatpush.msra.mxu0 0.0
    %6207 = vmatpush.msra.mxu0 0.0
    %6208 = vmatpush.msra.mxu0 0.0
    %6209 = vmatpush.msra.mxu0 0.0
    %6210 = vmatpush.msra.mxu0 0.0
    %6211 = vmatpush.msra.mxu0 0.0
    %6212 = vmatpush.msra.mxu0 0.0
    %6213 = vmatpush.msra.mxu0 0.0
    %6214 = vmatpush.msra.mxu0 0.0
    %6215 = vmatpush.msra.mxu0 0.0
    %6216 = vmatpush.msra.mxu0 0.0
    %6217 = vmatpush.msra.mxu0 0.0
    %6218 = vmatpush.msra.mxu0 %v6202
    %6219 = vmatpush.msra.mxu0 %v6195
    %6220 = vmatmul.f32.gmra.mxu0 %v6200
    %v6221 = vpop.f32.mrf.mxu0
    %v6222 = vadd.f32 0.0, %v6221
    %6223 = vdwg.mxu0
    %6224 = vrot.lane.b32.xlu0 %v6099, 112
    %v6225 = vpop.permute.xlu0 %6224
    %6226 = vrot.lane.b32.xlu0 %v6132, 112
    %v6227 = vpop.permute.xlu0 %6226
    %6228 = vrot.lane.b32.xlu0 %v6135, 112
    %v6229 = vpop.permute.xlu0 %6228
    %v6230 = vsel %vm480, %v6225, 0
    %v6232 = vsel %vm480, %v6227, 0
    %v6234 = vsel %vm480, %v6229, 0
    %6236 = vmatpush.xpose.msra.mxu0 0.0
    %6237 = vmatpush.xpose.msra.mxu0 0.0
    %6238 = vmatpush.xpose.msra.mxu0 0.0
    %6239 = vmatpush.xpose.msra.mxu0 0.0
    %6240 = vmatpush.xpose.msra.mxu0 0.0
    %6241 = vmatpush.xpose.msra.mxu0 0.0
    %6242 = vmatpush.xpose.msra.mxu0 0.0
    %6243 = vmatpush.xpose.msra.mxu0 0.0
    %6244 = vmatpush.xpose.msra.mxu0 0.0
    %6245 = vmatpush.xpose.msra.mxu0 0.0
    %6246 = vmatpush.xpose.msra.mxu0 0.0
    %6247 = vmatpush.xpose.msra.mxu0 0.0
    %6248 = vmatpush.xpose.msra.mxu0 0.0
    %6249 = vmatpush.xpose.msra.mxu0 0.0
    %6250 = vmatpush.xpose.msra.mxu0 %v6234
    %6251 = vmatpush.xpose.msra.mxu0 %v6232
    %6252 = vmatmul.f32.gmra.mxu0 %v6230
    %v6253 = vpop.f32.mrf.mxu0
    %v6254 = vadd.f32 0.0, %v6253
    %6255 = vdwg.mxu0
    %v6256 = vmul.f32 %v6254, 0.25
    %v6257 = vsel %vm517, %v6256, -inf
    %6258 = vmax.xlane.f32.xlu0 %v6257
    %v6259 = vpop.xlane.xlu0 %6258
    %v6260 = vsub.f32 %v6256, %v6259
    %v6261 = vmul.f32 %v6260, 1.442695
    %v6262 = vpow.pop %v6261
    %v6263 = vsel %vm517, %v6262, 0.0
    %6264 = vadd.xlane.f32.xlu0 %v6263
    %v6265 = vpop.xlane.xlu0 %6264
    %v6266 = vrcp.pop %v6265
    %v6267 = vmul.f32 %v6265, %v6266
    %v6268 = vsub.f32 1.0, %v6267
    %v6269 = vmul.f32 %v6266, %v6268
    %v6270 = vadd.f32 %v6266, %v6269
    %vm6271 = vweird.f32 %v6265
    %vm6272 = vweird.f32 %v6266
    %vm6273 = vmor %vm6271, %vm6272
    %v6274 = vsel %vm6273, %v6266, %v6270
    %v6275 = vand.u32 2147483647, %v6265
    %vm6276 = vcmp.eq.f32.partialorder %v6275, 8.507059e+37
    %v6277 = vand.u32 %v6265, 2147483648
    %v6278 = vor.u32 1.1754944e-38, %v6277
    %v6279 = vsel %vm6276, %v6278, %v6274
    %v6280 = vmul.f32 %v6262, %v6279
    %6281 = vrot.lane.b32.xlu0 %v6132, 48
    %v6282 = vpop.permute.xlu0 %6281
    %6283 = vrot.lane.b32.xlu0 %v6135, 48
    %v6284 = vpop.permute.xlu0 %6283
    %v6287 = vsel %vm517, %v6280, 0
    %v6289 = vsel %vm285, %v6284, 0
    %6291 = vmatpush.msra.mxu0 0.0
    %6292 = vmatpush.msra.mxu0 0.0
    %6293 = vmatpush.msra.mxu0 0.0
    %6294 = vmatpush.msra.mxu0 0.0
    %6295 = vmatpush.msra.mxu0 0.0
    %6296 = vmatpush.msra.mxu0 0.0
    %6297 = vmatpush.msra.mxu0 0.0
    %6298 = vmatpush.msra.mxu0 0.0
    %6299 = vmatpush.msra.mxu0 0.0
    %6300 = vmatpush.msra.mxu0 0.0
    %6301 = vmatpush.msra.mxu0 0.0
    %6302 = vmatpush.msra.mxu0 0.0
    %6303 = vmatpush.msra.mxu0 0.0
    %6304 = vmatpush.msra.mxu0 0.0
    %6305 = vmatpush.msra.mxu0 %v6289
    %6306 = vmatpush.msra.mxu0 %v6282
    %6307 = vmatmul.f32.gmra.mxu0 %v6287
    %v6308 = vpop.f32.mrf.mxu0
    %v6309 = vadd.f32 0.0, %v6308
    %6310 = vdwg.mxu0
    %6311 = vrot.lane.b32.xlu0 %v6099, 96
    %v6312 = vpop.permute.xlu0 %6311
    %6313 = vrot.lane.b32.xlu0 %v6132, 96
    %v6314 = vpop.permute.xlu0 %6313
    %6315 = vrot.lane.b32.xlu0 %v6135, 96
    %v6316 = vpop.permute.xlu0 %6315
    %v6317 = vsel %vm480, %v6312, 0
    %v6319 = vsel %vm480, %v6314, 0
    %v6321 = vsel %vm480, %v6316, 0
    %6323 = vmatpush.xpose.msra.mxu0 0.0
    %6324 = vmatpush.xpose.msra.mxu0 0.0
    %6325 = vmatpush.xpose.msra.mxu0 0.0
    %6326 = vmatpush.xpose.msra.mxu0 0.0
    %6327 = vmatpush.xpose.msra.mxu0 0.0
    %6328 = vmatpush.xpose.msra.mxu0 0.0
    %6329 = vmatpush.xpose.msra.mxu0 0.0
    %6330 = vmatpush.xpose.msra.mxu0 0.0
    %6331 = vmatpush.xpose.msra.mxu0 0.0
    %6332 = vmatpush.xpose.msra.mxu0 0.0
    %6333 = vmatpush.xpose.msra.mxu0 0.0
    %6334 = vmatpush.xpose.msra.mxu0 0.0
    %6335 = vmatpush.xpose.msra.mxu0 0.0
    %6336 = vmatpush.xpose.msra.mxu0 0.0
    %6337 = vmatpush.xpose.msra.mxu0 %v6321
    %6338 = vmatpush.xpose.msra.mxu0 %v6319
    %6339 = vmatmul.f32.gmra.mxu0 %v6317
    %v6340 = vpop.f32.mrf.mxu0
    %v6341 = vadd.f32 0.0, %v6340
    %6342 = vdwg.mxu0
    %v6343 = vmul.f32 %v6341, 0.25
    %v6344 = vsel %vm517, %v6343, -inf
    %6345 = vmax.xlane.f32.xlu0 %v6344
    %v6346 = vpop.xlane.xlu0 %6345
    %v6347 = vsub.f32 %v6343, %v6346
    %v6348 = vmul.f32 %v6347, 1.442695
    %v6349 = vpow.pop %v6348
    %v6350 = vsel %vm517, %v6349, 0.0
    %6351 = vadd.xlane.f32.xlu0 %v6350
    %v6352 = vpop.xlane.xlu0 %6351
    %v6353 = vrcp.pop %v6352
    %v6354 = vmul.f32 %v6352, %v6353
    %v6355 = vsub.f32 1.0, %v6354
    %v6356 = vmul.f32 %v6353, %v6355
    %v6357 = vadd.f32 %v6353, %v6356
    %vm6358 = vweird.f32 %v6352
    %vm6359 = vweird.f32 %v6353
    %vm6360 = vmor %vm6358, %vm6359
    %v6361 = vsel %vm6360, %v6353, %v6357
    %v6362 = vand.u32 2147483647, %v6352
    %vm6363 = vcmp.eq.f32.partialorder %v6362, 8.507059e+37
    %v6364 = vand.u32 %v6352, 2147483648
    %v6365 = vor.u32 1.1754944e-38, %v6364
    %v6366 = vsel %vm6363, %v6365, %v6361
    %v6367 = vmul.f32 %v6349, %v6366
    %6368 = vrot.lane.b32.xlu0 %v6132, 32
    %v6369 = vpop.permute.xlu0 %6368
    %6370 = vrot.lane.b32.xlu0 %v6135, 32
    %v6371 = vpop.permute.xlu0 %6370
    %v6374 = vsel %vm517, %v6367, 0
    %v6376 = vsel %vm285, %v6371, 0
    %6378 = vmatpush.msra.mxu0 0.0
    %6379 = vmatpush.msra.mxu0 0.0
    %6380 = vmatpush.msra.mxu0 0.0
    %6381 = vmatpush.msra.mxu0 0.0
    %6382 = vmatpush.msra.mxu0 0.0
    %6383 = vmatpush.msra.mxu0 0.0
    %6384 = vmatpush.msra.mxu0 0.0
    %6385 = vmatpush.msra.mxu0 0.0
    %6386 = vmatpush.msra.mxu0 0.0
    %6387 = vmatpush.msra.mxu0 0.0
    %6388 = vmatpush.msra.mxu0 0.0
    %6389 = vmatpush.msra.mxu0 0.0
    %6390 = vmatpush.msra.mxu0 0.0
    %6391 = vmatpush.msra.mxu0 0.0
    %6392 = vmatpush.msra.mxu0 %v6376
    %6393 = vmatpush.msra.mxu0 %v6369
    %6394 = vmatmul.f32.gmra.mxu0 %v6374
    %v6395 = vpop.f32.mrf.mxu0
    %v6396 = vadd.f32 0.0, %v6395
    %6397 = vdwg.mxu0
    %6398 = vrot.lane.b32.xlu0 %v6099, 80
    %v6399 = vpop.permute.xlu0 %6398
    %6400 = vrot.lane.b32.xlu0 %v6132, 80
    %v6401 = vpop.permute.xlu0 %6400
    %6402 = vrot.lane.b32.xlu0 %v6135, 80
    %v6403 = vpop.permute.xlu0 %6402
    %v6404 = vsel %vm480, %v6399, 0
    %v6406 = vsel %vm480, %v6401, 0
    %v6408 = vsel %vm480, %v6403, 0
    %6410 = vmatpush.xpose.msra.mxu0 0.0
    %6411 = vmatpush.xpose.msra.mxu0 0.0
    %6412 = vmatpush.xpose.msra.mxu0 0.0
    %6413 = vmatpush.xpose.msra.mxu0 0.0
    %6414 = vmatpush.xpose.msra.mxu0 0.0
    %6415 = vmatpush.xpose.msra.mxu0 0.0
    %6416 = vmatpush.xpose.msra.mxu0 0.0
    %6417 = vmatpush.xpose.msra.mxu0 0.0
    %6418 = vmatpush.xpose.msra.mxu0 0.0
    %6419 = vmatpush.xpose.msra.mxu0 0.0
    %6420 = vmatpush.xpose.msra.mxu0 0.0
    %6421 = vmatpush.xpose.msra.mxu0 0.0
    %6422 = vmatpush.xpose.msra.mxu0 0.0
    %6423 = vmatpush.xpose.msra.mxu0 0.0
    %6424 = vmatpush.xpose.msra.mxu0 %v6408
    %6425 = vmatpush.xpose.msra.mxu0 %v6406
    %6426 = vmatmul.f32.gmra.mxu0 %v6404
    %v6427 = vpop.f32.mrf.mxu0
    %v6428 = vadd.f32 0.0, %v6427
    %6429 = vdwg.mxu0
    %v6430 = vmul.f32 %v6428, 0.25
    %v6431 = vsel %vm517, %v6430, -inf
    %6432 = vmax.xlane.f32.xlu0 %v6431
    %v6433 = vpop.xlane.xlu0 %6432
    %v6434 = vsub.f32 %v6430, %v6433
    %v6435 = vmul.f32 %v6434, 1.442695
    %v6436 = vpow.pop %v6435
    %v6437 = vsel %vm517, %v6436, 0.0
    %6438 = vadd.xlane.f32.xlu0 %v6437
    %v6439 = vpop.xlane.xlu0 %6438
    %v6440 = vrcp.pop %v6439
    %v6441 = vmul.f32 %v6439, %v6440
    %v6442 = vsub.f32 1.0, %v6441
    %v6443 = vmul.f32 %v6440, %v6442
    %v6444 = vadd.f32 %v6440, %v6443
    %vm6445 = vweird.f32 %v6439
    %vm6446 = vweird.f32 %v6440
    %vm6447 = vmor %vm6445, %vm6446
    %v6448 = vsel %vm6447, %v6440, %v6444
    %v6449 = vand.u32 2147483647, %v6439
    %vm6450 = vcmp.eq.f32.partialorder %v6449, 8.507059e+37
    %v6451 = vand.u32 %v6439, 2147483648
    %v6452 = vor.u32 1.1754944e-38, %v6451
    %v6453 = vsel %vm6450, %v6452, %v6448
    %v6454 = vmul.f32 %v6436, %v6453
    %6455 = vrot.lane.b32.xlu0 %v6132, 16
    %v6456 = vpop.permute.xlu0 %6455
    %6457 = vrot.lane.b32.xlu0 %v6135, 16
    %v6458 = vpop.permute.xlu0 %6457
    %v6461 = vsel %vm517, %v6454, 0
    %v6463 = vsel %vm285, %v6458, 0
    %6465 = vmatpush.msra.mxu0 0.0
    %6466 = vmatpush.msra.mxu0 0.0
    %6467 = vmatpush.msra.mxu0 0.0
    %6468 = vmatpush.msra.mxu0 0.0
    %6469 = vmatpush.msra.mxu0 0.0
    %6470 = vmatpush.msra.mxu0 0.0
    %6471 = vmatpush.msra.mxu0 0.0
    %6472 = vmatpush.msra.mxu0 0.0
    %6473 = vmatpush.msra.mxu0 0.0
    %6474 = vmatpush.msra.mxu0 0.0
    %6475 = vmatpush.msra.mxu0 0.0
    %6476 = vmatpush.msra.mxu0 0.0
    %6477 = vmatpush.msra.mxu0 0.0
    %6478 = vmatpush.msra.mxu0 0.0
    %6479 = vmatpush.msra.mxu0 %v6463
    %6480 = vmatpush.msra.mxu0 %v6456
    %6481 = vmatmul.f32.gmra.mxu0 %v6461
    %v6482 = vpop.f32.mrf.mxu0
    %v6483 = vadd.f32 0.0, %v6482
    %6484 = vdwg.mxu0
    %6486 = vrot.lane.b32.xlu0 %v6309, 16
    %v6487 = vpop.permute.xlu0 %6486
    %6490 = vrot.lane.b32.xlu0 %v6396, 32
    %v6491 = vpop.permute.xlu0 %6490
    %6494 = vrot.lane.b32.xlu0 %v6483, 48
    %v6495 = vpop.permute.xlu0 %6494
    %v6497 = vsel %vm480, %v6222, %v6487
    %v6498 = vsel %vm1007, %v6497, %v6491
    %v6499 = vsel %vm1010, %v6498, %v6495
    %v6501 = vrot.slane %v6135, 2
    %v6502 = vrot.slane %v6138, 2
    %v6503 = vsel %vm1014, %v6501, %v6502
    %v6505 = vsel %vm480, %v6102, 0
    %v6507 = vsel %vm480, %v6503, 0
    %v6509 = vsel %vm480, %v6502, 0
    %6511 = vmatpush.xpose.msra.mxu0 0.0
    %6512 = vmatpush.xpose.msra.mxu0 0.0
    %6513 = vmatpush.xpose.msra.mxu0 0.0
    %6514 = vmatpush.xpose.msra.mxu0 0.0
    %6515 = vmatpush.xpose.msra.mxu0 0.0
    %6516 = vmatpush.xpose.msra.mxu0 0.0
    %6517 = vmatpush.xpose.msra.mxu0 0.0
    %6518 = vmatpush.xpose.msra.mxu0 0.0
    %6519 = vmatpush.xpose.msra.mxu0 0.0
    %6520 = vmatpush.xpose.msra.mxu0 0.0
    %6521 = vmatpush.xpose.msra.mxu0 0.0
    %6522 = vmatpush.xpose.msra.mxu0 0.0
    %6523 = vmatpush.xpose.msra.mxu0 0.0
    %6524 = vmatpush.xpose.msra.mxu0 0.0
    %6525 = vmatpush.xpose.msra.mxu0 %v6509
    %6526 = vmatpush.xpose.msra.mxu0 %v6507
    %6527 = vmatmul.f32.gmra.mxu0 %v6505
    %v6528 = vpop.f32.mrf.mxu0
    %v6529 = vadd.f32 0.0, %v6528
    %6530 = vdwg.mxu0
    %v6531 = vmul.f32 %v6529, 0.25
    %v6532 = vsel %vm517, %v6531, -inf
    %6533 = vmax.xlane.f32.xlu0 %v6532
    %v6534 = vpop.xlane.xlu0 %6533
    %v6535 = vsub.f32 %v6531, %v6534
    %v6536 = vmul.f32 %v6535, 1.442695
    %v6537 = vpow.pop %v6536
    %v6538 = vsel %vm517, %v6537, 0.0
    %6539 = vadd.xlane.f32.xlu0 %v6538
    %v6540 = vpop.xlane.xlu0 %6539
    %v6541 = vrcp.pop %v6540
    %v6542 = vmul.f32 %v6540, %v6541
    %v6543 = vsub.f32 1.0, %v6542
    %v6544 = vmul.f32 %v6541, %v6543
    %v6545 = vadd.f32 %v6541, %v6544
    %vm6546 = vweird.f32 %v6540
    %vm6547 = vweird.f32 %v6541
    %vm6548 = vmor %vm6546, %vm6547
    %v6549 = vsel %vm6548, %v6541, %v6545
    %v6550 = vand.u32 2147483647, %v6540
    %vm6551 = vcmp.eq.f32.partialorder %v6550, 8.507059e+37
    %v6552 = vand.u32 %v6540, 2147483648
    %v6553 = vor.u32 1.1754944e-38, %v6552
    %v6554 = vsel %vm6551, %v6553, %v6549
    %v6555 = vmul.f32 %v6537, %v6554
    %6556 = vrot.lane.b32.xlu0 %v6503, 64
    %v6557 = vpop.permute.xlu0 %6556
    %6558 = vrot.lane.b32.xlu0 %v6502, 64
    %v6559 = vpop.permute.xlu0 %6558
    %v6562 = vsel %vm517, %v6555, 0
    %v6564 = vsel %vm285, %v6559, 0
    %6566 = vmatpush.msra.mxu0 0.0
    %6567 = vmatpush.msra.mxu0 0.0
    %6568 = vmatpush.msra.mxu0 0.0
    %6569 = vmatpush.msra.mxu0 0.0
    %6570 = vmatpush.msra.mxu0 0.0
    %6571 = vmatpush.msra.mxu0 0.0
    %6572 = vmatpush.msra.mxu0 0.0
    %6573 = vmatpush.msra.mxu0 0.0
    %6574 = vmatpush.msra.mxu0 0.0
    %6575 = vmatpush.msra.mxu0 0.0
    %6576 = vmatpush.msra.mxu0 0.0
    %6577 = vmatpush.msra.mxu0 0.0
    %6578 = vmatpush.msra.mxu0 0.0
    %6579 = vmatpush.msra.mxu0 0.0
    %6580 = vmatpush.msra.mxu0 %v6564
    %6581 = vmatpush.msra.mxu0 %v6557
    %6582 = vmatmul.f32.gmra.mxu0 %v6562
    %v6583 = vpop.f32.mrf.mxu0
    %v6584 = vadd.f32 0.0, %v6583
    %6585 = vdwg.mxu0
    %6586 = vrot.lane.b32.xlu0 %v6102, 112
    %v6587 = vpop.permute.xlu0 %6586
    %6588 = vrot.lane.b32.xlu0 %v6503, 112
    %v6589 = vpop.permute.xlu0 %6588
    %6590 = vrot.lane.b32.xlu0 %v6502, 112
    %v6591 = vpop.permute.xlu0 %6590
    %v6592 = vsel %vm480, %v6587, 0
    %v6594 = vsel %vm480, %v6589, 0
    %v6596 = vsel %vm480, %v6591, 0
    %6598 = vmatpush.xpose.msra.mxu0 0.0
    %6599 = vmatpush.xpose.msra.mxu0 0.0
    %6600 = vmatpush.xpose.msra.mxu0 0.0
    %6601 = vmatpush.xpose.msra.mxu0 0.0
    %6602 = vmatpush.xpose.msra.mxu0 0.0
    %6603 = vmatpush.xpose.msra.mxu0 0.0
    %6604 = vmatpush.xpose.msra.mxu0 0.0
    %6605 = vmatpush.xpose.msra.mxu0 0.0
    %6606 = vmatpush.xpose.msra.mxu0 0.0
    %6607 = vmatpush.xpose.msra.mxu0 0.0
    %6608 = vmatpush.xpose.msra.mxu0 0.0
    %6609 = vmatpush.xpose.msra.mxu0 0.0
    %6610 = vmatpush.xpose.msra.mxu0 0.0
    %6611 = vmatpush.xpose.msra.mxu0 0.0
    %6612 = vmatpush.xpose.msra.mxu0 %v6596
    %6613 = vmatpush.xpose.msra.mxu0 %v6594
    %6614 = vmatmul.f32.gmra.mxu0 %v6592
    %v6615 = vpop.f32.mrf.mxu0
    %v6616 = vadd.f32 0.0, %v6615
    %6617 = vdwg.mxu0
    %v6618 = vmul.f32 %v6616, 0.25
    %v6619 = vsel %vm517, %v6618, -inf
    %6620 = vmax.xlane.f32.xlu0 %v6619
    %v6621 = vpop.xlane.xlu0 %6620
    %v6622 = vsub.f32 %v6618, %v6621
    %v6623 = vmul.f32 %v6622, 1.442695
    %v6624 = vpow.pop %v6623
    %v6625 = vsel %vm517, %v6624, 0.0
    %6626 = vadd.xlane.f32.xlu0 %v6625
    %v6627 = vpop.xlane.xlu0 %6626
    %v6628 = vrcp.pop %v6627
    %v6629 = vmul.f32 %v6627, %v6628
    %v6630 = vsub.f32 1.0, %v6629
    %v6631 = vmul.f32 %v6628, %v6630
    %v6632 = vadd.f32 %v6628, %v6631
    %vm6633 = vweird.f32 %v6627
    %vm6634 = vweird.f32 %v6628
    %vm6635 = vmor %vm6633, %vm6634
    %v6636 = vsel %vm6635, %v6628, %v6632
    %v6637 = vand.u32 2147483647, %v6627
    %vm6638 = vcmp.eq.f32.partialorder %v6637, 8.507059e+37
    %v6639 = vand.u32 %v6627, 2147483648
    %v6640 = vor.u32 1.1754944e-38, %v6639
    %v6641 = vsel %vm6638, %v6640, %v6636
    %v6642 = vmul.f32 %v6624, %v6641
    %6643 = vrot.lane.b32.xlu0 %v6503, 48
    %v6644 = vpop.permute.xlu0 %6643
    %6645 = vrot.lane.b32.xlu0 %v6502, 48
    %v6646 = vpop.permute.xlu0 %6645
    %v6649 = vsel %vm517, %v6642, 0
    %v6651 = vsel %vm285, %v6646, 0
    %6653 = vmatpush.msra.mxu0 0.0
    %6654 = vmatpush.msra.mxu0 0.0
    %6655 = vmatpush.msra.mxu0 0.0
    %6656 = vmatpush.msra.mxu0 0.0
    %6657 = vmatpush.msra.mxu0 0.0
    %6658 = vmatpush.msra.mxu0 0.0
    %6659 = vmatpush.msra.mxu0 0.0
    %6660 = vmatpush.msra.mxu0 0.0
    %6661 = vmatpush.msra.mxu0 0.0
    %6662 = vmatpush.msra.mxu0 0.0
    %6663 = vmatpush.msra.mxu0 0.0
    %6664 = vmatpush.msra.mxu0 0.0
    %6665 = vmatpush.msra.mxu0 0.0
    %6666 = vmatpush.msra.mxu0 0.0
    %6667 = vmatpush.msra.mxu0 %v6651
    %6668 = vmatpush.msra.mxu0 %v6644
    %6669 = vmatmul.f32.gmra.mxu0 %v6649
    %v6670 = vpop.f32.mrf.mxu0
    %v6671 = vadd.f32 0.0, %v6670
    %6672 = vdwg.mxu0
    %6673 = vrot.lane.b32.xlu0 %v6102, 96
    %v6674 = vpop.permute.xlu0 %6673
    %6675 = vrot.lane.b32.xlu0 %v6503, 96
    %v6676 = vpop.permute.xlu0 %6675
    %6677 = vrot.lane.b32.xlu0 %v6502, 96
    %v6678 = vpop.permute.xlu0 %6677
    %v6679 = vsel %vm480, %v6674, 0
    %v6681 = vsel %vm480, %v6676, 0
    %v6683 = vsel %vm480, %v6678, 0
    %6685 = vmatpush.xpose.msra.mxu0 0.0
    %6686 = vmatpush.xpose.msra.mxu0 0.0
    %6687 = vmatpush.xpose.msra.mxu0 0.0
    %6688 = vmatpush.xpose.msra.mxu0 0.0
    %6689 = vmatpush.xpose.msra.mxu0 0.0
    %6690 = vmatpush.xpose.msra.mxu0 0.0
    %6691 = vmatpush.xpose.msra.mxu0 0.0
    %6692 = vmatpush.xpose.msra.mxu0 0.0
    %6693 = vmatpush.xpose.msra.mxu0 0.0
    %6694 = vmatpush.xpose.msra.mxu0 0.0
    %6695 = vmatpush.xpose.msra.mxu0 0.0
    %6696 = vmatpush.xpose.msra.mxu0 0.0
    %6697 = vmatpush.xpose.msra.mxu0 0.0
    %6698 = vmatpush.xpose.msra.mxu0 0.0
    %6699 = vmatpush.xpose.msra.mxu0 %v6683
    %6700 = vmatpush.xpose.msra.mxu0 %v6681
    %6701 = vmatmul.f32.gmra.mxu0 %v6679
    %v6702 = vpop.f32.mrf.mxu0
    %v6703 = vadd.f32 0.0, %v6702
    %6704 = vdwg.mxu0
    %v6705 = vmul.f32 %v6703, 0.25
    %v6706 = vsel %vm517, %v6705, -inf
    %6707 = vmax.xlane.f32.xlu0 %v6706
    %v6708 = vpop.xlane.xlu0 %6707
    %v6709 = vsub.f32 %v6705, %v6708
    %v6710 = vmul.f32 %v6709, 1.442695
    %v6711 = vpow.pop %v6710
    %v6712 = vsel %vm517, %v6711, 0.0
    %6713 = vadd.xlane.f32.xlu0 %v6712
    %v6714 = vpop.xlane.xlu0 %6713
    %v6715 = vrcp.pop %v6714
    %v6716 = vmul.f32 %v6714, %v6715
    %v6717 = vsub.f32 1.0, %v6716
    %v6718 = vmul.f32 %v6715, %v6717
    %v6719 = vadd.f32 %v6715, %v6718
    %vm6720 = vweird.f32 %v6714
    %vm6721 = vweird.f32 %v6715
    %vm6722 = vmor %vm6720, %vm6721
    %v6723 = vsel %vm6722, %v6715, %v6719
    %v6724 = vand.u32 2147483647, %v6714
    %vm6725 = vcmp.eq.f32.partialorder %v6724, 8.507059e+37
    %v6726 = vand.u32 %v6714, 2147483648
    %v6727 = vor.u32 1.1754944e-38, %v6726
    %v6728 = vsel %vm6725, %v6727, %v6723
    %v6729 = vmul.f32 %v6711, %v6728
    %6730 = vrot.lane.b32.xlu0 %v6503, 32
    %v6731 = vpop.permute.xlu0 %6730
    %6732 = vrot.lane.b32.xlu0 %v6502, 32
    %v6733 = vpop.permute.xlu0 %6732
    %v6736 = vsel %vm517, %v6729, 0
    %v6738 = vsel %vm285, %v6733, 0
    %6740 = vmatpush.msra.mxu0 0.0
    %6741 = vmatpush.msra.mxu0 0.0
    %6742 = vmatpush.msra.mxu0 0.0
    %6743 = vmatpush.msra.mxu0 0.0
    %6744 = vmatpush.msra.mxu0 0.0
    %6745 = vmatpush.msra.mxu0 0.0
    %6746 = vmatpush.msra.mxu0 0.0
    %6747 = vmatpush.msra.mxu0 0.0
    %6748 = vmatpush.msra.mxu0 0.0
    %6749 = vmatpush.msra.mxu0 0.0
    %6750 = vmatpush.msra.mxu0 0.0
    %6751 = vmatpush.msra.mxu0 0.0
    %6752 = vmatpush.msra.mxu0 0.0
    %6753 = vmatpush.msra.mxu0 0.0
    %6754 = vmatpush.msra.mxu0 %v6738
    %6755 = vmatpush.msra.mxu0 %v6731
    %6756 = vmatmul.f32.gmra.mxu0 %v6736
    %v6757 = vpop.f32.mrf.mxu0
    %v6758 = vadd.f32 0.0, %v6757
    %6759 = vdwg.mxu0
    %6760 = vrot.lane.b32.xlu0 %v6102, 80
    %v6761 = vpop.permute.xlu0 %6760
    %6762 = vrot.lane.b32.xlu0 %v6503, 80
    %v6763 = vpop.permute.xlu0 %6762
    %6764 = vrot.lane.b32.xlu0 %v6502, 80
    %v6765 = vpop.permute.xlu0 %6764
    %v6766 = vsel %vm480, %v6761, 0
    %v6768 = vsel %vm480, %v6763, 0
    %v6770 = vsel %vm480, %v6765, 0
    %6772 = vmatpush.xpose.msra.mxu0 0.0
    %6773 = vmatpush.xpose.msra.mxu0 0.0
    %6774 = vmatpush.xpose.msra.mxu0 0.0
    %6775 = vmatpush.xpose.msra.mxu0 0.0
    %6776 = vmatpush.xpose.msra.mxu0 0.0
    %6777 = vmatpush.xpose.msra.mxu0 0.0
    %6778 = vmatpush.xpose.msra.mxu0 0.0
    %6779 = vmatpush.xpose.msra.mxu0 0.0
    %6780 = vmatpush.xpose.msra.mxu0 0.0
    %6781 = vmatpush.xpose.msra.mxu0 0.0
    %6782 = vmatpush.xpose.msra.mxu0 0.0
    %6783 = vmatpush.xpose.msra.mxu0 0.0
    %6784 = vmatpush.xpose.msra.mxu0 0.0
    %6785 = vmatpush.xpose.msra.mxu0 0.0
    %6786 = vmatpush.xpose.msra.mxu0 %v6770
    %6787 = vmatpush.xpose.msra.mxu0 %v6768
    %6788 = vmatmul.f32.gmra.mxu0 %v6766
    %v6789 = vpop.f32.mrf.mxu0
    %v6790 = vadd.f32 0.0, %v6789
    %6791 = vdwg.mxu0
    %v6792 = vmul.f32 %v6790, 0.25
    %v6793 = vsel %vm517, %v6792, -inf
    %6794 = vmax.xlane.f32.xlu0 %v6793
    %v6795 = vpop.xlane.xlu0 %6794
    %v6796 = vsub.f32 %v6792, %v6795
    %v6797 = vmul.f32 %v6796, 1.442695
    %v6798 = vpow.pop %v6797
    %v6799 = vsel %vm517, %v6798, 0.0
    %6800 = vadd.xlane.f32.xlu0 %v6799
    %v6801 = vpop.xlane.xlu0 %6800
    %v6802 = vrcp.pop %v6801
    %v6803 = vmul.f32 %v6801, %v6802
    %v6804 = vsub.f32 1.0, %v6803
    %v6805 = vmul.f32 %v6802, %v6804
    %v6806 = vadd.f32 %v6802, %v6805
    %vm6807 = vweird.f32 %v6801
    %vm6808 = vweird.f32 %v6802
    %vm6809 = vmor %vm6807, %vm6808
    %v6810 = vsel %vm6809, %v6802, %v6806
    %v6811 = vand.u32 2147483647, %v6801
    %vm6812 = vcmp.eq.f32.partialorder %v6811, 8.507059e+37
    %v6813 = vand.u32 %v6801, 2147483648
    %v6814 = vor.u32 1.1754944e-38, %v6813
    %v6815 = vsel %vm6812, %v6814, %v6810
    %v6816 = vmul.f32 %v6798, %v6815
    %6817 = vrot.lane.b32.xlu0 %v6503, 16
    %v6818 = vpop.permute.xlu0 %6817
    %6819 = vrot.lane.b32.xlu0 %v6502, 16
    %v6820 = vpop.permute.xlu0 %6819
    %v6823 = vsel %vm517, %v6816, 0
    %v6825 = vsel %vm285, %v6820, 0
    %6827 = vmatpush.msra.mxu0 0.0
    %6828 = vmatpush.msra.mxu0 0.0
    %6829 = vmatpush.msra.mxu0 0.0
    %6830 = vmatpush.msra.mxu0 0.0
    %6831 = vmatpush.msra.mxu0 0.0
    %6832 = vmatpush.msra.mxu0 0.0
    %6833 = vmatpush.msra.mxu0 0.0
    %6834 = vmatpush.msra.mxu0 0.0
    %6835 = vmatpush.msra.mxu0 0.0
    %6836 = vmatpush.msra.mxu0 0.0
    %6837 = vmatpush.msra.mxu0 0.0
    %6838 = vmatpush.msra.mxu0 0.0
    %6839 = vmatpush.msra.mxu0 0.0
    %6840 = vmatpush.msra.mxu0 0.0
    %6841 = vmatpush.msra.mxu0 %v6825
    %6842 = vmatpush.msra.mxu0 %v6818
    %6843 = vmatmul.f32.gmra.mxu0 %v6823
    %v6844 = vpop.f32.mrf.mxu0
    %v6845 = vadd.f32 0.0, %v6844
    %6846 = vdwg.mxu0
    %6848 = vrot.lane.b32.xlu0 %v6671, 16
    %v6849 = vpop.permute.xlu0 %6848
    %6852 = vrot.lane.b32.xlu0 %v6758, 32
    %v6853 = vpop.permute.xlu0 %6852
    %6856 = vrot.lane.b32.xlu0 %v6845, 48
    %v6857 = vpop.permute.xlu0 %6856
    %v6859 = vsel %vm480, %v6584, %v6849
    %v6860 = vsel %vm1007, %v6859, %v6853
    %v6861 = vsel %vm1010, %v6860, %v6857
    %s6862 = scalar_lea.vmem [#allocation15], 64
    %v6863 = vld [vmem:[%s6862] sm:$0xff]
    %v6864 = vld [vmem:[%s6862 + $0x8] sm:$0xff]
    %v6865 = vld [vmem:[%s6862 + $0x10] sm:$0xff]
    %v6866 = vld [vmem:[%s6862 + $0x18] sm:$0xff]
    %v6867 = vld [vmem:[%s6862 + $0x20] sm:$0xff]
    %v6868 = vld [vmem:[%s6862 + $0x28] sm:$0xff]
    %v6869 = vld [vmem:[%s6862 + $0x30] sm:$0xff]
    %v6870 = vld [vmem:[%s6862 + $0x38] sm:$0xff]
    %v6871 = vperm.slane %v5236, 4
    %v6873 = vsel %vm412, %v6499, 0
    %v6876 = vsel %vm412, %v6861, 0
    %6878 = vmatpush.msra.mxu0 0.0
    %6879 = vmatpush.msra.mxu0 0.0
    %6880 = vmatpush.msra.mxu0 0.0
    %6881 = vmatpush.msra.mxu0 0.0
    %6882 = vmatpush.msra.mxu0 0.0
    %6883 = vmatpush.msra.mxu0 0.0
    %6884 = vmatpush.msra.mxu0 0.0
    %6885 = vmatpush.msra.mxu0 0.0
    %6886 = vmatpush.msra.mxu0 %v6870
    %6887 = vmatpush.msra.mxu0 %v6869
    %6888 = vmatpush.msra.mxu0 %v6868
    %6889 = vmatpush.msra.mxu0 %v6867
    %6890 = vmatpush.msra.mxu0 %v6866
    %6891 = vmatpush.msra.mxu0 %v6865
    %6892 = vmatpush.msra.mxu0 %v6864
    %6893 = vmatpush.msra.mxu0 %v6863
    %6894 = vmatmul.f32.gmra.mxu0 %v6873
    %v6895 = vpop.f32.mrf.mxu0
    %v6896 = vadd.f32 %v6871, %v6895
    %6897 = vmatmul.f32.gmra.mxu0 %v6876
    %v6898 = vpop.f32.mrf.mxu0
    %v6899 = vadd.f32 %v6871, %v6898
    %6900 = vdwg.mxu0
    %v6901 = vadd.f32 %v6063, %v6896
    %v6902 = vadd.f32 %v6064, %v6899
    %v6903 = vsel %vm412, %v6901, 0.0
    %6904 = vadd.xlane.f32.xlu0 %v6903
    %v6905 = vpop.xlane.xlu0 %6904
    %v6906 = vsel %vm412, %v6902, 0.0
    %6907 = vadd.xlane.f32.xlu0 %v6906
    %v6908 = vpop.xlane.xlu0 %6907
    %v6909 = vmul.f32 %v6905, %v1622
    %v6910 = vmul.f32 %v6908, %v1622
    %v6911 = vsub.f32 %v6901, %v6909
    %v6912 = vsub.f32 %v6902, %v6910
    %v6913 = vmul.f32 %v6911, %v6911
    %v6914 = vmul.f32 %v6912, %v6912
    %v6915 = vsel %vm412, %v6913, 0.0
    %6916 = vadd.xlane.f32.xlu0 %v6915
    %v6917 = vpop.xlane.xlu0 %6916
    %v6918 = vsel %vm412, %v6914, 0.0
    %6919 = vadd.xlane.f32.xlu0 %v6918
    %v6920 = vpop.xlane.xlu0 %6919
    %v6921 = vmul.f32 %v6917, %v1622
    %v6922 = vmul.f32 %v6920, %v1622
    %v6923 = vadd.f32 %v6921, 1e-05
    %v6924 = vadd.f32 %v6922, 1e-05
    %v6925 = vrsqrt.pop %v6923
    %v6926 = vmul.f32 %v6925, %v6923
    %v6927 = vmul.f32 %v6926, %v6925
    %v6928 = vmul.f32 0.5, %v6927
    %v6929 = vsub.f32 1.5, %v6928
    %v6930 = vmul.f32 %v6925, %v6929
    %vm6931 = vweird.f32 %v6923
    %vm6932 = vweird.f32 %v6925
    %vm6933 = vmor %vm6931, %vm6932
    %v6934 = vsel %vm6933, %v6925, %v6930
    %v6935 = vrsqrt.pop %v6924
    %v6936 = vmul.f32 %v6935, %v6924
    %v6937 = vmul.f32 %v6936, %v6935
    %v6938 = vmul.f32 0.5, %v6937
    %v6939 = vsub.f32 1.5, %v6938
    %v6940 = vmul.f32 %v6935, %v6939
    %vm6941 = vweird.f32 %v6924
    %vm6942 = vweird.f32 %v6935
    %vm6943 = vmor %vm6941, %vm6942
    %v6944 = vsel %vm6943, %v6935, %v6940
    %v6945 = vmul.f32 %v6911, %v6934
    %v6946 = vmul.f32 %v6912, %v6944
    %v6947 = vperm.slane %v5238, 1
    %v6948 = vmul.f32 %v6945, %v6947
    %v6949 = vmul.f32 %v6946, %v6947
    %v6950 = vperm.slane %v5238, 2
    %v6951 = vadd.f32 %v6948, %v6950
    %v6952 = vadd.f32 %v6949, %v6950
    %s6953 = scalar_lea.vmem [#allocation16], 64
    %v6954 = vld [vmem:[%s6953] sm:$0xff]
    %v6955 = vld [vmem:[%s6953 + $0x8] sm:$0xff]
    %v6956 = vld [vmem:[%s6953 + $0x10] sm:$0xff]
    %v6957 = vld [vmem:[%s6953 + $0x18] sm:$0xff]
    %v6958 = vld [vmem:[%s6953 + $0x20] sm:$0xff]
    %v6959 = vld [vmem:[%s6953 + $0x28] sm:$0xff]
    %v6960 = vld [vmem:[%s6953 + $0x30] sm:$0xff]
    %v6961 = vld [vmem:[%s6953 + $0x38] sm:$0xff]
    %v6962 = vperm.slane %v5236, 5
    %v6964 = vsel %vm412, %v6951, 0
    %v6967 = vsel %vm412, %v6952, 0
    %6969 = vmatpush.msra.mxu0 0.0
    %6970 = vmatpush.msra.mxu0 0.0
    %6971 = vmatpush.msra.mxu0 0.0
    %6972 = vmatpush.msra.mxu0 0.0
    %6973 = vmatpush.msra.mxu0 0.0
    %6974 = vmatpush.msra.mxu0 0.0
    %6975 = vmatpush.msra.mxu0 0.0
    %6976 = vmatpush.msra.mxu0 0.0
    %6977 = vmatpush.msra.mxu0 %v6961
    %6978 = vmatpush.msra.mxu0 %v6960
    %6979 = vmatpush.msra.mxu0 %v6959
    %6980 = vmatpush.msra.mxu0 %v6958
    %6981 = vmatpush.msra.mxu0 %v6957
    %6982 = vmatpush.msra.mxu0 %v6956
    %6983 = vmatpush.msra.mxu0 %v6955
    %6984 = vmatpush.msra.mxu0 %v6954
    %6985 = vmatmul.f32.gmra.mxu0 %v6964
    %v6986 = vpop.f32.mrf.mxu0
    %v6987 = vadd.f32 %v6962, %v6986
    %6988 = vmatmul.f32.gmra.mxu0 %v6967
    %v6989 = vpop.f32.mrf.mxu0
    %v6990 = vadd.f32 %v6962, %v6989
    %6991 = vdwg.mxu0
    %v6992 = vmax.f32 %v6987, 0.0
    %v6993 = vmax.f32 %v6990, 0.0
    %s6994 = scalar_lea.vmem %s18, 128
    %v6995 = vld [vmem:[%s6994] sm:$0xff]
    %v6996 = vld [vmem:[%s6994 + $0x8] sm:$0xff]
    %v6997 = vld [vmem:[%s6994 + $0x10] sm:$0xff]
    %v6998 = vld [vmem:[%s6994 + $0x18] sm:$0xff]
    %v6999 = vld [vmem:[%s6994 + $0x20] sm:$0xff]
    %v7000 = vld [vmem:[%s6994 + $0x28] sm:$0xff]
    %v7001 = vld [vmem:[%s6994 + $0x30] sm:$0xff]
    %v7002 = vld [vmem:[%s6994 + $0x38] sm:$0xff]
    %v7003 = vld [vmem:[%s6994 + $0x40] sm:$0xff]
    %v7004 = vld [vmem:[%s6994 + $0x48] sm:$0xff]
    %v7005 = vld [vmem:[%s6994 + $0x50] sm:$0xff]
    %v7006 = vld [vmem:[%s6994 + $0x58] sm:$0xff]
    %v7007 = vld [vmem:[%s6994 + $0x60] sm:$0xff]
    %v7008 = vld [vmem:[%s6994 + $0x68] sm:$0xff]
    %v7009 = vld [vmem:[%s6994 + $0x70] sm:$0xff]
    %v7010 = vld [vmem:[%s6994 + $0x78] sm:$0xff]
    %v7011 = vperm.slane %v5236, 6
    %7012 = vmatpush.msra.mxu0 %v7010
    %7013 = vmatpush.msra.mxu0 %v7009
    %7014 = vmatpush.msra.mxu0 %v7008
    %7015 = vmatpush.msra.mxu0 %v7007
    %7016 = vmatpush.msra.mxu0 %v7006
    %7017 = vmatpush.msra.mxu0 %v7005
    %7018 = vmatpush.msra.mxu0 %v7004
    %7019 = vmatpush.msra.mxu0 %v7003
    %7020 = vmatpush.msra.mxu0 %v7002
    %7021 = vmatpush.msra.mxu0 %v7001
    %7022 = vmatpush.msra.mxu0 %v7000
    %7023 = vmatpush.msra.mxu0 %v6999
    %7024 = vmatpush.msra.mxu0 %v6998
    %7025 = vmatpush.msra.mxu0 %v6997
    %7026 = vmatpush.msra.mxu0 %v6996
    %7027 = vmatpush.msra.mxu0 %v6995
    %7028 = vmatmul.f32.gmra.mxu0 %v6992
    %v7029 = vpop.f32.mrf.mxu0
    %v7030 = vadd.f32 %v7011, %v7029
    %7031 = vmatmul.f32.gmra.mxu0 %v6993
    %v7032 = vpop.f32.mrf.mxu0
    %v7033 = vadd.f32 %v7011, %v7032
    %7034 = vdwg.mxu0
    %v7035 = vadd.f32 %v6951, %v7030
    %v7036 = vadd.f32 %v6952, %v7033
    %v7037 = vsel %vm412, %v7035, 0.0
    %7038 = vadd.xlane.f32.xlu0 %v7037
    %v7039 = vpop.xlane.xlu0 %7038
    %v7040 = vsel %vm412, %v7036, 0.0
    %7041 = vadd.xlane.f32.xlu0 %v7040
    %v7042 = vpop.xlane.xlu0 %7041
    %v7043 = vmul.f32 %v7039, %v1622
    %v7044 = vmul.f32 %v7042, %v1622
    %v7045 = vsub.f32 %v7035, %v7043
    %v7046 = vsub.f32 %v7036, %v7044
    %v7047 = vmul.f32 %v7045, %v7045
    %v7048 = vmul.f32 %v7046, %v7046
    %v7049 = vsel %vm412, %v7047, 0.0
    %7050 = vadd.xlane.f32.xlu0 %v7049
    %v7051 = vpop.xlane.xlu0 %7050
    %v7052 = vsel %vm412, %v7048, 0.0
    %7053 = vadd.xlane.f32.xlu0 %v7052
    %v7054 = vpop.xlane.xlu0 %7053
    %v7055 = vmul.f32 %v7051, %v1622
    %v7056 = vmul.f32 %v7054, %v1622
    %v7057 = vadd.f32 %v7055, 1e-05
    %v7058 = vadd.f32 %v7056, 1e-05
    %v7059 = vrsqrt.pop %v7057
    %v7060 = vmul.f32 %v7059, %v7057
    %v7061 = vmul.f32 %v7060, %v7059
    %v7062 = vmul.f32 0.5, %v7061
    %v7063 = vsub.f32 1.5, %v7062
    %v7064 = vmul.f32 %v7059, %v7063
    %vm7065 = vweird.f32 %v7057
    %vm7066 = vweird.f32 %v7059
    %vm7067 = vmor %vm7065, %vm7066
    %v7068 = vsel %vm7067, %v7059, %v7064
    %v7069 = vrsqrt.pop %v7058
    %v7070 = vmul.f32 %v7069, %v7058
    %v7071 = vmul.f32 %v7070, %v7069
    %v7072 = vmul.f32 0.5, %v7071
    %v7073 = vsub.f32 1.5, %v7072
    %v7074 = vmul.f32 %v7069, %v7073
    %vm7075 = vweird.f32 %v7058
    %vm7076 = vweird.f32 %v7069
    %vm7077 = vmor %vm7075, %vm7076
    %v7078 = vsel %vm7077, %v7069, %v7074
    %v7079 = vmul.f32 %v7045, %v7068
    %v7080 = vmul.f32 %v7046, %v7078
    %v7081 = vperm.slane %v5238, 3
    %v7082 = vmul.f32 %v7079, %v7081
    %v7083 = vmul.f32 %v7080, %v7081
    %v7084 = vperm.slane %v5238, 4
    %v7085 = vadd.f32 %v7082, %v7084
    %v7086 = vadd.f32 %v7083, %v7084
    %v7087 = vsel %vm412, %v7085, 0.0
    %7088 = vadd.xlane.f32.xlu0 %v7087
    %v7089 = vpop.xlane.xlu0 %7088
    %v7090 = vsel %vm412, %v7086, 0.0
    %7091 = vadd.xlane.f32.xlu0 %v7090
    %v7092 = vpop.xlane.xlu0 %7091
    %v7093 = vmul.f32 %v7089, %v1622
    %v7094 = vmul.f32 %v7092, %v1622
    %v7095 = vsub.f32 %v7085, %v7093
    %v7096 = vsub.f32 %v7086, %v7094
    %v7097 = vmul.f32 %v7095, %v7095
    %v7098 = vmul.f32 %v7096, %v7096
    %v7099 = vsel %vm412, %v7097, 0.0
    %7100 = vadd.xlane.f32.xlu0 %v7099
    %v7101 = vpop.xlane.xlu0 %7100
    %v7102 = vsel %vm412, %v7098, 0.0
    %7103 = vadd.xlane.f32.xlu0 %v7102
    %v7104 = vpop.xlane.xlu0 %7103
    %v7105 = vmul.f32 %v7101, %v1622
    %v7106 = vmul.f32 %v7104, %v1622
    %v7107 = vadd.f32 %v7105, 1e-05
    %v7108 = vadd.f32 %v7106, 1e-05
    %v7109 = vrsqrt.pop %v7107
    %v7110 = vmul.f32 %v7109, %v7107
    %v7111 = vmul.f32 %v7110, %v7109
    %v7112 = vmul.f32 0.5, %v7111
    %v7113 = vsub.f32 1.5, %v7112
    %v7114 = vmul.f32 %v7109, %v7113
    %vm7115 = vweird.f32 %v7107
    %vm7116 = vweird.f32 %v7109
    %vm7117 = vmor %vm7115, %vm7116
    %v7118 = vsel %vm7117, %v7109, %v7114
    %v7119 = vrsqrt.pop %v7108
    %v7120 = vmul.f32 %v7119, %v7108
    %v7121 = vmul.f32 %v7120, %v7119
    %v7122 = vmul.f32 0.5, %v7121
    %v7123 = vsub.f32 1.5, %v7122
    %v7124 = vmul.f32 %v7119, %v7123
    %vm7125 = vweird.f32 %v7108
    %vm7126 = vweird.f32 %v7119
    %vm7127 = vmor %vm7125, %vm7126
    %v7128 = vsel %vm7127, %v7119, %v7124
    %v7129 = vmul.f32 %v7095, %v7118
    %v7130 = vmul.f32 %v7096, %v7128
    %v7131 = vperm.slane %v3306, 2
    %v7132 = vmul.f32 %v7129, %v7131
    %v7133 = vmul.f32 %v7130, %v7131
    %v7134 = vperm.slane %v3306, 3
    %v7135 = vadd.f32 %v7132, %v7134
    %v7136 = vadd.f32 %v7133, %v7134
    %v7137 = vld [vmem:[#allocation18] sm:$0xff]
    %v7138 = vld [vmem:[#allocation18 + $0x8] sm:$0xff]
    %v7139 = vld [vmem:[#allocation18 + $0x10] sm:$0xff]
    %v7140 = vld [vmem:[#allocation18 + $0x18] sm:$0xff]
    %v7141 = vld [vmem:[#allocation18 + $0x20] sm:$0xff]
    %v7142 = vld [vmem:[#allocation18 + $0x28] sm:$0xff]
    %v7143 = vld [vmem:[#allocation18 + $0x30] sm:$0xff]
    %v7144 = vld [vmem:[#allocation18 + $0x38] sm:$0xff]
    %v7145 = vperm.slane %v3306, 4
    %v7147 = vsel %vm412, %v7135, 0
    %v7150 = vsel %vm412, %v7136, 0
    %7152 = vmatpush.msra.mxu0 0.0
    %7153 = vmatpush.msra.mxu0 0.0
    %7154 = vmatpush.msra.mxu0 0.0
    %7155 = vmatpush.msra.mxu0 0.0
    %7156 = vmatpush.msra.mxu0 0.0
    %7157 = vmatpush.msra.mxu0 0.0
    %7158 = vmatpush.msra.mxu0 0.0
    %7159 = vmatpush.msra.mxu0 0.0
    %7160 = vmatpush.msra.mxu0 %v7144
    %7161 = vmatpush.msra.mxu0 %v7143
    %7162 = vmatpush.msra.mxu0 %v7142
    %7163 = vmatpush.msra.mxu0 %v7141
    %7164 = vmatpush.msra.mxu0 %v7140
    %7165 = vmatpush.msra.mxu0 %v7139
    %7166 = vmatpush.msra.mxu0 %v7138
    %7167 = vmatpush.msra.mxu0 %v7137
    %7168 = vmatmul.f32.gmra.mxu0 %v7147
    %v7169 = vpop.f32.mrf.mxu0
    %v7170 = vadd.f32 %v7145, %v7169
    %7171 = vmatmul.f32.gmra.mxu0 %v7150
    %v7172 = vpop.f32.mrf.mxu0
    %v7173 = vadd.f32 %v7145, %v7172
    %7174 = vdwg.mxu0
    %7175 = vst [vmem:[%s22] sm:$0xff] %v7170
    %7176 = vst [vmem:[%s22 + $0x8] sm:$0xff] %v7173
    // Predicated region
    $region138: #{_forward.1} parent=1 // pred_check
      _
    $region139: #{_forward.1} parent=1 // pred_check_branch
      %7178 = sbr.rel (0) target = $region141
    $region140: #{_forward.1} parent=1 // pred_region
      _
    $region141: #{_forward.1} parent=1 // pred_fallthru
      _
    // Predicated region
    $region142: #{_forward.1} parent=1 // pred_check
      _
    $region143: #{_forward.1} parent=1 // pred_check_branch
      %7180 = sbr.rel (0) target = $region145
    $region144: #{_forward.1} parent=1 // pred_region
      _
    $region145: #{_forward.1} parent=1 // pred_fallthru
      _
    %7181 = vsyncpa [#allocation3], 1
    %7182 = vsyncpa [#allocation5], 1
    %7183 = vsyncpa [#allocation8], 1
    %7184 = vsyncpa [#allocation11], 1
    %7185 = vsyncpa [#allocation14], 1
    %7186 = vsyncpa [#allocation17], 1
    %7187 = vsyncpa [#allocation20], 1

</llo_original>
